<compile_context>
chip_gen: v7x
topology: tpu7x:2x2x1
jax: 0.10.0
libtpu: 0.0.40
codegen_flags: <defaults>
</compile_context>

<pallas_src>
import math

import jax
import jax.numpy as jnp
from jax.experimental import pallas as pl
from jax.experimental.pallas import tpu as pltpu

# ---- model dims (small but consistent with the module) ----
L = 4            # upstream num_hidden_layers
B = 2            # batch
T = 16           # upstream sequence length (pre conv-downsample)
H = 128          # upstream hidden_size == d_model
NH = 8           # nhead (fixed in module)
DH = H // NH     # per-head dim
FF = 1024        # dim_feedforward (fixed in module)
NLAYERS = 2      # TransformerEncoder num_layers (fixed in module)
NUM_CHARS = 32   # ASR vocab size
CLS_PAD = 128    # lane-dense padded classifier width
T2 = T // 2      # sequence length after stride-2 conv downsample
BT = B * T2      # flattened (batch, time) rows after downsample
EPS = 1e-5       # LayerNorm eps (PyTorch default)
NEG_INF = -1e30  # attention mask value for cross-batch keys


def _bf16(x):
    return x.astype(jnp.bfloat16)


def _layer_norm_f32(x, w, b):
    mu = jnp.mean(x, axis=-1, keepdims=True)
    var = jnp.mean((x - mu) ** 2, axis=-1, keepdims=True)
    return (x - mu) * jax.lax.rsqrt(var + EPS) * w + b


# --------------------------------------------------------------------------------------
# Single fused forward kernel.
# --------------------------------------------------------------------------------------
def fused_forward_kernel(lw_ref, hs_ref, bias_ref,
                         conv_w_ref, conv_b_ref,
                         w_in_ref, b_in_ref, w_out_ref, b_out_ref,
                         ln1w_ref, ln1b_ref,
                         ff_w1_ref, ff_b1_ref, ff_w2_ref, ff_b2_ref,
                         ln2w_ref, ln2b_ref,
                         cls_w_ref, cls_b_ref,
                         out_ref, ctx_ref):
    # --- 1) weighted sum over upstream layers (f32, VPU), already in (BT, 2H) layout ---
    ws = lw_ref[0] * hs_ref[0]
    for l in range(1, L):
        ws = ws + lw_ref[l] * hs_ref[l]                                   # (BT, 2H)

    # --- 2) Conv1d(H, H, k=2, s=2) as a single (BT, 2H) @ (2H, H) matmul ----------------
    x = jnp.dot(_bf16(ws), conv_w_ref[...],
                preferred_element_type=jnp.float32) + conv_b_ref[...]      # (BT, H)

    attn_bias = bias_ref[...]                                              # (BT, BT) 0 / -1e30
    scale = 1.0 / math.sqrt(DH)

    # --- 3) NLAYERS post-norm TransformerEncoderLayer(s) --------------------------------
    for li in range(NLAYERS):
        qkv = jnp.dot(_bf16(x), w_in_ref[li],
                      preferred_element_type=jnp.float32) + b_in_ref[li]   # (BT, 3H)
        q = qkv[:, 0:H]
        k = qkv[:, H:2 * H]
        v = qkv[:, 2 * H:3 * H]

        # per-head attention over both batch elements at once (block-diagonal mask);
        # head contexts land in a VMEM scratch at static lane slices (no concatenate).
        for h in range(NH):
            qh = _bf16(q[:, h * DH:(h + 1) * DH])
            kh = _bf16(k[:, h * DH:(h + 1) * DH])
            vh = _bf16(v[:, h * DH:(h + 1) * DH])
            s = jax.lax.dot_general(qh, kh, (((1,), (1,)), ((), ())),
                                    preferred_element_type=jnp.float32)    # (BT, BT)
            s = s * scale + attn_bias
            s = s - jnp.max(s, axis=-1, keepdims=True)
            p = jnp.exp(s)
            p = p * pl.reciprocal(jnp.sum(p, axis=-1, keepdims=True), approx=True)
            ctx_ref[:, h * DH:(h + 1) * DH] = jnp.dot(
                _bf16(p), vh, preferred_element_type=jnp.float32)

        attn = jnp.dot(_bf16(ctx_ref[...]), w_out_ref[li],
                       preferred_element_type=jnp.float32) + b_out_ref[li]
        x1 = _layer_norm_f32(x + attn, ln1w_ref[li], ln1b_ref[li])         # post-norm

        h1 = jnp.maximum(
            jnp.dot(_bf16(x1), ff_w1_ref[li],
                    preferred_element_type=jnp.float32) + ff_b1_ref[li], 0.0)
        ff = jnp.dot(_bf16(h1), ff_w2_ref[li],
                     preferred_element_type=jnp.float32) + ff_b2_ref[li]
        x = _layer_norm_f32(x1 + ff, ln2w_ref[li], ln2b_ref[li])

    # --- 4) ASR classifier, lane-dense (padded to CLS_PAD=128 lanes) --------------------
    out_ref[...] = jnp.dot(_bf16(x), cls_w_ref[...],
                           preferred_element_type=jnp.float32) + cls_b_ref[...]


# --------------------------------------------------------------------------------------
# Wrapper: layout glue (zero-copy reshape, weight concat/pad/cast) + single pallas_call.
# --------------------------------------------------------------------------------------
def downstream_forward(hidden_states, params):
    # (L, B, T, H) -> (L, B*T2, 2H): contiguous view; row = [even-step feats, odd-step feats]
    hs2 = hidden_states.reshape(L, BT, 2 * H)

    # Conv1d as one matmul: W_cat = [W_k0; W_k1] of shape (2H, H)
    # TODO(synk): for real PyTorch weights (out, in, k), conv_w0/conv_w1 = weight[:,:,0].T / weight[:,:,1].T
    conv_w = jnp.concatenate([params['conv_w0'], params['conv_w1']], axis=0)

    # classifier padded to a lane-dense 128-wide output slab (sliced back after the call)
    cls_w = jnp.zeros((H, CLS_PAD), jnp.float32).at[:, :NUM_CHARS].set(params['cls_w'])
    cls_b = jnp.zeros((1, CLS_PAD), jnp.float32).at[:, :NUM_CHARS].set(params['cls_b'])

    # block-diagonal attention bias: each batch element only attends within itself
    row = jnp.arange(BT) // T2
    attn_bias = jnp.where(row[:, None] == row[None, :], 0.0, NEG_INF).astype(jnp.float32)

    vmem = pl.BlockSpec(memory_space=pltpu.MemorySpace.VMEM)
    smem = pl.BlockSpec(memory_space=pltpu.MemorySpace.SMEM)

    out = pl.pallas_call(
        fused_forward_kernel,
        out_shape=jax.ShapeDtypeStruct((BT, CLS_PAD), jnp.float32),
        in_specs=[smem] + [vmem] * 18,
        out_specs=vmem,
        scratch_shapes=[pltpu.VMEM((BT, H), jnp.float32)],   # per-head context scratch
        compiler_params=pltpu.CompilerParams(vmem_limit_bytes=32 * 1024 * 1024),
    )(
        params['layer_weights'],
        hs2,
        attn_bias,
        _bf16(conv_w), params['conv_b'],
        _bf16(params['w_in']), params['b_in'],
        _bf16(params['w_out']), params['b_out'],
        params['ln1_w'], params['ln1_b'],
        _bf16(params['ff_w1']), params['ff_b1'],
        _bf16(params['ff_w2']), params['ff_b2'],
        params['ln2_w'], params['ln2_b'],
        _bf16(cls_w), cls_b,
    )
    return out[:, :NUM_CHARS].reshape(B, T2, NUM_CHARS)


# --------------------------------------------------------------------------------------
# Deterministic parameter init + pure-JAX reference (models bf16 MXU operand rounding).
# --------------------------------------------------------------------------------------
def init_params(key):
    ks = jax.random.split(key, 10)

    def lin(k, fan_in, shape):
        return jax.random.normal(k, shape, jnp.float32) / math.sqrt(fan_in)

    return {
        # raw (non-softmaxed) layer weights, init 1/L — matches the PyTorch module
        'layer_weights': jnp.full((L,), 1.0 / L, jnp.float32),
        'conv_w0': lin(ks[0], 2 * H, (H, H)),
        'conv_w1': lin(ks[1], 2 * H, (H, H)),
        'conv_b': lin(ks[2], 2 * H, (1, H)),
        'w_in': lin(ks[3], H, (NLAYERS, H, 3 * H)),
        'b_in': lin(ks[4], H, (NLAYERS, 1, 3 * H)),
        'w_out': lin(ks[5], H, (NLAYERS, H, H)),
        'b_out': jnp.zeros((NLAYERS, 1, H), jnp.float32),
        'ln1_w': jnp.ones((NLAYERS, 1, H), jnp.float32),
        'ln1_b': jnp.zeros((NLAYERS, 1, H), jnp.float32),
        'ff_w1': lin(ks[6], H, (NLAYERS, H, FF)),
        'ff_b1': lin(ks[7], H, (NLAYERS, 1, FF)),
        'ff_w2': lin(ks[8], FF, (NLAYERS, FF, H)),
        'ff_b2': jnp.zeros((NLAYERS, 1, H), jnp.float32),
        'ln2_w': jnp.ones((NLAYERS, 1, H), jnp.float32),
        'ln2_b': jnp.zeros((NLAYERS, 1, H), jnp.float32),
        'cls_w': lin(ks[9], H, (H, NUM_CHARS)),
        'cls_b': jnp.zeros((1, NUM_CHARS), jnp.float32),
    }


def reference_forward(hidden_states, params):
    P = jax.lax.Precision.HIGHEST

    def r(x):  # model MXU bf16 operand rounding (f32 accumulation)
        return x.astype(jnp.bfloat16).astype(jnp.float32)

    def ln(x, w, b):
        mu = jnp.mean(x, axis=-1, keepdims=True)
        var = jnp.mean((x - mu) ** 2, axis=-1, keepdims=True)
        return (x - mu) * jax.lax.rsqrt(var + EPS) * w + b

    ws = jnp.tensordot(params['layer_weights'], hidden_states, axes=([0], [0]))   # (B,T,H)
    xe, xo = ws[:, 0::2, :], ws[:, 1::2, :]
    x = (jnp.einsum('bth,hk->btk', r(xe), r(params['conv_w0']), precision=P)
         + jnp.einsum('bth,hk->btk', r(xo), r(params['conv_w1']), precision=P)
         + params['conv_b'])

    for li in range(NLAYERS):
        qkv = (jnp.einsum('bsh,hk->bsk', r(x), r(params['w_in'][li]), precision=P)
               + params['b_in'][li])
        q, k, v = qkv[..., :H], qkv[..., H:2 * H], qkv[..., 2 * H:]
        qh = q.reshape(B, T2, NH, DH)
        kh = k.reshape(B, T2, NH, DH)
        vh = v.reshape(B, T2, NH, DH)
        s = jnp.einsum('bqnd,bknd->bnqk', r(qh), r(kh), precision=P) / math.sqrt(DH)
        a = jax.nn.softmax(s, axis=-1)
        ctx = jnp.einsum('bnqk,bknd->bqnd', r(a), r(vh), precision=P).reshape(B, T2, H)
        attn = (jnp.einsum('bsh,hk->bsk', r(ctx), r(params['w_out'][li]), precision=P)
                + params['b_out'][li])
        x1 = ln(x + attn, params['ln1_w'][li], params['ln1_b'][li])
        h1 = jax.nn.relu(
            jnp.einsum('bsh,hf->bsf', r(x1), r(params['ff_w1'][li]), precision=P)
            + params['ff_b1'][li])
        ff = (jnp.einsum('bsf,fh->bsh', r(h1), r(params['ff_w2'][li]), precision=P)
              + params['ff_b2'][li])
        x = ln(x1 + ff, params['ln2_w'][li], params['ln2_b'][li])

    return (jnp.einsum('bsh,hc->bsc', r(x), r(params['cls_w']), precision=P)
            + params['cls_b'])


if __name__ == "__main__":
    key = jax.random.PRNGKey(0)
    k_hs, k_params = jax.random.split(key)

    # stacked upstream hidden_states (outputs.hidden_states[1:]) — synthetic, deterministic
    hidden_states = jax.random.normal(k_hs, (L, B, T, H), jnp.float32)
    params = init_params(k_params)

    logits = jax.jit(downstream_forward)(hidden_states, params)
    logits = jax.block_until_ready(logits)

    assert logits.shape == (B, T2, NUM_CHARS), logits.shape
    assert bool(jnp.all(jnp.isfinite(logits)))

    ref = reference_forward(hidden_states, params)
    max_err = float(jnp.max(jnp.abs(logits - ref)))
    assert max_err < 3e-2, f"mismatch vs reference: {max_err}"

    print("KERNEL_OK")
</pallas_src>

<mosaic_0001>
module attributes {stable_mosaic.version = 11 : i64} {
  func.func @fused_forward_kernel(%arg0: memref<4xf32, #tpu.memory_space<smem>>, %arg1: memref<4x16x256xf32, #tpu.memory_space<vmem>>, %arg2: memref<16x16xf32, #tpu.memory_space<vmem>>, %arg3: memref<256x128xbf16, #tpu.memory_space<vmem>>, %arg4: memref<1x128xf32, #tpu.memory_space<vmem>>, %arg5: memref<2x128x384xbf16, #tpu.memory_space<vmem>>, %arg6: memref<2x1x384xf32, #tpu.memory_space<vmem>>, %arg7: memref<2x128x128xbf16, #tpu.memory_space<vmem>>, %arg8: memref<2x1x128xf32, #tpu.memory_space<vmem>>, %arg9: memref<2x1x128xf32, #tpu.memory_space<vmem>>, %arg10: memref<2x1x128xf32, #tpu.memory_space<vmem>>, %arg11: memref<2x128x1024xbf16, #tpu.memory_space<vmem>>, %arg12: memref<2x1x1024xf32, #tpu.memory_space<vmem>>, %arg13: memref<2x1024x128xbf16, #tpu.memory_space<vmem>>, %arg14: memref<2x1x128xf32, #tpu.memory_space<vmem>>, %arg15: memref<2x1x128xf32, #tpu.memory_space<vmem>>, %arg16: memref<2x1x128xf32, #tpu.memory_space<vmem>>, %arg17: memref<128x128xbf16, #tpu.memory_space<vmem>>, %arg18: memref<1x128xf32, #tpu.memory_space<vmem>>, %arg19: memref<16x128xf32, #tpu.memory_space<vmem>>, %arg20: memref<16x128xf32, #tpu.memory_space<vmem>>) attributes {dimension_semantics = [], scalar_prefetch = 0 : i64, scratch_operands = 1 : i64, tpu.core_type = #tpu.core_type<tc>} {
    %c0 = arith.constant 0 : index
    %0 = memref.load %arg0[%c0] : memref<4xf32, #tpu.memory_space<smem>>
    %c0_0 = arith.constant 0 : index
    %c0_1 = arith.constant 0 : index
    %c0_2 = arith.constant 0 : index
    %1 = vector.load %arg1[%c0_0, %c0_1, %c0_2] : memref<4x16x256xf32, #tpu.memory_space<vmem>>, vector<1x16x256xf32>
    %2 = vector.shape_cast %1 : vector<1x16x256xf32> to vector<16x256xf32>
    %3 = vector.broadcast %0 : f32 to vector<16x256xf32>
    %4 = arith.mulf %3, %2 : vector<16x256xf32>
    %c1 = arith.constant 1 : index
    %5 = memref.load %arg0[%c1] : memref<4xf32, #tpu.memory_space<smem>>
    %c1_3 = arith.constant 1 : index
    %c0_4 = arith.constant 0 : index
    %c0_5 = arith.constant 0 : index
    %6 = vector.load %arg1[%c1_3, %c0_4, %c0_5] : memref<4x16x256xf32, #tpu.memory_space<vmem>>, vector<1x16x256xf32>
    %7 = vector.shape_cast %6 : vector<1x16x256xf32> to vector<16x256xf32>
    %8 = vector.broadcast %5 : f32 to vector<16x256xf32>
    %9 = arith.mulf %8, %7 : vector<16x256xf32>
    %10 = arith.addf %4, %9 : vector<16x256xf32>
    %c2 = arith.constant 2 : index
    %11 = memref.load %arg0[%c2] : memref<4xf32, #tpu.memory_space<smem>>
    %c2_6 = arith.constant 2 : index
    %c0_7 = arith.constant 0 : index
    %c0_8 = arith.constant 0 : index
    %12 = vector.load %arg1[%c2_6, %c0_7, %c0_8] : memref<4x16x256xf32, #tpu.memory_space<vmem>>, vector<1x16x256xf32>
    %13 = vector.shape_cast %12 : vector<1x16x256xf32> to vector<16x256xf32>
    %14 = vector.broadcast %11 : f32 to vector<16x256xf32>
    %15 = arith.mulf %14, %13 : vector<16x256xf32>
    %16 = arith.addf %10, %15 : vector<16x256xf32>
    %c3 = arith.constant 3 : index
    %17 = memref.load %arg0[%c3] : memref<4xf32, #tpu.memory_space<smem>>
    %c3_9 = arith.constant 3 : index
    %c0_10 = arith.constant 0 : index
    %c0_11 = arith.constant 0 : index
    %18 = vector.load %arg1[%c3_9, %c0_10, %c0_11] : memref<4x16x256xf32, #tpu.memory_space<vmem>>, vector<1x16x256xf32>
    %19 = vector.shape_cast %18 : vector<1x16x256xf32> to vector<16x256xf32>
    %20 = vector.broadcast %17 : f32 to vector<16x256xf32>
    %21 = arith.mulf %20, %19 : vector<16x256xf32>
    %22 = arith.addf %16, %21 : vector<16x256xf32>
    %23 = arith.truncf %22 : vector<16x256xf32> to vector<16x256xbf16>
    %c0_12 = arith.constant 0 : index
    %c0_13 = arith.constant 0 : index
    %24 = vector.load %arg3[%c0_12, %c0_13] : memref<256x128xbf16, #tpu.memory_space<vmem>>, vector<256x128xbf16>
    %cst = arith.constant dense<0.000000e+00> : vector<16x128xf32>
    %25 = tpu.matmul %23, %24, %cst {dimension_numbers = #tpu.dot_dimension_numbers<[1], [0], [0], [1], [0, 0, 1, 1], [], []>} : vector<16x256xbf16>, vector<256x128xbf16>, vector<16x128xf32> -> vector<16x128xf32>
    %c0_14 = arith.constant 0 : index
    %c0_15 = arith.constant 0 : index
    %26 = vector.load %arg4[%c0_14, %c0_15] : memref<1x128xf32, #tpu.memory_space<vmem>>, vector<1x128xf32>
    %27 = vector.broadcast %26 : vector<1x128xf32> to vector<16x128xf32>
    %28 = arith.addf %25, %27 : vector<16x128xf32>
    %c0_16 = arith.constant 0 : index
    %c0_17 = arith.constant 0 : index
    %29 = vector.load %arg2[%c0_16, %c0_17] : memref<16x16xf32, #tpu.memory_space<vmem>>, vector<16x16xf32>
    %30 = arith.truncf %28 : vector<16x128xf32> to vector<16x128xbf16>
    %c0_18 = arith.constant 0 : index
    %c0_19 = arith.constant 0 : index
    %c0_20 = arith.constant 0 : index
    %31 = vector.load %arg5[%c0_18, %c0_19, %c0_20] : memref<2x128x384xbf16, #tpu.memory_space<vmem>>, vector<1x128x384xbf16>
    %32 = vector.shape_cast %31 : vector<1x128x384xbf16> to vector<128x384xbf16>
    %cst_21 = arith.constant dense<0.000000e+00> : vector<16x384xf32>
    %33 = tpu.matmul %30, %32, %cst_21 {dimension_numbers = #tpu.dot_dimension_numbers<[1], [0], [0], [1], [0, 0, 1, 1], [], []>} : vector<16x128xbf16>, vector<128x384xbf16>, vector<16x384xf32> -> vector<16x384xf32>
    %c0_22 = arith.constant 0 : index
    %c0_23 = arith.constant 0 : index
    %c0_24 = arith.constant 0 : index
    %34 = vector.load %arg6[%c0_22, %c0_23, %c0_24] : memref<2x1x384xf32, #tpu.memory_space<vmem>>, vector<1x1x384xf32>
    %35 = vector.shape_cast %34 : vector<1x1x384xf32> to vector<1x384xf32>
    %36 = vector.broadcast %35 : vector<1x384xf32> to vector<16x384xf32>
    %37 = arith.addf %33, %36 : vector<16x384xf32>
    %38 = vector.extract_strided_slice %37 {offsets = [0, 0], sizes = [16, 128], strides = [1, 1]} : vector<16x384xf32> to vector<16x128xf32>
    %39 = vector.extract_strided_slice %37 {offsets = [0, 128], sizes = [16, 128], strides = [1, 1]} : vector<16x384xf32> to vector<16x128xf32>
    %40 = vector.extract_strided_slice %37 {offsets = [0, 256], sizes = [16, 128], strides = [1, 1]} : vector<16x384xf32> to vector<16x128xf32>
    %41 = vector.extract_strided_slice %38 {offsets = [0, 0], sizes = [16, 16], strides = [1, 1]} : vector<16x128xf32> to vector<16x16xf32>
    %42 = arith.truncf %41 : vector<16x16xf32> to vector<16x16xbf16>
    %43 = vector.extract_strided_slice %39 {offsets = [0, 0], sizes = [16, 16], strides = [1, 1]} : vector<16x128xf32> to vector<16x16xf32>
    %44 = arith.truncf %43 : vector<16x16xf32> to vector<16x16xbf16>
    %45 = vector.extract_strided_slice %40 {offsets = [0, 0], sizes = [16, 16], strides = [1, 1]} : vector<16x128xf32> to vector<16x16xf32>
    %46 = arith.truncf %45 : vector<16x16xf32> to vector<16x16xbf16>
    %cst_25 = arith.constant dense<0.000000e+00> : vector<16x16xf32>
    %47 = tpu.matmul %42, %44, %cst_25 {dimension_numbers = #tpu.dot_dimension_numbers<[1], [1], [0], [0], [0, 0, 1, 0], [], []>} : vector<16x16xbf16>, vector<16x16xbf16>, vector<16x16xf32> -> vector<16x16xf32>
    %cst_26 = arith.constant 2.500000e-01 : f32
    %48 = vector.broadcast %cst_26 : f32 to vector<16x16xf32>
    %49 = arith.mulf %47, %48 : vector<16x16xf32>
    %50 = arith.addf %49, %29 : vector<16x16xf32>
    %cst_27 = arith.constant dense<0xFF800000> : vector<16xf32>
    %51 = vector.multi_reduction <maximumf>, %50, %cst_27 [1] : vector<16x16xf32> to vector<16xf32>
    %52 = vector.shape_cast %51 : vector<16xf32> to vector<16x1xf32>
    %53 = vector.broadcast %52 : vector<16x1xf32> to vector<16x16xf32>
    %54 = arith.subf %50, %53 : vector<16x16xf32>
    %55 = math.exp %54 : vector<16x16xf32>
    %cst_28 = arith.constant dense<0.000000e+00> : vector<16xf32>
    %56 = vector.multi_reduction <add>, %55, %cst_28 [1] : vector<16x16xf32> to vector<16xf32>
    %57 = vector.shape_cast %56 : vector<16xf32> to vector<16x1xf32>
    %58 = tpu.reciprocal %57 {approx = true} : vector<16x1xf32> -> vector<16x1xf32>
    %59 = vector.broadcast %58 : vector<16x1xf32> to vector<16x16xf32>
    %60 = arith.mulf %55, %59 : vector<16x16xf32>
    %61 = arith.truncf %60 : vector<16x16xf32> to vector<16x16xbf16>
    %cst_29 = arith.constant dense<0.000000e+00> : vector<16x16xf32>
    %62 = tpu.matmul %61, %46, %cst_29 {dimension_numbers = #tpu.dot_dimension_numbers<[1], [0], [0], [1], [0, 0, 1, 1], [], []>} : vector<16x16xbf16>, vector<16x16xbf16>, vector<16x16xf32> -> vector<16x16xf32>
    %c0_30 = arith.constant 0 : index
    %c0_31 = arith.constant 0 : index
    %63 = vector.load %arg20[%c0_30, %c0_31] : memref<16x128xf32, #tpu.memory_space<vmem>>, vector<16x16xf32>
    tpu.vector_store %arg20[%c0_30, %c0_31], %62 {strides = array<i32>} : memref<16x128xf32, #tpu.memory_space<vmem>>, vector<16x16xf32>,
    %64 = vector.extract_strided_slice %38 {offsets = [0, 16], sizes = [16, 16], strides = [1, 1]} : vector<16x128xf32> to vector<16x16xf32>
    %65 = arith.truncf %64 : vector<16x16xf32> to vector<16x16xbf16>
    %66 = vector.extract_strided_slice %39 {offsets = [0, 16], sizes = [16, 16], strides = [1, 1]} : vector<16x128xf32> to vector<16x16xf32>
    %67 = arith.truncf %66 : vector<16x16xf32> to vector<16x16xbf16>
    %68 = vector.extract_strided_slice %40 {offsets = [0, 16], sizes = [16, 16], strides = [1, 1]} : vector<16x128xf32> to vector<16x16xf32>
    %69 = arith.truncf %68 : vector<16x16xf32> to vector<16x16xbf16>
    %cst_32 = arith.constant dense<0.000000e+00> : vector<16x16xf32>
    %70 = tpu.matmul %65, %67, %cst_32 {dimension_numbers = #tpu.dot_dimension_numbers<[1], [1], [0], [0], [0, 0, 1, 0], [], []>} : vector<16x16xbf16>, vector<16x16xbf16>, vector<16x16xf32> -> vector<16x16xf32>
    %cst_33 = arith.constant 2.500000e-01 : f32
    %71 = vector.broadcast %cst_33 : f32 to vector<16x16xf32>
    %72 = arith.mulf %70, %71 : vector<16x16xf32>
    %73 = arith.addf %72, %29 : vector<16x16xf32>
    %cst_34 = arith.constant dense<0xFF800000> : vector<16xf32>
    %74 = vector.multi_reduction <maximumf>, %73, %cst_34 [1] : vector<16x16xf32> to vector<16xf32>
    %75 = vector.shape_cast %74 : vector<16xf32> to vector<16x1xf32>
    %76 = vector.broadcast %75 : vector<16x1xf32> to vector<16x16xf32>
    %77 = arith.subf %73, %76 : vector<16x16xf32>
    %78 = math.exp %77 : vector<16x16xf32>
    %cst_35 = arith.constant dense<0.000000e+00> : vector<16xf32>
    %79 = vector.multi_reduction <add>, %78, %cst_35 [1] : vector<16x16xf32> to vector<16xf32>
    %80 = vector.shape_cast %79 : vector<16xf32> to vector<16x1xf32>
    %81 = tpu.reciprocal %80 {approx = true} : vector<16x1xf32> -> vector<16x1xf32>
    %82 = vector.broadcast %81 : vector<16x1xf32> to vector<16x16xf32>
    %83 = arith.mulf %78, %82 : vector<16x16xf32>
    %84 = arith.truncf %83 : vector<16x16xf32> to vector<16x16xbf16>
    %cst_36 = arith.constant dense<0.000000e+00> : vector<16x16xf32>
    %85 = tpu.matmul %84, %69, %cst_36 {dimension_numbers = #tpu.dot_dimension_numbers<[1], [0], [0], [1], [0, 0, 1, 1], [], []>} : vector<16x16xbf16>, vector<16x16xbf16>, vector<16x16xf32> -> vector<16x16xf32>
    %c0_37 = arith.constant 0 : index
    %c16 = arith.constant 16 : index
    %86 = vector.load %arg20[%c0_37, %c16] : memref<16x128xf32, #tpu.memory_space<vmem>>, vector<16x16xf32>
    tpu.vector_store %arg20[%c0_37, %c16], %85 {strides = array<i32>} : memref<16x128xf32, #tpu.memory_space<vmem>>, vector<16x16xf32>,
    %87 = vector.extract_strided_slice %38 {offsets = [0, 32], sizes = [16, 16], strides = [1, 1]} : vector<16x128xf32> to vector<16x16xf32>
    %88 = arith.truncf %87 : vector<16x16xf32> to vector<16x16xbf16>
    %89 = vector.extract_strided_slice %39 {offsets = [0, 32], sizes = [16, 16], strides = [1, 1]} : vector<16x128xf32> to vector<16x16xf32>
    %90 = arith.truncf %89 : vector<16x16xf32> to vector<16x16xbf16>
    %91 = vector.extract_strided_slice %40 {offsets = [0, 32], sizes = [16, 16], strides = [1, 1]} : vector<16x128xf32> to vector<16x16xf32>
    %92 = arith.truncf %91 : vector<16x16xf32> to vector<16x16xbf16>
    %cst_38 = arith.constant dense<0.000000e+00> : vector<16x16xf32>
    %93 = tpu.matmul %88, %90, %cst_38 {dimension_numbers = #tpu.dot_dimension_numbers<[1], [1], [0], [0], [0, 0, 1, 0], [], []>} : vector<16x16xbf16>, vector<16x16xbf16>, vector<16x16xf32> -> vector<16x16xf32>
    %cst_39 = arith.constant 2.500000e-01 : f32
    %94 = vector.broadcast %cst_39 : f32 to vector<16x16xf32>
    %95 = arith.mulf %93, %94 : vector<16x16xf32>
    %96 = arith.addf %95, %29 : vector<16x16xf32>
    %cst_40 = arith.constant dense<0xFF800000> : vector<16xf32>
    %97 = vector.multi_reduction <maximumf>, %96, %cst_40 [1] : vector<16x16xf32> to vector<16xf32>
    %98 = vector.shape_cast %97 : vector<16xf32> to vector<16x1xf32>
    %99 = vector.broadcast %98 : vector<16x1xf32> to vector<16x16xf32>
    %100 = arith.subf %96, %99 : vector<16x16xf32>
    %101 = math.exp %100 : vector<16x16xf32>
    %cst_41 = arith.constant dense<0.000000e+00> : vector<16xf32>
    %102 = vector.multi_reduction <add>, %101, %cst_41 [1] : vector<16x16xf32> to vector<16xf32>
    %103 = vector.shape_cast %102 : vector<16xf32> to vector<16x1xf32>
    %104 = tpu.reciprocal %103 {approx = true} : vector<16x1xf32> -> vector<16x1xf32>
    %105 = vector.broadcast %104 : vector<16x1xf32> to vector<16x16xf32>
    %106 = arith.mulf %101, %105 : vector<16x16xf32>
    %107 = arith.truncf %106 : vector<16x16xf32> to vector<16x16xbf16>
    %cst_42 = arith.constant dense<0.000000e+00> : vector<16x16xf32>
    %108 = tpu.matmul %107, %92, %cst_42 {dimension_numbers = #tpu.dot_dimension_numbers<[1], [0], [0], [1], [0, 0, 1, 1], [], []>} : vector<16x16xbf16>, vector<16x16xbf16>, vector<16x16xf32> -> vector<16x16xf32>
    %c0_43 = arith.constant 0 : index
    %c32 = arith.constant 32 : index
    %109 = vector.load %arg20[%c0_43, %c32] : memref<16x128xf32, #tpu.memory_space<vmem>>, vector<16x16xf32>
    tpu.vector_store %arg20[%c0_43, %c32], %108 {strides = array<i32>} : memref<16x128xf32, #tpu.memory_space<vmem>>, vector<16x16xf32>,
    %110 = vector.extract_strided_slice %38 {offsets = [0, 48], sizes = [16, 16], strides = [1, 1]} : vector<16x128xf32> to vector<16x16xf32>
    %111 = arith.truncf %110 : vector<16x16xf32> to vector<16x16xbf16>
    %112 = vector.extract_strided_slice %39 {offsets = [0, 48], sizes = [16, 16], strides = [1, 1]} : vector<16x128xf32> to vector<16x16xf32>
    %113 = arith.truncf %112 : vector<16x16xf32> to vector<16x16xbf16>
    %114 = vector.extract_strided_slice %40 {offsets = [0, 48], sizes = [16, 16], strides = [1, 1]} : vector<16x128xf32> to vector<16x16xf32>
    %115 = arith.truncf %114 : vector<16x16xf32> to vector<16x16xbf16>
    %cst_44 = arith.constant dense<0.000000e+00> : vector<16x16xf32>
    %116 = tpu.matmul %111, %113, %cst_44 {dimension_numbers = #tpu.dot_dimension_numbers<[1], [1], [0], [0], [0, 0, 1, 0], [], []>} : vector<16x16xbf16>, vector<16x16xbf16>, vector<16x16xf32> -> vector<16x16xf32>
    %cst_45 = arith.constant 2.500000e-01 : f32
    %117 = vector.broadcast %cst_45 : f32 to vector<16x16xf32>
    %118 = arith.mulf %116, %117 : vector<16x16xf32>
    %119 = arith.addf %118, %29 : vector<16x16xf32>
    %cst_46 = arith.constant dense<0xFF800000> : vector<16xf32>
    %120 = vector.multi_reduction <maximumf>, %119, %cst_46 [1] : vector<16x16xf32> to vector<16xf32>
    %121 = vector.shape_cast %120 : vector<16xf32> to vector<16x1xf32>
    %122 = vector.broadcast %121 : vector<16x1xf32> to vector<16x16xf32>
    %123 = arith.subf %119, %122 : vector<16x16xf32>
    %124 = math.exp %123 : vector<16x16xf32>
    %cst_47 = arith.constant dense<0.000000e+00> : vector<16xf32>
    %125 = vector.multi_reduction <add>, %124, %cst_47 [1] : vector<16x16xf32> to vector<16xf32>
    %126 = vector.shape_cast %125 : vector<16xf32> to vector<16x1xf32>
    %127 = tpu.reciprocal %126 {approx = true} : vector<16x1xf32> -> vector<16x1xf32>
    %128 = vector.broadcast %127 : vector<16x1xf32> to vector<16x16xf32>
    %129 = arith.mulf %124, %128 : vector<16x16xf32>
    %130 = arith.truncf %129 : vector<16x16xf32> to vector<16x16xbf16>
    %cst_48 = arith.constant dense<0.000000e+00> : vector<16x16xf32>
    %131 = tpu.matmul %130, %115, %cst_48 {dimension_numbers = #tpu.dot_dimension_numbers<[1], [0], [0], [1], [0, 0, 1, 1], [], []>} : vector<16x16xbf16>, vector<16x16xbf16>, vector<16x16xf32> -> vector<16x16xf32>
    %c0_49 = arith.constant 0 : index
    %c48 = arith.constant 48 : index
    %132 = vector.load %arg20[%c0_49, %c48] : memref<16x128xf32, #tpu.memory_space<vmem>>, vector<16x16xf32>
    tpu.vector_store %arg20[%c0_49, %c48], %131 {strides = array<i32>} : memref<16x128xf32, #tpu.memory_space<vmem>>, vector<16x16xf32>,
    %133 = vector.extract_strided_slice %38 {offsets = [0, 64], sizes = [16, 16], strides = [1, 1]} : vector<16x128xf32> to vector<16x16xf32>
    %134 = arith.truncf %133 : vector<16x16xf32> to vector<16x16xbf16>
    %135 = vector.extract_strided_slice %39 {offsets = [0, 64], sizes = [16, 16], strides = [1, 1]} : vector<16x128xf32> to vector<16x16xf32>
    %136 = arith.truncf %135 : vector<16x16xf32> to vector<16x16xbf16>
    %137 = vector.extract_strided_slice %40 {offsets = [0, 64], sizes = [16, 16], strides = [1, 1]} : vector<16x128xf32> to vector<16x16xf32>
    %138 = arith.truncf %137 : vector<16x16xf32> to vector<16x16xbf16>
    %cst_50 = arith.constant dense<0.000000e+00> : vector<16x16xf32>
    %139 = tpu.matmul %134, %136, %cst_50 {dimension_numbers = #tpu.dot_dimension_numbers<[1], [1], [0], [0], [0, 0, 1, 0], [], []>} : vector<16x16xbf16>, vector<16x16xbf16>, vector<16x16xf32> -> vector<16x16xf32>
    %cst_51 = arith.constant 2.500000e-01 : f32
    %140 = vector.broadcast %cst_51 : f32 to vector<16x16xf32>
    %141 = arith.mulf %139, %140 : vector<16x16xf32>
    %142 = arith.addf %141, %29 : vector<16x16xf32>
    %cst_52 = arith.constant dense<0xFF800000> : vector<16xf32>
    %143 = vector.multi_reduction <maximumf>, %142, %cst_52 [1] : vector<16x16xf32> to vector<16xf32>
    %144 = vector.shape_cast %143 : vector<16xf32> to vector<16x1xf32>
    %145 = vector.broadcast %144 : vector<16x1xf32> to vector<16x16xf32>
    %146 = arith.subf %142, %145 : vector<16x16xf32>
    %147 = math.exp %146 : vector<16x16xf32>
    %cst_53 = arith.constant dense<0.000000e+00> : vector<16xf32>
    %148 = vector.multi_reduction <add>, %147, %cst_53 [1] : vector<16x16xf32> to vector<16xf32>
    %149 = vector.shape_cast %148 : vector<16xf32> to vector<16x1xf32>
    %150 = tpu.reciprocal %149 {approx = true} : vector<16x1xf32> -> vector<16x1xf32>
    %151 = vector.broadcast %150 : vector<16x1xf32> to vector<16x16xf32>
    %152 = arith.mulf %147, %151 : vector<16x16xf32>
    %153 = arith.truncf %152 : vector<16x16xf32> to vector<16x16xbf16>
    %cst_54 = arith.constant dense<0.000000e+00> : vector<16x16xf32>
    %154 = tpu.matmul %153, %138, %cst_54 {dimension_numbers = #tpu.dot_dimension_numbers<[1], [0], [0], [1], [0, 0, 1, 1], [], []>} : vector<16x16xbf16>, vector<16x16xbf16>, vector<16x16xf32> -> vector<16x16xf32>
    %c0_55 = arith.constant 0 : index
    %c64 = arith.constant 64 : index
    %155 = vector.load %arg20[%c0_55, %c64] : memref<16x128xf32, #tpu.memory_space<vmem>>, vector<16x16xf32>
    tpu.vector_store %arg20[%c0_55, %c64], %154 {strides = array<i32>} : memref<16x128xf32, #tpu.memory_space<vmem>>, vector<16x16xf32>,
    %156 = vector.extract_strided_slice %38 {offsets = [0, 80], sizes = [16, 16], strides = [1, 1]} : vector<16x128xf32> to vector<16x16xf32>
    %157 = arith.truncf %156 : vector<16x16xf32> to vector<16x16xbf16>
    %158 = vector.extract_strided_slice %39 {offsets = [0, 80], sizes = [16, 16], strides = [1, 1]} : vector<16x128xf32> to vector<16x16xf32>
    %159 = arith.truncf %158 : vector<16x16xf32> to vector<16x16xbf16>
    %160 = vector.extract_strided_slice %40 {offsets = [0, 80], sizes = [16, 16], strides = [1, 1]} : vector<16x128xf32> to vector<16x16xf32>
    %161 = arith.truncf %160 : vector<16x16xf32> to vector<16x16xbf16>
    %cst_56 = arith.constant dense<0.000000e+00> : vector<16x16xf32>
    %162 = tpu.matmul %157, %159, %cst_56 {dimension_numbers = #tpu.dot_dimension_numbers<[1], [1], [0], [0], [0, 0, 1, 0], [], []>} : vector<16x16xbf16>, vector<16x16xbf16>, vector<16x16xf32> -> vector<16x16xf32>
    %cst_57 = arith.constant 2.500000e-01 : f32
    %163 = vector.broadcast %cst_57 : f32 to vector<16x16xf32>
    %164 = arith.mulf %162, %163 : vector<16x16xf32>
    %165 = arith.addf %164, %29 : vector<16x16xf32>
    %cst_58 = arith.constant dense<0xFF800000> : vector<16xf32>
    %166 = vector.multi_reduction <maximumf>, %165, %cst_58 [1] : vector<16x16xf32> to vector<16xf32>
    %167 = vector.shape_cast %166 : vector<16xf32> to vector<16x1xf32>
    %168 = vector.broadcast %167 : vector<16x1xf32> to vector<16x16xf32>
    %169 = arith.subf %165, %168 : vector<16x16xf32>
    %170 = math.exp %169 : vector<16x16xf32>
    %cst_59 = arith.constant dense<0.000000e+00> : vector<16xf32>
    %171 = vector.multi_reduction <add>, %170, %cst_59 [1] : vector<16x16xf32> to vector<16xf32>
    %172 = vector.shape_cast %171 : vector<16xf32> to vector<16x1xf32>
    %173 = tpu.reciprocal %172 {approx = true} : vector<16x1xf32> -> vector<16x1xf32>
    %174 = vector.broadcast %173 : vector<16x1xf32> to vector<16x16xf32>
    %175 = arith.mulf %170, %174 : vector<16x16xf32>
    %176 = arith.truncf %175 : vector<16x16xf32> to vector<16x16xbf16>
    %cst_60 = arith.constant dense<0.000000e+00> : vector<16x16xf32>
    %177 = tpu.matmul %176, %161, %cst_60 {dimension_numbers = #tpu.dot_dimension_numbers<[1], [0], [0], [1], [0, 0, 1, 1], [], []>} : vector<16x16xbf16>, vector<16x16xbf16>, vector<16x16xf32> -> vector<16x16xf32>
    %c0_61 = arith.constant 0 : index
    %c80 = arith.constant 80 : index
    %178 = vector.load %arg20[%c0_61, %c80] : memref<16x128xf32, #tpu.memory_space<vmem>>, vector<16x16xf32>
    tpu.vector_store %arg20[%c0_61, %c80], %177 {strides = array<i32>} : memref<16x128xf32, #tpu.memory_space<vmem>>, vector<16x16xf32>,
    %179 = vector.extract_strided_slice %38 {offsets = [0, 96], sizes = [16, 16], strides = [1, 1]} : vector<16x128xf32> to vector<16x16xf32>
    %180 = arith.truncf %179 : vector<16x16xf32> to vector<16x16xbf16>
    %181 = vector.extract_strided_slice %39 {offsets = [0, 96], sizes = [16, 16], strides = [1, 1]} : vector<16x128xf32> to vector<16x16xf32>
    %182 = arith.truncf %181 : vector<16x16xf32> to vector<16x16xbf16>
    %183 = vector.extract_strided_slice %40 {offsets = [0, 96], sizes = [16, 16], strides = [1, 1]} : vector<16x128xf32> to vector<16x16xf32>
    %184 = arith.truncf %183 : vector<16x16xf32> to vector<16x16xbf16>
    %cst_62 = arith.constant dense<0.000000e+00> : vector<16x16xf32>
    %185 = tpu.matmul %180, %182, %cst_62 {dimension_numbers = #tpu.dot_dimension_numbers<[1], [1], [0], [0], [0, 0, 1, 0], [], []>} : vector<16x16xbf16>, vector<16x16xbf16>, vector<16x16xf32> -> vector<16x16xf32>
    %cst_63 = arith.constant 2.500000e-01 : f32
    %186 = vector.broadcast %cst_63 : f32 to vector<16x16xf32>
    %187 = arith.mulf %185, %186 : vector<16x16xf32>
    %188 = arith.addf %187, %29 : vector<16x16xf32>
    %cst_64 = arith.constant dense<0xFF800000> : vector<16xf32>
    %189 = vector.multi_reduction <maximumf>, %188, %cst_64 [1] : vector<16x16xf32> to vector<16xf32>
    %190 = vector.shape_cast %189 : vector<16xf32> to vector<16x1xf32>
    %191 = vector.broadcast %190 : vector<16x1xf32> to vector<16x16xf32>
    %192 = arith.subf %188, %191 : vector<16x16xf32>
    %193 = math.exp %192 : vector<16x16xf32>
    %cst_65 = arith.constant dense<0.000000e+00> : vector<16xf32>
    %194 = vector.multi_reduction <add>, %193, %cst_65 [1] : vector<16x16xf32> to vector<16xf32>
    %195 = vector.shape_cast %194 : vector<16xf32> to vector<16x1xf32>
    %196 = tpu.reciprocal %195 {approx = true} : vector<16x1xf32> -> vector<16x1xf32>
    %197 = vector.broadcast %196 : vector<16x1xf32> to vector<16x16xf32>
    %198 = arith.mulf %193, %197 : vector<16x16xf32>
    %199 = arith.truncf %198 : vector<16x16xf32> to vector<16x16xbf16>
    %cst_66 = arith.constant dense<0.000000e+00> : vector<16x16xf32>
    %200 = tpu.matmul %199, %184, %cst_66 {dimension_numbers = #tpu.dot_dimension_numbers<[1], [0], [0], [1], [0, 0, 1, 1], [], []>} : vector<16x16xbf16>, vector<16x16xbf16>, vector<16x16xf32> -> vector<16x16xf32>
    %c0_67 = arith.constant 0 : index
    %c96 = arith.constant 96 : index
    %201 = vector.load %arg20[%c0_67, %c96] : memref<16x128xf32, #tpu.memory_space<vmem>>, vector<16x16xf32>
    tpu.vector_store %arg20[%c0_67, %c96], %200 {strides = array<i32>} : memref<16x128xf32, #tpu.memory_space<vmem>>, vector<16x16xf32>,
    %202 = vector.extract_strided_slice %38 {offsets = [0, 112], sizes = [16, 16], strides = [1, 1]} : vector<16x128xf32> to vector<16x16xf32>
    %203 = arith.truncf %202 : vector<16x16xf32> to vector<16x16xbf16>
    %204 = vector.extract_strided_slice %39 {offsets = [0, 112], sizes = [16, 16], strides = [1, 1]} : vector<16x128xf32> to vector<16x16xf32>
    %205 = arith.truncf %204 : vector<16x16xf32> to vector<16x16xbf16>
    %206 = vector.extract_strided_slice %40 {offsets = [0, 112], sizes = [16, 16], strides = [1, 1]} : vector<16x128xf32> to vector<16x16xf32>
    %207 = arith.truncf %206 : vector<16x16xf32> to vector<16x16xbf16>
    %cst_68 = arith.constant dense<0.000000e+00> : vector<16x16xf32>
    %208 = tpu.matmul %203, %205, %cst_68 {dimension_numbers = #tpu.dot_dimension_numbers<[1], [1], [0], [0], [0, 0, 1, 0], [], []>} : vector<16x16xbf16>, vector<16x16xbf16>, vector<16x16xf32> -> vector<16x16xf32>
    %cst_69 = arith.constant 2.500000e-01 : f32
    %209 = vector.broadcast %cst_69 : f32 to vector<16x16xf32>
    %210 = arith.mulf %208, %209 : vector<16x16xf32>
    %211 = arith.addf %210, %29 : vector<16x16xf32>
    %cst_70 = arith.constant dense<0xFF800000> : vector<16xf32>
    %212 = vector.multi_reduction <maximumf>, %211, %cst_70 [1] : vector<16x16xf32> to vector<16xf32>
    %213 = vector.shape_cast %212 : vector<16xf32> to vector<16x1xf32>
    %214 = vector.broadcast %213 : vector<16x1xf32> to vector<16x16xf32>
    %215 = arith.subf %211, %214 : vector<16x16xf32>
    %216 = math.exp %215 : vector<16x16xf32>
    %cst_71 = arith.constant dense<0.000000e+00> : vector<16xf32>
    %217 = vector.multi_reduction <add>, %216, %cst_71 [1] : vector<16x16xf32> to vector<16xf32>
    %218 = vector.shape_cast %217 : vector<16xf32> to vector<16x1xf32>
    %219 = tpu.reciprocal %218 {approx = true} : vector<16x1xf32> -> vector<16x1xf32>
    %220 = vector.broadcast %219 : vector<16x1xf32> to vector<16x16xf32>
    %221 = arith.mulf %216, %220 : vector<16x16xf32>
    %222 = arith.truncf %221 : vector<16x16xf32> to vector<16x16xbf16>
    %cst_72 = arith.constant dense<0.000000e+00> : vector<16x16xf32>
    %223 = tpu.matmul %222, %207, %cst_72 {dimension_numbers = #tpu.dot_dimension_numbers<[1], [0], [0], [1], [0, 0, 1, 1], [], []>} : vector<16x16xbf16>, vector<16x16xbf16>, vector<16x16xf32> -> vector<16x16xf32>
    %c0_73 = arith.constant 0 : index
    %c112 = arith.constant 112 : index
    %224 = vector.load %arg20[%c0_73, %c112] : memref<16x128xf32, #tpu.memory_space<vmem>>, vector<16x16xf32>
    tpu.vector_store %arg20[%c0_73, %c112], %223 {strides = array<i32>} : memref<16x128xf32, #tpu.memory_space<vmem>>, vector<16x16xf32>,
    %c0_74 = arith.constant 0 : index
    %c0_75 = arith.constant 0 : index
    %225 = vector.load %arg20[%c0_74, %c0_75] : memref<16x128xf32, #tpu.memory_space<vmem>>, vector<16x128xf32>
    %226 = arith.truncf %225 : vector<16x128xf32> to vector<16x128xbf16>
    %c0_76 = arith.constant 0 : index
    %c0_77 = arith.constant 0 : index
    %c0_78 = arith.constant 0 : index
    %227 = vector.load %arg7[%c0_76, %c0_77, %c0_78] : memref<2x128x128xbf16, #tpu.memory_space<vmem>>, vector<1x128x128xbf16>
    %228 = vector.shape_cast %227 : vector<1x128x128xbf16> to vector<128x128xbf16>
    %cst_79 = arith.constant dense<0.000000e+00> : vector<16x128xf32>
    %229 = tpu.matmul %226, %228, %cst_79 {dimension_numbers = #tpu.dot_dimension_numbers<[1], [0], [0], [1], [0, 0, 1, 1], [], []>} : vector<16x128xbf16>, vector<128x128xbf16>, vector<16x128xf32> -> vector<16x128xf32>
    %c0_80 = arith.constant 0 : index
    %c0_81 = arith.constant 0 : index
    %c0_82 = arith.constant 0 : index
    %230 = vector.load %arg8[%c0_80, %c0_81, %c0_82] : memref<2x1x128xf32, #tpu.memory_space<vmem>>, vector<1x1x128xf32>
    %231 = vector.shape_cast %230 : vector<1x1x128xf32> to vector<1x128xf32>
    %232 = vector.broadcast %231 : vector<1x128xf32> to vector<16x128xf32>
    %233 = arith.addf %229, %232 : vector<16x128xf32>
    %234 = arith.addf %28, %233 : vector<16x128xf32>
    %c0_83 = arith.constant 0 : index
    %c0_84 = arith.constant 0 : index
    %c0_85 = arith.constant 0 : index
    %235 = vector.load %arg9[%c0_83, %c0_84, %c0_85] : memref<2x1x128xf32, #tpu.memory_space<vmem>>, vector<1x1x128xf32>
    %236 = vector.shape_cast %235 : vector<1x1x128xf32> to vector<1x128xf32>
    %c0_86 = arith.constant 0 : index
    %c0_87 = arith.constant 0 : index
    %c0_88 = arith.constant 0 : index
    %237 = vector.load %arg10[%c0_86, %c0_87, %c0_88] : memref<2x1x128xf32, #tpu.memory_space<vmem>>, vector<1x1x128xf32>
    %238 = vector.shape_cast %237 : vector<1x1x128xf32> to vector<1x128xf32>
    %cst_89 = arith.constant dense<0.000000e+00> : vector<16xf32>
    %239 = vector.multi_reduction <add>, %234, %cst_89 [1] : vector<16x128xf32> to vector<16xf32>
    %240 = vector.shape_cast %239 : vector<16xf32> to vector<16x1xf32>
    %cst_90 = arith.constant 1.280000e+02 : f32
    %241 = vector.broadcast %cst_90 : f32 to vector<16x1xf32>
    %242 = arith.divf %240, %241 : vector<16x1xf32>
    %243 = vector.broadcast %242 : vector<16x1xf32> to vector<16x128xf32>
    %244 = arith.subf %234, %243 : vector<16x128xf32>
    %245 = arith.mulf %244, %244 : vector<16x128xf32>
    %cst_91 = arith.constant dense<0.000000e+00> : vector<16xf32>
    %246 = vector.multi_reduction <add>, %245, %cst_91 [1] : vector<16x128xf32> to vector<16xf32>
    %247 = vector.shape_cast %246 : vector<16xf32> to vector<16x1xf32>
    %cst_92 = arith.constant 1.280000e+02 : f32
    %248 = vector.broadcast %cst_92 : f32 to vector<16x1xf32>
    %249 = arith.divf %247, %248 : vector<16x1xf32>
    %250 = vector.broadcast %242 : vector<16x1xf32> to vector<16x128xf32>
    %251 = arith.subf %234, %250 : vector<16x128xf32>
    %cst_93 = arith.constant 9.99999974E-6 : f32
    %252 = vector.broadcast %cst_93 : f32 to vector<16x1xf32>
    %253 = arith.addf %249, %252 : vector<16x1xf32>
    %254 = math.rsqrt %253 : vector<16x1xf32>
    %255 = vector.broadcast %254 : vector<16x1xf32> to vector<16x128xf32>
    %256 = arith.mulf %251, %255 : vector<16x128xf32>
    %257 = vector.broadcast %236 : vector<1x128xf32> to vector<16x128xf32>
    %258 = arith.mulf %256, %257 : vector<16x128xf32>
    %259 = vector.broadcast %238 : vector<1x128xf32> to vector<16x128xf32>
    %260 = arith.addf %258, %259 : vector<16x128xf32>
    %261 = arith.truncf %260 : vector<16x128xf32> to vector<16x128xbf16>
    %c0_94 = arith.constant 0 : index
    %c0_95 = arith.constant 0 : index
    %c0_96 = arith.constant 0 : index
    %262 = vector.load %arg11[%c0_94, %c0_95, %c0_96] : memref<2x128x1024xbf16, #tpu.memory_space<vmem>>, vector<1x128x1024xbf16>
    %263 = vector.shape_cast %262 : vector<1x128x1024xbf16> to vector<128x1024xbf16>
    %cst_97 = arith.constant dense<0.000000e+00> : vector<16x1024xf32>
    %264 = tpu.matmul %261, %263, %cst_97 {dimension_numbers = #tpu.dot_dimension_numbers<[1], [0], [0], [1], [0, 0, 1, 1], [], []>} : vector<16x128xbf16>, vector<128x1024xbf16>, vector<16x1024xf32> -> vector<16x1024xf32>
    %c0_98 = arith.constant 0 : index
    %c0_99 = arith.constant 0 : index
    %c0_100 = arith.constant 0 : index
    %265 = vector.load %arg12[%c0_98, %c0_99, %c0_100] : memref<2x1x1024xf32, #tpu.memory_space<vmem>>, vector<1x1x1024xf32>
    %266 = vector.shape_cast %265 : vector<1x1x1024xf32> to vector<1x1024xf32>
    %267 = vector.broadcast %266 : vector<1x1024xf32> to vector<16x1024xf32>
    %268 = arith.addf %264, %267 : vector<16x1024xf32>
    %cst_101 = arith.constant 0.000000e+00 : f32
    %269 = vector.broadcast %cst_101 : f32 to vector<16x1024xf32>
    %270 = arith.maximumf %268, %269 : vector<16x1024xf32>
    %271 = arith.truncf %270 : vector<16x1024xf32> to vector<16x1024xbf16>
    %c0_102 = arith.constant 0 : index
    %c0_103 = arith.constant 0 : index
    %c0_104 = arith.constant 0 : index
    %272 = vector.load %arg13[%c0_102, %c0_103, %c0_104] : memref<2x1024x128xbf16, #tpu.memory_space<vmem>>, vector<1x1024x128xbf16>
    %273 = vector.shape_cast %272 : vector<1x1024x128xbf16> to vector<1024x128xbf16>
    %cst_105 = arith.constant dense<0.000000e+00> : vector<16x128xf32>
    %274 = tpu.matmul %271, %273, %cst_105 {dimension_numbers = #tpu.dot_dimension_numbers<[1], [0], [0], [1], [0, 0, 1, 1], [], []>} : vector<16x1024xbf16>, vector<1024x128xbf16>, vector<16x128xf32> -> vector<16x128xf32>
    %c0_106 = arith.constant 0 : index
    %c0_107 = arith.constant 0 : index
    %c0_108 = arith.constant 0 : index
    %275 = vector.load %arg14[%c0_106, %c0_107, %c0_108] : memref<2x1x128xf32, #tpu.memory_space<vmem>>, vector<1x1x128xf32>
    %276 = vector.shape_cast %275 : vector<1x1x128xf32> to vector<1x128xf32>
    %277 = vector.broadcast %276 : vector<1x128xf32> to vector<16x128xf32>
    %278 = arith.addf %274, %277 : vector<16x128xf32>
    %279 = arith.addf %260, %278 : vector<16x128xf32>
    %c0_109 = arith.constant 0 : index
    %c0_110 = arith.constant 0 : index
    %c0_111 = arith.constant 0 : index
    %280 = vector.load %arg15[%c0_109, %c0_110, %c0_111] : memref<2x1x128xf32, #tpu.memory_space<vmem>>, vector<1x1x128xf32>
    %281 = vector.shape_cast %280 : vector<1x1x128xf32> to vector<1x128xf32>
    %c0_112 = arith.constant 0 : index
    %c0_113 = arith.constant 0 : index
    %c0_114 = arith.constant 0 : index
    %282 = vector.load %arg16[%c0_112, %c0_113, %c0_114] : memref<2x1x128xf32, #tpu.memory_space<vmem>>, vector<1x1x128xf32>
    %283 = vector.shape_cast %282 : vector<1x1x128xf32> to vector<1x128xf32>
    %cst_115 = arith.constant dense<0.000000e+00> : vector<16xf32>
    %284 = vector.multi_reduction <add>, %279, %cst_115 [1] : vector<16x128xf32> to vector<16xf32>
    %285 = vector.shape_cast %284 : vector<16xf32> to vector<16x1xf32>
    %cst_116 = arith.constant 1.280000e+02 : f32
    %286 = vector.broadcast %cst_116 : f32 to vector<16x1xf32>
    %287 = arith.divf %285, %286 : vector<16x1xf32>
    %288 = vector.broadcast %287 : vector<16x1xf32> to vector<16x128xf32>
    %289 = arith.subf %279, %288 : vector<16x128xf32>
    %290 = arith.mulf %289, %289 : vector<16x128xf32>
    %cst_117 = arith.constant dense<0.000000e+00> : vector<16xf32>
    %291 = vector.multi_reduction <add>, %290, %cst_117 [1] : vector<16x128xf32> to vector<16xf32>
    %292 = vector.shape_cast %291 : vector<16xf32> to vector<16x1xf32>
    %cst_118 = arith.constant 1.280000e+02 : f32
    %293 = vector.broadcast %cst_118 : f32 to vector<16x1xf32>
    %294 = arith.divf %292, %293 : vector<16x1xf32>
    %295 = vector.broadcast %287 : vector<16x1xf32> to vector<16x128xf32>
    %296 = arith.subf %279, %295 : vector<16x128xf32>
    %cst_119 = arith.constant 9.99999974E-6 : f32
    %297 = vector.broadcast %cst_119 : f32 to vector<16x1xf32>
    %298 = arith.addf %294, %297 : vector<16x1xf32>
    %299 = math.rsqrt %298 : vector<16x1xf32>
    %300 = vector.broadcast %299 : vector<16x1xf32> to vector<16x128xf32>
    %301 = arith.mulf %296, %300 : vector<16x128xf32>
    %302 = vector.broadcast %281 : vector<1x128xf32> to vector<16x128xf32>
    %303 = arith.mulf %301, %302 : vector<16x128xf32>
    %304 = vector.broadcast %283 : vector<1x128xf32> to vector<16x128xf32>
    %305 = arith.addf %303, %304 : vector<16x128xf32>
    %306 = arith.truncf %305 : vector<16x128xf32> to vector<16x128xbf16>
    %c1_120 = arith.constant 1 : index
    %c0_121 = arith.constant 0 : index
    %c0_122 = arith.constant 0 : index
    %307 = vector.load %arg5[%c1_120, %c0_121, %c0_122] : memref<2x128x384xbf16, #tpu.memory_space<vmem>>, vector<1x128x384xbf16>
    %308 = vector.shape_cast %307 : vector<1x128x384xbf16> to vector<128x384xbf16>
    %cst_123 = arith.constant dense<0.000000e+00> : vector<16x384xf32>
    %309 = tpu.matmul %306, %308, %cst_123 {dimension_numbers = #tpu.dot_dimension_numbers<[1], [0], [0], [1], [0, 0, 1, 1], [], []>} : vector<16x128xbf16>, vector<128x384xbf16>, vector<16x384xf32> -> vector<16x384xf32>
    %c1_124 = arith.constant 1 : index
    %c0_125 = arith.constant 0 : index
    %c0_126 = arith.constant 0 : index
    %310 = vector.load %arg6[%c1_124, %c0_125, %c0_126] : memref<2x1x384xf32, #tpu.memory_space<vmem>>, vector<1x1x384xf32>
    %311 = vector.shape_cast %310 : vector<1x1x384xf32> to vector<1x384xf32>
    %312 = vector.broadcast %311 : vector<1x384xf32> to vector<16x384xf32>
    %313 = arith.addf %309, %312 : vector<16x384xf32>
    %314 = vector.extract_strided_slice %313 {offsets = [0, 0], sizes = [16, 128], strides = [1, 1]} : vector<16x384xf32> to vector<16x128xf32>
    %315 = vector.extract_strided_slice %313 {offsets = [0, 128], sizes = [16, 128], strides = [1, 1]} : vector<16x384xf32> to vector<16x128xf32>
    %316 = vector.extract_strided_slice %313 {offsets = [0, 256], sizes = [16, 128], strides = [1, 1]} : vector<16x384xf32> to vector<16x128xf32>
    %317 = vector.extract_strided_slice %314 {offsets = [0, 0], sizes = [16, 16], strides = [1, 1]} : vector<16x128xf32> to vector<16x16xf32>
    %318 = arith.truncf %317 : vector<16x16xf32> to vector<16x16xbf16>
    %319 = vector.extract_strided_slice %315 {offsets = [0, 0], sizes = [16, 16], strides = [1, 1]} : vector<16x128xf32> to vector<16x16xf32>
    %320 = arith.truncf %319 : vector<16x16xf32> to vector<16x16xbf16>
    %321 = vector.extract_strided_slice %316 {offsets = [0, 0], sizes = [16, 16], strides = [1, 1]} : vector<16x128xf32> to vector<16x16xf32>
    %322 = arith.truncf %321 : vector<16x16xf32> to vector<16x16xbf16>
    %cst_127 = arith.constant dense<0.000000e+00> : vector<16x16xf32>
    %323 = tpu.matmul %318, %320, %cst_127 {dimension_numbers = #tpu.dot_dimension_numbers<[1], [1], [0], [0], [0, 0, 1, 0], [], []>} : vector<16x16xbf16>, vector<16x16xbf16>, vector<16x16xf32> -> vector<16x16xf32>
    %cst_128 = arith.constant 2.500000e-01 : f32
    %324 = vector.broadcast %cst_128 : f32 to vector<16x16xf32>
    %325 = arith.mulf %323, %324 : vector<16x16xf32>
    %326 = arith.addf %325, %29 : vector<16x16xf32>
    %cst_129 = arith.constant dense<0xFF800000> : vector<16xf32>
    %327 = vector.multi_reduction <maximumf>, %326, %cst_129 [1] : vector<16x16xf32> to vector<16xf32>
    %328 = vector.shape_cast %327 : vector<16xf32> to vector<16x1xf32>
    %329 = vector.broadcast %328 : vector<16x1xf32> to vector<16x16xf32>
    %330 = arith.subf %326, %329 : vector<16x16xf32>
    %331 = math.exp %330 : vector<16x16xf32>
    %cst_130 = arith.constant dense<0.000000e+00> : vector<16xf32>
    %332 = vector.multi_reduction <add>, %331, %cst_130 [1] : vector<16x16xf32> to vector<16xf32>
    %333 = vector.shape_cast %332 : vector<16xf32> to vector<16x1xf32>
    %334 = tpu.reciprocal %333 {approx = true} : vector<16x1xf32> -> vector<16x1xf32>
    %335 = vector.broadcast %334 : vector<16x1xf32> to vector<16x16xf32>
    %336 = arith.mulf %331, %335 : vector<16x16xf32>
    %337 = arith.truncf %336 : vector<16x16xf32> to vector<16x16xbf16>
    %cst_131 = arith.constant dense<0.000000e+00> : vector<16x16xf32>
    %338 = tpu.matmul %337, %322, %cst_131 {dimension_numbers = #tpu.dot_dimension_numbers<[1], [0], [0], [1], [0, 0, 1, 1], [], []>} : vector<16x16xbf16>, vector<16x16xbf16>, vector<16x16xf32> -> vector<16x16xf32>
    %c0_132 = arith.constant 0 : index
    %c0_133 = arith.constant 0 : index
    %339 = vector.load %arg20[%c0_132, %c0_133] : memref<16x128xf32, #tpu.memory_space<vmem>>, vector<16x16xf32>
    tpu.vector_store %arg20[%c0_132, %c0_133], %338 {strides = array<i32>} : memref<16x128xf32, #tpu.memory_space<vmem>>, vector<16x16xf32>,
    %340 = vector.extract_strided_slice %314 {offsets = [0, 16], sizes = [16, 16], strides = [1, 1]} : vector<16x128xf32> to vector<16x16xf32>
    %341 = arith.truncf %340 : vector<16x16xf32> to vector<16x16xbf16>
    %342 = vector.extract_strided_slice %315 {offsets = [0, 16], sizes = [16, 16], strides = [1, 1]} : vector<16x128xf32> to vector<16x16xf32>
    %343 = arith.truncf %342 : vector<16x16xf32> to vector<16x16xbf16>
    %344 = vector.extract_strided_slice %316 {offsets = [0, 16], sizes = [16, 16], strides = [1, 1]} : vector<16x128xf32> to vector<16x16xf32>
    %345 = arith.truncf %344 : vector<16x16xf32> to vector<16x16xbf16>
    %cst_134 = arith.constant dense<0.000000e+00> : vector<16x16xf32>
    %346 = tpu.matmul %341, %343, %cst_134 {dimension_numbers = #tpu.dot_dimension_numbers<[1], [1], [0], [0], [0, 0, 1, 0], [], []>} : vector<16x16xbf16>, vector<16x16xbf16>, vector<16x16xf32> -> vector<16x16xf32>
    %cst_135 = arith.constant 2.500000e-01 : f32
    %347 = vector.broadcast %cst_135 : f32 to vector<16x16xf32>
    %348 = arith.mulf %346, %347 : vector<16x16xf32>
    %349 = arith.addf %348, %29 : vector<16x16xf32>
    %cst_136 = arith.constant dense<0xFF800000> : vector<16xf32>
    %350 = vector.multi_reduction <maximumf>, %349, %cst_136 [1] : vector<16x16xf32> to vector<16xf32>
    %351 = vector.shape_cast %350 : vector<16xf32> to vector<16x1xf32>
    %352 = vector.broadcast %351 : vector<16x1xf32> to vector<16x16xf32>
    %353 = arith.subf %349, %352 : vector<16x16xf32>
    %354 = math.exp %353 : vector<16x16xf32>
    %cst_137 = arith.constant dense<0.000000e+00> : vector<16xf32>
    %355 = vector.multi_reduction <add>, %354, %cst_137 [1] : vector<16x16xf32> to vector<16xf32>
    %356 = vector.shape_cast %355 : vector<16xf32> to vector<16x1xf32>
    %357 = tpu.reciprocal %356 {approx = true} : vector<16x1xf32> -> vector<16x1xf32>
    %358 = vector.broadcast %357 : vector<16x1xf32> to vector<16x16xf32>
    %359 = arith.mulf %354, %358 : vector<16x16xf32>
    %360 = arith.truncf %359 : vector<16x16xf32> to vector<16x16xbf16>
    %cst_138 = arith.constant dense<0.000000e+00> : vector<16x16xf32>
    %361 = tpu.matmul %360, %345, %cst_138 {dimension_numbers = #tpu.dot_dimension_numbers<[1], [0], [0], [1], [0, 0, 1, 1], [], []>} : vector<16x16xbf16>, vector<16x16xbf16>, vector<16x16xf32> -> vector<16x16xf32>
    %c0_139 = arith.constant 0 : index
    %c16_140 = arith.constant 16 : index
    %362 = vector.load %arg20[%c0_139, %c16_140] : memref<16x128xf32, #tpu.memory_space<vmem>>, vector<16x16xf32>
    tpu.vector_store %arg20[%c0_139, %c16_140], %361 {strides = array<i32>} : memref<16x128xf32, #tpu.memory_space<vmem>>, vector<16x16xf32>,
    %363 = vector.extract_strided_slice %314 {offsets = [0, 32], sizes = [16, 16], strides = [1, 1]} : vector<16x128xf32> to vector<16x16xf32>
    %364 = arith.truncf %363 : vector<16x16xf32> to vector<16x16xbf16>
    %365 = vector.extract_strided_slice %315 {offsets = [0, 32], sizes = [16, 16], strides = [1, 1]} : vector<16x128xf32> to vector<16x16xf32>
    %366 = arith.truncf %365 : vector<16x16xf32> to vector<16x16xbf16>
    %367 = vector.extract_strided_slice %316 {offsets = [0, 32], sizes = [16, 16], strides = [1, 1]} : vector<16x128xf32> to vector<16x16xf32>
    %368 = arith.truncf %367 : vector<16x16xf32> to vector<16x16xbf16>
    %cst_141 = arith.constant dense<0.000000e+00> : vector<16x16xf32>
    %369 = tpu.matmul %364, %366, %cst_141 {dimension_numbers = #tpu.dot_dimension_numbers<[1], [1], [0], [0], [0, 0, 1, 0], [], []>} : vector<16x16xbf16>, vector<16x16xbf16>, vector<16x16xf32> -> vector<16x16xf32>
    %cst_142 = arith.constant 2.500000e-01 : f32
    %370 = vector.broadcast %cst_142 : f32 to vector<16x16xf32>
    %371 = arith.mulf %369, %370 : vector<16x16xf32>
    %372 = arith.addf %371, %29 : vector<16x16xf32>
    %cst_143 = arith.constant dense<0xFF800000> : vector<16xf32>
    %373 = vector.multi_reduction <maximumf>, %372, %cst_143 [1] : vector<16x16xf32> to vector<16xf32>
    %374 = vector.shape_cast %373 : vector<16xf32> to vector<16x1xf32>
    %375 = vector.broadcast %374 : vector<16x1xf32> to vector<16x16xf32>
    %376 = arith.subf %372, %375 : vector<16x16xf32>
    %377 = math.exp %376 : vector<16x16xf32>
    %cst_144 = arith.constant dense<0.000000e+00> : vector<16xf32>
    %378 = vector.multi_reduction <add>, %377, %cst_144 [1] : vector<16x16xf32> to vector<16xf32>
    %379 = vector.shape_cast %378 : vector<16xf32> to vector<16x1xf32>
    %380 = tpu.reciprocal %379 {approx = true} : vector<16x1xf32> -> vector<16x1xf32>
    %381 = vector.broadcast %380 : vector<16x1xf32> to vector<16x16xf32>
    %382 = arith.mulf %377, %381 : vector<16x16xf32>
    %383 = arith.truncf %382 : vector<16x16xf32> to vector<16x16xbf16>
    %cst_145 = arith.constant dense<0.000000e+00> : vector<16x16xf32>
    %384 = tpu.matmul %383, %368, %cst_145 {dimension_numbers = #tpu.dot_dimension_numbers<[1], [0], [0], [1], [0, 0, 1, 1], [], []>} : vector<16x16xbf16>, vector<16x16xbf16>, vector<16x16xf32> -> vector<16x16xf32>
    %c0_146 = arith.constant 0 : index
    %c32_147 = arith.constant 32 : index
    %385 = vector.load %arg20[%c0_146, %c32_147] : memref<16x128xf32, #tpu.memory_space<vmem>>, vector<16x16xf32>
    tpu.vector_store %arg20[%c0_146, %c32_147], %384 {strides = array<i32>} : memref<16x128xf32, #tpu.memory_space<vmem>>, vector<16x16xf32>,
    %386 = vector.extract_strided_slice %314 {offsets = [0, 48], sizes = [16, 16], strides = [1, 1]} : vector<16x128xf32> to vector<16x16xf32>
    %387 = arith.truncf %386 : vector<16x16xf32> to vector<16x16xbf16>
    %388 = vector.extract_strided_slice %315 {offsets = [0, 48], sizes = [16, 16], strides = [1, 1]} : vector<16x128xf32> to vector<16x16xf32>
    %389 = arith.truncf %388 : vector<16x16xf32> to vector<16x16xbf16>
    %390 = vector.extract_strided_slice %316 {offsets = [0, 48], sizes = [16, 16], strides = [1, 1]} : vector<16x128xf32> to vector<16x16xf32>
    %391 = arith.truncf %390 : vector<16x16xf32> to vector<16x16xbf16>
    %cst_148 = arith.constant dense<0.000000e+00> : vector<16x16xf32>
    %392 = tpu.matmul %387, %389, %cst_148 {dimension_numbers = #tpu.dot_dimension_numbers<[1], [1], [0], [0], [0, 0, 1, 0], [], []>} : vector<16x16xbf16>, vector<16x16xbf16>, vector<16x16xf32> -> vector<16x16xf32>
    %cst_149 = arith.constant 2.500000e-01 : f32
    %393 = vector.broadcast %cst_149 : f32 to vector<16x16xf32>
    %394 = arith.mulf %392, %393 : vector<16x16xf32>
    %395 = arith.addf %394, %29 : vector<16x16xf32>
    %cst_150 = arith.constant dense<0xFF800000> : vector<16xf32>
    %396 = vector.multi_reduction <maximumf>, %395, %cst_150 [1] : vector<16x16xf32> to vector<16xf32>
    %397 = vector.shape_cast %396 : vector<16xf32> to vector<16x1xf32>
    %398 = vector.broadcast %397 : vector<16x1xf32> to vector<16x16xf32>
    %399 = arith.subf %395, %398 : vector<16x16xf32>
    %400 = math.exp %399 : vector<16x16xf32>
    %cst_151 = arith.constant dense<0.000000e+00> : vector<16xf32>
    %401 = vector.multi_reduction <add>, %400, %cst_151 [1] : vector<16x16xf32> to vector<16xf32>
    %402 = vector.shape_cast %401 : vector<16xf32> to vector<16x1xf32>
    %403 = tpu.reciprocal %402 {approx = true} : vector<16x1xf32> -> vector<16x1xf32>
    %404 = vector.broadcast %403 : vector<16x1xf32> to vector<16x16xf32>
    %405 = arith.mulf %400, %404 : vector<16x16xf32>
    %406 = arith.truncf %405 : vector<16x16xf32> to vector<16x16xbf16>
    %cst_152 = arith.constant dense<0.000000e+00> : vector<16x16xf32>
    %407 = tpu.matmul %406, %391, %cst_152 {dimension_numbers = #tpu.dot_dimension_numbers<[1], [0], [0], [1], [0, 0, 1, 1], [], []>} : vector<16x16xbf16>, vector<16x16xbf16>, vector<16x16xf32> -> vector<16x16xf32>
    %c0_153 = arith.constant 0 : index
    %c48_154 = arith.constant 48 : index
    %408 = vector.load %arg20[%c0_153, %c48_154] : memref<16x128xf32, #tpu.memory_space<vmem>>, vector<16x16xf32>
    tpu.vector_store %arg20[%c0_153, %c48_154], %407 {strides = array<i32>} : memref<16x128xf32, #tpu.memory_space<vmem>>, vector<16x16xf32>,
    %409 = vector.extract_strided_slice %314 {offsets = [0, 64], sizes = [16, 16], strides = [1, 1]} : vector<16x128xf32> to vector<16x16xf32>
    %410 = arith.truncf %409 : vector<16x16xf32> to vector<16x16xbf16>
    %411 = vector.extract_strided_slice %315 {offsets = [0, 64], sizes = [16, 16], strides = [1, 1]} : vector<16x128xf32> to vector<16x16xf32>
    %412 = arith.truncf %411 : vector<16x16xf32> to vector<16x16xbf16>
    %413 = vector.extract_strided_slice %316 {offsets = [0, 64], sizes = [16, 16], strides = [1, 1]} : vector<16x128xf32> to vector<16x16xf32>
    %414 = arith.truncf %413 : vector<16x16xf32> to vector<16x16xbf16>
    %cst_155 = arith.constant dense<0.000000e+00> : vector<16x16xf32>
    %415 = tpu.matmul %410, %412, %cst_155 {dimension_numbers = #tpu.dot_dimension_numbers<[1], [1], [0], [0], [0, 0, 1, 0], [], []>} : vector<16x16xbf16>, vector<16x16xbf16>, vector<16x16xf32> -> vector<16x16xf32>
    %cst_156 = arith.constant 2.500000e-01 : f32
    %416 = vector.broadcast %cst_156 : f32 to vector<16x16xf32>
    %417 = arith.mulf %415, %416 : vector<16x16xf32>
    %418 = arith.addf %417, %29 : vector<16x16xf32>
    %cst_157 = arith.constant dense<0xFF800000> : vector<16xf32>
    %419 = vector.multi_reduction <maximumf>, %418, %cst_157 [1] : vector<16x16xf32> to vector<16xf32>
    %420 = vector.shape_cast %419 : vector<16xf32> to vector<16x1xf32>
    %421 = vector.broadcast %420 : vector<16x1xf32> to vector<16x16xf32>
    %422 = arith.subf %418, %421 : vector<16x16xf32>
    %423 = math.exp %422 : vector<16x16xf32>
    %cst_158 = arith.constant dense<0.000000e+00> : vector<16xf32>
    %424 = vector.multi_reduction <add>, %423, %cst_158 [1] : vector<16x16xf32> to vector<16xf32>
    %425 = vector.shape_cast %424 : vector<16xf32> to vector<16x1xf32>
    %426 = tpu.reciprocal %425 {approx = true} : vector<16x1xf32> -> vector<16x1xf32>
    %427 = vector.broadcast %426 : vector<16x1xf32> to vector<16x16xf32>
    %428 = arith.mulf %423, %427 : vector<16x16xf32>
    %429 = arith.truncf %428 : vector<16x16xf32> to vector<16x16xbf16>
    %cst_159 = arith.constant dense<0.000000e+00> : vector<16x16xf32>
    %430 = tpu.matmul %429, %414, %cst_159 {dimension_numbers = #tpu.dot_dimension_numbers<[1], [0], [0], [1], [0, 0, 1, 1], [], []>} : vector<16x16xbf16>, vector<16x16xbf16>, vector<16x16xf32> -> vector<16x16xf32>
    %c0_160 = arith.constant 0 : index
    %c64_161 = arith.constant 64 : index
    %431 = vector.load %arg20[%c0_160, %c64_161] : memref<16x128xf32, #tpu.memory_space<vmem>>, vector<16x16xf32>
    tpu.vector_store %arg20[%c0_160, %c64_161], %430 {strides = array<i32>} : memref<16x128xf32, #tpu.memory_space<vmem>>, vector<16x16xf32>,
    %432 = vector.extract_strided_slice %314 {offsets = [0, 80], sizes = [16, 16], strides = [1, 1]} : vector<16x128xf32> to vector<16x16xf32>
    %433 = arith.truncf %432 : vector<16x16xf32> to vector<16x16xbf16>
    %434 = vector.extract_strided_slice %315 {offsets = [0, 80], sizes = [16, 16], strides = [1, 1]} : vector<16x128xf32> to vector<16x16xf32>
    %435 = arith.truncf %434 : vector<16x16xf32> to vector<16x16xbf16>
    %436 = vector.extract_strided_slice %316 {offsets = [0, 80], sizes = [16, 16], strides = [1, 1]} : vector<16x128xf32> to vector<16x16xf32>
    %437 = arith.truncf %436 : vector<16x16xf32> to vector<16x16xbf16>
    %cst_162 = arith.constant dense<0.000000e+00> : vector<16x16xf32>
    %438 = tpu.matmul %433, %435, %cst_162 {dimension_numbers = #tpu.dot_dimension_numbers<[1], [1], [0], [0], [0, 0, 1, 0], [], []>} : vector<16x16xbf16>, vector<16x16xbf16>, vector<16x16xf32> -> vector<16x16xf32>
    %cst_163 = arith.constant 2.500000e-01 : f32
    %439 = vector.broadcast %cst_163 : f32 to vector<16x16xf32>
    %440 = arith.mulf %438, %439 : vector<16x16xf32>
    %441 = arith.addf %440, %29 : vector<16x16xf32>
    %cst_164 = arith.constant dense<0xFF800000> : vector<16xf32>
    %442 = vector.multi_reduction <maximumf>, %441, %cst_164 [1] : vector<16x16xf32> to vector<16xf32>
    %443 = vector.shape_cast %442 : vector<16xf32> to vector<16x1xf32>
    %444 = vector.broadcast %443 : vector<16x1xf32> to vector<16x16xf32>
    %445 = arith.subf %441, %444 : vector<16x16xf32>
    %446 = math.exp %445 : vector<16x16xf32>
    %cst_165 = arith.constant dense<0.000000e+00> : vector<16xf32>
    %447 = vector.multi_reduction <add>, %446, %cst_165 [1] : vector<16x16xf32> to vector<16xf32>
    %448 = vector.shape_cast %447 : vector<16xf32> to vector<16x1xf32>
    %449 = tpu.reciprocal %448 {approx = true} : vector<16x1xf32> -> vector<16x1xf32>
    %450 = vector.broadcast %449 : vector<16x1xf32> to vector<16x16xf32>
    %451 = arith.mulf %446, %450 : vector<16x16xf32>
    %452 = arith.truncf %451 : vector<16x16xf32> to vector<16x16xbf16>
    %cst_166 = arith.constant dense<0.000000e+00> : vector<16x16xf32>
    %453 = tpu.matmul %452, %437, %cst_166 {dimension_numbers = #tpu.dot_dimension_numbers<[1], [0], [0], [1], [0, 0, 1, 1], [], []>} : vector<16x16xbf16>, vector<16x16xbf16>, vector<16x16xf32> -> vector<16x16xf32>
    %c0_167 = arith.constant 0 : index
    %c80_168 = arith.constant 80 : index
    %454 = vector.load %arg20[%c0_167, %c80_168] : memref<16x128xf32, #tpu.memory_space<vmem>>, vector<16x16xf32>
    tpu.vector_store %arg20[%c0_167, %c80_168], %453 {strides = array<i32>} : memref<16x128xf32, #tpu.memory_space<vmem>>, vector<16x16xf32>,
    %455 = vector.extract_strided_slice %314 {offsets = [0, 96], sizes = [16, 16], strides = [1, 1]} : vector<16x128xf32> to vector<16x16xf32>
    %456 = arith.truncf %455 : vector<16x16xf32> to vector<16x16xbf16>
    %457 = vector.extract_strided_slice %315 {offsets = [0, 96], sizes = [16, 16], strides = [1, 1]} : vector<16x128xf32> to vector<16x16xf32>
    %458 = arith.truncf %457 : vector<16x16xf32> to vector<16x16xbf16>
    %459 = vector.extract_strided_slice %316 {offsets = [0, 96], sizes = [16, 16], strides = [1, 1]} : vector<16x128xf32> to vector<16x16xf32>
    %460 = arith.truncf %459 : vector<16x16xf32> to vector<16x16xbf16>
    %cst_169 = arith.constant dense<0.000000e+00> : vector<16x16xf32>
    %461 = tpu.matmul %456, %458, %cst_169 {dimension_numbers = #tpu.dot_dimension_numbers<[1], [1], [0], [0], [0, 0, 1, 0], [], []>} : vector<16x16xbf16>, vector<16x16xbf16>, vector<16x16xf32> -> vector<16x16xf32>
    %cst_170 = arith.constant 2.500000e-01 : f32
    %462 = vector.broadcast %cst_170 : f32 to vector<16x16xf32>
    %463 = arith.mulf %461, %462 : vector<16x16xf32>
    %464 = arith.addf %463, %29 : vector<16x16xf32>
    %cst_171 = arith.constant dense<0xFF800000> : vector<16xf32>
    %465 = vector.multi_reduction <maximumf>, %464, %cst_171 [1] : vector<16x16xf32> to vector<16xf32>
    %466 = vector.shape_cast %465 : vector<16xf32> to vector<16x1xf32>
    %467 = vector.broadcast %466 : vector<16x1xf32> to vector<16x16xf32>
    %468 = arith.subf %464, %467 : vector<16x16xf32>
    %469 = math.exp %468 : vector<16x16xf32>
    %cst_172 = arith.constant dense<0.000000e+00> : vector<16xf32>
    %470 = vector.multi_reduction <add>, %469, %cst_172 [1] : vector<16x16xf32> to vector<16xf32>
    %471 = vector.shape_cast %470 : vector<16xf32> to vector<16x1xf32>
    %472 = tpu.reciprocal %471 {approx = true} : vector<16x1xf32> -> vector<16x1xf32>
    %473 = vector.broadcast %472 : vector<16x1xf32> to vector<16x16xf32>
    %474 = arith.mulf %469, %473 : vector<16x16xf32>
    %475 = arith.truncf %474 : vector<16x16xf32> to vector<16x16xbf16>
    %cst_173 = arith.constant dense<0.000000e+00> : vector<16x16xf32>
    %476 = tpu.matmul %475, %460, %cst_173 {dimension_numbers = #tpu.dot_dimension_numbers<[1], [0], [0], [1], [0, 0, 1, 1], [], []>} : vector<16x16xbf16>, vector<16x16xbf16>, vector<16x16xf32> -> vector<16x16xf32>
    %c0_174 = arith.constant 0 : index
    %c96_175 = arith.constant 96 : index
    %477 = vector.load %arg20[%c0_174, %c96_175] : memref<16x128xf32, #tpu.memory_space<vmem>>, vector<16x16xf32>
    tpu.vector_store %arg20[%c0_174, %c96_175], %476 {strides = array<i32>} : memref<16x128xf32, #tpu.memory_space<vmem>>, vector<16x16xf32>,
    %478 = vector.extract_strided_slice %314 {offsets = [0, 112], sizes = [16, 16], strides = [1, 1]} : vector<16x128xf32> to vector<16x16xf32>
    %479 = arith.truncf %478 : vector<16x16xf32> to vector<16x16xbf16>
    %480 = vector.extract_strided_slice %315 {offsets = [0, 112], sizes = [16, 16], strides = [1, 1]} : vector<16x128xf32> to vector<16x16xf32>
    %481 = arith.truncf %480 : vector<16x16xf32> to vector<16x16xbf16>
    %482 = vector.extract_strided_slice %316 {offsets = [0, 112], sizes = [16, 16], strides = [1, 1]} : vector<16x128xf32> to vector<16x16xf32>
    %483 = arith.truncf %482 : vector<16x16xf32> to vector<16x16xbf16>
    %cst_176 = arith.constant dense<0.000000e+00> : vector<16x16xf32>
    %484 = tpu.matmul %479, %481, %cst_176 {dimension_numbers = #tpu.dot_dimension_numbers<[1], [1], [0], [0], [0, 0, 1, 0], [], []>} : vector<16x16xbf16>, vector<16x16xbf16>, vector<16x16xf32> -> vector<16x16xf32>
    %cst_177 = arith.constant 2.500000e-01 : f32
    %485 = vector.broadcast %cst_177 : f32 to vector<16x16xf32>
    %486 = arith.mulf %484, %485 : vector<16x16xf32>
    %487 = arith.addf %486, %29 : vector<16x16xf32>
    %cst_178 = arith.constant dense<0xFF800000> : vector<16xf32>
    %488 = vector.multi_reduction <maximumf>, %487, %cst_178 [1] : vector<16x16xf32> to vector<16xf32>
    %489 = vector.shape_cast %488 : vector<16xf32> to vector<16x1xf32>
    %490 = vector.broadcast %489 : vector<16x1xf32> to vector<16x16xf32>
    %491 = arith.subf %487, %490 : vector<16x16xf32>
    %492 = math.exp %491 : vector<16x16xf32>
    %cst_179 = arith.constant dense<0.000000e+00> : vector<16xf32>
    %493 = vector.multi_reduction <add>, %492, %cst_179 [1] : vector<16x16xf32> to vector<16xf32>
    %494 = vector.shape_cast %493 : vector<16xf32> to vector<16x1xf32>
    %495 = tpu.reciprocal %494 {approx = true} : vector<16x1xf32> -> vector<16x1xf32>
    %496 = vector.broadcast %495 : vector<16x1xf32> to vector<16x16xf32>
    %497 = arith.mulf %492, %496 : vector<16x16xf32>
    %498 = arith.truncf %497 : vector<16x16xf32> to vector<16x16xbf16>
    %cst_180 = arith.constant dense<0.000000e+00> : vector<16x16xf32>
    %499 = tpu.matmul %498, %483, %cst_180 {dimension_numbers = #tpu.dot_dimension_numbers<[1], [0], [0], [1], [0, 0, 1, 1], [], []>} : vector<16x16xbf16>, vector<16x16xbf16>, vector<16x16xf32> -> vector<16x16xf32>
    %c0_181 = arith.constant 0 : index
    %c112_182 = arith.constant 112 : index
    %500 = vector.load %arg20[%c0_181, %c112_182] : memref<16x128xf32, #tpu.memory_space<vmem>>, vector<16x16xf32>
    tpu.vector_store %arg20[%c0_181, %c112_182], %499 {strides = array<i32>} : memref<16x128xf32, #tpu.memory_space<vmem>>, vector<16x16xf32>,
    %c0_183 = arith.constant 0 : index
    %c0_184 = arith.constant 0 : index
    %501 = vector.load %arg20[%c0_183, %c0_184] : memref<16x128xf32, #tpu.memory_space<vmem>>, vector<16x128xf32>
    %502 = arith.truncf %501 : vector<16x128xf32> to vector<16x128xbf16>
    %c1_185 = arith.constant 1 : index
    %c0_186 = arith.constant 0 : index
    %c0_187 = arith.constant 0 : index
    %503 = vector.load %arg7[%c1_185, %c0_186, %c0_187] : memref<2x128x128xbf16, #tpu.memory_space<vmem>>, vector<1x128x128xbf16>
    %504 = vector.shape_cast %503 : vector<1x128x128xbf16> to vector<128x128xbf16>
    %cst_188 = arith.constant dense<0.000000e+00> : vector<16x128xf32>
    %505 = tpu.matmul %502, %504, %cst_188 {dimension_numbers = #tpu.dot_dimension_numbers<[1], [0], [0], [1], [0, 0, 1, 1], [], []>} : vector<16x128xbf16>, vector<128x128xbf16>, vector<16x128xf32> -> vector<16x128xf32>
    %c1_189 = arith.constant 1 : index
    %c0_190 = arith.constant 0 : index
    %c0_191 = arith.constant 0 : index
    %506 = vector.load %arg8[%c1_189, %c0_190, %c0_191] : memref<2x1x128xf32, #tpu.memory_space<vmem>>, vector<1x1x128xf32>
    %507 = vector.shape_cast %506 : vector<1x1x128xf32> to vector<1x128xf32>
    %508 = vector.broadcast %507 : vector<1x128xf32> to vector<16x128xf32>
    %509 = arith.addf %505, %508 : vector<16x128xf32>
    %510 = arith.addf %305, %509 : vector<16x128xf32>
    %c1_192 = arith.constant 1 : index
    %c0_193 = arith.constant 0 : index
    %c0_194 = arith.constant 0 : index
    %511 = vector.load %arg9[%c1_192, %c0_193, %c0_194] : memref<2x1x128xf32, #tpu.memory_space<vmem>>, vector<1x1x128xf32>
    %512 = vector.shape_cast %511 : vector<1x1x128xf32> to vector<1x128xf32>
    %c1_195 = arith.constant 1 : index
    %c0_196 = arith.constant 0 : index
    %c0_197 = arith.constant 0 : index
    %513 = vector.load %arg10[%c1_195, %c0_196, %c0_197] : memref<2x1x128xf32, #tpu.memory_space<vmem>>, vector<1x1x128xf32>
    %514 = vector.shape_cast %513 : vector<1x1x128xf32> to vector<1x128xf32>
    %cst_198 = arith.constant dense<0.000000e+00> : vector<16xf32>
    %515 = vector.multi_reduction <add>, %510, %cst_198 [1] : vector<16x128xf32> to vector<16xf32>
    %516 = vector.shape_cast %515 : vector<16xf32> to vector<16x1xf32>
    %cst_199 = arith.constant 1.280000e+02 : f32
    %517 = vector.broadcast %cst_199 : f32 to vector<16x1xf32>
    %518 = arith.divf %516, %517 : vector<16x1xf32>
    %519 = vector.broadcast %518 : vector<16x1xf32> to vector<16x128xf32>
    %520 = arith.subf %510, %519 : vector<16x128xf32>
    %521 = arith.mulf %520, %520 : vector<16x128xf32>
    %cst_200 = arith.constant dense<0.000000e+00> : vector<16xf32>
    %522 = vector.multi_reduction <add>, %521, %cst_200 [1] : vector<16x128xf32> to vector<16xf32>
    %523 = vector.shape_cast %522 : vector<16xf32> to vector<16x1xf32>
    %cst_201 = arith.constant 1.280000e+02 : f32
    %524 = vector.broadcast %cst_201 : f32 to vector<16x1xf32>
    %525 = arith.divf %523, %524 : vector<16x1xf32>
    %526 = vector.broadcast %518 : vector<16x1xf32> to vector<16x128xf32>
    %527 = arith.subf %510, %526 : vector<16x128xf32>
    %cst_202 = arith.constant 9.99999974E-6 : f32
    %528 = vector.broadcast %cst_202 : f32 to vector<16x1xf32>
    %529 = arith.addf %525, %528 : vector<16x1xf32>
    %530 = math.rsqrt %529 : vector<16x1xf32>
    %531 = vector.broadcast %530 : vector<16x1xf32> to vector<16x128xf32>
    %532 = arith.mulf %527, %531 : vector<16x128xf32>
    %533 = vector.broadcast %512 : vector<1x128xf32> to vector<16x128xf32>
    %534 = arith.mulf %532, %533 : vector<16x128xf32>
    %535 = vector.broadcast %514 : vector<1x128xf32> to vector<16x128xf32>
    %536 = arith.addf %534, %535 : vector<16x128xf32>
    %537 = arith.truncf %536 : vector<16x128xf32> to vector<16x128xbf16>
    %c1_203 = arith.constant 1 : index
    %c0_204 = arith.constant 0 : index
    %c0_205 = arith.constant 0 : index
    %538 = vector.load %arg11[%c1_203, %c0_204, %c0_205] : memref<2x128x1024xbf16, #tpu.memory_space<vmem>>, vector<1x128x1024xbf16>
    %539 = vector.shape_cast %538 : vector<1x128x1024xbf16> to vector<128x1024xbf16>
    %cst_206 = arith.constant dense<0.000000e+00> : vector<16x1024xf32>
    %540 = tpu.matmul %537, %539, %cst_206 {dimension_numbers = #tpu.dot_dimension_numbers<[1], [0], [0], [1], [0, 0, 1, 1], [], []>} : vector<16x128xbf16>, vector<128x1024xbf16>, vector<16x1024xf32> -> vector<16x1024xf32>
    %c1_207 = arith.constant 1 : index
    %c0_208 = arith.constant 0 : index
    %c0_209 = arith.constant 0 : index
    %541 = vector.load %arg12[%c1_207, %c0_208, %c0_209] : memref<2x1x1024xf32, #tpu.memory_space<vmem>>, vector<1x1x1024xf32>
    %542 = vector.shape_cast %541 : vector<1x1x1024xf32> to vector<1x1024xf32>
    %543 = vector.broadcast %542 : vector<1x1024xf32> to vector<16x1024xf32>
    %544 = arith.addf %540, %543 : vector<16x1024xf32>
    %cst_210 = arith.constant 0.000000e+00 : f32
    %545 = vector.broadcast %cst_210 : f32 to vector<16x1024xf32>
    %546 = arith.maximumf %544, %545 : vector<16x1024xf32>
    %547 = arith.truncf %546 : vector<16x1024xf32> to vector<16x1024xbf16>
    %c1_211 = arith.constant 1 : index
    %c0_212 = arith.constant 0 : index
    %c0_213 = arith.constant 0 : index
    %548 = vector.load %arg13[%c1_211, %c0_212, %c0_213] : memref<2x1024x128xbf16, #tpu.memory_space<vmem>>, vector<1x1024x128xbf16>
    %549 = vector.shape_cast %548 : vector<1x1024x128xbf16> to vector<1024x128xbf16>
    %cst_214 = arith.constant dense<0.000000e+00> : vector<16x128xf32>
    %550 = tpu.matmul %547, %549, %cst_214 {dimension_numbers = #tpu.dot_dimension_numbers<[1], [0], [0], [1], [0, 0, 1, 1], [], []>} : vector<16x1024xbf16>, vector<1024x128xbf16>, vector<16x128xf32> -> vector<16x128xf32>
    %c1_215 = arith.constant 1 : index
    %c0_216 = arith.constant 0 : index
    %c0_217 = arith.constant 0 : index
    %551 = vector.load %arg14[%c1_215, %c0_216, %c0_217] : memref<2x1x128xf32, #tpu.memory_space<vmem>>, vector<1x1x128xf32>
    %552 = vector.shape_cast %551 : vector<1x1x128xf32> to vector<1x128xf32>
    %553 = vector.broadcast %552 : vector<1x128xf32> to vector<16x128xf32>
    %554 = arith.addf %550, %553 : vector<16x128xf32>
    %555 = arith.addf %536, %554 : vector<16x128xf32>
    %c1_218 = arith.constant 1 : index
    %c0_219 = arith.constant 0 : index
    %c0_220 = arith.constant 0 : index
    %556 = vector.load %arg15[%c1_218, %c0_219, %c0_220] : memref<2x1x128xf32, #tpu.memory_space<vmem>>, vector<1x1x128xf32>
    %557 = vector.shape_cast %556 : vector<1x1x128xf32> to vector<1x128xf32>
    %c1_221 = arith.constant 1 : index
    %c0_222 = arith.constant 0 : index
    %c0_223 = arith.constant 0 : index
    %558 = vector.load %arg16[%c1_221, %c0_222, %c0_223] : memref<2x1x128xf32, #tpu.memory_space<vmem>>, vector<1x1x128xf32>
    %559 = vector.shape_cast %558 : vector<1x1x128xf32> to vector<1x128xf32>
    %cst_224 = arith.constant dense<0.000000e+00> : vector<16xf32>
    %560 = vector.multi_reduction <add>, %555, %cst_224 [1] : vector<16x128xf32> to vector<16xf32>
    %561 = vector.shape_cast %560 : vector<16xf32> to vector<16x1xf32>
    %cst_225 = arith.constant 1.280000e+02 : f32
    %562 = vector.broadcast %cst_225 : f32 to vector<16x1xf32>
    %563 = arith.divf %561, %562 : vector<16x1xf32>
    %564 = vector.broadcast %563 : vector<16x1xf32> to vector<16x128xf32>
    %565 = arith.subf %555, %564 : vector<16x128xf32>
    %566 = arith.mulf %565, %565 : vector<16x128xf32>
    %cst_226 = arith.constant dense<0.000000e+00> : vector<16xf32>
    %567 = vector.multi_reduction <add>, %566, %cst_226 [1] : vector<16x128xf32> to vector<16xf32>
    %568 = vector.shape_cast %567 : vector<16xf32> to vector<16x1xf32>
    %cst_227 = arith.constant 1.280000e+02 : f32
    %569 = vector.broadcast %cst_227 : f32 to vector<16x1xf32>
    %570 = arith.divf %568, %569 : vector<16x1xf32>
    %571 = vector.broadcast %563 : vector<16x1xf32> to vector<16x128xf32>
    %572 = arith.subf %555, %571 : vector<16x128xf32>
    %cst_228 = arith.constant 9.99999974E-6 : f32
    %573 = vector.broadcast %cst_228 : f32 to vector<16x1xf32>
    %574 = arith.addf %570, %573 : vector<16x1xf32>
    %575 = math.rsqrt %574 : vector<16x1xf32>
    %576 = vector.broadcast %575 : vector<16x1xf32> to vector<16x128xf32>
    %577 = arith.mulf %572, %576 : vector<16x128xf32>
    %578 = vector.broadcast %557 : vector<1x128xf32> to vector<16x128xf32>
    %579 = arith.mulf %577, %578 : vector<16x128xf32>
    %580 = vector.broadcast %559 : vector<1x128xf32> to vector<16x128xf32>
    %581 = arith.addf %579, %580 : vector<16x128xf32>
    %582 = arith.truncf %581 : vector<16x128xf32> to vector<16x128xbf16>
    %c0_229 = arith.constant 0 : index
    %c0_230 = arith.constant 0 : index
    %583 = vector.load %arg17[%c0_229, %c0_230] : memref<128x128xbf16, #tpu.memory_space<vmem>>, vector<128x128xbf16>
    %cst_231 = arith.constant dense<0.000000e+00> : vector<16x128xf32>
    %584 = tpu.matmul %582, %583, %cst_231 {dimension_numbers = #tpu.dot_dimension_numbers<[1], [0], [0], [1], [0, 0, 1, 1], [], []>} : vector<16x128xbf16>, vector<128x128xbf16>, vector<16x128xf32> -> vector<16x128xf32>
    %c0_232 = arith.constant 0 : index
    %c0_233 = arith.constant 0 : index
    %585 = vector.load %arg18[%c0_232, %c0_233] : memref<1x128xf32, #tpu.memory_space<vmem>>, vector<1x128xf32>
    %586 = vector.broadcast %585 : vector<1x128xf32> to vector<16x128xf32>
    %587 = arith.addf %584, %586 : vector<16x128xf32>
    %c0_234 = arith.constant 0 : index
    %c0_235 = arith.constant 0 : index
    %588 = vector.load %arg19[%c0_234, %c0_235] : memref<16x128xf32, #tpu.memory_space<vmem>>, vector<16x128xf32>
    tpu.vector_store %arg19[%c0_234, %c0_235], %587 {strides = array<i32>} : memref<16x128xf32, #tpu.memory_space<vmem>>, vector<16x128xf32>,
    return
  }
}

</mosaic_0001>

<llo_original>
// kernel: downstream_forward.1
$region0: #{downstream_forward.1}
  #allocation0 [shape = 'u32[]', space=smem, size = 0x4, offset = 0x4, fixed_abs, tag = 'smem constant byte address 0x4 - core index']
  #allocation1 [shape = 'u32[144,128]{1,0:T(1,128)}', space=vmem, size = 0x12000, scoped, tag = 'internal scratch']
  #allocation2 [shape = 'f32[16,128]{1,0:T(8,128)}', space=vmem, size = 0x2000, scoped, tag = 'scratch operand']
  %s0 = inlined_call_operand.vmem [shape: f32[4], index: 0, kind: input, shape index: {}]
  %s1 = inlined_call_operand.vmem [shape: f32[4,16,256], index: 1, kind: input, shape index: {}]
  %s2 = inlined_call_operand.vmem [shape: f32[16,16], index: 2, kind: input, shape index: {}]
  %s3 = inlined_call_operand.vmem [shape: bf16[256,128], index: 3, kind: input, shape index: {}]
  %s4 = inlined_call_operand.vmem [shape: f32[1,128], index: 4, kind: input, shape index: {}]
  %s5 = inlined_call_operand.vmem [shape: bf16[2,128,384], index: 5, kind: input, shape index: {}]
  %s6 = inlined_call_operand.vmem [shape: f32[2,1,384], index: 6, kind: input, shape index: {}]
  %s7 = inlined_call_operand.vmem [shape: bf16[2,128,128], index: 7, kind: input, shape index: {}]
  %s8 = inlined_call_operand.vmem [shape: f32[2,1,128], index: 8, kind: input, shape index: {}]
  %s9 = inlined_call_operand.vmem [shape: f32[2,1,128], index: 9, kind: input, shape index: {}]
  %s10 = inlined_call_operand.vmem [shape: f32[2,1,128], index: 10, kind: input, shape index: {}]
  %s11 = inlined_call_operand.vmem [shape: bf16[2,128,1024], index: 11, kind: input, shape index: {}]
  %s12 = inlined_call_operand.vmem [shape: f32[2,1,1024], index: 12, kind: input, shape index: {}]
  %s13 = inlined_call_operand.vmem [shape: bf16[2,1024,128], index: 13, kind: input, shape index: {}]
  %s14 = inlined_call_operand.vmem [shape: f32[2,1,128], index: 14, kind: input, shape index: {}]
  %s15 = inlined_call_operand.vmem [shape: f32[2,1,128], index: 15, kind: input, shape index: {}]
  %s16 = inlined_call_operand.vmem [shape: f32[2,1,128], index: 16, kind: input, shape index: {}]
  %s17 = inlined_call_operand.vmem [shape: bf16[128,128], index: 17, kind: input, shape index: {}]
  %s18 = inlined_call_operand.vmem [shape: f32[1,128], index: 18, kind: input, shape index: {}]
  %s19 = inlined_call_operand.vmem [shape: f32[16,128], index: 19, kind: output, shape index: {}]
  %s20 = sld [smem:[#allocation0]]
  $region90: #{downstream_forward.1} parent=0
    _
  %s22 = ssub.s32 1, %s20
  %s23 = scalar_select 0, %s22, %s20
  $region1: #{downstream_forward.1} parent=0
    #allocation3 [shape = 'u8[512]{0}', space=smem, size = 0x200, scoped, tag = 'input window, operand 0, single buffered']
    #allocation4 [shape = 's32[1]{0}', space=sflag, size = 0x4, scoped, tag = 'scoped memory for downstream_forward.1']
    %24 = vsyncpa [#allocation4], 0
    // Predicated region
    $region2: #{downstream_forward.1} parent=1 // pred_check
      _
    $region3: #{downstream_forward.1} parent=1 // pred_check_branch
      %26 = sbr.rel (0) target = $region5
    $region4: #{downstream_forward.1} parent=1 // pred_region
      %s28 = ssub.s32 16, 16
      %29 = vsyncadd [#allocation4], %s28
      %s31 = sshll.u32 %s0, 4
      %s32 = int_to_ptr.vmem [resolvable:$true] %s31
      %34 = dma.vmem_to_smem %s32, 16, [#allocation3], [#allocation4]
    $region5: #{downstream_forward.1} parent=1 // pred_fallthru
      _
    // Predicated region
    $region6: #{downstream_forward.1} parent=1 // pred_check
      _
    $region7: #{downstream_forward.1} parent=1 // pred_check_branch
      %36 = sbr.rel (0) target = $region9
    $region8: #{downstream_forward.1} parent=1 // pred_region
      _
    $region9: #{downstream_forward.1} parent=1 // pred_fallthru
      _
    // Predicated region
    $region10: #{downstream_forward.1} parent=1 // pred_check
      _
    $region11: #{downstream_forward.1} parent=1 // pred_check_branch
      %38 = sbr.rel (0) target = $region13
    $region12: #{downstream_forward.1} parent=1 // pred_region
      _
    $region13: #{downstream_forward.1} parent=1 // pred_fallthru
      _
    // Predicated region
    $region14: #{downstream_forward.1} parent=1 // pred_check
      _
    $region15: #{downstream_forward.1} parent=1 // pred_check_branch
      %40 = sbr.rel (0) target = $region17
    $region16: #{downstream_forward.1} parent=1 // pred_region
      _
    $region17: #{downstream_forward.1} parent=1 // pred_fallthru
      _
    // Predicated region
    $region18: #{downstream_forward.1} parent=1 // pred_check
      _
    $region19: #{downstream_forward.1} parent=1 // pred_check_branch
      %42 = sbr.rel (0) target = $region21
    $region20: #{downstream_forward.1} parent=1 // pred_region
      _
    $region21: #{downstream_forward.1} parent=1 // pred_fallthru
      _
    // Predicated region
    $region22: #{downstream_forward.1} parent=1 // pred_check
      _
    $region23: #{downstream_forward.1} parent=1 // pred_check_branch
      %44 = sbr.rel (0) target = $region25
    $region24: #{downstream_forward.1} parent=1 // pred_region
      _
    $region25: #{downstream_forward.1} parent=1 // pred_fallthru
      _
    // Predicated region
    $region26: #{downstream_forward.1} parent=1 // pred_check
      _
    $region27: #{downstream_forward.1} parent=1 // pred_check_branch
      %46 = sbr.rel (0) target = $region29
    $region28: #{downstream_forward.1} parent=1 // pred_region
      _
    $region29: #{downstream_forward.1} parent=1 // pred_fallthru
      _
    // Predicated region
    $region30: #{downstream_forward.1} parent=1 // pred_check
      _
    $region31: #{downstream_forward.1} parent=1 // pred_check_branch
      %48 = sbr.rel (0) target = $region33
    $region32: #{downstream_forward.1} parent=1 // pred_region
      _
    $region33: #{downstream_forward.1} parent=1 // pred_fallthru
      _
    // Predicated region
    $region34: #{downstream_forward.1} parent=1 // pred_check
      _
    $region35: #{downstream_forward.1} parent=1 // pred_check_branch
      %50 = sbr.rel (0) target = $region37
    $region36: #{downstream_forward.1} parent=1 // pred_region
      _
    $region37: #{downstream_forward.1} parent=1 // pred_fallthru
      _
    // Predicated region
    $region38: #{downstream_forward.1} parent=1 // pred_check
      _
    $region39: #{downstream_forward.1} parent=1 // pred_check_branch
      %52 = sbr.rel (0) target = $region41
    $region40: #{downstream_forward.1} parent=1 // pred_region
      _
    $region41: #{downstream_forward.1} parent=1 // pred_fallthru
      _
    // Predicated region
    $region42: #{downstream_forward.1} parent=1 // pred_check
      _
    $region43: #{downstream_forward.1} parent=1 // pred_check_branch
      %54 = sbr.rel (0) target = $region45
    $region44: #{downstream_forward.1} parent=1 // pred_region
      _
    $region45: #{downstream_forward.1} parent=1 // pred_fallthru
      _
    // Predicated region
    $region46: #{downstream_forward.1} parent=1 // pred_check
      _
    $region47: #{downstream_forward.1} parent=1 // pred_check_branch
      %56 = sbr.rel (0) target = $region49
    $region48: #{downstream_forward.1} parent=1 // pred_region
      _
    $region49: #{downstream_forward.1} parent=1 // pred_fallthru
      _
    // Predicated region
    $region50: #{downstream_forward.1} parent=1 // pred_check
      _
    $region51: #{downstream_forward.1} parent=1 // pred_check_branch
      %58 = sbr.rel (0) target = $region53
    $region52: #{downstream_forward.1} parent=1 // pred_region
      _
    $region53: #{downstream_forward.1} parent=1 // pred_fallthru
      _
    // Predicated region
    $region54: #{downstream_forward.1} parent=1 // pred_check
      _
    $region55: #{downstream_forward.1} parent=1 // pred_check_branch
      %60 = sbr.rel (0) target = $region57
    $region56: #{downstream_forward.1} parent=1 // pred_region
      _
    $region57: #{downstream_forward.1} parent=1 // pred_fallthru
      _
    // Predicated region
    $region58: #{downstream_forward.1} parent=1 // pred_check
      _
    $region59: #{downstream_forward.1} parent=1 // pred_check_branch
      %62 = sbr.rel (0) target = $region61
    $region60: #{downstream_forward.1} parent=1 // pred_region
      _
    $region61: #{downstream_forward.1} parent=1 // pred_fallthru
      _
    // Predicated region
    $region62: #{downstream_forward.1} parent=1 // pred_check
      _
    $region63: #{downstream_forward.1} parent=1 // pred_check_branch
      %64 = sbr.rel (0) target = $region65
    $region64: #{downstream_forward.1} parent=1 // pred_region
      _
    $region65: #{downstream_forward.1} parent=1 // pred_fallthru
      _
    // Predicated region
    $region66: #{downstream_forward.1} parent=1 // pred_check
      _
    $region67: #{downstream_forward.1} parent=1 // pred_check_branch
      %66 = sbr.rel (0) target = $region69
    $region68: #{downstream_forward.1} parent=1 // pred_region
      _
    $region69: #{downstream_forward.1} parent=1 // pred_fallthru
      _
    // Predicated region
    $region70: #{downstream_forward.1} parent=1 // pred_check
      _
    $region71: #{downstream_forward.1} parent=1 // pred_check_branch
      %68 = sbr.rel (0) target = $region73
    $region72: #{downstream_forward.1} parent=1 // pred_region
      _
    $region73: #{downstream_forward.1} parent=1 // pred_fallthru
      _
    // Predicated region
    $region74: #{downstream_forward.1} parent=1 // pred_check
      _
    $region75: #{downstream_forward.1} parent=1 // pred_check_branch
      %70 = sbr.rel (0) target = $region77
    $region76: #{downstream_forward.1} parent=1 // pred_region
      _
    $region77: #{downstream_forward.1} parent=1 // pred_fallthru
      _
    // Predicated region
    $region78: #{downstream_forward.1} parent=1 // pred_check
      _
    $region79: #{downstream_forward.1} parent=1 // pred_check_branch
      %72 = sbr.rel (0) target = $region81
    $region80: #{downstream_forward.1} parent=1 // pred_region
      %73 = dma.done [#allocation4], 16
    $region81: #{downstream_forward.1} parent=1 // pred_fallthru
      _
    %74 = sfence
    %s76 = sld [smem:[#allocation3]]
    %v77 = vld [vmem:[%s1] sm:$0xff]
    %v78 = vld [vmem:[%s1 + $0x8] sm:$0xff]
    %v79 = vld [vmem:[%s1 + $0x10] sm:$0xff]
    %v80 = vld [vmem:[%s1 + $0x18] sm:$0xff]
    %v81 = vstv %s76
    %v82 = vmul.f32 %v81, %v77
    %v83 = vmul.f32 %v81, %v78
    %v84 = vmul.f32 %v81, %v79
    %v85 = vmul.f32 %v81, %v80
    %s86 = sld [smem:[#allocation3 + $0x1]]
    %s87 = scalar_lea.vmem %s1, 32
    %v88 = vld [vmem:[%s87] sm:$0xff]
    %v89 = vld [vmem:[%s87 + $0x8] sm:$0xff]
    %v90 = vld [vmem:[%s87 + $0x10] sm:$0xff]
    %v91 = vld [vmem:[%s87 + $0x18] sm:$0xff]
    %v92 = vstv %s86
    %v93 = vmul.f32 %v92, %v88
    %v94 = vmul.f32 %v92, %v89
    %v95 = vmul.f32 %v92, %v90
    %v96 = vmul.f32 %v92, %v91
    %v97 = vadd.f32 %v82, %v93
    %v98 = vadd.f32 %v83, %v94
    %v99 = vadd.f32 %v84, %v95
    %v100 = vadd.f32 %v85, %v96
    %s101 = sld [smem:[#allocation3 + $0x2]]
    %s102 = scalar_lea.vmem %s1, 64
    %v103 = vld [vmem:[%s102] sm:$0xff]
    %v104 = vld [vmem:[%s102 + $0x8] sm:$0xff]
    %v105 = vld [vmem:[%s102 + $0x10] sm:$0xff]
    %v106 = vld [vmem:[%s102 + $0x18] sm:$0xff]
    %v107 = vstv %s101
    %v108 = vmul.f32 %v107, %v103
    %v109 = vmul.f32 %v107, %v104
    %v110 = vmul.f32 %v107, %v105
    %v111 = vmul.f32 %v107, %v106
    %v112 = vadd.f32 %v97, %v108
    %v113 = vadd.f32 %v98, %v109
    %v114 = vadd.f32 %v99, %v110
    %v115 = vadd.f32 %v100, %v111
    %s116 = sld [smem:[#allocation3 + $0x3]]
    %s117 = scalar_lea.vmem %s1, 96
    %v118 = vld [vmem:[%s117] sm:$0xff]
    %v119 = vld [vmem:[%s117 + $0x8] sm:$0xff]
    %v120 = vld [vmem:[%s117 + $0x10] sm:$0xff]
    %v121 = vld [vmem:[%s117 + $0x18] sm:$0xff]
    %v122 = vstv %s116
    %v123 = vmul.f32 %v122, %v118
    %v124 = vmul.f32 %v122, %v119
    %v125 = vmul.f32 %v122, %v120
    %v126 = vmul.f32 %v122, %v121
    %v127 = vadd.f32 %v112, %v123
    %v128 = vadd.f32 %v113, %v124
    %v129 = vadd.f32 %v114, %v125
    %v130 = vadd.f32 %v115, %v126
    %v131 = vpack.c.bf16 %v129, %v127
    %v132 = vpack.c.bf16 %v130, %v128
    %v133 = vld [vmem:[%s3] sm:$0xf]
    %v134 = vld [vmem:[%s3 + $0x4] sm:$0xf]
    %v135 = vld [vmem:[%s3 + $0x8] sm:$0xf]
    %v136 = vld [vmem:[%s3 + $0xc] sm:$0xf]
    %v137 = vld [vmem:[%s3 + $0x10] sm:$0xf]
    %v138 = vld [vmem:[%s3 + $0x14] sm:$0xf]
    %v139 = vld [vmem:[%s3 + $0x18] sm:$0xf]
    %v140 = vld [vmem:[%s3 + $0x1c] sm:$0xf]
    %v141 = vld [vmem:[%s3 + $0x20] sm:$0xf]
    %v142 = vld [vmem:[%s3 + $0x24] sm:$0xf]
    %v143 = vld [vmem:[%s3 + $0x28] sm:$0xf]
    %v144 = vld [vmem:[%s3 + $0x2c] sm:$0xf]
    %v145 = vld [vmem:[%s3 + $0x30] sm:$0xf]
    %v146 = vld [vmem:[%s3 + $0x34] sm:$0xf]
    %v147 = vld [vmem:[%s3 + $0x38] sm:$0xf]
    %v148 = vld [vmem:[%s3 + $0x3c] sm:$0xf]
    %v149 = vld [vmem:[%s3 + $0x40] sm:$0xf]
    %v150 = vld [vmem:[%s3 + $0x44] sm:$0xf]
    %v151 = vld [vmem:[%s3 + $0x48] sm:$0xf]
    %v152 = vld [vmem:[%s3 + $0x4c] sm:$0xf]
    %v153 = vld [vmem:[%s3 + $0x50] sm:$0xf]
    %v154 = vld [vmem:[%s3 + $0x54] sm:$0xf]
    %v155 = vld [vmem:[%s3 + $0x58] sm:$0xf]
    %v156 = vld [vmem:[%s3 + $0x5c] sm:$0xf]
    %v157 = vld [vmem:[%s3 + $0x60] sm:$0xf]
    %v158 = vld [vmem:[%s3 + $0x64] sm:$0xf]
    %v159 = vld [vmem:[%s3 + $0x68] sm:$0xf]
    %v160 = vld [vmem:[%s3 + $0x6c] sm:$0xf]
    %v161 = vld [vmem:[%s3 + $0x70] sm:$0xf]
    %v162 = vld [vmem:[%s3 + $0x74] sm:$0xf]
    %v163 = vld [vmem:[%s3 + $0x78] sm:$0xf]
    %v164 = vld [vmem:[%s3 + $0x7c] sm:$0xf]
    %v165 = vld [vmem:[%s4] sm:$0x1]
    %v167 = vlaneseq
    %v168 = vshrl.u32 %v167, 7
    %v169 = vsub.s32 0, %v168
    %v170 = vrot.slane %v165, %v169
    %v204 = vunpack.c.l.b16 %v133
    %v205 = vunpack.c.l.b16 %v134
    %v206 = vunpack.c.l.b16 %v135
    %v207 = vunpack.c.l.b16 %v136
    %v208 = vunpack.c.l.b16 %v137
    %v209 = vunpack.c.l.b16 %v138
    %v210 = vunpack.c.l.b16 %v139
    %v211 = vunpack.c.l.b16 %v140
    %v212 = vunpack.c.l.b16 %v141
    %v213 = vunpack.c.l.b16 %v142
    %v214 = vunpack.c.l.b16 %v143
    %v215 = vunpack.c.l.b16 %v144
    %v216 = vunpack.c.l.b16 %v145
    %v217 = vunpack.c.l.b16 %v146
    %v218 = vunpack.c.l.b16 %v147
    %v219 = vunpack.c.l.b16 %v148
    %v220 = vunpack.c.l.b16 %v149
    %v221 = vunpack.c.l.b16 %v150
    %v222 = vunpack.c.l.b16 %v151
    %v223 = vunpack.c.l.b16 %v152
    %v224 = vunpack.c.l.b16 %v153
    %v225 = vunpack.c.l.b16 %v154
    %v226 = vunpack.c.l.b16 %v155
    %v227 = vunpack.c.l.b16 %v156
    %v228 = vunpack.c.l.b16 %v157
    %v229 = vunpack.c.l.b16 %v158
    %v230 = vunpack.c.l.b16 %v159
    %v231 = vunpack.c.l.b16 %v160
    %v232 = vunpack.c.l.b16 %v161
    %v233 = vunpack.c.l.b16 %v162
    %v234 = vunpack.c.l.b16 %v163
    %v235 = vunpack.c.l.b16 %v164
    %v236 = vpack.c.b16 %v205, %v204
    %v237 = vpack.c.b16 %v207, %v206
    %v238 = vpack.c.b16 %v209, %v208
    %v239 = vpack.c.b16 %v211, %v210
    %v240 = vpack.c.b16 %v213, %v212
    %v241 = vpack.c.b16 %v215, %v214
    %v242 = vpack.c.b16 %v217, %v216
    %v243 = vpack.c.b16 %v219, %v218
    %v244 = vpack.c.b16 %v221, %v220
    %v245 = vpack.c.b16 %v223, %v222
    %v246 = vpack.c.b16 %v225, %v224
    %v247 = vpack.c.b16 %v227, %v226
    %v248 = vpack.c.b16 %v229, %v228
    %v249 = vpack.c.b16 %v231, %v230
    %v250 = vpack.c.b16 %v233, %v232
    %v251 = vpack.c.b16 %v235, %v234
    %268 = vmatprep.subr.bf16.mxu0 0
    %269 = vmatpush1.bf16.msra.mxu0 %v236
    %270 = vmatprep.subr.bf16.mxu0 0
    %271 = vmatpush1.bf16.msra.mxu0 %v237
    %272 = vmatprep.subr.bf16.mxu0 0
    %273 = vmatpush1.bf16.msra.mxu0 %v238
    %274 = vmatprep.subr.bf16.mxu0 0
    %275 = vmatpush1.bf16.msra.mxu0 %v239
    %276 = vmatprep.subr.bf16.mxu0 0
    %277 = vmatpush1.bf16.msra.mxu0 %v240
    %278 = vmatprep.subr.bf16.mxu0 0
    %279 = vmatpush1.bf16.msra.mxu0 %v241
    %280 = vmatprep.subr.bf16.mxu0 0
    %281 = vmatpush1.bf16.msra.mxu0 %v242
    %282 = vmatprep.subr.bf16.mxu0 0
    %283 = vmatpush1.bf16.msra.mxu0 %v243
    %284 = vmatprep.subr.bf16.mxu0 0
    %285 = vmatpush1.bf16.msra.mxu0 %v244
    %286 = vmatprep.subr.bf16.mxu0 0
    %287 = vmatpush1.bf16.msra.mxu0 %v245
    %288 = vmatprep.subr.bf16.mxu0 0
    %289 = vmatpush1.bf16.msra.mxu0 %v246
    %290 = vmatprep.subr.bf16.mxu0 0
    %291 = vmatpush1.bf16.msra.mxu0 %v247
    %292 = vmatprep.subr.bf16.mxu0 0
    %293 = vmatpush1.bf16.msra.mxu0 %v248
    %294 = vmatprep.subr.bf16.mxu0 0
    %295 = vmatpush1.bf16.msra.mxu0 %v249
    %296 = vmatprep.subr.bf16.mxu0 0
    %297 = vmatpush1.bf16.msra.mxu0 %v250
    %298 = vmatprep.subr.bf16.mxu0 0
    %299 = vmatpush1.bf16.msra.mxu0 %v251
    %300 = vmatprep.mubr.bf16.mxu0 %v132
    %301 = vmatmul.mubr.bf16.gmra.mrb[0].mxu0 %v131
    %v302 = vpop.f32.mrb[0].mxu0
    %v303 = vadd.f32 %v170, %v302
    %v304 = vpop.f32.mrb[0].mxu0
    %v305 = vpop.f32.mrb[0].mxu0
    %v306 = vadd.f32 %v170, %v305
    %v307 = vpop.f32.mrb[0].mxu0
    %308 = vdwg.mxu0
    %v309 = vld [vmem:[%s2] sm:$0xff]
    %v310 = vld [vmem:[%s2 + $0x8] sm:$0xff]
    %v311 = vpack.c.bf16 %v306, %v303
    %v312 = vld [vmem:[%s5] sm:$0xff]
    %v313 = vld [vmem:[%s5 + $0x8] sm:$0xf]
    %v314 = vld [vmem:[%s5 + $0xc] sm:$0xff]
    %v315 = vld [vmem:[%s5 + $0x14] sm:$0xf]
    %v316 = vld [vmem:[%s5 + $0x18] sm:$0xff]
    %v317 = vld [vmem:[%s5 + $0x20] sm:$0xf]
    %v318 = vld [vmem:[%s5 + $0x24] sm:$0xff]
    %v319 = vld [vmem:[%s5 + $0x2c] sm:$0xf]
    %v320 = vld [vmem:[%s5 + $0x30] sm:$0xff]
    %v321 = vld [vmem:[%s5 + $0x38] sm:$0xf]
    %v322 = vld [vmem:[%s5 + $0x3c] sm:$0xff]
    %v323 = vld [vmem:[%s5 + $0x44] sm:$0xf]
    %v324 = vld [vmem:[%s5 + $0x48] sm:$0xff]
    %v325 = vld [vmem:[%s5 + $0x50] sm:$0xf]
    %v326 = vld [vmem:[%s5 + $0x54] sm:$0xff]
    %v327 = vld [vmem:[%s5 + $0x5c] sm:$0xf]
    %v328 = vld [vmem:[%s5 + $0x60] sm:$0xff]
    %v329 = vld [vmem:[%s5 + $0x68] sm:$0xf]
    %v330 = vld [vmem:[%s5 + $0x6c] sm:$0xff]
    %v331 = vld [vmem:[%s5 + $0x74] sm:$0xf]
    %v332 = vld [vmem:[%s5 + $0x78] sm:$0xff]
    %v333 = vld [vmem:[%s5 + $0x80] sm:$0xf]
    %v334 = vld [vmem:[%s5 + $0x84] sm:$0xff]
    %v335 = vld [vmem:[%s5 + $0x8c] sm:$0xf]
    %v336 = vld [vmem:[%s5 + $0x90] sm:$0xff]
    %v337 = vld [vmem:[%s5 + $0x98] sm:$0xf]
    %v338 = vld [vmem:[%s5 + $0x9c] sm:$0xff]
    %v339 = vld [vmem:[%s5 + $0xa4] sm:$0xf]
    %v340 = vld [vmem:[%s5 + $0xa8] sm:$0xff]
    %v341 = vld [vmem:[%s5 + $0xb0] sm:$0xf]
    %v342 = vld [vmem:[%s5 + $0xb4] sm:$0xff]
    %v343 = vld [vmem:[%s5 + $0xbc] sm:$0xf]
    %v344 = vld [vmem:[%s6] sm:$0x7]
    %v346 = vlaneseq
    %v347 = vshrl.u32 %v346, 7
    %v348 = vsub.s32 0, %v347
    %v349 = vrot.slane %v344, %v348
    %v350 = vlaneseq
    %v351 = vshrl.u32 %v350, 7
    %v352 = vsub.s32 1, %v351
    %v353 = vrot.slane %v344, %v352
    %v354 = vlaneseq
    %v355 = vshrl.u32 %v354, 7
    %v356 = vsub.s32 2, %v355
    %v357 = vrot.slane %v344, %v356
    %v393 = vunpack.c.l.b16 %v312
    %v394 = vunpack.c.h.b16 %v312
    %v395 = vunpack.c.l.b16 %v313
    %v396 = vunpack.c.l.b16 %v314
    %v397 = vunpack.c.h.b16 %v314
    %v398 = vunpack.c.l.b16 %v315
    %v399 = vunpack.c.l.b16 %v316
    %v400 = vunpack.c.h.b16 %v316
    %v401 = vunpack.c.l.b16 %v317
    %v402 = vunpack.c.l.b16 %v318
    %v403 = vunpack.c.h.b16 %v318
    %v404 = vunpack.c.l.b16 %v319
    %v405 = vunpack.c.l.b16 %v320
    %v406 = vunpack.c.h.b16 %v320
    %v407 = vunpack.c.l.b16 %v321
    %v408 = vunpack.c.l.b16 %v322
    %v409 = vunpack.c.h.b16 %v322
    %v410 = vunpack.c.l.b16 %v323
    %v411 = vunpack.c.l.b16 %v324
    %v412 = vunpack.c.h.b16 %v324
    %v413 = vunpack.c.l.b16 %v325
    %v414 = vunpack.c.l.b16 %v326
    %v415 = vunpack.c.h.b16 %v326
    %v416 = vunpack.c.l.b16 %v327
    %v417 = vunpack.c.l.b16 %v328
    %v418 = vunpack.c.h.b16 %v328
    %v419 = vunpack.c.l.b16 %v329
    %v420 = vunpack.c.l.b16 %v330
    %v421 = vunpack.c.h.b16 %v330
    %v422 = vunpack.c.l.b16 %v331
    %v423 = vunpack.c.l.b16 %v332
    %v424 = vunpack.c.h.b16 %v332
    %v425 = vunpack.c.l.b16 %v333
    %v426 = vunpack.c.l.b16 %v334
    %v427 = vunpack.c.h.b16 %v334
    %v428 = vunpack.c.l.b16 %v335
    %v429 = vunpack.c.l.b16 %v336
    %v430 = vunpack.c.h.b16 %v336
    %v431 = vunpack.c.l.b16 %v337
    %v432 = vunpack.c.l.b16 %v338
    %v433 = vunpack.c.h.b16 %v338
    %v434 = vunpack.c.l.b16 %v339
    %v435 = vunpack.c.l.b16 %v340
    %v436 = vunpack.c.h.b16 %v340
    %v437 = vunpack.c.l.b16 %v341
    %v438 = vunpack.c.l.b16 %v342
    %v439 = vunpack.c.h.b16 %v342
    %v440 = vunpack.c.l.b16 %v343
    %v441 = vpack.c.b16 %v396, %v393
    %v442 = vpack.c.b16 %v397, %v394
    %v443 = vpack.c.b16 %v398, %v395
    %v444 = vpack.c.b16 %v402, %v399
    %v445 = vpack.c.b16 %v403, %v400
    %v446 = vpack.c.b16 %v404, %v401
    %v447 = vpack.c.b16 %v408, %v405
    %v448 = vpack.c.b16 %v409, %v406
    %v449 = vpack.c.b16 %v410, %v407
    %v450 = vpack.c.b16 %v414, %v411
    %v451 = vpack.c.b16 %v415, %v412
    %v452 = vpack.c.b16 %v416, %v413
    %v453 = vpack.c.b16 %v420, %v417
    %v454 = vpack.c.b16 %v421, %v418
    %v455 = vpack.c.b16 %v422, %v419
    %v456 = vpack.c.b16 %v426, %v423
    %v457 = vpack.c.b16 %v427, %v424
    %v458 = vpack.c.b16 %v428, %v425
    %v459 = vpack.c.b16 %v432, %v429
    %v460 = vpack.c.b16 %v433, %v430
    %v461 = vpack.c.b16 %v434, %v431
    %v462 = vpack.c.b16 %v438, %v435
    %v463 = vpack.c.b16 %v439, %v436
    %v464 = vpack.c.b16 %v440, %v437
    %489 = vmatprep.subr.bf16.mxu0 %v442
    %490 = vmatpush1.bf16.msra.mxu0 %v441
    %491 = vmatprep.subr.bf16.mxu0 %v445
    %492 = vmatpush1.bf16.msra.mxu0 %v444
    %493 = vmatprep.subr.bf16.mxu0 %v448
    %494 = vmatpush1.bf16.msra.mxu0 %v447
    %495 = vmatprep.subr.bf16.mxu0 %v451
    %496 = vmatpush1.bf16.msra.mxu0 %v450
    %497 = vmatprep.subr.bf16.mxu0 %v454
    %498 = vmatpush1.bf16.msra.mxu0 %v453
    %499 = vmatprep.subr.bf16.mxu0 %v457
    %500 = vmatpush1.bf16.msra.mxu0 %v456
    %501 = vmatprep.subr.bf16.mxu0 %v460
    %502 = vmatpush1.bf16.msra.mxu0 %v459
    %503 = vmatprep.subr.bf16.mxu0 %v463
    %504 = vmatpush1.bf16.msra.mxu0 %v462
    %505 = vmatprep.subr.bf16.mxu0 0
    %506 = vmatpush1.bf16.msra.mxu0 0
    %507 = vmatprep.subr.bf16.mxu0 0
    %508 = vmatpush1.bf16.msra.mxu0 0
    %509 = vmatprep.subr.bf16.mxu0 0
    %510 = vmatpush1.bf16.msra.mxu0 0
    %511 = vmatprep.subr.bf16.mxu0 0
    %512 = vmatpush1.bf16.msra.mxu0 0
    %513 = vmatprep.subr.bf16.mxu0 0
    %514 = vmatpush1.bf16.msra.mxu0 0
    %515 = vmatprep.subr.bf16.mxu0 0
    %516 = vmatpush1.bf16.msra.mxu0 0
    %517 = vmatprep.subr.bf16.mxu0 0
    %518 = vmatpush1.bf16.msra.mxu0 0
    %519 = vmatprep.subr.bf16.mxu0 0
    %520 = vmatpush1.bf16.msra.mxu0 0
    %521 = vmatprep.mubr.bf16.mxu0 0
    %522 = vmatmul.mubr.bf16.gmra.mrb[0].mxu0 %v311
    %v523 = vpop.f32.mrb[0].mxu0
    %v524 = vadd.f32 %v349, %v523
    %v525 = vpop.f32.mrb[0].mxu0
    %v526 = vadd.f32 %v353, %v525
    %v527 = vpop.f32.mrb[0].mxu0
    %v528 = vadd.f32 %v349, %v527
    %v529 = vpop.f32.mrb[0].mxu0
    %v530 = vadd.f32 %v353, %v529
    %531 = vdwg.mxu0
    %532 = vmatprep.subr.bf16.mxu0 0
    %533 = vmatpush1.bf16.msra.mxu0 %v443
    %534 = vmatprep.subr.bf16.mxu0 0
    %535 = vmatpush1.bf16.msra.mxu0 %v446
    %536 = vmatprep.subr.bf16.mxu0 0
    %537 = vmatpush1.bf16.msra.mxu0 %v449
    %538 = vmatprep.subr.bf16.mxu0 0
    %539 = vmatpush1.bf16.msra.mxu0 %v452
    %540 = vmatprep.subr.bf16.mxu0 0
    %541 = vmatpush1.bf16.msra.mxu0 %v455
    %542 = vmatprep.subr.bf16.mxu0 0
    %543 = vmatpush1.bf16.msra.mxu0 %v458
    %544 = vmatprep.subr.bf16.mxu0 0
    %545 = vmatpush1.bf16.msra.mxu0 %v461
    %546 = vmatprep.subr.bf16.mxu0 0
    %547 = vmatpush1.bf16.msra.mxu0 %v464
    %548 = vmatprep.subr.bf16.mxu0 0
    %549 = vmatpush1.bf16.msra.mxu0 0
    %550 = vmatprep.subr.bf16.mxu0 0
    %551 = vmatpush1.bf16.msra.mxu0 0
    %552 = vmatprep.subr.bf16.mxu0 0
    %553 = vmatpush1.bf16.msra.mxu0 0
    %554 = vmatprep.subr.bf16.mxu0 0
    %555 = vmatpush1.bf16.msra.mxu0 0
    %556 = vmatprep.subr.bf16.mxu0 0
    %557 = vmatpush1.bf16.msra.mxu0 0
    %558 = vmatprep.subr.bf16.mxu0 0
    %559 = vmatpush1.bf16.msra.mxu0 0
    %560 = vmatprep.subr.bf16.mxu0 0
    %561 = vmatpush1.bf16.msra.mxu0 0
    %562 = vmatprep.subr.bf16.mxu0 0
    %563 = vmatpush1.bf16.msra.mxu0 0
    %564 = vmatprep.mubr.bf16.mxu0 0
    %565 = vmatmul.mubr.bf16.gmra.mrb[0].mxu0 %v311
    %v566 = vpop.f32.mrb[0].mxu0
    %v567 = vadd.f32 %v357, %v566
    %v568 = vpop.f32.mrb[0].mxu0
    %v569 = vpop.f32.mrb[0].mxu0
    %v570 = vadd.f32 %v357, %v569
    %v571 = vpop.f32.mrb[0].mxu0
    %572 = vdwg.mxu0
    %v573 = vpack.c.bf16 %v528, %v524
    %v574 = vpack.c.bf16 %v530, %v526
    %v575 = vpack.c.bf16 %v570, %v567
    %vm576 = vcmask 130048
    %v578 = vsel %vm576, %v573, 0
    %v581 = vsel %vm576, %v574, 0
    %583 = vmatprep.subr.bf16.mxu0 0
    %584 = vmatpush1.bf16.xpose.msra.mxu0 %v581
    %585 = vmatprep.subr.bf16.mxu0 0
    %586 = vmatpush1.bf16.xpose.msra.mxu0 0
    %587 = vmatprep.subr.bf16.mxu0 0
    %588 = vmatpush1.bf16.xpose.msra.mxu0 0
    %589 = vmatprep.subr.bf16.mxu0 0
    %590 = vmatpush1.bf16.xpose.msra.mxu0 0
    %591 = vmatprep.subr.bf16.mxu0 0
    %592 = vmatpush1.bf16.xpose.msra.mxu0 0
    %593 = vmatprep.subr.bf16.mxu0 0
    %594 = vmatpush1.bf16.xpose.msra.mxu0 0
    %595 = vmatprep.subr.bf16.mxu0 0
    %596 = vmatpush1.bf16.xpose.msra.mxu0 0
    %597 = vmatprep.subr.bf16.mxu0 0
    %598 = vmatpush1.bf16.xpose.msra.mxu0 0
    %599 = vmatprep.subr.bf16.mxu0 0
    %600 = vmatpush1.bf16.xpose.msra.mxu0 0
    %601 = vmatprep.subr.bf16.mxu0 0
    %602 = vmatpush1.bf16.xpose.msra.mxu0 0
    %603 = vmatprep.subr.bf16.mxu0 0
    %604 = vmatpush1.bf16.xpose.msra.mxu0 0
    %605 = vmatprep.subr.bf16.mxu0 0
    %606 = vmatpush1.bf16.xpose.msra.mxu0 0
    %607 = vmatprep.subr.bf16.mxu0 0
    %608 = vmatpush1.bf16.xpose.msra.mxu0 0
    %609 = vmatprep.subr.bf16.mxu0 0
    %610 = vmatpush1.bf16.xpose.msra.mxu0 0
    %611 = vmatprep.subr.bf16.mxu0 0
    %612 = vmatpush1.bf16.xpose.msra.mxu0 0
    %613 = vmatprep.subr.bf16.mxu0 0
    %614 = vmatpush1.bf16.xpose.msra.mxu0 0
    %615 = vmatprep.mubr.bf16.mxu0 0
    %616 = vmatmul.mubr.bf16.gmra.mrb[0].mxu0 %v578
    %v617 = vpop.f32.mrb[0].mxu0
    %v618 = vadd.f32 0.0, %v617
    %v619 = vpop.f32.mrb[0].mxu0
    %v620 = vpop.f32.mrb[0].mxu0
    %v621 = vadd.f32 0.0, %v620
    %v622 = vpop.f32.mrb[0].mxu0
    %623 = vdwg.mxu0
    %v624 = vmul.f32 %v618, 0.25
    %v625 = vmul.f32 %v621, 0.25
    %v626 = vadd.f32 %v624, %v309
    %v627 = vadd.f32 %v625, %v310
    %v628 = vsel %vm576, %v626, -inf
    %629 = vmax.xlane.f32.xlu0 %v628
    %v630 = vpop.xlane.xlu0 %629
    %v631 = vsel %vm576, %v627, -inf
    %632 = vmax.xlane.f32.xlu0 %v631
    %v633 = vpop.xlane.xlu0 %632
    %v634 = vsub.f32 %v626, %v630
    %v635 = vsub.f32 %v627, %v633
    %v636 = vmul.f32 %v634, 1.442695
    %v637 = vpow.pop %v636
    %v638 = vmul.f32 %v635, 1.442695
    %v639 = vpow.pop %v638
    %v640 = vsel %vm576, %v637, 0.0
    %641 = vadd.xlane.f32.xlu0 %v640
    %v642 = vpop.xlane.xlu0 %641
    %v643 = vsel %vm576, %v639, 0.0
    %644 = vadd.xlane.f32.xlu0 %v643
    %v645 = vpop.xlane.xlu0 %644
    %v646 = vrcp.pop %v642
    %v647 = vrcp.pop %v645
    %v648 = vmul.f32 %v637, %v646
    %v649 = vmul.f32 %v639, %v647
    %v650 = vpack.c.bf16 %v649, %v648
    %v652 = vsel %vm576, %v650, 0
    %654 = vmatprep.subr.bf16.mxu0 0
    %655 = vmatpush1.bf16.msra.mxu0 %v575
    %656 = vmatprep.subr.bf16.mxu0 0
    %657 = vmatpush1.bf16.msra.mxu0 0
    %658 = vmatprep.subr.bf16.mxu0 0
    %659 = vmatpush1.bf16.msra.mxu0 0
    %660 = vmatprep.subr.bf16.mxu0 0
    %661 = vmatpush1.bf16.msra.mxu0 0
    %662 = vmatprep.subr.bf16.mxu0 0
    %663 = vmatpush1.bf16.msra.mxu0 0
    %664 = vmatprep.subr.bf16.mxu0 0
    %665 = vmatpush1.bf16.msra.mxu0 0
    %666 = vmatprep.subr.bf16.mxu0 0
    %667 = vmatpush1.bf16.msra.mxu0 0
    %668 = vmatprep.subr.bf16.mxu0 0
    %669 = vmatpush1.bf16.msra.mxu0 0
    %670 = vmatprep.subr.bf16.mxu0 0
    %671 = vmatpush1.bf16.msra.mxu0 0
    %672 = vmatprep.subr.bf16.mxu0 0
    %673 = vmatpush1.bf16.msra.mxu0 0
    %674 = vmatprep.subr.bf16.mxu0 0
    %675 = vmatpush1.bf16.msra.mxu0 0
    %676 = vmatprep.subr.bf16.mxu0 0
    %677 = vmatpush1.bf16.msra.mxu0 0
    %678 = vmatprep.subr.bf16.mxu0 0
    %679 = vmatpush1.bf16.msra.mxu0 0
    %680 = vmatprep.subr.bf16.mxu0 0
    %681 = vmatpush1.bf16.msra.mxu0 0
    %682 = vmatprep.subr.bf16.mxu0 0
    %683 = vmatpush1.bf16.msra.mxu0 0
    %684 = vmatprep.subr.bf16.mxu0 0
    %685 = vmatpush1.bf16.msra.mxu0 0
    %686 = vmatprep.mubr.bf16.mxu0 0
    %687 = vmatmul.mubr.bf16.gmra.mrb[0].mxu0 %v652
    %v688 = vpop.f32.mrb[0].mxu0
    %v689 = vadd.f32 0.0, %v688
    %v690 = vpop.f32.mrb[0].mxu0
    %v691 = vpop.f32.mrb[0].mxu0
    %v692 = vadd.f32 0.0, %v691
    %v693 = vpop.f32.mrb[0].mxu0
    %694 = vdwg.mxu0
    %695 = vst.msk [vmem:[#allocation2] sm:$0xff] %vm576, %v689
    %696 = vst.msk [vmem:[#allocation2 + $0x8] sm:$0xff] %vm576, %v692
    %698 = vrot.lane.b32.xlu0 %v573, 112
    %v699 = vpop.permute.xlu0 %698
    %701 = vrot.lane.b32.xlu0 %v574, 112
    %v702 = vpop.permute.xlu0 %701
    %v704 = vsel %vm576, %v699, 0
    %v707 = vsel %vm576, %v702, 0
    %709 = vmatprep.subr.bf16.mxu0 0
    %710 = vmatpush1.bf16.xpose.msra.mxu0 %v707
    %711 = vmatprep.subr.bf16.mxu0 0
    %712 = vmatpush1.bf16.xpose.msra.mxu0 0
    %713 = vmatprep.subr.bf16.mxu0 0
    %714 = vmatpush1.bf16.xpose.msra.mxu0 0
    %715 = vmatprep.subr.bf16.mxu0 0
    %716 = vmatpush1.bf16.xpose.msra.mxu0 0
    %717 = vmatprep.subr.bf16.mxu0 0
    %718 = vmatpush1.bf16.xpose.msra.mxu0 0
    %719 = vmatprep.subr.bf16.mxu0 0
    %720 = vmatpush1.bf16.xpose.msra.mxu0 0
    %721 = vmatprep.subr.bf16.mxu0 0
    %722 = vmatpush1.bf16.xpose.msra.mxu0 0
    %723 = vmatprep.subr.bf16.mxu0 0
    %724 = vmatpush1.bf16.xpose.msra.mxu0 0
    %725 = vmatprep.subr.bf16.mxu0 0
    %726 = vmatpush1.bf16.xpose.msra.mxu0 0
    %727 = vmatprep.subr.bf16.mxu0 0
    %728 = vmatpush1.bf16.xpose.msra.mxu0 0
    %729 = vmatprep.subr.bf16.mxu0 0
    %730 = vmatpush1.bf16.xpose.msra.mxu0 0
    %731 = vmatprep.subr.bf16.mxu0 0
    %732 = vmatpush1.bf16.xpose.msra.mxu0 0
    %733 = vmatprep.subr.bf16.mxu0 0
    %734 = vmatpush1.bf16.xpose.msra.mxu0 0
    %735 = vmatprep.subr.bf16.mxu0 0
    %736 = vmatpush1.bf16.xpose.msra.mxu0 0
    %737 = vmatprep.subr.bf16.mxu0 0
    %738 = vmatpush1.bf16.xpose.msra.mxu0 0
    %739 = vmatprep.subr.bf16.mxu0 0
    %740 = vmatpush1.bf16.xpose.msra.mxu0 0
    %741 = vmatprep.mubr.bf16.mxu0 0
    %742 = vmatmul.mubr.bf16.gmra.mrb[0].mxu0 %v704
    %v743 = vpop.f32.mrb[0].mxu0
    %v744 = vadd.f32 0.0, %v743
    %v745 = vpop.f32.mrb[0].mxu0
    %v746 = vpop.f32.mrb[0].mxu0
    %v747 = vadd.f32 0.0, %v746
    %v748 = vpop.f32.mrb[0].mxu0
    %749 = vdwg.mxu0
    %v750 = vmul.f32 %v744, 0.25
    %v751 = vmul.f32 %v747, 0.25
    %v752 = vadd.f32 %v750, %v309
    %v753 = vadd.f32 %v751, %v310
    %v754 = vsel %vm576, %v752, -inf
    %755 = vmax.xlane.f32.xlu0 %v754
    %v756 = vpop.xlane.xlu0 %755
    %v757 = vsel %vm576, %v753, -inf
    %758 = vmax.xlane.f32.xlu0 %v757
    %v759 = vpop.xlane.xlu0 %758
    %v760 = vsub.f32 %v752, %v756
    %v761 = vsub.f32 %v753, %v759
    %v762 = vmul.f32 %v760, 1.442695
    %v763 = vpow.pop %v762
    %v764 = vmul.f32 %v761, 1.442695
    %v765 = vpow.pop %v764
    %v766 = vsel %vm576, %v763, 0.0
    %767 = vadd.xlane.f32.xlu0 %v766
    %v768 = vpop.xlane.xlu0 %767
    %v769 = vsel %vm576, %v765, 0.0
    %770 = vadd.xlane.f32.xlu0 %v769
    %v771 = vpop.xlane.xlu0 %770
    %v772 = vrcp.pop %v768
    %v773 = vrcp.pop %v771
    %v774 = vmul.f32 %v763, %v772
    %v775 = vmul.f32 %v765, %v773
    %v776 = vpack.c.bf16 %v775, %v774
    %778 = vrot.lane.b32.xlu0 %v575, 112
    %v779 = vpop.permute.xlu0 %778
    %v782 = vsel %vm576, %v776, 0
    %784 = vmatprep.subr.bf16.mxu0 0
    %785 = vmatpush1.bf16.msra.mxu0 %v779
    %786 = vmatprep.subr.bf16.mxu0 0
    %787 = vmatpush1.bf16.msra.mxu0 0
    %788 = vmatprep.subr.bf16.mxu0 0
    %789 = vmatpush1.bf16.msra.mxu0 0
    %790 = vmatprep.subr.bf16.mxu0 0
    %791 = vmatpush1.bf16.msra.mxu0 0
    %792 = vmatprep.subr.bf16.mxu0 0
    %793 = vmatpush1.bf16.msra.mxu0 0
    %794 = vmatprep.subr.bf16.mxu0 0
    %795 = vmatpush1.bf16.msra.mxu0 0
    %796 = vmatprep.subr.bf16.mxu0 0
    %797 = vmatpush1.bf16.msra.mxu0 0
    %798 = vmatprep.subr.bf16.mxu0 0
    %799 = vmatpush1.bf16.msra.mxu0 0
    %800 = vmatprep.subr.bf16.mxu0 0
    %801 = vmatpush1.bf16.msra.mxu0 0
    %802 = vmatprep.subr.bf16.mxu0 0
    %803 = vmatpush1.bf16.msra.mxu0 0
    %804 = vmatprep.subr.bf16.mxu0 0
    %805 = vmatpush1.bf16.msra.mxu0 0
    %806 = vmatprep.subr.bf16.mxu0 0
    %807 = vmatpush1.bf16.msra.mxu0 0
    %808 = vmatprep.subr.bf16.mxu0 0
    %809 = vmatpush1.bf16.msra.mxu0 0
    %810 = vmatprep.subr.bf16.mxu0 0
    %811 = vmatpush1.bf16.msra.mxu0 0
    %812 = vmatprep.subr.bf16.mxu0 0
    %813 = vmatpush1.bf16.msra.mxu0 0
    %814 = vmatprep.subr.bf16.mxu0 0
    %815 = vmatpush1.bf16.msra.mxu0 0
    %816 = vmatprep.mubr.bf16.mxu0 0
    %817 = vmatmul.mubr.bf16.gmra.mrb[0].mxu0 %v782
    %v818 = vpop.f32.mrb[0].mxu0
    %v819 = vadd.f32 0.0, %v818
    %v820 = vpop.f32.mrb[0].mxu0
    %v821 = vpop.f32.mrb[0].mxu0
    %v822 = vadd.f32 0.0, %v821
    %v823 = vpop.f32.mrb[0].mxu0
    %824 = vdwg.mxu0
    %827 = vrot.lane.b32.xlu0 %v819, 16
    %v828 = vpop.permute.xlu0 %827
    %829 = vrot.lane.b32.xlu0 %v822, 16
    %v830 = vpop.permute.xlu0 %829
    %vm833 = vcmask 261248
    %834 = vst.msk [vmem:[#allocation2] sm:$0xff] %vm833, %v828
    %835 = vst.msk [vmem:[#allocation2 + $0x8] sm:$0xff] %vm833, %v830
    %836 = vrot.lane.b32.xlu0 %v573, 96
    %v837 = vpop.permute.xlu0 %836
    %838 = vrot.lane.b32.xlu0 %v574, 96
    %v839 = vpop.permute.xlu0 %838
    %v841 = vsel %vm576, %v837, 0
    %v844 = vsel %vm576, %v839, 0
    %846 = vmatprep.subr.bf16.mxu0 0
    %847 = vmatpush1.bf16.xpose.msra.mxu0 %v844
    %848 = vmatprep.subr.bf16.mxu0 0
    %849 = vmatpush1.bf16.xpose.msra.mxu0 0
    %850 = vmatprep.subr.bf16.mxu0 0
    %851 = vmatpush1.bf16.xpose.msra.mxu0 0
    %852 = vmatprep.subr.bf16.mxu0 0
    %853 = vmatpush1.bf16.xpose.msra.mxu0 0
    %854 = vmatprep.subr.bf16.mxu0 0
    %855 = vmatpush1.bf16.xpose.msra.mxu0 0
    %856 = vmatprep.subr.bf16.mxu0 0
    %857 = vmatpush1.bf16.xpose.msra.mxu0 0
    %858 = vmatprep.subr.bf16.mxu0 0
    %859 = vmatpush1.bf16.xpose.msra.mxu0 0
    %860 = vmatprep.subr.bf16.mxu0 0
    %861 = vmatpush1.bf16.xpose.msra.mxu0 0
    %862 = vmatprep.subr.bf16.mxu0 0
    %863 = vmatpush1.bf16.xpose.msra.mxu0 0
    %864 = vmatprep.subr.bf16.mxu0 0
    %865 = vmatpush1.bf16.xpose.msra.mxu0 0
    %866 = vmatprep.subr.bf16.mxu0 0
    %867 = vmatpush1.bf16.xpose.msra.mxu0 0
    %868 = vmatprep.subr.bf16.mxu0 0
    %869 = vmatpush1.bf16.xpose.msra.mxu0 0
    %870 = vmatprep.subr.bf16.mxu0 0
    %871 = vmatpush1.bf16.xpose.msra.mxu0 0
    %872 = vmatprep.subr.bf16.mxu0 0
    %873 = vmatpush1.bf16.xpose.msra.mxu0 0
    %874 = vmatprep.subr.bf16.mxu0 0
    %875 = vmatpush1.bf16.xpose.msra.mxu0 0
    %876 = vmatprep.subr.bf16.mxu0 0
    %877 = vmatpush1.bf16.xpose.msra.mxu0 0
    %878 = vmatprep.mubr.bf16.mxu0 0
    %879 = vmatmul.mubr.bf16.gmra.mrb[0].mxu0 %v841
    %v880 = vpop.f32.mrb[0].mxu0
    %v881 = vadd.f32 0.0, %v880
    %v882 = vpop.f32.mrb[0].mxu0
    %v883 = vpop.f32.mrb[0].mxu0
    %v884 = vadd.f32 0.0, %v883
    %v885 = vpop.f32.mrb[0].mxu0
    %886 = vdwg.mxu0
    %v887 = vmul.f32 %v881, 0.25
    %v888 = vmul.f32 %v884, 0.25
    %v889 = vadd.f32 %v887, %v309
    %v890 = vadd.f32 %v888, %v310
    %v891 = vsel %vm576, %v889, -inf
    %892 = vmax.xlane.f32.xlu0 %v891
    %v893 = vpop.xlane.xlu0 %892
    %v894 = vsel %vm576, %v890, -inf
    %895 = vmax.xlane.f32.xlu0 %v894
    %v896 = vpop.xlane.xlu0 %895
    %v897 = vsub.f32 %v889, %v893
    %v898 = vsub.f32 %v890, %v896
    %v899 = vmul.f32 %v897, 1.442695
    %v900 = vpow.pop %v899
    %v901 = vmul.f32 %v898, 1.442695
    %v902 = vpow.pop %v901
    %v903 = vsel %vm576, %v900, 0.0
    %904 = vadd.xlane.f32.xlu0 %v903
    %v905 = vpop.xlane.xlu0 %904
    %v906 = vsel %vm576, %v902, 0.0
    %907 = vadd.xlane.f32.xlu0 %v906
    %v908 = vpop.xlane.xlu0 %907
    %v909 = vrcp.pop %v905
    %v910 = vrcp.pop %v908
    %v911 = vmul.f32 %v900, %v909
    %v912 = vmul.f32 %v902, %v910
    %v913 = vpack.c.bf16 %v912, %v911
    %914 = vrot.lane.b32.xlu0 %v575, 96
    %v915 = vpop.permute.xlu0 %914
    %v918 = vsel %vm576, %v913, 0
    %920 = vmatprep.subr.bf16.mxu0 0
    %921 = vmatpush1.bf16.msra.mxu0 %v915
    %922 = vmatprep.subr.bf16.mxu0 0
    %923 = vmatpush1.bf16.msra.mxu0 0
    %924 = vmatprep.subr.bf16.mxu0 0
    %925 = vmatpush1.bf16.msra.mxu0 0
    %926 = vmatprep.subr.bf16.mxu0 0
    %927 = vmatpush1.bf16.msra.mxu0 0
    %928 = vmatprep.subr.bf16.mxu0 0
    %929 = vmatpush1.bf16.msra.mxu0 0
    %930 = vmatprep.subr.bf16.mxu0 0
    %931 = vmatpush1.bf16.msra.mxu0 0
    %932 = vmatprep.subr.bf16.mxu0 0
    %933 = vmatpush1.bf16.msra.mxu0 0
    %934 = vmatprep.subr.bf16.mxu0 0
    %935 = vmatpush1.bf16.msra.mxu0 0
    %936 = vmatprep.subr.bf16.mxu0 0
    %937 = vmatpush1.bf16.msra.mxu0 0
    %938 = vmatprep.subr.bf16.mxu0 0
    %939 = vmatpush1.bf16.msra.mxu0 0
    %940 = vmatprep.subr.bf16.mxu0 0
    %941 = vmatpush1.bf16.msra.mxu0 0
    %942 = vmatprep.subr.bf16.mxu0 0
    %943 = vmatpush1.bf16.msra.mxu0 0
    %944 = vmatprep.subr.bf16.mxu0 0
    %945 = vmatpush1.bf16.msra.mxu0 0
    %946 = vmatprep.subr.bf16.mxu0 0
    %947 = vmatpush1.bf16.msra.mxu0 0
    %948 = vmatprep.subr.bf16.mxu0 0
    %949 = vmatpush1.bf16.msra.mxu0 0
    %950 = vmatprep.subr.bf16.mxu0 0
    %951 = vmatpush1.bf16.msra.mxu0 0
    %952 = vmatprep.mubr.bf16.mxu0 0
    %953 = vmatmul.mubr.bf16.gmra.mrb[0].mxu0 %v918
    %v954 = vpop.f32.mrb[0].mxu0
    %v955 = vadd.f32 0.0, %v954
    %v956 = vpop.f32.mrb[0].mxu0
    %v957 = vpop.f32.mrb[0].mxu0
    %v958 = vadd.f32 0.0, %v957
    %v959 = vpop.f32.mrb[0].mxu0
    %960 = vdwg.mxu0
    %963 = vrot.lane.b32.xlu0 %v955, 32
    %v964 = vpop.permute.xlu0 %963
    %965 = vrot.lane.b32.xlu0 %v958, 32
    %v966 = vpop.permute.xlu0 %965
    %vm969 = vcmask 392448
    %970 = vst.msk [vmem:[#allocation2] sm:$0xff] %vm969, %v964
    %971 = vst.msk [vmem:[#allocation2 + $0x8] sm:$0xff] %vm969, %v966
    %972 = vrot.lane.b32.xlu0 %v573, 80
    %v973 = vpop.permute.xlu0 %972
    %974 = vrot.lane.b32.xlu0 %v574, 80
    %v975 = vpop.permute.xlu0 %974
    %v977 = vsel %vm576, %v973, 0
    %v980 = vsel %vm576, %v975, 0
    %982 = vmatprep.subr.bf16.mxu0 0
    %983 = vmatpush1.bf16.xpose.msra.mxu0 %v980
    %984 = vmatprep.subr.bf16.mxu0 0
    %985 = vmatpush1.bf16.xpose.msra.mxu0 0
    %986 = vmatprep.subr.bf16.mxu0 0
    %987 = vmatpush1.bf16.xpose.msra.mxu0 0
    %988 = vmatprep.subr.bf16.mxu0 0
    %989 = vmatpush1.bf16.xpose.msra.mxu0 0
    %990 = vmatprep.subr.bf16.mxu0 0
    %991 = vmatpush1.bf16.xpose.msra.mxu0 0
    %992 = vmatprep.subr.bf16.mxu0 0
    %993 = vmatpush1.bf16.xpose.msra.mxu0 0
    %994 = vmatprep.subr.bf16.mxu0 0
    %995 = vmatpush1.bf16.xpose.msra.mxu0 0
    %996 = vmatprep.subr.bf16.mxu0 0
    %997 = vmatpush1.bf16.xpose.msra.mxu0 0
    %998 = vmatprep.subr.bf16.mxu0 0
    %999 = vmatpush1.bf16.xpose.msra.mxu0 0
    %1000 = vmatprep.subr.bf16.mxu0 0
    %1001 = vmatpush1.bf16.xpose.msra.mxu0 0
    %1002 = vmatprep.subr.bf16.mxu0 0
    %1003 = vmatpush1.bf16.xpose.msra.mxu0 0
    %1004 = vmatprep.subr.bf16.mxu0 0
    %1005 = vmatpush1.bf16.xpose.msra.mxu0 0
    %1006 = vmatprep.subr.bf16.mxu0 0
    %1007 = vmatpush1.bf16.xpose.msra.mxu0 0
    %1008 = vmatprep.subr.bf16.mxu0 0
    %1009 = vmatpush1.bf16.xpose.msra.mxu0 0
    %1010 = vmatprep.subr.bf16.mxu0 0
    %1011 = vmatpush1.bf16.xpose.msra.mxu0 0
    %1012 = vmatprep.subr.bf16.mxu0 0
    %1013 = vmatpush1.bf16.xpose.msra.mxu0 0
    %1014 = vmatprep.mubr.bf16.mxu0 0
    %1015 = vmatmul.mubr.bf16.gmra.mrb[0].mxu0 %v977
    %v1016 = vpop.f32.mrb[0].mxu0
    %v1017 = vadd.f32 0.0, %v1016
    %v1018 = vpop.f32.mrb[0].mxu0
    %v1019 = vpop.f32.mrb[0].mxu0
    %v1020 = vadd.f32 0.0, %v1019
    %v1021 = vpop.f32.mrb[0].mxu0
    %1022 = vdwg.mxu0
    %v1023 = vmul.f32 %v1017, 0.25
    %v1024 = vmul.f32 %v1020, 0.25
    %v1025 = vadd.f32 %v1023, %v309
    %v1026 = vadd.f32 %v1024, %v310
    %v1027 = vsel %vm576, %v1025, -inf
    %1028 = vmax.xlane.f32.xlu0 %v1027
    %v1029 = vpop.xlane.xlu0 %1028
    %v1030 = vsel %vm576, %v1026, -inf
    %1031 = vmax.xlane.f32.xlu0 %v1030
    %v1032 = vpop.xlane.xlu0 %1031
    %v1033 = vsub.f32 %v1025, %v1029
    %v1034 = vsub.f32 %v1026, %v1032
    %v1035 = vmul.f32 %v1033, 1.442695
    %v1036 = vpow.pop %v1035
    %v1037 = vmul.f32 %v1034, 1.442695
    %v1038 = vpow.pop %v1037
    %v1039 = vsel %vm576, %v1036, 0.0
    %1040 = vadd.xlane.f32.xlu0 %v1039
    %v1041 = vpop.xlane.xlu0 %1040
    %v1042 = vsel %vm576, %v1038, 0.0
    %1043 = vadd.xlane.f32.xlu0 %v1042
    %v1044 = vpop.xlane.xlu0 %1043
    %v1045 = vrcp.pop %v1041
    %v1046 = vrcp.pop %v1044
    %v1047 = vmul.f32 %v1036, %v1045
    %v1048 = vmul.f32 %v1038, %v1046
    %v1049 = vpack.c.bf16 %v1048, %v1047
    %1050 = vrot.lane.b32.xlu0 %v575, 80
    %v1051 = vpop.permute.xlu0 %1050
    %v1054 = vsel %vm576, %v1049, 0
    %1056 = vmatprep.subr.bf16.mxu0 0
    %1057 = vmatpush1.bf16.msra.mxu0 %v1051
    %1058 = vmatprep.subr.bf16.mxu0 0
    %1059 = vmatpush1.bf16.msra.mxu0 0
    %1060 = vmatprep.subr.bf16.mxu0 0
    %1061 = vmatpush1.bf16.msra.mxu0 0
    %1062 = vmatprep.subr.bf16.mxu0 0
    %1063 = vmatpush1.bf16.msra.mxu0 0
    %1064 = vmatprep.subr.bf16.mxu0 0
    %1065 = vmatpush1.bf16.msra.mxu0 0
    %1066 = vmatprep.subr.bf16.mxu0 0
    %1067 = vmatpush1.bf16.msra.mxu0 0
    %1068 = vmatprep.subr.bf16.mxu0 0
    %1069 = vmatpush1.bf16.msra.mxu0 0
    %1070 = vmatprep.subr.bf16.mxu0 0
    %1071 = vmatpush1.bf16.msra.mxu0 0
    %1072 = vmatprep.subr.bf16.mxu0 0
    %1073 = vmatpush1.bf16.msra.mxu0 0
    %1074 = vmatprep.subr.bf16.mxu0 0
    %1075 = vmatpush1.bf16.msra.mxu0 0
    %1076 = vmatprep.subr.bf16.mxu0 0
    %1077 = vmatpush1.bf16.msra.mxu0 0
    %1078 = vmatprep.subr.bf16.mxu0 0
    %1079 = vmatpush1.bf16.msra.mxu0 0
    %1080 = vmatprep.subr.bf16.mxu0 0
    %1081 = vmatpush1.bf16.msra.mxu0 0
    %1082 = vmatprep.subr.bf16.mxu0 0
    %1083 = vmatpush1.bf16.msra.mxu0 0
    %1084 = vmatprep.subr.bf16.mxu0 0
    %1085 = vmatpush1.bf16.msra.mxu0 0
    %1086 = vmatprep.subr.bf16.mxu0 0
    %1087 = vmatpush1.bf16.msra.mxu0 0
    %1088 = vmatprep.mubr.bf16.mxu0 0
    %1089 = vmatmul.mubr.bf16.gmra.mrb[0].mxu0 %v1054
    %v1090 = vpop.f32.mrb[0].mxu0
    %v1091 = vadd.f32 0.0, %v1090
    %v1092 = vpop.f32.mrb[0].mxu0
    %v1093 = vpop.f32.mrb[0].mxu0
    %v1094 = vadd.f32 0.0, %v1093
    %v1095 = vpop.f32.mrb[0].mxu0
    %1096 = vdwg.mxu0
    %1099 = vrot.lane.b32.xlu0 %v1091, 48
    %v1100 = vpop.permute.xlu0 %1099
    %1101 = vrot.lane.b32.xlu0 %v1094, 48
    %v1102 = vpop.permute.xlu0 %1101
    %vm1105 = vcmask 523648
    %1106 = vst.msk [vmem:[#allocation2] sm:$0xff] %vm1105, %v1100
    %1107 = vst.msk [vmem:[#allocation2 + $0x8] sm:$0xff] %vm1105, %v1102
    %1108 = vrot.lane.b32.xlu0 %v573, 64
    %v1109 = vpop.permute.xlu0 %1108
    %1110 = vrot.lane.b32.xlu0 %v574, 64
    %v1111 = vpop.permute.xlu0 %1110
    %v1113 = vsel %vm576, %v1109, 0
    %v1116 = vsel %vm576, %v1111, 0
    %1118 = vmatprep.subr.bf16.mxu0 0
    %1119 = vmatpush1.bf16.xpose.msra.mxu0 %v1116
    %1120 = vmatprep.subr.bf16.mxu0 0
    %1121 = vmatpush1.bf16.xpose.msra.mxu0 0
    %1122 = vmatprep.subr.bf16.mxu0 0
    %1123 = vmatpush1.bf16.xpose.msra.mxu0 0
    %1124 = vmatprep.subr.bf16.mxu0 0
    %1125 = vmatpush1.bf16.xpose.msra.mxu0 0
    %1126 = vmatprep.subr.bf16.mxu0 0
    %1127 = vmatpush1.bf16.xpose.msra.mxu0 0
    %1128 = vmatprep.subr.bf16.mxu0 0
    %1129 = vmatpush1.bf16.xpose.msra.mxu0 0
    %1130 = vmatprep.subr.bf16.mxu0 0
    %1131 = vmatpush1.bf16.xpose.msra.mxu0 0
    %1132 = vmatprep.subr.bf16.mxu0 0
    %1133 = vmatpush1.bf16.xpose.msra.mxu0 0
    %1134 = vmatprep.subr.bf16.mxu0 0
    %1135 = vmatpush1.bf16.xpose.msra.mxu0 0
    %1136 = vmatprep.subr.bf16.mxu0 0
    %1137 = vmatpush1.bf16.xpose.msra.mxu0 0
    %1138 = vmatprep.subr.bf16.mxu0 0
    %1139 = vmatpush1.bf16.xpose.msra.mxu0 0
    %1140 = vmatprep.subr.bf16.mxu0 0
    %1141 = vmatpush1.bf16.xpose.msra.mxu0 0
    %1142 = vmatprep.subr.bf16.mxu0 0
    %1143 = vmatpush1.bf16.xpose.msra.mxu0 0
    %1144 = vmatprep.subr.bf16.mxu0 0
    %1145 = vmatpush1.bf16.xpose.msra.mxu0 0
    %1146 = vmatprep.subr.bf16.mxu0 0
    %1147 = vmatpush1.bf16.xpose.msra.mxu0 0
    %1148 = vmatprep.subr.bf16.mxu0 0
    %1149 = vmatpush1.bf16.xpose.msra.mxu0 0
    %1150 = vmatprep.mubr.bf16.mxu0 0
    %1151 = vmatmul.mubr.bf16.gmra.mrb[0].mxu0 %v1113
    %v1152 = vpop.f32.mrb[0].mxu0
    %v1153 = vadd.f32 0.0, %v1152
    %v1154 = vpop.f32.mrb[0].mxu0
    %v1155 = vpop.f32.mrb[0].mxu0
    %v1156 = vadd.f32 0.0, %v1155
    %v1157 = vpop.f32.mrb[0].mxu0
    %1158 = vdwg.mxu0
    %v1159 = vmul.f32 %v1153, 0.25
    %v1160 = vmul.f32 %v1156, 0.25
    %v1161 = vadd.f32 %v1159, %v309
    %v1162 = vadd.f32 %v1160, %v310
    %v1163 = vsel %vm576, %v1161, -inf
    %1164 = vmax.xlane.f32.xlu0 %v1163
    %v1165 = vpop.xlane.xlu0 %1164
    %v1166 = vsel %vm576, %v1162, -inf
    %1167 = vmax.xlane.f32.xlu0 %v1166
    %v1168 = vpop.xlane.xlu0 %1167
    %v1169 = vsub.f32 %v1161, %v1165
    %v1170 = vsub.f32 %v1162, %v1168
    %v1171 = vmul.f32 %v1169, 1.442695
    %v1172 = vpow.pop %v1171
    %v1173 = vmul.f32 %v1170, 1.442695
    %v1174 = vpow.pop %v1173
    %v1175 = vsel %vm576, %v1172, 0.0
    %1176 = vadd.xlane.f32.xlu0 %v1175
    %v1177 = vpop.xlane.xlu0 %1176
    %v1178 = vsel %vm576, %v1174, 0.0
    %1179 = vadd.xlane.f32.xlu0 %v1178
    %v1180 = vpop.xlane.xlu0 %1179
    %v1181 = vrcp.pop %v1177
    %v1182 = vrcp.pop %v1180
    %v1183 = vmul.f32 %v1172, %v1181
    %v1184 = vmul.f32 %v1174, %v1182
    %v1185 = vpack.c.bf16 %v1184, %v1183
    %1186 = vrot.lane.b32.xlu0 %v575, 64
    %v1187 = vpop.permute.xlu0 %1186
    %v1190 = vsel %vm576, %v1185, 0
    %1192 = vmatprep.subr.bf16.mxu0 0
    %1193 = vmatpush1.bf16.msra.mxu0 %v1187
    %1194 = vmatprep.subr.bf16.mxu0 0
    %1195 = vmatpush1.bf16.msra.mxu0 0
    %1196 = vmatprep.subr.bf16.mxu0 0
    %1197 = vmatpush1.bf16.msra.mxu0 0
    %1198 = vmatprep.subr.bf16.mxu0 0
    %1199 = vmatpush1.bf16.msra.mxu0 0
    %1200 = vmatprep.subr.bf16.mxu0 0
    %1201 = vmatpush1.bf16.msra.mxu0 0
    %1202 = vmatprep.subr.bf16.mxu0 0
    %1203 = vmatpush1.bf16.msra.mxu0 0
    %1204 = vmatprep.subr.bf16.mxu0 0
    %1205 = vmatpush1.bf16.msra.mxu0 0
    %1206 = vmatprep.subr.bf16.mxu0 0
    %1207 = vmatpush1.bf16.msra.mxu0 0
    %1208 = vmatprep.subr.bf16.mxu0 0
    %1209 = vmatpush1.bf16.msra.mxu0 0
    %1210 = vmatprep.subr.bf16.mxu0 0
    %1211 = vmatpush1.bf16.msra.mxu0 0
    %1212 = vmatprep.subr.bf16.mxu0 0
    %1213 = vmatpush1.bf16.msra.mxu0 0
    %1214 = vmatprep.subr.bf16.mxu0 0
    %1215 = vmatpush1.bf16.msra.mxu0 0
    %1216 = vmatprep.subr.bf16.mxu0 0
    %1217 = vmatpush1.bf16.msra.mxu0 0
    %1218 = vmatprep.subr.bf16.mxu0 0
    %1219 = vmatpush1.bf16.msra.mxu0 0
    %1220 = vmatprep.subr.bf16.mxu0 0
    %1221 = vmatpush1.bf16.msra.mxu0 0
    %1222 = vmatprep.subr.bf16.mxu0 0
    %1223 = vmatpush1.bf16.msra.mxu0 0
    %1224 = vmatprep.mubr.bf16.mxu0 0
    %1225 = vmatmul.mubr.bf16.gmra.mrb[0].mxu0 %v1190
    %v1226 = vpop.f32.mrb[0].mxu0
    %v1227 = vadd.f32 0.0, %v1226
    %v1228 = vpop.f32.mrb[0].mxu0
    %v1229 = vpop.f32.mrb[0].mxu0
    %v1230 = vadd.f32 0.0, %v1229
    %v1231 = vpop.f32.mrb[0].mxu0
    %1232 = vdwg.mxu0
    %1235 = vrot.lane.b32.xlu0 %v1227, 64
    %v1236 = vpop.permute.xlu0 %1235
    %1237 = vrot.lane.b32.xlu0 %v1230, 64
    %v1238 = vpop.permute.xlu0 %1237
    %vm1241 = vcmask 654848
    %1242 = vst.msk [vmem:[#allocation2] sm:$0xff] %vm1241, %v1236
    %1243 = vst.msk [vmem:[#allocation2 + $0x8] sm:$0xff] %vm1241, %v1238
    %1244 = vrot.lane.b32.xlu0 %v573, 48
    %v1245 = vpop.permute.xlu0 %1244
    %1246 = vrot.lane.b32.xlu0 %v574, 48
    %v1247 = vpop.permute.xlu0 %1246
    %v1249 = vsel %vm576, %v1245, 0
    %v1252 = vsel %vm576, %v1247, 0
    %1254 = vmatprep.subr.bf16.mxu0 0
    %1255 = vmatpush1.bf16.xpose.msra.mxu0 %v1252
    %1256 = vmatprep.subr.bf16.mxu0 0
    %1257 = vmatpush1.bf16.xpose.msra.mxu0 0
    %1258 = vmatprep.subr.bf16.mxu0 0
    %1259 = vmatpush1.bf16.xpose.msra.mxu0 0
    %1260 = vmatprep.subr.bf16.mxu0 0
    %1261 = vmatpush1.bf16.xpose.msra.mxu0 0
    %1262 = vmatprep.subr.bf16.mxu0 0
    %1263 = vmatpush1.bf16.xpose.msra.mxu0 0
    %1264 = vmatprep.subr.bf16.mxu0 0
    %1265 = vmatpush1.bf16.xpose.msra.mxu0 0
    %1266 = vmatprep.subr.bf16.mxu0 0
    %1267 = vmatpush1.bf16.xpose.msra.mxu0 0
    %1268 = vmatprep.subr.bf16.mxu0 0
    %1269 = vmatpush1.bf16.xpose.msra.mxu0 0
    %1270 = vmatprep.subr.bf16.mxu0 0
    %1271 = vmatpush1.bf16.xpose.msra.mxu0 0
    %1272 = vmatprep.subr.bf16.mxu0 0
    %1273 = vmatpush1.bf16.xpose.msra.mxu0 0
    %1274 = vmatprep.subr.bf16.mxu0 0
    %1275 = vmatpush1.bf16.xpose.msra.mxu0 0
    %1276 = vmatprep.subr.bf16.mxu0 0
    %1277 = vmatpush1.bf16.xpose.msra.mxu0 0
    %1278 = vmatprep.subr.bf16.mxu0 0
    %1279 = vmatpush1.bf16.xpose.msra.mxu0 0
    %1280 = vmatprep.subr.bf16.mxu0 0
    %1281 = vmatpush1.bf16.xpose.msra.mxu0 0
    %1282 = vmatprep.subr.bf16.mxu0 0
    %1283 = vmatpush1.bf16.xpose.msra.mxu0 0
    %1284 = vmatprep.subr.bf16.mxu0 0
    %1285 = vmatpush1.bf16.xpose.msra.mxu0 0
    %1286 = vmatprep.mubr.bf16.mxu0 0
    %1287 = vmatmul.mubr.bf16.gmra.mrb[0].mxu0 %v1249
    %v1288 = vpop.f32.mrb[0].mxu0
    %v1289 = vadd.f32 0.0, %v1288
    %v1290 = vpop.f32.mrb[0].mxu0
    %v1291 = vpop.f32.mrb[0].mxu0
    %v1292 = vadd.f32 0.0, %v1291
    %v1293 = vpop.f32.mrb[0].mxu0
    %1294 = vdwg.mxu0
    %v1295 = vmul.f32 %v1289, 0.25
    %v1296 = vmul.f32 %v1292, 0.25
    %v1297 = vadd.f32 %v1295, %v309
    %v1298 = vadd.f32 %v1296, %v310
    %v1299 = vsel %vm576, %v1297, -inf
    %1300 = vmax.xlane.f32.xlu0 %v1299
    %v1301 = vpop.xlane.xlu0 %1300
    %v1302 = vsel %vm576, %v1298, -inf
    %1303 = vmax.xlane.f32.xlu0 %v1302
    %v1304 = vpop.xlane.xlu0 %1303
    %v1305 = vsub.f32 %v1297, %v1301
    %v1306 = vsub.f32 %v1298, %v1304
    %v1307 = vmul.f32 %v1305, 1.442695
    %v1308 = vpow.pop %v1307
    %v1309 = vmul.f32 %v1306, 1.442695
    %v1310 = vpow.pop %v1309
    %v1311 = vsel %vm576, %v1308, 0.0
    %1312 = vadd.xlane.f32.xlu0 %v1311
    %v1313 = vpop.xlane.xlu0 %1312
    %v1314 = vsel %vm576, %v1310, 0.0
    %1315 = vadd.xlane.f32.xlu0 %v1314
    %v1316 = vpop.xlane.xlu0 %1315
    %v1317 = vrcp.pop %v1313
    %v1318 = vrcp.pop %v1316
    %v1319 = vmul.f32 %v1308, %v1317
    %v1320 = vmul.f32 %v1310, %v1318
    %v1321 = vpack.c.bf16 %v1320, %v1319
    %1322 = vrot.lane.b32.xlu0 %v575, 48
    %v1323 = vpop.permute.xlu0 %1322
    %v1326 = vsel %vm576, %v1321, 0
    %1328 = vmatprep.subr.bf16.mxu0 0
    %1329 = vmatpush1.bf16.msra.mxu0 %v1323
    %1330 = vmatprep.subr.bf16.mxu0 0
    %1331 = vmatpush1.bf16.msra.mxu0 0
    %1332 = vmatprep.subr.bf16.mxu0 0
    %1333 = vmatpush1.bf16.msra.mxu0 0
    %1334 = vmatprep.subr.bf16.mxu0 0
    %1335 = vmatpush1.bf16.msra.mxu0 0
    %1336 = vmatprep.subr.bf16.mxu0 0
    %1337 = vmatpush1.bf16.msra.mxu0 0
    %1338 = vmatprep.subr.bf16.mxu0 0
    %1339 = vmatpush1.bf16.msra.mxu0 0
    %1340 = vmatprep.subr.bf16.mxu0 0
    %1341 = vmatpush1.bf16.msra.mxu0 0
    %1342 = vmatprep.subr.bf16.mxu0 0
    %1343 = vmatpush1.bf16.msra.mxu0 0
    %1344 = vmatprep.subr.bf16.mxu0 0
    %1345 = vmatpush1.bf16.msra.mxu0 0
    %1346 = vmatprep.subr.bf16.mxu0 0
    %1347 = vmatpush1.bf16.msra.mxu0 0
    %1348 = vmatprep.subr.bf16.mxu0 0
    %1349 = vmatpush1.bf16.msra.mxu0 0
    %1350 = vmatprep.subr.bf16.mxu0 0
    %1351 = vmatpush1.bf16.msra.mxu0 0
    %1352 = vmatprep.subr.bf16.mxu0 0
    %1353 = vmatpush1.bf16.msra.mxu0 0
    %1354 = vmatprep.subr.bf16.mxu0 0
    %1355 = vmatpush1.bf16.msra.mxu0 0
    %1356 = vmatprep.subr.bf16.mxu0 0
    %1357 = vmatpush1.bf16.msra.mxu0 0
    %1358 = vmatprep.subr.bf16.mxu0 0
    %1359 = vmatpush1.bf16.msra.mxu0 0
    %1360 = vmatprep.mubr.bf16.mxu0 0
    %1361 = vmatmul.mubr.bf16.gmra.mrb[0].mxu0 %v1326
    %v1362 = vpop.f32.mrb[0].mxu0
    %v1363 = vadd.f32 0.0, %v1362
    %v1364 = vpop.f32.mrb[0].mxu0
    %v1365 = vpop.f32.mrb[0].mxu0
    %v1366 = vadd.f32 0.0, %v1365
    %v1367 = vpop.f32.mrb[0].mxu0
    %1368 = vdwg.mxu0
    %1371 = vrot.lane.b32.xlu0 %v1363, 80
    %v1372 = vpop.permute.xlu0 %1371
    %1373 = vrot.lane.b32.xlu0 %v1366, 80
    %v1374 = vpop.permute.xlu0 %1373
    %vm1377 = vcmask 786048
    %1378 = vst.msk [vmem:[#allocation2] sm:$0xff] %vm1377, %v1372
    %1379 = vst.msk [vmem:[#allocation2 + $0x8] sm:$0xff] %vm1377, %v1374
    %1380 = vrot.lane.b32.xlu0 %v573, 32
    %v1381 = vpop.permute.xlu0 %1380
    %1382 = vrot.lane.b32.xlu0 %v574, 32
    %v1383 = vpop.permute.xlu0 %1382
    %v1385 = vsel %vm576, %v1381, 0
    %v1388 = vsel %vm576, %v1383, 0
    %1390 = vmatprep.subr.bf16.mxu0 0
    %1391 = vmatpush1.bf16.xpose.msra.mxu0 %v1388
    %1392 = vmatprep.subr.bf16.mxu0 0
    %1393 = vmatpush1.bf16.xpose.msra.mxu0 0
    %1394 = vmatprep.subr.bf16.mxu0 0
    %1395 = vmatpush1.bf16.xpose.msra.mxu0 0
    %1396 = vmatprep.subr.bf16.mxu0 0
    %1397 = vmatpush1.bf16.xpose.msra.mxu0 0
    %1398 = vmatprep.subr.bf16.mxu0 0
    %1399 = vmatpush1.bf16.xpose.msra.mxu0 0
    %1400 = vmatprep.subr.bf16.mxu0 0
    %1401 = vmatpush1.bf16.xpose.msra.mxu0 0
    %1402 = vmatprep.subr.bf16.mxu0 0
    %1403 = vmatpush1.bf16.xpose.msra.mxu0 0
    %1404 = vmatprep.subr.bf16.mxu0 0
    %1405 = vmatpush1.bf16.xpose.msra.mxu0 0
    %1406 = vmatprep.subr.bf16.mxu0 0
    %1407 = vmatpush1.bf16.xpose.msra.mxu0 0
    %1408 = vmatprep.subr.bf16.mxu0 0
    %1409 = vmatpush1.bf16.xpose.msra.mxu0 0
    %1410 = vmatprep.subr.bf16.mxu0 0
    %1411 = vmatpush1.bf16.xpose.msra.mxu0 0
    %1412 = vmatprep.subr.bf16.mxu0 0
    %1413 = vmatpush1.bf16.xpose.msra.mxu0 0
    %1414 = vmatprep.subr.bf16.mxu0 0
    %1415 = vmatpush1.bf16.xpose.msra.mxu0 0
    %1416 = vmatprep.subr.bf16.mxu0 0
    %1417 = vmatpush1.bf16.xpose.msra.mxu0 0
    %1418 = vmatprep.subr.bf16.mxu0 0
    %1419 = vmatpush1.bf16.xpose.msra.mxu0 0
    %1420 = vmatprep.subr.bf16.mxu0 0
    %1421 = vmatpush1.bf16.xpose.msra.mxu0 0
    %1422 = vmatprep.mubr.bf16.mxu0 0
    %1423 = vmatmul.mubr.bf16.gmra.mrb[0].mxu0 %v1385
    %v1424 = vpop.f32.mrb[0].mxu0
    %v1425 = vadd.f32 0.0, %v1424
    %v1426 = vpop.f32.mrb[0].mxu0
    %v1427 = vpop.f32.mrb[0].mxu0
    %v1428 = vadd.f32 0.0, %v1427
    %v1429 = vpop.f32.mrb[0].mxu0
    %1430 = vdwg.mxu0
    %v1431 = vmul.f32 %v1425, 0.25
    %v1432 = vmul.f32 %v1428, 0.25
    %v1433 = vadd.f32 %v1431, %v309
    %v1434 = vadd.f32 %v1432, %v310
    %v1435 = vsel %vm576, %v1433, -inf
    %1436 = vmax.xlane.f32.xlu0 %v1435
    %v1437 = vpop.xlane.xlu0 %1436
    %v1438 = vsel %vm576, %v1434, -inf
    %1439 = vmax.xlane.f32.xlu0 %v1438
    %v1440 = vpop.xlane.xlu0 %1439
    %v1441 = vsub.f32 %v1433, %v1437
    %v1442 = vsub.f32 %v1434, %v1440
    %v1443 = vmul.f32 %v1441, 1.442695
    %v1444 = vpow.pop %v1443
    %v1445 = vmul.f32 %v1442, 1.442695
    %v1446 = vpow.pop %v1445
    %v1447 = vsel %vm576, %v1444, 0.0
    %1448 = vadd.xlane.f32.xlu0 %v1447
    %v1449 = vpop.xlane.xlu0 %1448
    %v1450 = vsel %vm576, %v1446, 0.0
    %1451 = vadd.xlane.f32.xlu0 %v1450
    %v1452 = vpop.xlane.xlu0 %1451
    %v1453 = vrcp.pop %v1449
    %v1454 = vrcp.pop %v1452
    %v1455 = vmul.f32 %v1444, %v1453
    %v1456 = vmul.f32 %v1446, %v1454
    %v1457 = vpack.c.bf16 %v1456, %v1455
    %1458 = vrot.lane.b32.xlu0 %v575, 32
    %v1459 = vpop.permute.xlu0 %1458
    %v1462 = vsel %vm576, %v1457, 0
    %1464 = vmatprep.subr.bf16.mxu0 0
    %1465 = vmatpush1.bf16.msra.mxu0 %v1459
    %1466 = vmatprep.subr.bf16.mxu0 0
    %1467 = vmatpush1.bf16.msra.mxu0 0
    %1468 = vmatprep.subr.bf16.mxu0 0
    %1469 = vmatpush1.bf16.msra.mxu0 0
    %1470 = vmatprep.subr.bf16.mxu0 0
    %1471 = vmatpush1.bf16.msra.mxu0 0
    %1472 = vmatprep.subr.bf16.mxu0 0
    %1473 = vmatpush1.bf16.msra.mxu0 0
    %1474 = vmatprep.subr.bf16.mxu0 0
    %1475 = vmatpush1.bf16.msra.mxu0 0
    %1476 = vmatprep.subr.bf16.mxu0 0
    %1477 = vmatpush1.bf16.msra.mxu0 0
    %1478 = vmatprep.subr.bf16.mxu0 0
    %1479 = vmatpush1.bf16.msra.mxu0 0
    %1480 = vmatprep.subr.bf16.mxu0 0
    %1481 = vmatpush1.bf16.msra.mxu0 0
    %1482 = vmatprep.subr.bf16.mxu0 0
    %1483 = vmatpush1.bf16.msra.mxu0 0
    %1484 = vmatprep.subr.bf16.mxu0 0
    %1485 = vmatpush1.bf16.msra.mxu0 0
    %1486 = vmatprep.subr.bf16.mxu0 0
    %1487 = vmatpush1.bf16.msra.mxu0 0
    %1488 = vmatprep.subr.bf16.mxu0 0
    %1489 = vmatpush1.bf16.msra.mxu0 0
    %1490 = vmatprep.subr.bf16.mxu0 0
    %1491 = vmatpush1.bf16.msra.mxu0 0
    %1492 = vmatprep.subr.bf16.mxu0 0
    %1493 = vmatpush1.bf16.msra.mxu0 0
    %1494 = vmatprep.subr.bf16.mxu0 0
    %1495 = vmatpush1.bf16.msra.mxu0 0
    %1496 = vmatprep.mubr.bf16.mxu0 0
    %1497 = vmatmul.mubr.bf16.gmra.mrb[0].mxu0 %v1462
    %v1498 = vpop.f32.mrb[0].mxu0
    %v1499 = vadd.f32 0.0, %v1498
    %v1500 = vpop.f32.mrb[0].mxu0
    %v1501 = vpop.f32.mrb[0].mxu0
    %v1502 = vadd.f32 0.0, %v1501
    %v1503 = vpop.f32.mrb[0].mxu0
    %1504 = vdwg.mxu0
    %1507 = vrot.lane.b32.xlu0 %v1499, 96
    %v1508 = vpop.permute.xlu0 %1507
    %1509 = vrot.lane.b32.xlu0 %v1502, 96
    %v1510 = vpop.permute.xlu0 %1509
    %vm1513 = vcmask 917248
    %1514 = vst.msk [vmem:[#allocation2] sm:$0xff] %vm1513, %v1508
    %1515 = vst.msk [vmem:[#allocation2 + $0x8] sm:$0xff] %vm1513, %v1510
    %1516 = vrot.lane.b32.xlu0 %v573, 16
    %v1517 = vpop.permute.xlu0 %1516
    %1518 = vrot.lane.b32.xlu0 %v574, 16
    %v1519 = vpop.permute.xlu0 %1518
    %v1521 = vsel %vm576, %v1517, 0
    %v1524 = vsel %vm576, %v1519, 0
    %1526 = vmatprep.subr.bf16.mxu0 0
    %1527 = vmatpush1.bf16.xpose.msra.mxu0 %v1524
    %1528 = vmatprep.subr.bf16.mxu0 0
    %1529 = vmatpush1.bf16.xpose.msra.mxu0 0
    %1530 = vmatprep.subr.bf16.mxu0 0
    %1531 = vmatpush1.bf16.xpose.msra.mxu0 0
    %1532 = vmatprep.subr.bf16.mxu0 0
    %1533 = vmatpush1.bf16.xpose.msra.mxu0 0
    %1534 = vmatprep.subr.bf16.mxu0 0
    %1535 = vmatpush1.bf16.xpose.msra.mxu0 0
    %1536 = vmatprep.subr.bf16.mxu0 0
    %1537 = vmatpush1.bf16.xpose.msra.mxu0 0
    %1538 = vmatprep.subr.bf16.mxu0 0
    %1539 = vmatpush1.bf16.xpose.msra.mxu0 0
    %1540 = vmatprep.subr.bf16.mxu0 0
    %1541 = vmatpush1.bf16.xpose.msra.mxu0 0
    %1542 = vmatprep.subr.bf16.mxu0 0
    %1543 = vmatpush1.bf16.xpose.msra.mxu0 0
    %1544 = vmatprep.subr.bf16.mxu0 0
    %1545 = vmatpush1.bf16.xpose.msra.mxu0 0
    %1546 = vmatprep.subr.bf16.mxu0 0
    %1547 = vmatpush1.bf16.xpose.msra.mxu0 0
    %1548 = vmatprep.subr.bf16.mxu0 0
    %1549 = vmatpush1.bf16.xpose.msra.mxu0 0
    %1550 = vmatprep.subr.bf16.mxu0 0
    %1551 = vmatpush1.bf16.xpose.msra.mxu0 0
    %1552 = vmatprep.subr.bf16.mxu0 0
    %1553 = vmatpush1.bf16.xpose.msra.mxu0 0
    %1554 = vmatprep.subr.bf16.mxu0 0
    %1555 = vmatpush1.bf16.xpose.msra.mxu0 0
    %1556 = vmatprep.subr.bf16.mxu0 0
    %1557 = vmatpush1.bf16.xpose.msra.mxu0 0
    %1558 = vmatprep.mubr.bf16.mxu0 0
    %1559 = vmatmul.mubr.bf16.gmra.mrb[0].mxu0 %v1521
    %v1560 = vpop.f32.mrb[0].mxu0
    %v1561 = vadd.f32 0.0, %v1560
    %v1562 = vpop.f32.mrb[0].mxu0
    %v1563 = vpop.f32.mrb[0].mxu0
    %v1564 = vadd.f32 0.0, %v1563
    %v1565 = vpop.f32.mrb[0].mxu0
    %1566 = vdwg.mxu0
    %v1567 = vmul.f32 %v1561, 0.25
    %v1568 = vmul.f32 %v1564, 0.25
    %v1569 = vadd.f32 %v1567, %v309
    %v1570 = vadd.f32 %v1568, %v310
    %v1571 = vsel %vm576, %v1569, -inf
    %1572 = vmax.xlane.f32.xlu0 %v1571
    %v1573 = vpop.xlane.xlu0 %1572
    %v1574 = vsel %vm576, %v1570, -inf
    %1575 = vmax.xlane.f32.xlu0 %v1574
    %v1576 = vpop.xlane.xlu0 %1575
    %v1577 = vsub.f32 %v1569, %v1573
    %v1578 = vsub.f32 %v1570, %v1576
    %v1579 = vmul.f32 %v1577, 1.442695
    %v1580 = vpow.pop %v1579
    %v1581 = vmul.f32 %v1578, 1.442695
    %v1582 = vpow.pop %v1581
    %v1583 = vsel %vm576, %v1580, 0.0
    %1584 = vadd.xlane.f32.xlu0 %v1583
    %v1585 = vpop.xlane.xlu0 %1584
    %v1586 = vsel %vm576, %v1582, 0.0
    %1587 = vadd.xlane.f32.xlu0 %v1586
    %v1588 = vpop.xlane.xlu0 %1587
    %v1589 = vrcp.pop %v1585
    %v1590 = vrcp.pop %v1588
    %v1591 = vmul.f32 %v1580, %v1589
    %v1592 = vmul.f32 %v1582, %v1590
    %v1593 = vpack.c.bf16 %v1592, %v1591
    %1594 = vrot.lane.b32.xlu0 %v575, 16
    %v1595 = vpop.permute.xlu0 %1594
    %v1598 = vsel %vm576, %v1593, 0
    %1600 = vmatprep.subr.bf16.mxu0 0
    %1601 = vmatpush1.bf16.msra.mxu0 %v1595
    %1602 = vmatprep.subr.bf16.mxu0 0
    %1603 = vmatpush1.bf16.msra.mxu0 0
    %1604 = vmatprep.subr.bf16.mxu0 0
    %1605 = vmatpush1.bf16.msra.mxu0 0
    %1606 = vmatprep.subr.bf16.mxu0 0
    %1607 = vmatpush1.bf16.msra.mxu0 0
    %1608 = vmatprep.subr.bf16.mxu0 0
    %1609 = vmatpush1.bf16.msra.mxu0 0
    %1610 = vmatprep.subr.bf16.mxu0 0
    %1611 = vmatpush1.bf16.msra.mxu0 0
    %1612 = vmatprep.subr.bf16.mxu0 0
    %1613 = vmatpush1.bf16.msra.mxu0 0
    %1614 = vmatprep.subr.bf16.mxu0 0
    %1615 = vmatpush1.bf16.msra.mxu0 0
    %1616 = vmatprep.subr.bf16.mxu0 0
    %1617 = vmatpush1.bf16.msra.mxu0 0
    %1618 = vmatprep.subr.bf16.mxu0 0
    %1619 = vmatpush1.bf16.msra.mxu0 0
    %1620 = vmatprep.subr.bf16.mxu0 0
    %1621 = vmatpush1.bf16.msra.mxu0 0
    %1622 = vmatprep.subr.bf16.mxu0 0
    %1623 = vmatpush1.bf16.msra.mxu0 0
    %1624 = vmatprep.subr.bf16.mxu0 0
    %1625 = vmatpush1.bf16.msra.mxu0 0
    %1626 = vmatprep.subr.bf16.mxu0 0
    %1627 = vmatpush1.bf16.msra.mxu0 0
    %1628 = vmatprep.subr.bf16.mxu0 0
    %1629 = vmatpush1.bf16.msra.mxu0 0
    %1630 = vmatprep.subr.bf16.mxu0 0
    %1631 = vmatpush1.bf16.msra.mxu0 0
    %1632 = vmatprep.mubr.bf16.mxu0 0
    %1633 = vmatmul.mubr.bf16.gmra.mrb[0].mxu0 %v1598
    %v1634 = vpop.f32.mrb[0].mxu0
    %v1635 = vadd.f32 0.0, %v1634
    %v1636 = vpop.f32.mrb[0].mxu0
    %v1637 = vpop.f32.mrb[0].mxu0
    %v1638 = vadd.f32 0.0, %v1637
    %v1639 = vpop.f32.mrb[0].mxu0
    %1640 = vdwg.mxu0
    %1643 = vrot.lane.b32.xlu0 %v1635, 112
    %v1644 = vpop.permute.xlu0 %1643
    %1645 = vrot.lane.b32.xlu0 %v1638, 112
    %v1646 = vpop.permute.xlu0 %1645
    %vm1649 = vcmask 1048448
    %1650 = vst.msk [vmem:[#allocation2] sm:$0xff] %vm1649, %v1644
    %1651 = vst.msk [vmem:[#allocation2 + $0x8] sm:$0xff] %vm1649, %v1646
    %v1652 = vld [vmem:[#allocation2] sm:$0xff]
    %v1653 = vld [vmem:[#allocation2 + $0x8] sm:$0xff]
    %v1654 = vpack.c.bf16 %v1653, %v1652
    %v1655 = vld [vmem:[%s7] sm:$0xf]
    %v1656 = vld [vmem:[%s7 + $0x4] sm:$0xf]
    %v1657 = vld [vmem:[%s7 + $0x8] sm:$0xf]
    %v1658 = vld [vmem:[%s7 + $0xc] sm:$0xf]
    %v1659 = vld [vmem:[%s7 + $0x10] sm:$0xf]
    %v1660 = vld [vmem:[%s7 + $0x14] sm:$0xf]
    %v1661 = vld [vmem:[%s7 + $0x18] sm:$0xf]
    %v1662 = vld [vmem:[%s7 + $0x1c] sm:$0xf]
    %v1663 = vld [vmem:[%s7 + $0x20] sm:$0xf]
    %v1664 = vld [vmem:[%s7 + $0x24] sm:$0xf]
    %v1665 = vld [vmem:[%s7 + $0x28] sm:$0xf]
    %v1666 = vld [vmem:[%s7 + $0x2c] sm:$0xf]
    %v1667 = vld [vmem:[%s7 + $0x30] sm:$0xf]
    %v1668 = vld [vmem:[%s7 + $0x34] sm:$0xf]
    %v1669 = vld [vmem:[%s7 + $0x38] sm:$0xf]
    %v1670 = vld [vmem:[%s7 + $0x3c] sm:$0xf]
    %v1671 = vld [vmem:[%s8] sm:$0x1]
    %v1673 = vlaneseq
    %v1674 = vshrl.u32 %v1673, 7
    %v1675 = vsub.s32 0, %v1674
    %v1676 = vrot.slane %v1671, %v1675
    %v1694 = vunpack.c.l.b16 %v1655
    %v1695 = vunpack.c.l.b16 %v1656
    %v1696 = vunpack.c.l.b16 %v1657
    %v1697 = vunpack.c.l.b16 %v1658
    %v1698 = vunpack.c.l.b16 %v1659
    %v1699 = vunpack.c.l.b16 %v1660
    %v1700 = vunpack.c.l.b16 %v1661
    %v1701 = vunpack.c.l.b16 %v1662
    %v1702 = vunpack.c.l.b16 %v1663
    %v1703 = vunpack.c.l.b16 %v1664
    %v1704 = vunpack.c.l.b16 %v1665
    %v1705 = vunpack.c.l.b16 %v1666
    %v1706 = vunpack.c.l.b16 %v1667
    %v1707 = vunpack.c.l.b16 %v1668
    %v1708 = vunpack.c.l.b16 %v1669
    %v1709 = vunpack.c.l.b16 %v1670
    %v1710 = vpack.c.b16 %v1695, %v1694
    %v1711 = vpack.c.b16 %v1697, %v1696
    %v1712 = vpack.c.b16 %v1699, %v1698
    %v1713 = vpack.c.b16 %v1701, %v1700
    %v1714 = vpack.c.b16 %v1703, %v1702
    %v1715 = vpack.c.b16 %v1705, %v1704
    %v1716 = vpack.c.b16 %v1707, %v1706
    %v1717 = vpack.c.b16 %v1709, %v1708
    %1726 = vmatprep.subr.bf16.mxu0 0
    %1727 = vmatpush1.bf16.msra.mxu0 %v1710
    %1728 = vmatprep.subr.bf16.mxu0 0
    %1729 = vmatpush1.bf16.msra.mxu0 %v1711
    %1730 = vmatprep.subr.bf16.mxu0 0
    %1731 = vmatpush1.bf16.msra.mxu0 %v1712
    %1732 = vmatprep.subr.bf16.mxu0 0
    %1733 = vmatpush1.bf16.msra.mxu0 %v1713
    %1734 = vmatprep.subr.bf16.mxu0 0
    %1735 = vmatpush1.bf16.msra.mxu0 %v1714
    %1736 = vmatprep.subr.bf16.mxu0 0
    %1737 = vmatpush1.bf16.msra.mxu0 %v1715
    %1738 = vmatprep.subr.bf16.mxu0 0
    %1739 = vmatpush1.bf16.msra.mxu0 %v1716
    %1740 = vmatprep.subr.bf16.mxu0 0
    %1741 = vmatpush1.bf16.msra.mxu0 %v1717
    %1742 = vmatprep.subr.bf16.mxu0 0
    %1743 = vmatpush1.bf16.msra.mxu0 0
    %1744 = vmatprep.subr.bf16.mxu0 0
    %1745 = vmatpush1.bf16.msra.mxu0 0
    %1746 = vmatprep.subr.bf16.mxu0 0
    %1747 = vmatpush1.bf16.msra.mxu0 0
    %1748 = vmatprep.subr.bf16.mxu0 0
    %1749 = vmatpush1.bf16.msra.mxu0 0
    %1750 = vmatprep.subr.bf16.mxu0 0
    %1751 = vmatpush1.bf16.msra.mxu0 0
    %1752 = vmatprep.subr.bf16.mxu0 0
    %1753 = vmatpush1.bf16.msra.mxu0 0
    %1754 = vmatprep.subr.bf16.mxu0 0
    %1755 = vmatpush1.bf16.msra.mxu0 0
    %1756 = vmatprep.subr.bf16.mxu0 0
    %1757 = vmatpush1.bf16.msra.mxu0 0
    %1758 = vmatprep.mubr.bf16.mxu0 0
    %1759 = vmatmul.mubr.bf16.gmra.mrb[0].mxu0 %v1654
    %v1760 = vpop.f32.mrb[0].mxu0
    %v1761 = vadd.f32 %v1676, %v1760
    %v1762 = vpop.f32.mrb[0].mxu0
    %v1763 = vpop.f32.mrb[0].mxu0
    %v1764 = vadd.f32 %v1676, %v1763
    %v1765 = vpop.f32.mrb[0].mxu0
    %1766 = vdwg.mxu0
    %v1767 = vadd.f32 %v303, %v1761
    %v1768 = vadd.f32 %v306, %v1764
    %v1769 = vld [vmem:[%s9] sm:$0x1]
    %v1770 = vld [vmem:[%s10] sm:$0x1]
    %1771 = vadd.xlane.f32.xlu0 %v1767
    %v1772 = vpop.xlane.xlu0 %1771
    %1773 = vadd.xlane.f32.xlu0 %v1768
    %v1774 = vpop.xlane.xlu0 %1773
    %v1775 = vrcp.pop 128.0
    %v1776 = vmul.f32 %v1772, %v1775
    %v1777 = vmul.f32 %v1774, %v1775
    %v1778 = vsub.f32 %v1767, %v1776
    %v1779 = vsub.f32 %v1768, %v1777
    %v1780 = vmul.f32 %v1778, %v1778
    %v1781 = vmul.f32 %v1779, %v1779
    %1782 = vadd.xlane.f32.xlu0 %v1780
    %v1783 = vpop.xlane.xlu0 %1782
    %1784 = vadd.xlane.f32.xlu0 %v1781
    %v1785 = vpop.xlane.xlu0 %1784
    %v1786 = vmul.f32 %v1783, %v1775
    %v1787 = vmul.f32 %v1785, %v1775
    %v1788 = vadd.f32 %v1786, 1e-05
    %v1789 = vadd.f32 %v1787, 1e-05
    %v1790 = vrsqrt.pop %v1788
    %v1791 = vrsqrt.pop %v1789
    %v1792 = vmul.f32 %v1778, %v1790
    %v1793 = vmul.f32 %v1779, %v1791
    %v1795 = vlaneseq
    %v1796 = vshrl.u32 %v1795, 7
    %v1797 = vsub.s32 0, %v1796
    %v1798 = vrot.slane %v1769, %v1797
    %v1800 = vmul.f32 %v1792, %v1798
    %v1801 = vmul.f32 %v1793, %v1798
    %v1803 = vlaneseq
    %v1804 = vshrl.u32 %v1803, 7
    %v1805 = vsub.s32 0, %v1804
    %v1806 = vrot.slane %v1770, %v1805
    %v1808 = vadd.f32 %v1800, %v1806
    %v1809 = vadd.f32 %v1801, %v1806
    %v1810 = vpack.c.bf16 %v1809, %v1808
    %v1811 = vld [vmem:[%s11] sm:$0xff]
    %v1812 = vld [vmem:[%s11 + $0x8] sm:$0xff]
    %v1813 = vld [vmem:[%s11 + $0x10] sm:$0xff]
    %v1814 = vld [vmem:[%s11 + $0x18] sm:$0xff]
    %v1815 = vld [vmem:[%s11 + $0x20] sm:$0xff]
    %v1816 = vld [vmem:[%s11 + $0x28] sm:$0xff]
    %v1817 = vld [vmem:[%s11 + $0x30] sm:$0xff]
    %v1818 = vld [vmem:[%s11 + $0x38] sm:$0xff]
    %v1819 = vld [vmem:[%s11 + $0x40] sm:$0xff]
    %v1820 = vld [vmem:[%s11 + $0x48] sm:$0xff]
    %v1821 = vld [vmem:[%s11 + $0x50] sm:$0xff]
    %v1822 = vld [vmem:[%s11 + $0x58] sm:$0xff]
    %v1823 = vld [vmem:[%s11 + $0x60] sm:$0xff]
    %v1824 = vld [vmem:[%s11 + $0x68] sm:$0xff]
    %v1825 = vld [vmem:[%s11 + $0x70] sm:$0xff]
    %v1826 = vld [vmem:[%s11 + $0x78] sm:$0xff]
    %v1827 = vld [vmem:[%s11 + $0x80] sm:$0xff]
    %v1828 = vld [vmem:[%s11 + $0x88] sm:$0xff]
    %v1829 = vld [vmem:[%s11 + $0x90] sm:$0xff]
    %v1830 = vld [vmem:[%s11 + $0x98] sm:$0xff]
    %v1831 = vld [vmem:[%s11 + $0xa0] sm:$0xff]
    %v1832 = vld [vmem:[%s11 + $0xa8] sm:$0xff]
    %v1833 = vld [vmem:[%s11 + $0xb0] sm:$0xff]
    %v1834 = vld [vmem:[%s11 + $0xb8] sm:$0xff]
    %v1835 = vld [vmem:[%s11 + $0xc0] sm:$0xff]
    %v1836 = vld [vmem:[%s11 + $0xc8] sm:$0xff]
    %v1837 = vld [vmem:[%s11 + $0xd0] sm:$0xff]
    %v1838 = vld [vmem:[%s11 + $0xd8] sm:$0xff]
    %v1839 = vld [vmem:[%s11 + $0xe0] sm:$0xff]
    %v1840 = vld [vmem:[%s11 + $0xe8] sm:$0xff]
    %v1841 = vld [vmem:[%s11 + $0xf0] sm:$0xff]
    %v1842 = vld [vmem:[%s11 + $0xf8] sm:$0xff]
    %v1843 = vld [vmem:[%s11 + $0x100] sm:$0xff]
    %v1844 = vld [vmem:[%s11 + $0x108] sm:$0xff]
    %v1845 = vld [vmem:[%s11 + $0x110] sm:$0xff]
    %v1846 = vld [vmem:[%s11 + $0x118] sm:$0xff]
    %v1847 = vld [vmem:[%s11 + $0x120] sm:$0xff]
    %v1848 = vld [vmem:[%s11 + $0x128] sm:$0xff]
    %v1849 = vld [vmem:[%s11 + $0x130] sm:$0xff]
    %v1850 = vld [vmem:[%s11 + $0x138] sm:$0xff]
    %v1851 = vld [vmem:[%s11 + $0x140] sm:$0xff]
    %v1852 = vld [vmem:[%s11 + $0x148] sm:$0xff]
    %v1853 = vld [vmem:[%s11 + $0x150] sm:$0xff]
    %v1854 = vld [vmem:[%s11 + $0x158] sm:$0xff]
    %v1855 = vld [vmem:[%s11 + $0x160] sm:$0xff]
    %v1856 = vld [vmem:[%s11 + $0x168] sm:$0xff]
    %v1857 = vld [vmem:[%s11 + $0x170] sm:$0xff]
    %v1858 = vld [vmem:[%s11 + $0x178] sm:$0xff]
    %v1859 = vld [vmem:[%s11 + $0x180] sm:$0xff]
    %v1860 = vld [vmem:[%s11 + $0x188] sm:$0xff]
    %v1861 = vld [vmem:[%s11 + $0x190] sm:$0xff]
    %v1862 = vld [vmem:[%s11 + $0x198] sm:$0xff]
    %v1863 = vld [vmem:[%s11 + $0x1a0] sm:$0xff]
    %v1864 = vld [vmem:[%s11 + $0x1a8] sm:$0xff]
    %v1865 = vld [vmem:[%s11 + $0x1b0] sm:$0xff]
    %v1866 = vld [vmem:[%s11 + $0x1b8] sm:$0xff]
    %v1867 = vld [vmem:[%s11 + $0x1c0] sm:$0xff]
    %v1868 = vld [vmem:[%s11 + $0x1c8] sm:$0xff]
    %v1869 = vld [vmem:[%s11 + $0x1d0] sm:$0xff]
    %v1870 = vld [vmem:[%s11 + $0x1d8] sm:$0xff]
    %v1871 = vld [vmem:[%s11 + $0x1e0] sm:$0xff]
    %v1872 = vld [vmem:[%s11 + $0x1e8] sm:$0xff]
    %v1873 = vld [vmem:[%s11 + $0x1f0] sm:$0xff]
    %v1874 = vld [vmem:[%s11 + $0x1f8] sm:$0xff]
    %v1875 = vld [vmem:[%s12] sm:$0xff]
    %v1877 = vlaneseq
    %v1878 = vshrl.u32 %v1877, 7
    %v1879 = vsub.s32 0, %v1878
    %v1880 = vrot.slane %v1875, %v1879
    %v1881 = vlaneseq
    %v1882 = vshrl.u32 %v1881, 7
    %v1883 = vsub.s32 1, %v1882
    %v1884 = vrot.slane %v1875, %v1883
    %v1885 = vlaneseq
    %v1886 = vshrl.u32 %v1885, 7
    %v1887 = vsub.s32 2, %v1886
    %v1888 = vrot.slane %v1875, %v1887
    %v1889 = vlaneseq
    %v1890 = vshrl.u32 %v1889, 7
    %v1891 = vsub.s32 3, %v1890
    %v1892 = vrot.slane %v1875, %v1891
    %v1893 = vlaneseq
    %v1894 = vshrl.u32 %v1893, 7
    %v1895 = vsub.s32 4, %v1894
    %v1896 = vrot.slane %v1875, %v1895
    %v1897 = vlaneseq
    %v1898 = vshrl.u32 %v1897, 7
    %v1899 = vsub.s32 5, %v1898
    %v1900 = vrot.slane %v1875, %v1899
    %v1901 = vlaneseq
    %v1902 = vshrl.u32 %v1901, 7
    %v1903 = vsub.s32 6, %v1902
    %v1904 = vrot.slane %v1875, %v1903
    %v1905 = vlaneseq
    %v1906 = vshrl.u32 %v1905, 7
    %v1907 = vsub.s32 7, %v1906
    %v1908 = vrot.slane %v1875, %v1907
    %v1981 = vunpack.c.l.b16 %v1811
    %v1982 = vunpack.c.h.b16 %v1811
    %v1983 = vunpack.c.l.b16 %v1812
    %v1984 = vunpack.c.h.b16 %v1812
    %v1985 = vunpack.c.l.b16 %v1813
    %v1986 = vunpack.c.h.b16 %v1813
    %v1987 = vunpack.c.l.b16 %v1814
    %v1988 = vunpack.c.h.b16 %v1814
    %v1989 = vunpack.c.l.b16 %v1815
    %v1990 = vunpack.c.h.b16 %v1815
    %v1991 = vunpack.c.l.b16 %v1816
    %v1992 = vunpack.c.h.b16 %v1816
    %v1993 = vunpack.c.l.b16 %v1817
    %v1994 = vunpack.c.h.b16 %v1817
    %v1995 = vunpack.c.l.b16 %v1818
    %v1996 = vunpack.c.h.b16 %v1818
    %v1997 = vunpack.c.l.b16 %v1819
    %v1998 = vunpack.c.h.b16 %v1819
    %v1999 = vunpack.c.l.b16 %v1820
    %v2000 = vunpack.c.h.b16 %v1820
    %v2001 = vunpack.c.l.b16 %v1821
    %v2002 = vunpack.c.h.b16 %v1821
    %v2003 = vunpack.c.l.b16 %v1822
    %v2004 = vunpack.c.h.b16 %v1822
    %v2005 = vunpack.c.l.b16 %v1823
    %v2006 = vunpack.c.h.b16 %v1823
    %v2007 = vunpack.c.l.b16 %v1824
    %v2008 = vunpack.c.h.b16 %v1824
    %v2009 = vunpack.c.l.b16 %v1825
    %v2010 = vunpack.c.h.b16 %v1825
    %v2011 = vunpack.c.l.b16 %v1826
    %v2012 = vunpack.c.h.b16 %v1826
    %v2013 = vunpack.c.l.b16 %v1827
    %v2014 = vunpack.c.h.b16 %v1827
    %v2015 = vunpack.c.l.b16 %v1828
    %v2016 = vunpack.c.h.b16 %v1828
    %v2017 = vunpack.c.l.b16 %v1829
    %v2018 = vunpack.c.h.b16 %v1829
    %v2019 = vunpack.c.l.b16 %v1830
    %v2020 = vunpack.c.h.b16 %v1830
    %v2021 = vunpack.c.l.b16 %v1831
    %v2022 = vunpack.c.h.b16 %v1831
    %v2023 = vunpack.c.l.b16 %v1832
    %v2024 = vunpack.c.h.b16 %v1832
    %v2025 = vunpack.c.l.b16 %v1833
    %v2026 = vunpack.c.h.b16 %v1833
    %v2027 = vunpack.c.l.b16 %v1834
    %v2028 = vunpack.c.h.b16 %v1834
    %v2029 = vunpack.c.l.b16 %v1835
    %v2030 = vunpack.c.h.b16 %v1835
    %v2031 = vunpack.c.l.b16 %v1836
    %v2032 = vunpack.c.h.b16 %v1836
    %v2033 = vunpack.c.l.b16 %v1837
    %v2034 = vunpack.c.h.b16 %v1837
    %v2035 = vunpack.c.l.b16 %v1838
    %v2036 = vunpack.c.h.b16 %v1838
    %v2037 = vunpack.c.l.b16 %v1839
    %v2038 = vunpack.c.h.b16 %v1839
    %v2039 = vunpack.c.l.b16 %v1840
    %v2040 = vunpack.c.h.b16 %v1840
    %v2041 = vunpack.c.l.b16 %v1841
    %v2042 = vunpack.c.h.b16 %v1841
    %v2043 = vunpack.c.l.b16 %v1842
    %v2044 = vunpack.c.h.b16 %v1842
    %v2045 = vunpack.c.l.b16 %v1843
    %v2046 = vunpack.c.h.b16 %v1843
    %v2047 = vunpack.c.l.b16 %v1844
    %v2048 = vunpack.c.h.b16 %v1844
    %v2049 = vunpack.c.l.b16 %v1845
    %v2050 = vunpack.c.h.b16 %v1845
    %v2051 = vunpack.c.l.b16 %v1846
    %v2052 = vunpack.c.h.b16 %v1846
    %v2053 = vunpack.c.l.b16 %v1847
    %v2054 = vunpack.c.h.b16 %v1847
    %v2055 = vunpack.c.l.b16 %v1848
    %v2056 = vunpack.c.h.b16 %v1848
    %v2057 = vunpack.c.l.b16 %v1849
    %v2058 = vunpack.c.h.b16 %v1849
    %v2059 = vunpack.c.l.b16 %v1850
    %v2060 = vunpack.c.h.b16 %v1850
    %v2061 = vunpack.c.l.b16 %v1851
    %v2062 = vunpack.c.h.b16 %v1851
    %v2063 = vunpack.c.l.b16 %v1852
    %v2064 = vunpack.c.h.b16 %v1852
    %v2065 = vunpack.c.l.b16 %v1853
    %v2066 = vunpack.c.h.b16 %v1853
    %v2067 = vunpack.c.l.b16 %v1854
    %v2068 = vunpack.c.h.b16 %v1854
    %v2069 = vunpack.c.l.b16 %v1855
    %v2070 = vunpack.c.h.b16 %v1855
    %v2071 = vunpack.c.l.b16 %v1856
    %v2072 = vunpack.c.h.b16 %v1856
    %v2073 = vunpack.c.l.b16 %v1857
    %v2074 = vunpack.c.h.b16 %v1857
    %v2075 = vunpack.c.l.b16 %v1858
    %v2076 = vunpack.c.h.b16 %v1858
    %v2077 = vunpack.c.l.b16 %v1859
    %v2078 = vunpack.c.h.b16 %v1859
    %v2079 = vunpack.c.l.b16 %v1860
    %v2080 = vunpack.c.h.b16 %v1860
    %v2081 = vunpack.c.l.b16 %v1861
    %v2082 = vunpack.c.h.b16 %v1861
    %v2083 = vunpack.c.l.b16 %v1862
    %v2084 = vunpack.c.h.b16 %v1862
    %v2085 = vunpack.c.l.b16 %v1863
    %v2086 = vunpack.c.h.b16 %v1863
    %v2087 = vunpack.c.l.b16 %v1864
    %v2088 = vunpack.c.h.b16 %v1864
    %v2089 = vunpack.c.l.b16 %v1865
    %v2090 = vunpack.c.h.b16 %v1865
    %v2091 = vunpack.c.l.b16 %v1866
    %v2092 = vunpack.c.h.b16 %v1866
    %v2093 = vunpack.c.l.b16 %v1867
    %v2094 = vunpack.c.h.b16 %v1867
    %v2095 = vunpack.c.l.b16 %v1868
    %v2096 = vunpack.c.h.b16 %v1868
    %v2097 = vunpack.c.l.b16 %v1869
    %v2098 = vunpack.c.h.b16 %v1869
    %v2099 = vunpack.c.l.b16 %v1870
    %v2100 = vunpack.c.h.b16 %v1870
    %v2101 = vunpack.c.l.b16 %v1871
    %v2102 = vunpack.c.h.b16 %v1871
    %v2103 = vunpack.c.l.b16 %v1872
    %v2104 = vunpack.c.h.b16 %v1872
    %v2105 = vunpack.c.l.b16 %v1873
    %v2106 = vunpack.c.h.b16 %v1873
    %v2107 = vunpack.c.l.b16 %v1874
    %v2108 = vunpack.c.h.b16 %v1874
    %v2109 = vpack.c.b16 %v1989, %v1981
    %v2110 = vpack.c.b16 %v1990, %v1982
    %v2111 = vpack.c.b16 %v1991, %v1983
    %v2112 = vpack.c.b16 %v1992, %v1984
    %v2113 = vpack.c.b16 %v1993, %v1985
    %v2114 = vpack.c.b16 %v1994, %v1986
    %v2115 = vpack.c.b16 %v1995, %v1987
    %v2116 = vpack.c.b16 %v1996, %v1988
    %v2117 = vpack.c.b16 %v2005, %v1997
    %v2118 = vpack.c.b16 %v2006, %v1998
    %v2119 = vpack.c.b16 %v2007, %v1999
    %v2120 = vpack.c.b16 %v2008, %v2000
    %v2121 = vpack.c.b16 %v2009, %v2001
    %v2122 = vpack.c.b16 %v2010, %v2002
    %v2123 = vpack.c.b16 %v2011, %v2003
    %v2124 = vpack.c.b16 %v2012, %v2004
    %v2125 = vpack.c.b16 %v2021, %v2013
    %v2126 = vpack.c.b16 %v2022, %v2014
    %v2127 = vpack.c.b16 %v2023, %v2015
    %v2128 = vpack.c.b16 %v2024, %v2016
    %v2129 = vpack.c.b16 %v2025, %v2017
    %v2130 = vpack.c.b16 %v2026, %v2018
    %v2131 = vpack.c.b16 %v2027, %v2019
    %v2132 = vpack.c.b16 %v2028, %v2020
    %v2133 = vpack.c.b16 %v2037, %v2029
    %v2134 = vpack.c.b16 %v2038, %v2030
    %v2135 = vpack.c.b16 %v2039, %v2031
    %v2136 = vpack.c.b16 %v2040, %v2032
    %v2137 = vpack.c.b16 %v2041, %v2033
    %v2138 = vpack.c.b16 %v2042, %v2034
    %v2139 = vpack.c.b16 %v2043, %v2035
    %v2140 = vpack.c.b16 %v2044, %v2036
    %v2141 = vpack.c.b16 %v2053, %v2045
    %v2142 = vpack.c.b16 %v2054, %v2046
    %v2143 = vpack.c.b16 %v2055, %v2047
    %v2144 = vpack.c.b16 %v2056, %v2048
    %v2145 = vpack.c.b16 %v2057, %v2049
    %v2146 = vpack.c.b16 %v2058, %v2050
    %v2147 = vpack.c.b16 %v2059, %v2051
    %v2148 = vpack.c.b16 %v2060, %v2052
    %v2149 = vpack.c.b16 %v2069, %v2061
    %v2150 = vpack.c.b16 %v2070, %v2062
    %v2151 = vpack.c.b16 %v2071, %v2063
    %v2152 = vpack.c.b16 %v2072, %v2064
    %v2153 = vpack.c.b16 %v2073, %v2065
    %v2154 = vpack.c.b16 %v2074, %v2066
    %v2155 = vpack.c.b16 %v2075, %v2067
    %v2156 = vpack.c.b16 %v2076, %v2068
    %v2157 = vpack.c.b16 %v2085, %v2077
    %v2158 = vpack.c.b16 %v2086, %v2078
    %v2159 = vpack.c.b16 %v2087, %v2079
    %v2160 = vpack.c.b16 %v2088, %v2080
    %v2161 = vpack.c.b16 %v2089, %v2081
    %v2162 = vpack.c.b16 %v2090, %v2082
    %v2163 = vpack.c.b16 %v2091, %v2083
    %v2164 = vpack.c.b16 %v2092, %v2084
    %v2165 = vpack.c.b16 %v2101, %v2093
    %v2166 = vpack.c.b16 %v2102, %v2094
    %v2167 = vpack.c.b16 %v2103, %v2095
    %v2168 = vpack.c.b16 %v2104, %v2096
    %v2169 = vpack.c.b16 %v2105, %v2097
    %v2170 = vpack.c.b16 %v2106, %v2098
    %v2171 = vpack.c.b16 %v2107, %v2099
    %v2172 = vpack.c.b16 %v2108, %v2100
    %2237 = vmatprep.subr.bf16.mxu0 %v2110
    %2238 = vmatpush1.bf16.msra.mxu0 %v2109
    %2239 = vmatprep.subr.bf16.mxu0 %v2118
    %2240 = vmatpush1.bf16.msra.mxu0 %v2117
    %2241 = vmatprep.subr.bf16.mxu0 %v2126
    %2242 = vmatpush1.bf16.msra.mxu0 %v2125
    %2243 = vmatprep.subr.bf16.mxu0 %v2134
    %2244 = vmatpush1.bf16.msra.mxu0 %v2133
    %2245 = vmatprep.subr.bf16.mxu0 %v2142
    %2246 = vmatpush1.bf16.msra.mxu0 %v2141
    %2247 = vmatprep.subr.bf16.mxu0 %v2150
    %2248 = vmatpush1.bf16.msra.mxu0 %v2149
    %2249 = vmatprep.subr.bf16.mxu0 %v2158
    %2250 = vmatpush1.bf16.msra.mxu0 %v2157
    %2251 = vmatprep.subr.bf16.mxu0 %v2166
    %2252 = vmatpush1.bf16.msra.mxu0 %v2165
    %2253 = vmatprep.subr.bf16.mxu0 0
    %2254 = vmatpush1.bf16.msra.mxu0 0
    %2255 = vmatprep.subr.bf16.mxu0 0
    %2256 = vmatpush1.bf16.msra.mxu0 0
    %2257 = vmatprep.subr.bf16.mxu0 0
    %2258 = vmatpush1.bf16.msra.mxu0 0
    %2259 = vmatprep.subr.bf16.mxu0 0
    %2260 = vmatpush1.bf16.msra.mxu0 0
    %2261 = vmatprep.subr.bf16.mxu0 0
    %2262 = vmatpush1.bf16.msra.mxu0 0
    %2263 = vmatprep.subr.bf16.mxu0 0
    %2264 = vmatpush1.bf16.msra.mxu0 0
    %2265 = vmatprep.subr.bf16.mxu0 0
    %2266 = vmatpush1.bf16.msra.mxu0 0
    %2267 = vmatprep.subr.bf16.mxu0 0
    %2268 = vmatpush1.bf16.msra.mxu0 0
    %2269 = vmatprep.mubr.bf16.mxu0 0
    %2270 = vmatmul.mubr.bf16.gmra.mrb[0].mxu0 %v1810
    %v2271 = vpop.f32.mrb[0].mxu0
    %v2272 = vadd.f32 %v1880, %v2271
    %v2273 = vpop.f32.mrb[0].mxu0
    %v2274 = vadd.f32 %v1884, %v2273
    %v2275 = vpop.f32.mrb[0].mxu0
    %v2276 = vadd.f32 %v1880, %v2275
    %v2277 = vpop.f32.mrb[0].mxu0
    %v2278 = vadd.f32 %v1884, %v2277
    %2279 = vdwg.mxu0
    %2280 = vmatprep.subr.bf16.mxu0 %v2112
    %2281 = vmatpush1.bf16.msra.mxu0 %v2111
    %2282 = vmatprep.subr.bf16.mxu0 %v2120
    %2283 = vmatpush1.bf16.msra.mxu0 %v2119
    %2284 = vmatprep.subr.bf16.mxu0 %v2128
    %2285 = vmatpush1.bf16.msra.mxu0 %v2127
    %2286 = vmatprep.subr.bf16.mxu0 %v2136
    %2287 = vmatpush1.bf16.msra.mxu0 %v2135
    %2288 = vmatprep.subr.bf16.mxu0 %v2144
    %2289 = vmatpush1.bf16.msra.mxu0 %v2143
    %2290 = vmatprep.subr.bf16.mxu0 %v2152
    %2291 = vmatpush1.bf16.msra.mxu0 %v2151
    %2292 = vmatprep.subr.bf16.mxu0 %v2160
    %2293 = vmatpush1.bf16.msra.mxu0 %v2159
    %2294 = vmatprep.subr.bf16.mxu0 %v2168
    %2295 = vmatpush1.bf16.msra.mxu0 %v2167
    %2296 = vmatprep.subr.bf16.mxu0 0
    %2297 = vmatpush1.bf16.msra.mxu0 0
    %2298 = vmatprep.subr.bf16.mxu0 0
    %2299 = vmatpush1.bf16.msra.mxu0 0
    %2300 = vmatprep.subr.bf16.mxu0 0
    %2301 = vmatpush1.bf16.msra.mxu0 0
    %2302 = vmatprep.subr.bf16.mxu0 0
    %2303 = vmatpush1.bf16.msra.mxu0 0
    %2304 = vmatprep.subr.bf16.mxu0 0
    %2305 = vmatpush1.bf16.msra.mxu0 0
    %2306 = vmatprep.subr.bf16.mxu0 0
    %2307 = vmatpush1.bf16.msra.mxu0 0
    %2308 = vmatprep.subr.bf16.mxu0 0
    %2309 = vmatpush1.bf16.msra.mxu0 0
    %2310 = vmatprep.subr.bf16.mxu0 0
    %2311 = vmatpush1.bf16.msra.mxu0 0
    %2312 = vmatprep.mubr.bf16.mxu0 0
    %2313 = vmatmul.mubr.bf16.gmra.mrb[0].mxu0 %v1810
    %v2314 = vpop.f32.mrb[0].mxu0
    %v2315 = vadd.f32 %v1888, %v2314
    %v2316 = vpop.f32.mrb[0].mxu0
    %v2317 = vadd.f32 %v1892, %v2316
    %v2318 = vpop.f32.mrb[0].mxu0
    %v2319 = vadd.f32 %v1888, %v2318
    %v2320 = vpop.f32.mrb[0].mxu0
    %v2321 = vadd.f32 %v1892, %v2320
    %2322 = vdwg.mxu0
    %2323 = vmatprep.subr.bf16.mxu0 %v2114
    %2324 = vmatpush1.bf16.msra.mxu0 %v2113
    %2325 = vmatprep.subr.bf16.mxu0 %v2122
    %2326 = vmatpush1.bf16.msra.mxu0 %v2121
    %2327 = vmatprep.subr.bf16.mxu0 %v2130
    %2328 = vmatpush1.bf16.msra.mxu0 %v2129
    %2329 = vmatprep.subr.bf16.mxu0 %v2138
    %2330 = vmatpush1.bf16.msra.mxu0 %v2137
    %2331 = vmatprep.subr.bf16.mxu0 %v2146
    %2332 = vmatpush1.bf16.msra.mxu0 %v2145
    %2333 = vmatprep.subr.bf16.mxu0 %v2154
    %2334 = vmatpush1.bf16.msra.mxu0 %v2153
    %2335 = vmatprep.subr.bf16.mxu0 %v2162
    %2336 = vmatpush1.bf16.msra.mxu0 %v2161
    %2337 = vmatprep.subr.bf16.mxu0 %v2170
    %2338 = vmatpush1.bf16.msra.mxu0 %v2169
    %2339 = vmatprep.subr.bf16.mxu0 0
    %2340 = vmatpush1.bf16.msra.mxu0 0
    %2341 = vmatprep.subr.bf16.mxu0 0
    %2342 = vmatpush1.bf16.msra.mxu0 0
    %2343 = vmatprep.subr.bf16.mxu0 0
    %2344 = vmatpush1.bf16.msra.mxu0 0
    %2345 = vmatprep.subr.bf16.mxu0 0
    %2346 = vmatpush1.bf16.msra.mxu0 0
    %2347 = vmatprep.subr.bf16.mxu0 0
    %2348 = vmatpush1.bf16.msra.mxu0 0
    %2349 = vmatprep.subr.bf16.mxu0 0
    %2350 = vmatpush1.bf16.msra.mxu0 0
    %2351 = vmatprep.subr.bf16.mxu0 0
    %2352 = vmatpush1.bf16.msra.mxu0 0
    %2353 = vmatprep.subr.bf16.mxu0 0
    %2354 = vmatpush1.bf16.msra.mxu0 0
    %2355 = vmatprep.mubr.bf16.mxu0 0
    %2356 = vmatmul.mubr.bf16.gmra.mrb[0].mxu0 %v1810
    %v2357 = vpop.f32.mrb[0].mxu0
    %v2358 = vadd.f32 %v1896, %v2357
    %v2359 = vpop.f32.mrb[0].mxu0
    %v2360 = vadd.f32 %v1900, %v2359
    %v2361 = vpop.f32.mrb[0].mxu0
    %v2362 = vadd.f32 %v1896, %v2361
    %v2363 = vpop.f32.mrb[0].mxu0
    %v2364 = vadd.f32 %v1900, %v2363
    %2365 = vdwg.mxu0
    %2366 = vmatprep.subr.bf16.mxu0 %v2116
    %2367 = vmatpush1.bf16.msra.mxu0 %v2115
    %2368 = vmatprep.subr.bf16.mxu0 %v2124
    %2369 = vmatpush1.bf16.msra.mxu0 %v2123
    %2370 = vmatprep.subr.bf16.mxu0 %v2132
    %2371 = vmatpush1.bf16.msra.mxu0 %v2131
    %2372 = vmatprep.subr.bf16.mxu0 %v2140
    %2373 = vmatpush1.bf16.msra.mxu0 %v2139
    %2374 = vmatprep.subr.bf16.mxu0 %v2148
    %2375 = vmatpush1.bf16.msra.mxu0 %v2147
    %2376 = vmatprep.subr.bf16.mxu0 %v2156
    %2377 = vmatpush1.bf16.msra.mxu0 %v2155
    %2378 = vmatprep.subr.bf16.mxu0 %v2164
    %2379 = vmatpush1.bf16.msra.mxu0 %v2163
    %2380 = vmatprep.subr.bf16.mxu0 %v2172
    %2381 = vmatpush1.bf16.msra.mxu0 %v2171
    %2382 = vmatprep.subr.bf16.mxu0 0
    %2383 = vmatpush1.bf16.msra.mxu0 0
    %2384 = vmatprep.subr.bf16.mxu0 0
    %2385 = vmatpush1.bf16.msra.mxu0 0
    %2386 = vmatprep.subr.bf16.mxu0 0
    %2387 = vmatpush1.bf16.msra.mxu0 0
    %2388 = vmatprep.subr.bf16.mxu0 0
    %2389 = vmatpush1.bf16.msra.mxu0 0
    %2390 = vmatprep.subr.bf16.mxu0 0
    %2391 = vmatpush1.bf16.msra.mxu0 0
    %2392 = vmatprep.subr.bf16.mxu0 0
    %2393 = vmatpush1.bf16.msra.mxu0 0
    %2394 = vmatprep.subr.bf16.mxu0 0
    %2395 = vmatpush1.bf16.msra.mxu0 0
    %2396 = vmatprep.subr.bf16.mxu0 0
    %2397 = vmatpush1.bf16.msra.mxu0 0
    %2398 = vmatprep.mubr.bf16.mxu0 0
    %2399 = vmatmul.mubr.bf16.gmra.mrb[0].mxu0 %v1810
    %v2400 = vpop.f32.mrb[0].mxu0
    %v2401 = vadd.f32 %v1904, %v2400
    %v2402 = vpop.f32.mrb[0].mxu0
    %v2403 = vadd.f32 %v1908, %v2402
    %v2404 = vpop.f32.mrb[0].mxu0
    %v2405 = vadd.f32 %v1904, %v2404
    %v2406 = vpop.f32.mrb[0].mxu0
    %v2407 = vadd.f32 %v1908, %v2406
    %2408 = vdwg.mxu0
    %v2409 = vmax.f32 %v2272, 0.0
    %v2410 = vmax.f32 %v2274, 0.0
    %v2411 = vmax.f32 %v2315, 0.0
    %v2412 = vmax.f32 %v2317, 0.0
    %v2413 = vmax.f32 %v2358, 0.0
    %v2414 = vmax.f32 %v2360, 0.0
    %v2415 = vmax.f32 %v2401, 0.0
    %v2416 = vmax.f32 %v2403, 0.0
    %v2417 = vmax.f32 %v2276, 0.0
    %v2418 = vmax.f32 %v2278, 0.0
    %v2419 = vmax.f32 %v2319, 0.0
    %v2420 = vmax.f32 %v2321, 0.0
    %v2421 = vmax.f32 %v2362, 0.0
    %v2422 = vmax.f32 %v2364, 0.0
    %v2423 = vmax.f32 %v2405, 0.0
    %v2424 = vmax.f32 %v2407, 0.0
    %v2425 = vpack.c.bf16 %v2417, %v2409
    %v2426 = vpack.c.bf16 %v2418, %v2410
    %v2427 = vpack.c.bf16 %v2419, %v2411
    %v2428 = vpack.c.bf16 %v2420, %v2412
    %v2429 = vpack.c.bf16 %v2421, %v2413
    %v2430 = vpack.c.bf16 %v2422, %v2414
    %v2431 = vpack.c.bf16 %v2423, %v2415
    %v2432 = vpack.c.bf16 %v2424, %v2416
    %v2433 = vld [vmem:[%s13] sm:$0xf]
    %v2434 = vld [vmem:[%s13 + $0x4] sm:$0xf]
    %v2435 = vld [vmem:[%s13 + $0x8] sm:$0xf]
    %v2436 = vld [vmem:[%s13 + $0xc] sm:$0xf]
    %v2437 = vld [vmem:[%s13 + $0x10] sm:$0xf]
    %v2438 = vld [vmem:[%s13 + $0x14] sm:$0xf]
    %v2439 = vld [vmem:[%s13 + $0x18] sm:$0xf]
    %v2440 = vld [vmem:[%s13 + $0x1c] sm:$0xf]
    %v2441 = vld [vmem:[%s13 + $0x20] sm:$0xf]
    %v2442 = vld [vmem:[%s13 + $0x24] sm:$0xf]
    %v2443 = vld [vmem:[%s13 + $0x28] sm:$0xf]
    %v2444 = vld [vmem:[%s13 + $0x2c] sm:$0xf]
    %v2445 = vld [vmem:[%s13 + $0x30] sm:$0xf]
    %v2446 = vld [vmem:[%s13 + $0x34] sm:$0xf]
    %v2447 = vld [vmem:[%s13 + $0x38] sm:$0xf]
    %v2448 = vld [vmem:[%s13 + $0x3c] sm:$0xf]
    %v2449 = vld [vmem:[%s13 + $0x40] sm:$0xf]
    %v2450 = vld [vmem:[%s13 + $0x44] sm:$0xf]
    %v2451 = vld [vmem:[%s13 + $0x48] sm:$0xf]
    %v2452 = vld [vmem:[%s13 + $0x4c] sm:$0xf]
    %v2453 = vld [vmem:[%s13 + $0x50] sm:$0xf]
    %v2454 = vld [vmem:[%s13 + $0x54] sm:$0xf]
    %v2455 = vld [vmem:[%s13 + $0x58] sm:$0xf]
    %v2456 = vld [vmem:[%s13 + $0x5c] sm:$0xf]
    %v2457 = vld [vmem:[%s13 + $0x60] sm:$0xf]
    %v2458 = vld [vmem:[%s13 + $0x64] sm:$0xf]
    %v2459 = vld [vmem:[%s13 + $0x68] sm:$0xf]
    %v2460 = vld [vmem:[%s13 + $0x6c] sm:$0xf]
    %v2461 = vld [vmem:[%s13 + $0x70] sm:$0xf]
    %v2462 = vld [vmem:[%s13 + $0x74] sm:$0xf]
    %v2463 = vld [vmem:[%s13 + $0x78] sm:$0xf]
    %v2464 = vld [vmem:[%s13 + $0x7c] sm:$0xf]
    %v2465 = vld [vmem:[%s13 + $0x80] sm:$0xf]
    %v2466 = vld [vmem:[%s13 + $0x84] sm:$0xf]
    %v2467 = vld [vmem:[%s13 + $0x88] sm:$0xf]
    %v2468 = vld [vmem:[%s13 + $0x8c] sm:$0xf]
    %v2469 = vld [vmem:[%s13 + $0x90] sm:$0xf]
    %v2470 = vld [vmem:[%s13 + $0x94] sm:$0xf]
    %v2471 = vld [vmem:[%s13 + $0x98] sm:$0xf]
    %v2472 = vld [vmem:[%s13 + $0x9c] sm:$0xf]
    %v2473 = vld [vmem:[%s13 + $0xa0] sm:$0xf]
    %v2474 = vld [vmem:[%s13 + $0xa4] sm:$0xf]
    %v2475 = vld [vmem:[%s13 + $0xa8] sm:$0xf]
    %v2476 = vld [vmem:[%s13 + $0xac] sm:$0xf]
    %v2477 = vld [vmem:[%s13 + $0xb0] sm:$0xf]
    %v2478 = vld [vmem:[%s13 + $0xb4] sm:$0xf]
    %v2479 = vld [vmem:[%s13 + $0xb8] sm:$0xf]
    %v2480 = vld [vmem:[%s13 + $0xbc] sm:$0xf]
    %v2481 = vld [vmem:[%s13 + $0xc0] sm:$0xf]
    %v2482 = vld [vmem:[%s13 + $0xc4] sm:$0xf]
    %v2483 = vld [vmem:[%s13 + $0xc8] sm:$0xf]
    %v2484 = vld [vmem:[%s13 + $0xcc] sm:$0xf]
    %v2485 = vld [vmem:[%s13 + $0xd0] sm:$0xf]
    %v2486 = vld [vmem:[%s13 + $0xd4] sm:$0xf]
    %v2487 = vld [vmem:[%s13 + $0xd8] sm:$0xf]
    %v2488 = vld [vmem:[%s13 + $0xdc] sm:$0xf]
    %v2489 = vld [vmem:[%s13 + $0xe0] sm:$0xf]
    %v2490 = vld [vmem:[%s13 + $0xe4] sm:$0xf]
    %v2491 = vld [vmem:[%s13 + $0xe8] sm:$0xf]
    %v2492 = vld [vmem:[%s13 + $0xec] sm:$0xf]
    %v2493 = vld [vmem:[%s13 + $0xf0] sm:$0xf]
    %v2494 = vld [vmem:[%s13 + $0xf4] sm:$0xf]
    %v2495 = vld [vmem:[%s13 + $0xf8] sm:$0xf]
    %v2496 = vld [vmem:[%s13 + $0xfc] sm:$0xf]
    %v2497 = vld [vmem:[%s13 + $0x100] sm:$0xf]
    %v2498 = vld [vmem:[%s13 + $0x104] sm:$0xf]
    %v2499 = vld [vmem:[%s13 + $0x108] sm:$0xf]
    %v2500 = vld [vmem:[%s13 + $0x10c] sm:$0xf]
    %v2501 = vld [vmem:[%s13 + $0x110] sm:$0xf]
    %v2502 = vld [vmem:[%s13 + $0x114] sm:$0xf]
    %v2503 = vld [vmem:[%s13 + $0x118] sm:$0xf]
    %v2504 = vld [vmem:[%s13 + $0x11c] sm:$0xf]
    %v2505 = vld [vmem:[%s13 + $0x120] sm:$0xf]
    %v2506 = vld [vmem:[%s13 + $0x124] sm:$0xf]
    %v2507 = vld [vmem:[%s13 + $0x128] sm:$0xf]
    %v2508 = vld [vmem:[%s13 + $0x12c] sm:$0xf]
    %v2509 = vld [vmem:[%s13 + $0x130] sm:$0xf]
    %v2510 = vld [vmem:[%s13 + $0x134] sm:$0xf]
    %v2511 = vld [vmem:[%s13 + $0x138] sm:$0xf]
    %v2512 = vld [vmem:[%s13 + $0x13c] sm:$0xf]
    %v2513 = vld [vmem:[%s13 + $0x140] sm:$0xf]
    %v2514 = vld [vmem:[%s13 + $0x144] sm:$0xf]
    %v2515 = vld [vmem:[%s13 + $0x148] sm:$0xf]
    %v2516 = vld [vmem:[%s13 + $0x14c] sm:$0xf]
    %v2517 = vld [vmem:[%s13 + $0x150] sm:$0xf]
    %v2518 = vld [vmem:[%s13 + $0x154] sm:$0xf]
    %v2519 = vld [vmem:[%s13 + $0x158] sm:$0xf]
    %v2520 = vld [vmem:[%s13 + $0x15c] sm:$0xf]
    %v2521 = vld [vmem:[%s13 + $0x160] sm:$0xf]
    %v2522 = vld [vmem:[%s13 + $0x164] sm:$0xf]
    %v2523 = vld [vmem:[%s13 + $0x168] sm:$0xf]
    %v2524 = vld [vmem:[%s13 + $0x16c] sm:$0xf]
    %v2525 = vld [vmem:[%s13 + $0x170] sm:$0xf]
    %v2526 = vld [vmem:[%s13 + $0x174] sm:$0xf]
    %v2527 = vld [vmem:[%s13 + $0x178] sm:$0xf]
    %v2528 = vld [vmem:[%s13 + $0x17c] sm:$0xf]
    %v2529 = vld [vmem:[%s13 + $0x180] sm:$0xf]
    %v2530 = vld [vmem:[%s13 + $0x184] sm:$0xf]
    %v2531 = vld [vmem:[%s13 + $0x188] sm:$0xf]
    %v2532 = vld [vmem:[%s13 + $0x18c] sm:$0xf]
    %v2533 = vld [vmem:[%s13 + $0x190] sm:$0xf]
    %v2534 = vld [vmem:[%s13 + $0x194] sm:$0xf]
    %v2535 = vld [vmem:[%s13 + $0x198] sm:$0xf]
    %v2536 = vld [vmem:[%s13 + $0x19c] sm:$0xf]
    %v2537 = vld [vmem:[%s13 + $0x1a0] sm:$0xf]
    %v2538 = vld [vmem:[%s13 + $0x1a4] sm:$0xf]
    %v2539 = vld [vmem:[%s13 + $0x1a8] sm:$0xf]
    %v2540 = vld [vmem:[%s13 + $0x1ac] sm:$0xf]
    %v2541 = vld [vmem:[%s13 + $0x1b0] sm:$0xf]
    %v2542 = vld [vmem:[%s13 + $0x1b4] sm:$0xf]
    %v2543 = vld [vmem:[%s13 + $0x1b8] sm:$0xf]
    %v2544 = vld [vmem:[%s13 + $0x1bc] sm:$0xf]
    %v2545 = vld [vmem:[%s13 + $0x1c0] sm:$0xf]
    %v2546 = vld [vmem:[%s13 + $0x1c4] sm:$0xf]
    %v2547 = vld [vmem:[%s13 + $0x1c8] sm:$0xf]
    %v2548 = vld [vmem:[%s13 + $0x1cc] sm:$0xf]
    %v2549 = vld [vmem:[%s13 + $0x1d0] sm:$0xf]
    %v2550 = vld [vmem:[%s13 + $0x1d4] sm:$0xf]
    %v2551 = vld [vmem:[%s13 + $0x1d8] sm:$0xf]
    %v2552 = vld [vmem:[%s13 + $0x1dc] sm:$0xf]
    %v2553 = vld [vmem:[%s13 + $0x1e0] sm:$0xf]
    %v2554 = vld [vmem:[%s13 + $0x1e4] sm:$0xf]
    %v2555 = vld [vmem:[%s13 + $0x1e8] sm:$0xf]
    %v2556 = vld [vmem:[%s13 + $0x1ec] sm:$0xf]
    %v2557 = vld [vmem:[%s13 + $0x1f0] sm:$0xf]
    %v2558 = vld [vmem:[%s13 + $0x1f4] sm:$0xf]
    %v2559 = vld [vmem:[%s13 + $0x1f8] sm:$0xf]
    %v2560 = vld [vmem:[%s13 + $0x1fc] sm:$0xf]
    %v2561 = vld [vmem:[%s14] sm:$0x1]
    %v2563 = vlaneseq
    %v2564 = vshrl.u32 %v2563, 7
    %v2565 = vsub.s32 0, %v2564
    %v2566 = vrot.slane %v2561, %v2565
    %v2696 = vunpack.c.l.b16 %v2433
    %v2697 = vunpack.c.l.b16 %v2434
    %v2698 = vunpack.c.l.b16 %v2435
    %v2699 = vunpack.c.l.b16 %v2436
    %v2700 = vunpack.c.l.b16 %v2437
    %v2701 = vunpack.c.l.b16 %v2438
    %v2702 = vunpack.c.l.b16 %v2439
    %v2703 = vunpack.c.l.b16 %v2440
    %v2704 = vunpack.c.l.b16 %v2441
    %v2705 = vunpack.c.l.b16 %v2442
    %v2706 = vunpack.c.l.b16 %v2443
    %v2707 = vunpack.c.l.b16 %v2444
    %v2708 = vunpack.c.l.b16 %v2445
    %v2709 = vunpack.c.l.b16 %v2446
    %v2710 = vunpack.c.l.b16 %v2447
    %v2711 = vunpack.c.l.b16 %v2448
    %v2712 = vunpack.c.l.b16 %v2449
    %v2713 = vunpack.c.l.b16 %v2450
    %v2714 = vunpack.c.l.b16 %v2451
    %v2715 = vunpack.c.l.b16 %v2452
    %v2716 = vunpack.c.l.b16 %v2453
    %v2717 = vunpack.c.l.b16 %v2454
    %v2718 = vunpack.c.l.b16 %v2455
    %v2719 = vunpack.c.l.b16 %v2456
    %v2720 = vunpack.c.l.b16 %v2457
    %v2721 = vunpack.c.l.b16 %v2458
    %v2722 = vunpack.c.l.b16 %v2459
    %v2723 = vunpack.c.l.b16 %v2460
    %v2724 = vunpack.c.l.b16 %v2461
    %v2725 = vunpack.c.l.b16 %v2462
    %v2726 = vunpack.c.l.b16 %v2463
    %v2727 = vunpack.c.l.b16 %v2464
    %v2728 = vunpack.c.l.b16 %v2465
    %v2729 = vunpack.c.l.b16 %v2466
    %v2730 = vunpack.c.l.b16 %v2467
    %v2731 = vunpack.c.l.b16 %v2468
    %v2732 = vunpack.c.l.b16 %v2469
    %v2733 = vunpack.c.l.b16 %v2470
    %v2734 = vunpack.c.l.b16 %v2471
    %v2735 = vunpack.c.l.b16 %v2472
    %v2736 = vunpack.c.l.b16 %v2473
    %v2737 = vunpack.c.l.b16 %v2474
    %v2738 = vunpack.c.l.b16 %v2475
    %v2739 = vunpack.c.l.b16 %v2476
    %v2740 = vunpack.c.l.b16 %v2477
    %v2741 = vunpack.c.l.b16 %v2478
    %v2742 = vunpack.c.l.b16 %v2479
    %v2743 = vunpack.c.l.b16 %v2480
    %v2744 = vunpack.c.l.b16 %v2481
    %v2745 = vunpack.c.l.b16 %v2482
    %v2746 = vunpack.c.l.b16 %v2483
    %v2747 = vunpack.c.l.b16 %v2484
    %v2748 = vunpack.c.l.b16 %v2485
    %v2749 = vunpack.c.l.b16 %v2486
    %v2750 = vunpack.c.l.b16 %v2487
    %v2751 = vunpack.c.l.b16 %v2488
    %v2752 = vunpack.c.l.b16 %v2489
    %v2753 = vunpack.c.l.b16 %v2490
    %v2754 = vunpack.c.l.b16 %v2491
    %v2755 = vunpack.c.l.b16 %v2492
    %v2756 = vunpack.c.l.b16 %v2493
    %v2757 = vunpack.c.l.b16 %v2494
    %v2758 = vunpack.c.l.b16 %v2495
    %v2759 = vunpack.c.l.b16 %v2496
    %v2760 = vunpack.c.l.b16 %v2497
    %v2761 = vunpack.c.l.b16 %v2498
    %v2762 = vunpack.c.l.b16 %v2499
    %v2763 = vunpack.c.l.b16 %v2500
    %v2764 = vunpack.c.l.b16 %v2501
    %v2765 = vunpack.c.l.b16 %v2502
    %v2766 = vunpack.c.l.b16 %v2503
    %v2767 = vunpack.c.l.b16 %v2504
    %v2768 = vunpack.c.l.b16 %v2505
    %v2769 = vunpack.c.l.b16 %v2506
    %v2770 = vunpack.c.l.b16 %v2507
    %v2771 = vunpack.c.l.b16 %v2508
    %v2772 = vunpack.c.l.b16 %v2509
    %v2773 = vunpack.c.l.b16 %v2510
    %v2774 = vunpack.c.l.b16 %v2511
    %v2775 = vunpack.c.l.b16 %v2512
    %v2776 = vunpack.c.l.b16 %v2513
    %v2777 = vunpack.c.l.b16 %v2514
    %v2778 = vunpack.c.l.b16 %v2515
    %v2779 = vunpack.c.l.b16 %v2516
    %v2780 = vunpack.c.l.b16 %v2517
    %v2781 = vunpack.c.l.b16 %v2518
    %v2782 = vunpack.c.l.b16 %v2519
    %v2783 = vunpack.c.l.b16 %v2520
    %v2784 = vunpack.c.l.b16 %v2521
    %v2785 = vunpack.c.l.b16 %v2522
    %v2786 = vunpack.c.l.b16 %v2523
    %v2787 = vunpack.c.l.b16 %v2524
    %v2788 = vunpack.c.l.b16 %v2525
    %v2789 = vunpack.c.l.b16 %v2526
    %v2790 = vunpack.c.l.b16 %v2527
    %v2791 = vunpack.c.l.b16 %v2528
    %v2792 = vunpack.c.l.b16 %v2529
    %v2793 = vunpack.c.l.b16 %v2530
    %v2794 = vunpack.c.l.b16 %v2531
    %v2795 = vunpack.c.l.b16 %v2532
    %v2796 = vunpack.c.l.b16 %v2533
    %v2797 = vunpack.c.l.b16 %v2534
    %v2798 = vunpack.c.l.b16 %v2535
    %v2799 = vunpack.c.l.b16 %v2536
    %v2800 = vunpack.c.l.b16 %v2537
    %v2801 = vunpack.c.l.b16 %v2538
    %v2802 = vunpack.c.l.b16 %v2539
    %v2803 = vunpack.c.l.b16 %v2540
    %v2804 = vunpack.c.l.b16 %v2541
    %v2805 = vunpack.c.l.b16 %v2542
    %v2806 = vunpack.c.l.b16 %v2543
    %v2807 = vunpack.c.l.b16 %v2544
    %v2808 = vunpack.c.l.b16 %v2545
    %v2809 = vunpack.c.l.b16 %v2546
    %v2810 = vunpack.c.l.b16 %v2547
    %v2811 = vunpack.c.l.b16 %v2548
    %v2812 = vunpack.c.l.b16 %v2549
    %v2813 = vunpack.c.l.b16 %v2550
    %v2814 = vunpack.c.l.b16 %v2551
    %v2815 = vunpack.c.l.b16 %v2552
    %v2816 = vunpack.c.l.b16 %v2553
    %v2817 = vunpack.c.l.b16 %v2554
    %v2818 = vunpack.c.l.b16 %v2555
    %v2819 = vunpack.c.l.b16 %v2556
    %v2820 = vunpack.c.l.b16 %v2557
    %v2821 = vunpack.c.l.b16 %v2558
    %v2822 = vunpack.c.l.b16 %v2559
    %v2823 = vunpack.c.l.b16 %v2560
    %v2824 = vpack.c.b16 %v2697, %v2696
    %v2825 = vpack.c.b16 %v2699, %v2698
    %v2826 = vpack.c.b16 %v2701, %v2700
    %v2827 = vpack.c.b16 %v2703, %v2702
    %v2828 = vpack.c.b16 %v2705, %v2704
    %v2829 = vpack.c.b16 %v2707, %v2706
    %v2830 = vpack.c.b16 %v2709, %v2708
    %v2831 = vpack.c.b16 %v2711, %v2710
    %v2832 = vpack.c.b16 %v2713, %v2712
    %v2833 = vpack.c.b16 %v2715, %v2714
    %v2834 = vpack.c.b16 %v2717, %v2716
    %v2835 = vpack.c.b16 %v2719, %v2718
    %v2836 = vpack.c.b16 %v2721, %v2720
    %v2837 = vpack.c.b16 %v2723, %v2722
    %v2838 = vpack.c.b16 %v2725, %v2724
    %v2839 = vpack.c.b16 %v2727, %v2726
    %v2840 = vpack.c.b16 %v2729, %v2728
    %v2841 = vpack.c.b16 %v2731, %v2730
    %v2842 = vpack.c.b16 %v2733, %v2732
    %v2843 = vpack.c.b16 %v2735, %v2734
    %v2844 = vpack.c.b16 %v2737, %v2736
    %v2845 = vpack.c.b16 %v2739, %v2738
    %v2846 = vpack.c.b16 %v2741, %v2740
    %v2847 = vpack.c.b16 %v2743, %v2742
    %v2848 = vpack.c.b16 %v2745, %v2744
    %v2849 = vpack.c.b16 %v2747, %v2746
    %v2850 = vpack.c.b16 %v2749, %v2748
    %v2851 = vpack.c.b16 %v2751, %v2750
    %v2852 = vpack.c.b16 %v2753, %v2752
    %v2853 = vpack.c.b16 %v2755, %v2754
    %v2854 = vpack.c.b16 %v2757, %v2756
    %v2855 = vpack.c.b16 %v2759, %v2758
    %v2856 = vpack.c.b16 %v2761, %v2760
    %v2857 = vpack.c.b16 %v2763, %v2762
    %v2858 = vpack.c.b16 %v2765, %v2764
    %v2859 = vpack.c.b16 %v2767, %v2766
    %v2860 = vpack.c.b16 %v2769, %v2768
    %v2861 = vpack.c.b16 %v2771, %v2770
    %v2862 = vpack.c.b16 %v2773, %v2772
    %v2863 = vpack.c.b16 %v2775, %v2774
    %v2864 = vpack.c.b16 %v2777, %v2776
    %v2865 = vpack.c.b16 %v2779, %v2778
    %v2866 = vpack.c.b16 %v2781, %v2780
    %v2867 = vpack.c.b16 %v2783, %v2782
    %v2868 = vpack.c.b16 %v2785, %v2784
    %v2869 = vpack.c.b16 %v2787, %v2786
    %v2870 = vpack.c.b16 %v2789, %v2788
    %v2871 = vpack.c.b16 %v2791, %v2790
    %v2872 = vpack.c.b16 %v2793, %v2792
    %v2873 = vpack.c.b16 %v2795, %v2794
    %v2874 = vpack.c.b16 %v2797, %v2796
    %v2875 = vpack.c.b16 %v2799, %v2798
    %v2876 = vpack.c.b16 %v2801, %v2800
    %v2877 = vpack.c.b16 %v2803, %v2802
    %v2878 = vpack.c.b16 %v2805, %v2804
    %v2879 = vpack.c.b16 %v2807, %v2806
    %v2880 = vpack.c.b16 %v2809, %v2808
    %v2881 = vpack.c.b16 %v2811, %v2810
    %v2882 = vpack.c.b16 %v2813, %v2812
    %v2883 = vpack.c.b16 %v2815, %v2814
    %v2884 = vpack.c.b16 %v2817, %v2816
    %v2885 = vpack.c.b16 %v2819, %v2818
    %v2886 = vpack.c.b16 %v2821, %v2820
    %v2887 = vpack.c.b16 %v2823, %v2822
    %2952 = vmatprep.subr.bf16.mxu0 0
    %2953 = vmatpush1.bf16.msra.mxu0 %v2824
    %2954 = vmatprep.subr.bf16.mxu0 0
    %2955 = vmatpush1.bf16.msra.mxu0 %v2825
    %2956 = vmatprep.subr.bf16.mxu0 0
    %2957 = vmatpush1.bf16.msra.mxu0 %v2826
    %2958 = vmatprep.subr.bf16.mxu0 0
    %2959 = vmatpush1.bf16.msra.mxu0 %v2827
    %2960 = vmatprep.subr.bf16.mxu0 0
    %2961 = vmatpush1.bf16.msra.mxu0 %v2828
    %2962 = vmatprep.subr.bf16.mxu0 0
    %2963 = vmatpush1.bf16.msra.mxu0 %v2829
    %2964 = vmatprep.subr.bf16.mxu0 0
    %2965 = vmatpush1.bf16.msra.mxu0 %v2830
    %2966 = vmatprep.subr.bf16.mxu0 0
    %2967 = vmatpush1.bf16.msra.mxu0 %v2831
    %2968 = vmatprep.subr.bf16.mxu0 0
    %2969 = vmatpush1.bf16.msra.mxu0 %v2832
    %2970 = vmatprep.subr.bf16.mxu0 0
    %2971 = vmatpush1.bf16.msra.mxu0 %v2833
    %2972 = vmatprep.subr.bf16.mxu0 0
    %2973 = vmatpush1.bf16.msra.mxu0 %v2834
    %2974 = vmatprep.subr.bf16.mxu0 0
    %2975 = vmatpush1.bf16.msra.mxu0 %v2835
    %2976 = vmatprep.subr.bf16.mxu0 0
    %2977 = vmatpush1.bf16.msra.mxu0 %v2836
    %2978 = vmatprep.subr.bf16.mxu0 0
    %2979 = vmatpush1.bf16.msra.mxu0 %v2837
    %2980 = vmatprep.subr.bf16.mxu0 0
    %2981 = vmatpush1.bf16.msra.mxu0 %v2838
    %2982 = vmatprep.subr.bf16.mxu0 0
    %2983 = vmatpush1.bf16.msra.mxu0 %v2839
    %2984 = vmatprep.mubr.bf16.mxu0 %v2426
    %2985 = vmatmul.mubr.bf16.gmra.mrb[0].mxu0 %v2425
    %v2986 = vpop.f32.mrb[0].mxu0
    %v2987 = vadd.f32 %v2566, %v2986
    %v2988 = vpop.f32.mrb[0].mxu0
    %v2989 = vpop.f32.mrb[0].mxu0
    %v2990 = vadd.f32 %v2566, %v2989
    %v2991 = vpop.f32.mrb[0].mxu0
    %2992 = vdwg.mxu0
    %2993 = vmatprep.subr.bf16.mxu0 0
    %2994 = vmatpush1.bf16.msra.mxu0 %v2840
    %2995 = vmatprep.subr.bf16.mxu0 0
    %2996 = vmatpush1.bf16.msra.mxu0 %v2841
    %2997 = vmatprep.subr.bf16.mxu0 0
    %2998 = vmatpush1.bf16.msra.mxu0 %v2842
    %2999 = vmatprep.subr.bf16.mxu0 0
    %3000 = vmatpush1.bf16.msra.mxu0 %v2843
    %3001 = vmatprep.subr.bf16.mxu0 0
    %3002 = vmatpush1.bf16.msra.mxu0 %v2844
    %3003 = vmatprep.subr.bf16.mxu0 0
    %3004 = vmatpush1.bf16.msra.mxu0 %v2845
    %3005 = vmatprep.subr.bf16.mxu0 0
    %3006 = vmatpush1.bf16.msra.mxu0 %v2846
    %3007 = vmatprep.subr.bf16.mxu0 0
    %3008 = vmatpush1.bf16.msra.mxu0 %v2847
    %3009 = vmatprep.subr.bf16.mxu0 0
    %3010 = vmatpush1.bf16.msra.mxu0 %v2848
    %3011 = vmatprep.subr.bf16.mxu0 0
    %3012 = vmatpush1.bf16.msra.mxu0 %v2849
    %3013 = vmatprep.subr.bf16.mxu0 0
    %3014 = vmatpush1.bf16.msra.mxu0 %v2850
    %3015 = vmatprep.subr.bf16.mxu0 0
    %3016 = vmatpush1.bf16.msra.mxu0 %v2851
    %3017 = vmatprep.subr.bf16.mxu0 0
    %3018 = vmatpush1.bf16.msra.mxu0 %v2852
    %3019 = vmatprep.subr.bf16.mxu0 0
    %3020 = vmatpush1.bf16.msra.mxu0 %v2853
    %3021 = vmatprep.subr.bf16.mxu0 0
    %3022 = vmatpush1.bf16.msra.mxu0 %v2854
    %3023 = vmatprep.subr.bf16.mxu0 0
    %3024 = vmatpush1.bf16.msra.mxu0 %v2855
    %3025 = vmatprep.mubr.bf16.mxu0 %v2428
    %3026 = vmatmul.mubr.bf16.gmra.mrb[0].mxu0 %v2427
    %v3027 = vpop.f32.mrb[0].mxu0
    %v3028 = vadd.f32 %v2987, %v3027
    %v3029 = vpop.f32.mrb[0].mxu0
    %v3030 = vpop.f32.mrb[0].mxu0
    %v3031 = vadd.f32 %v2990, %v3030
    %v3032 = vpop.f32.mrb[0].mxu0
    %3033 = vdwg.mxu0
    %3034 = vmatprep.subr.bf16.mxu0 0
    %3035 = vmatpush1.bf16.msra.mxu0 %v2856
    %3036 = vmatprep.subr.bf16.mxu0 0
    %3037 = vmatpush1.bf16.msra.mxu0 %v2857
    %3038 = vmatprep.subr.bf16.mxu0 0
    %3039 = vmatpush1.bf16.msra.mxu0 %v2858
    %3040 = vmatprep.subr.bf16.mxu0 0
    %3041 = vmatpush1.bf16.msra.mxu0 %v2859
    %3042 = vmatprep.subr.bf16.mxu0 0
    %3043 = vmatpush1.bf16.msra.mxu0 %v2860
    %3044 = vmatprep.subr.bf16.mxu0 0
    %3045 = vmatpush1.bf16.msra.mxu0 %v2861
    %3046 = vmatprep.subr.bf16.mxu0 0
    %3047 = vmatpush1.bf16.msra.mxu0 %v2862
    %3048 = vmatprep.subr.bf16.mxu0 0
    %3049 = vmatpush1.bf16.msra.mxu0 %v2863
    %3050 = vmatprep.subr.bf16.mxu0 0
    %3051 = vmatpush1.bf16.msra.mxu0 %v2864
    %3052 = vmatprep.subr.bf16.mxu0 0
    %3053 = vmatpush1.bf16.msra.mxu0 %v2865
    %3054 = vmatprep.subr.bf16.mxu0 0
    %3055 = vmatpush1.bf16.msra.mxu0 %v2866
    %3056 = vmatprep.subr.bf16.mxu0 0
    %3057 = vmatpush1.bf16.msra.mxu0 %v2867
    %3058 = vmatprep.subr.bf16.mxu0 0
    %3059 = vmatpush1.bf16.msra.mxu0 %v2868
    %3060 = vmatprep.subr.bf16.mxu0 0
    %3061 = vmatpush1.bf16.msra.mxu0 %v2869
    %3062 = vmatprep.subr.bf16.mxu0 0
    %3063 = vmatpush1.bf16.msra.mxu0 %v2870
    %3064 = vmatprep.subr.bf16.mxu0 0
    %3065 = vmatpush1.bf16.msra.mxu0 %v2871
    %3066 = vmatprep.mubr.bf16.mxu0 %v2430
    %3067 = vmatmul.mubr.bf16.gmra.mrb[0].mxu0 %v2429
    %v3068 = vpop.f32.mrb[0].mxu0
    %v3069 = vadd.f32 %v3028, %v3068
    %v3070 = vpop.f32.mrb[0].mxu0
    %v3071 = vpop.f32.mrb[0].mxu0
    %v3072 = vadd.f32 %v3031, %v3071
    %v3073 = vpop.f32.mrb[0].mxu0
    %3074 = vdwg.mxu0
    %3075 = vmatprep.subr.bf16.mxu0 0
    %3076 = vmatpush1.bf16.msra.mxu0 %v2872
    %3077 = vmatprep.subr.bf16.mxu0 0
    %3078 = vmatpush1.bf16.msra.mxu0 %v2873
    %3079 = vmatprep.subr.bf16.mxu0 0
    %3080 = vmatpush1.bf16.msra.mxu0 %v2874
    %3081 = vmatprep.subr.bf16.mxu0 0
    %3082 = vmatpush1.bf16.msra.mxu0 %v2875
    %3083 = vmatprep.subr.bf16.mxu0 0
    %3084 = vmatpush1.bf16.msra.mxu0 %v2876
    %3085 = vmatprep.subr.bf16.mxu0 0
    %3086 = vmatpush1.bf16.msra.mxu0 %v2877
    %3087 = vmatprep.subr.bf16.mxu0 0
    %3088 = vmatpush1.bf16.msra.mxu0 %v2878
    %3089 = vmatprep.subr.bf16.mxu0 0
    %3090 = vmatpush1.bf16.msra.mxu0 %v2879
    %3091 = vmatprep.subr.bf16.mxu0 0
    %3092 = vmatpush1.bf16.msra.mxu0 %v2880
    %3093 = vmatprep.subr.bf16.mxu0 0
    %3094 = vmatpush1.bf16.msra.mxu0 %v2881
    %3095 = vmatprep.subr.bf16.mxu0 0
    %3096 = vmatpush1.bf16.msra.mxu0 %v2882
    %3097 = vmatprep.subr.bf16.mxu0 0
    %3098 = vmatpush1.bf16.msra.mxu0 %v2883
    %3099 = vmatprep.subr.bf16.mxu0 0
    %3100 = vmatpush1.bf16.msra.mxu0 %v2884
    %3101 = vmatprep.subr.bf16.mxu0 0
    %3102 = vmatpush1.bf16.msra.mxu0 %v2885
    %3103 = vmatprep.subr.bf16.mxu0 0
    %3104 = vmatpush1.bf16.msra.mxu0 %v2886
    %3105 = vmatprep.subr.bf16.mxu0 0
    %3106 = vmatpush1.bf16.msra.mxu0 %v2887
    %3107 = vmatprep.mubr.bf16.mxu0 %v2432
    %3108 = vmatmul.mubr.bf16.gmra.mrb[0].mxu0 %v2431
    %v3109 = vpop.f32.mrb[0].mxu0
    %v3110 = vadd.f32 %v3069, %v3109
    %v3111 = vpop.f32.mrb[0].mxu0
    %v3112 = vpop.f32.mrb[0].mxu0
    %v3113 = vadd.f32 %v3072, %v3112
    %v3114 = vpop.f32.mrb[0].mxu0
    %3115 = vdwg.mxu0
    %v3116 = vadd.f32 %v1808, %v3110
    %v3117 = vadd.f32 %v1809, %v3113
    %v3118 = vld [vmem:[%s15] sm:$0x1]
    %v3119 = vld [vmem:[%s16] sm:$0x1]
    %3120 = vadd.xlane.f32.xlu0 %v3116
    %v3121 = vpop.xlane.xlu0 %3120
    %3122 = vadd.xlane.f32.xlu0 %v3117
    %v3123 = vpop.xlane.xlu0 %3122
    %v3124 = vmul.f32 %v3121, %v1775
    %v3125 = vmul.f32 %v3123, %v1775
    %v3126 = vsub.f32 %v3116, %v3124
    %v3127 = vsub.f32 %v3117, %v3125
    %v3128 = vmul.f32 %v3126, %v3126
    %v3129 = vmul.f32 %v3127, %v3127
    %3130 = vadd.xlane.f32.xlu0 %v3128
    %v3131 = vpop.xlane.xlu0 %3130
    %3132 = vadd.xlane.f32.xlu0 %v3129
    %v3133 = vpop.xlane.xlu0 %3132
    %v3134 = vmul.f32 %v3131, %v1775
    %v3135 = vmul.f32 %v3133, %v1775
    %v3136 = vadd.f32 %v3134, 1e-05
    %v3137 = vadd.f32 %v3135, 1e-05
    %v3138 = vrsqrt.pop %v3136
    %v3139 = vrsqrt.pop %v3137
    %v3140 = vmul.f32 %v3126, %v3138
    %v3141 = vmul.f32 %v3127, %v3139
    %v3143 = vlaneseq
    %v3144 = vshrl.u32 %v3143, 7
    %v3145 = vsub.s32 0, %v3144
    %v3146 = vrot.slane %v3118, %v3145
    %v3148 = vmul.f32 %v3140, %v3146
    %v3149 = vmul.f32 %v3141, %v3146
    %v3151 = vlaneseq
    %v3152 = vshrl.u32 %v3151, 7
    %v3153 = vsub.s32 0, %v3152
    %v3154 = vrot.slane %v3119, %v3153
    %v3156 = vadd.f32 %v3148, %v3154
    %v3157 = vadd.f32 %v3149, %v3154
    %v3158 = vpack.c.bf16 %v3157, %v3156
    %s3159 = scalar_lea.vmem %s5, 192
    %v3160 = vld [vmem:[%s3159] sm:$0xff]
    %v3161 = vld [vmem:[%s3159 + $0x8] sm:$0xf]
    %v3162 = vld [vmem:[%s3159 + $0xc] sm:$0xff]
    %v3163 = vld [vmem:[%s3159 + $0x14] sm:$0xf]
    %v3164 = vld [vmem:[%s3159 + $0x18] sm:$0xff]
    %v3165 = vld [vmem:[%s3159 + $0x20] sm:$0xf]
    %v3166 = vld [vmem:[%s3159 + $0x24] sm:$0xff]
    %v3167 = vld [vmem:[%s3159 + $0x2c] sm:$0xf]
    %v3168 = vld [vmem:[%s3159 + $0x30] sm:$0xff]
    %v3169 = vld [vmem:[%s3159 + $0x38] sm:$0xf]
    %v3170 = vld [vmem:[%s3159 + $0x3c] sm:$0xff]
    %v3171 = vld [vmem:[%s3159 + $0x44] sm:$0xf]
    %v3172 = vld [vmem:[%s3159 + $0x48] sm:$0xff]
    %v3173 = vld [vmem:[%s3159 + $0x50] sm:$0xf]
    %v3174 = vld [vmem:[%s3159 + $0x54] sm:$0xff]
    %v3175 = vld [vmem:[%s3159 + $0x5c] sm:$0xf]
    %v3176 = vld [vmem:[%s3159 + $0x60] sm:$0xff]
    %v3177 = vld [vmem:[%s3159 + $0x68] sm:$0xf]
    %v3178 = vld [vmem:[%s3159 + $0x6c] sm:$0xff]
    %v3179 = vld [vmem:[%s3159 + $0x74] sm:$0xf]
    %v3180 = vld [vmem:[%s3159 + $0x78] sm:$0xff]
    %v3181 = vld [vmem:[%s3159 + $0x80] sm:$0xf]
    %v3182 = vld [vmem:[%s3159 + $0x84] sm:$0xff]
    %v3183 = vld [vmem:[%s3159 + $0x8c] sm:$0xf]
    %v3184 = vld [vmem:[%s3159 + $0x90] sm:$0xff]
    %v3185 = vld [vmem:[%s3159 + $0x98] sm:$0xf]
    %v3186 = vld [vmem:[%s3159 + $0x9c] sm:$0xff]
    %v3187 = vld [vmem:[%s3159 + $0xa4] sm:$0xf]
    %v3188 = vld [vmem:[%s3159 + $0xa8] sm:$0xff]
    %v3189 = vld [vmem:[%s3159 + $0xb0] sm:$0xf]
    %v3190 = vld [vmem:[%s3159 + $0xb4] sm:$0xff]
    %v3191 = vld [vmem:[%s3159 + $0xbc] sm:$0xf]
    %s3192 = scalar_lea.vmem %s6, 3
    %v3193 = vld [vmem:[%s3192] sm:$0x7]
    %v3195 = vlaneseq
    %v3196 = vshrl.u32 %v3195, 7
    %v3197 = vsub.s32 0, %v3196
    %v3198 = vrot.slane %v3193, %v3197
    %v3199 = vlaneseq
    %v3200 = vshrl.u32 %v3199, 7
    %v3201 = vsub.s32 1, %v3200
    %v3202 = vrot.slane %v3193, %v3201
    %v3203 = vlaneseq
    %v3204 = vshrl.u32 %v3203, 7
    %v3205 = vsub.s32 2, %v3204
    %v3206 = vrot.slane %v3193, %v3205
    %v3242 = vunpack.c.l.b16 %v3160
    %v3243 = vunpack.c.h.b16 %v3160
    %v3244 = vunpack.c.l.b16 %v3161
    %v3245 = vunpack.c.l.b16 %v3162
    %v3246 = vunpack.c.h.b16 %v3162
    %v3247 = vunpack.c.l.b16 %v3163
    %v3248 = vunpack.c.l.b16 %v3164
    %v3249 = vunpack.c.h.b16 %v3164
    %v3250 = vunpack.c.l.b16 %v3165
    %v3251 = vunpack.c.l.b16 %v3166
    %v3252 = vunpack.c.h.b16 %v3166
    %v3253 = vunpack.c.l.b16 %v3167
    %v3254 = vunpack.c.l.b16 %v3168
    %v3255 = vunpack.c.h.b16 %v3168
    %v3256 = vunpack.c.l.b16 %v3169
    %v3257 = vunpack.c.l.b16 %v3170
    %v3258 = vunpack.c.h.b16 %v3170
    %v3259 = vunpack.c.l.b16 %v3171
    %v3260 = vunpack.c.l.b16 %v3172
    %v3261 = vunpack.c.h.b16 %v3172
    %v3262 = vunpack.c.l.b16 %v3173
    %v3263 = vunpack.c.l.b16 %v3174
    %v3264 = vunpack.c.h.b16 %v3174
    %v3265 = vunpack.c.l.b16 %v3175
    %v3266 = vunpack.c.l.b16 %v3176
    %v3267 = vunpack.c.h.b16 %v3176
    %v3268 = vunpack.c.l.b16 %v3177
    %v3269 = vunpack.c.l.b16 %v3178
    %v3270 = vunpack.c.h.b16 %v3178
    %v3271 = vunpack.c.l.b16 %v3179
    %v3272 = vunpack.c.l.b16 %v3180
    %v3273 = vunpack.c.h.b16 %v3180
    %v3274 = vunpack.c.l.b16 %v3181
    %v3275 = vunpack.c.l.b16 %v3182
    %v3276 = vunpack.c.h.b16 %v3182
    %v3277 = vunpack.c.l.b16 %v3183
    %v3278 = vunpack.c.l.b16 %v3184
    %v3279 = vunpack.c.h.b16 %v3184
    %v3280 = vunpack.c.l.b16 %v3185
    %v3281 = vunpack.c.l.b16 %v3186
    %v3282 = vunpack.c.h.b16 %v3186
    %v3283 = vunpack.c.l.b16 %v3187
    %v3284 = vunpack.c.l.b16 %v3188
    %v3285 = vunpack.c.h.b16 %v3188
    %v3286 = vunpack.c.l.b16 %v3189
    %v3287 = vunpack.c.l.b16 %v3190
    %v3288 = vunpack.c.h.b16 %v3190
    %v3289 = vunpack.c.l.b16 %v3191
    %v3290 = vpack.c.b16 %v3245, %v3242
    %v3291 = vpack.c.b16 %v3246, %v3243
    %v3292 = vpack.c.b16 %v3247, %v3244
    %v3293 = vpack.c.b16 %v3251, %v3248
    %v3294 = vpack.c.b16 %v3252, %v3249
    %v3295 = vpack.c.b16 %v3253, %v3250
    %v3296 = vpack.c.b16 %v3257, %v3254
    %v3297 = vpack.c.b16 %v3258, %v3255
    %v3298 = vpack.c.b16 %v3259, %v3256
    %v3299 = vpack.c.b16 %v3263, %v3260
    %v3300 = vpack.c.b16 %v3264, %v3261
    %v3301 = vpack.c.b16 %v3265, %v3262
    %v3302 = vpack.c.b16 %v3269, %v3266
    %v3303 = vpack.c.b16 %v3270, %v3267
    %v3304 = vpack.c.b16 %v3271, %v3268
    %v3305 = vpack.c.b16 %v3275, %v3272
    %v3306 = vpack.c.b16 %v3276, %v3273
    %v3307 = vpack.c.b16 %v3277, %v3274
    %v3308 = vpack.c.b16 %v3281, %v3278
    %v3309 = vpack.c.b16 %v3282, %v3279
    %v3310 = vpack.c.b16 %v3283, %v3280
    %v3311 = vpack.c.b16 %v3287, %v3284
    %v3312 = vpack.c.b16 %v3288, %v3285
    %v3313 = vpack.c.b16 %v3289, %v3286
    %3338 = vmatprep.subr.bf16.mxu0 %v3291
    %3339 = vmatpush1.bf16.msra.mxu0 %v3290
    %3340 = vmatprep.subr.bf16.mxu0 %v3294
    %3341 = vmatpush1.bf16.msra.mxu0 %v3293
    %3342 = vmatprep.subr.bf16.mxu0 %v3297
    %3343 = vmatpush1.bf16.msra.mxu0 %v3296
    %3344 = vmatprep.subr.bf16.mxu0 %v3300
    %3345 = vmatpush1.bf16.msra.mxu0 %v3299
    %3346 = vmatprep.subr.bf16.mxu0 %v3303
    %3347 = vmatpush1.bf16.msra.mxu0 %v3302
    %3348 = vmatprep.subr.bf16.mxu0 %v3306
    %3349 = vmatpush1.bf16.msra.mxu0 %v3305
    %3350 = vmatprep.subr.bf16.mxu0 %v3309
    %3351 = vmatpush1.bf16.msra.mxu0 %v3308
    %3352 = vmatprep.subr.bf16.mxu0 %v3312
    %3353 = vmatpush1.bf16.msra.mxu0 %v3311
    %3354 = vmatprep.subr.bf16.mxu0 0
    %3355 = vmatpush1.bf16.msra.mxu0 0
    %3356 = vmatprep.subr.bf16.mxu0 0
    %3357 = vmatpush1.bf16.msra.mxu0 0
    %3358 = vmatprep.subr.bf16.mxu0 0
    %3359 = vmatpush1.bf16.msra.mxu0 0
    %3360 = vmatprep.subr.bf16.mxu0 0
    %3361 = vmatpush1.bf16.msra.mxu0 0
    %3362 = vmatprep.subr.bf16.mxu0 0
    %3363 = vmatpush1.bf16.msra.mxu0 0
    %3364 = vmatprep.subr.bf16.mxu0 0
    %3365 = vmatpush1.bf16.msra.mxu0 0
    %3366 = vmatprep.subr.bf16.mxu0 0
    %3367 = vmatpush1.bf16.msra.mxu0 0
    %3368 = vmatprep.subr.bf16.mxu0 0
    %3369 = vmatpush1.bf16.msra.mxu0 0
    %3370 = vmatprep.mubr.bf16.mxu0 0
    %3371 = vmatmul.mubr.bf16.gmra.mrb[0].mxu0 %v3158
    %v3372 = vpop.f32.mrb[0].mxu0
    %v3373 = vadd.f32 %v3198, %v3372
    %v3374 = vpop.f32.mrb[0].mxu0
    %v3375 = vadd.f32 %v3202, %v3374
    %v3376 = vpop.f32.mrb[0].mxu0
    %v3377 = vadd.f32 %v3198, %v3376
    %v3378 = vpop.f32.mrb[0].mxu0
    %v3379 = vadd.f32 %v3202, %v3378
    %3380 = vdwg.mxu0
    %3381 = vmatprep.subr.bf16.mxu0 0
    %3382 = vmatpush1.bf16.msra.mxu0 %v3292
    %3383 = vmatprep.subr.bf16.mxu0 0
    %3384 = vmatpush1.bf16.msra.mxu0 %v3295
    %3385 = vmatprep.subr.bf16.mxu0 0
    %3386 = vmatpush1.bf16.msra.mxu0 %v3298
    %3387 = vmatprep.subr.bf16.mxu0 0
    %3388 = vmatpush1.bf16.msra.mxu0 %v3301
    %3389 = vmatprep.subr.bf16.mxu0 0
    %3390 = vmatpush1.bf16.msra.mxu0 %v3304
    %3391 = vmatprep.subr.bf16.mxu0 0
    %3392 = vmatpush1.bf16.msra.mxu0 %v3307
    %3393 = vmatprep.subr.bf16.mxu0 0
    %3394 = vmatpush1.bf16.msra.mxu0 %v3310
    %3395 = vmatprep.subr.bf16.mxu0 0
    %3396 = vmatpush1.bf16.msra.mxu0 %v3313
    %3397 = vmatprep.subr.bf16.mxu0 0
    %3398 = vmatpush1.bf16.msra.mxu0 0
    %3399 = vmatprep.subr.bf16.mxu0 0
    %3400 = vmatpush1.bf16.msra.mxu0 0
    %3401 = vmatprep.subr.bf16.mxu0 0
    %3402 = vmatpush1.bf16.msra.mxu0 0
    %3403 = vmatprep.subr.bf16.mxu0 0
    %3404 = vmatpush1.bf16.msra.mxu0 0
    %3405 = vmatprep.subr.bf16.mxu0 0
    %3406 = vmatpush1.bf16.msra.mxu0 0
    %3407 = vmatprep.subr.bf16.mxu0 0
    %3408 = vmatpush1.bf16.msra.mxu0 0
    %3409 = vmatprep.subr.bf16.mxu0 0
    %3410 = vmatpush1.bf16.msra.mxu0 0
    %3411 = vmatprep.subr.bf16.mxu0 0
    %3412 = vmatpush1.bf16.msra.mxu0 0
    %3413 = vmatprep.mubr.bf16.mxu0 0
    %3414 = vmatmul.mubr.bf16.gmra.mrb[0].mxu0 %v3158
    %v3415 = vpop.f32.mrb[0].mxu0
    %v3416 = vadd.f32 %v3206, %v3415
    %v3417 = vpop.f32.mrb[0].mxu0
    %v3418 = vpop.f32.mrb[0].mxu0
    %v3419 = vadd.f32 %v3206, %v3418
    %v3420 = vpop.f32.mrb[0].mxu0
    %3421 = vdwg.mxu0
    %v3422 = vpack.c.bf16 %v3377, %v3373
    %v3423 = vpack.c.bf16 %v3379, %v3375
    %v3424 = vpack.c.bf16 %v3419, %v3416
    %v3426 = vsel %vm576, %v3422, 0
    %v3429 = vsel %vm576, %v3423, 0
    %3431 = vmatprep.subr.bf16.mxu0 0
    %3432 = vmatpush1.bf16.xpose.msra.mxu0 %v3429
    %3433 = vmatprep.subr.bf16.mxu0 0
    %3434 = vmatpush1.bf16.xpose.msra.mxu0 0
    %3435 = vmatprep.subr.bf16.mxu0 0
    %3436 = vmatpush1.bf16.xpose.msra.mxu0 0
    %3437 = vmatprep.subr.bf16.mxu0 0
    %3438 = vmatpush1.bf16.xpose.msra.mxu0 0
    %3439 = vmatprep.subr.bf16.mxu0 0
    %3440 = vmatpush1.bf16.xpose.msra.mxu0 0
    %3441 = vmatprep.subr.bf16.mxu0 0
    %3442 = vmatpush1.bf16.xpose.msra.mxu0 0
    %3443 = vmatprep.subr.bf16.mxu0 0
    %3444 = vmatpush1.bf16.xpose.msra.mxu0 0
    %3445 = vmatprep.subr.bf16.mxu0 0
    %3446 = vmatpush1.bf16.xpose.msra.mxu0 0
    %3447 = vmatprep.subr.bf16.mxu0 0
    %3448 = vmatpush1.bf16.xpose.msra.mxu0 0
    %3449 = vmatprep.subr.bf16.mxu0 0
    %3450 = vmatpush1.bf16.xpose.msra.mxu0 0
    %3451 = vmatprep.subr.bf16.mxu0 0
    %3452 = vmatpush1.bf16.xpose.msra.mxu0 0
    %3453 = vmatprep.subr.bf16.mxu0 0
    %3454 = vmatpush1.bf16.xpose.msra.mxu0 0
    %3455 = vmatprep.subr.bf16.mxu0 0
    %3456 = vmatpush1.bf16.xpose.msra.mxu0 0
    %3457 = vmatprep.subr.bf16.mxu0 0
    %3458 = vmatpush1.bf16.xpose.msra.mxu0 0
    %3459 = vmatprep.subr.bf16.mxu0 0
    %3460 = vmatpush1.bf16.xpose.msra.mxu0 0
    %3461 = vmatprep.subr.bf16.mxu0 0
    %3462 = vmatpush1.bf16.xpose.msra.mxu0 0
    %3463 = vmatprep.mubr.bf16.mxu0 0
    %3464 = vmatmul.mubr.bf16.gmra.mrb[0].mxu0 %v3426
    %v3465 = vpop.f32.mrb[0].mxu0
    %v3466 = vadd.f32 0.0, %v3465
    %v3467 = vpop.f32.mrb[0].mxu0
    %v3468 = vpop.f32.mrb[0].mxu0
    %v3469 = vadd.f32 0.0, %v3468
    %v3470 = vpop.f32.mrb[0].mxu0
    %3471 = vdwg.mxu0
    %v3472 = vmul.f32 %v3466, 0.25
    %v3473 = vmul.f32 %v3469, 0.25
    %v3474 = vadd.f32 %v3472, %v309
    %v3475 = vadd.f32 %v3473, %v310
    %v3476 = vsel %vm576, %v3474, -inf
    %3477 = vmax.xlane.f32.xlu0 %v3476
    %v3478 = vpop.xlane.xlu0 %3477
    %v3479 = vsel %vm576, %v3475, -inf
    %3480 = vmax.xlane.f32.xlu0 %v3479
    %v3481 = vpop.xlane.xlu0 %3480
    %v3482 = vsub.f32 %v3474, %v3478
    %v3483 = vsub.f32 %v3475, %v3481
    %v3484 = vmul.f32 %v3482, 1.442695
    %v3485 = vpow.pop %v3484
    %v3486 = vmul.f32 %v3483, 1.442695
    %v3487 = vpow.pop %v3486
    %v3488 = vsel %vm576, %v3485, 0.0
    %3489 = vadd.xlane.f32.xlu0 %v3488
    %v3490 = vpop.xlane.xlu0 %3489
    %v3491 = vsel %vm576, %v3487, 0.0
    %3492 = vadd.xlane.f32.xlu0 %v3491
    %v3493 = vpop.xlane.xlu0 %3492
    %v3494 = vrcp.pop %v3490
    %v3495 = vrcp.pop %v3493
    %v3496 = vmul.f32 %v3485, %v3494
    %v3497 = vmul.f32 %v3487, %v3495
    %v3498 = vpack.c.bf16 %v3497, %v3496
    %v3500 = vsel %vm576, %v3498, 0
    %3502 = vmatprep.subr.bf16.mxu0 0
    %3503 = vmatpush1.bf16.msra.mxu0 %v3424
    %3504 = vmatprep.subr.bf16.mxu0 0
    %3505 = vmatpush1.bf16.msra.mxu0 0
    %3506 = vmatprep.subr.bf16.mxu0 0
    %3507 = vmatpush1.bf16.msra.mxu0 0
    %3508 = vmatprep.subr.bf16.mxu0 0
    %3509 = vmatpush1.bf16.msra.mxu0 0
    %3510 = vmatprep.subr.bf16.mxu0 0
    %3511 = vmatpush1.bf16.msra.mxu0 0
    %3512 = vmatprep.subr.bf16.mxu0 0
    %3513 = vmatpush1.bf16.msra.mxu0 0
    %3514 = vmatprep.subr.bf16.mxu0 0
    %3515 = vmatpush1.bf16.msra.mxu0 0
    %3516 = vmatprep.subr.bf16.mxu0 0
    %3517 = vmatpush1.bf16.msra.mxu0 0
    %3518 = vmatprep.subr.bf16.mxu0 0
    %3519 = vmatpush1.bf16.msra.mxu0 0
    %3520 = vmatprep.subr.bf16.mxu0 0
    %3521 = vmatpush1.bf16.msra.mxu0 0
    %3522 = vmatprep.subr.bf16.mxu0 0
    %3523 = vmatpush1.bf16.msra.mxu0 0
    %3524 = vmatprep.subr.bf16.mxu0 0
    %3525 = vmatpush1.bf16.msra.mxu0 0
    %3526 = vmatprep.subr.bf16.mxu0 0
    %3527 = vmatpush1.bf16.msra.mxu0 0
    %3528 = vmatprep.subr.bf16.mxu0 0
    %3529 = vmatpush1.bf16.msra.mxu0 0
    %3530 = vmatprep.subr.bf16.mxu0 0
    %3531 = vmatpush1.bf16.msra.mxu0 0
    %3532 = vmatprep.subr.bf16.mxu0 0
    %3533 = vmatpush1.bf16.msra.mxu0 0
    %3534 = vmatprep.mubr.bf16.mxu0 0
    %3535 = vmatmul.mubr.bf16.gmra.mrb[0].mxu0 %v3500
    %v3536 = vpop.f32.mrb[0].mxu0
    %v3537 = vadd.f32 0.0, %v3536
    %v3538 = vpop.f32.mrb[0].mxu0
    %v3539 = vpop.f32.mrb[0].mxu0
    %v3540 = vadd.f32 0.0, %v3539
    %v3541 = vpop.f32.mrb[0].mxu0
    %3542 = vdwg.mxu0
    %3543 = vst.msk [vmem:[#allocation2] sm:$0xff] %vm576, %v3537
    %3544 = vst.msk [vmem:[#allocation2 + $0x8] sm:$0xff] %vm576, %v3540
    %3546 = vrot.lane.b32.xlu0 %v3422, 112
    %v3547 = vpop.permute.xlu0 %3546
    %3549 = vrot.lane.b32.xlu0 %v3423, 112
    %v3550 = vpop.permute.xlu0 %3549
    %v3552 = vsel %vm576, %v3547, 0
    %v3555 = vsel %vm576, %v3550, 0
    %3557 = vmatprep.subr.bf16.mxu0 0
    %3558 = vmatpush1.bf16.xpose.msra.mxu0 %v3555
    %3559 = vmatprep.subr.bf16.mxu0 0
    %3560 = vmatpush1.bf16.xpose.msra.mxu0 0
    %3561 = vmatprep.subr.bf16.mxu0 0
    %3562 = vmatpush1.bf16.xpose.msra.mxu0 0
    %3563 = vmatprep.subr.bf16.mxu0 0
    %3564 = vmatpush1.bf16.xpose.msra.mxu0 0
    %3565 = vmatprep.subr.bf16.mxu0 0
    %3566 = vmatpush1.bf16.xpose.msra.mxu0 0
    %3567 = vmatprep.subr.bf16.mxu0 0
    %3568 = vmatpush1.bf16.xpose.msra.mxu0 0
    %3569 = vmatprep.subr.bf16.mxu0 0
    %3570 = vmatpush1.bf16.xpose.msra.mxu0 0
    %3571 = vmatprep.subr.bf16.mxu0 0
    %3572 = vmatpush1.bf16.xpose.msra.mxu0 0
    %3573 = vmatprep.subr.bf16.mxu0 0
    %3574 = vmatpush1.bf16.xpose.msra.mxu0 0
    %3575 = vmatprep.subr.bf16.mxu0 0
    %3576 = vmatpush1.bf16.xpose.msra.mxu0 0
    %3577 = vmatprep.subr.bf16.mxu0 0
    %3578 = vmatpush1.bf16.xpose.msra.mxu0 0
    %3579 = vmatprep.subr.bf16.mxu0 0
    %3580 = vmatpush1.bf16.xpose.msra.mxu0 0
    %3581 = vmatprep.subr.bf16.mxu0 0
    %3582 = vmatpush1.bf16.xpose.msra.mxu0 0
    %3583 = vmatprep.subr.bf16.mxu0 0
    %3584 = vmatpush1.bf16.xpose.msra.mxu0 0
    %3585 = vmatprep.subr.bf16.mxu0 0
    %3586 = vmatpush1.bf16.xpose.msra.mxu0 0
    %3587 = vmatprep.subr.bf16.mxu0 0
    %3588 = vmatpush1.bf16.xpose.msra.mxu0 0
    %3589 = vmatprep.mubr.bf16.mxu0 0
    %3590 = vmatmul.mubr.bf16.gmra.mrb[0].mxu0 %v3552
    %v3591 = vpop.f32.mrb[0].mxu0
    %v3592 = vadd.f32 0.0, %v3591
    %v3593 = vpop.f32.mrb[0].mxu0
    %v3594 = vpop.f32.mrb[0].mxu0
    %v3595 = vadd.f32 0.0, %v3594
    %v3596 = vpop.f32.mrb[0].mxu0
    %3597 = vdwg.mxu0
    %v3598 = vmul.f32 %v3592, 0.25
    %v3599 = vmul.f32 %v3595, 0.25
    %v3600 = vadd.f32 %v3598, %v309
    %v3601 = vadd.f32 %v3599, %v310
    %v3602 = vsel %vm576, %v3600, -inf
    %3603 = vmax.xlane.f32.xlu0 %v3602
    %v3604 = vpop.xlane.xlu0 %3603
    %v3605 = vsel %vm576, %v3601, -inf
    %3606 = vmax.xlane.f32.xlu0 %v3605
    %v3607 = vpop.xlane.xlu0 %3606
    %v3608 = vsub.f32 %v3600, %v3604
    %v3609 = vsub.f32 %v3601, %v3607
    %v3610 = vmul.f32 %v3608, 1.442695
    %v3611 = vpow.pop %v3610
    %v3612 = vmul.f32 %v3609, 1.442695
    %v3613 = vpow.pop %v3612
    %v3614 = vsel %vm576, %v3611, 0.0
    %3615 = vadd.xlane.f32.xlu0 %v3614
    %v3616 = vpop.xlane.xlu0 %3615
    %v3617 = vsel %vm576, %v3613, 0.0
    %3618 = vadd.xlane.f32.xlu0 %v3617
    %v3619 = vpop.xlane.xlu0 %3618
    %v3620 = vrcp.pop %v3616
    %v3621 = vrcp.pop %v3619
    %v3622 = vmul.f32 %v3611, %v3620
    %v3623 = vmul.f32 %v3613, %v3621
    %v3624 = vpack.c.bf16 %v3623, %v3622
    %3626 = vrot.lane.b32.xlu0 %v3424, 112
    %v3627 = vpop.permute.xlu0 %3626
    %v3630 = vsel %vm576, %v3624, 0
    %3632 = vmatprep.subr.bf16.mxu0 0
    %3633 = vmatpush1.bf16.msra.mxu0 %v3627
    %3634 = vmatprep.subr.bf16.mxu0 0
    %3635 = vmatpush1.bf16.msra.mxu0 0
    %3636 = vmatprep.subr.bf16.mxu0 0
    %3637 = vmatpush1.bf16.msra.mxu0 0
    %3638 = vmatprep.subr.bf16.mxu0 0
    %3639 = vmatpush1.bf16.msra.mxu0 0
    %3640 = vmatprep.subr.bf16.mxu0 0
    %3641 = vmatpush1.bf16.msra.mxu0 0
    %3642 = vmatprep.subr.bf16.mxu0 0
    %3643 = vmatpush1.bf16.msra.mxu0 0
    %3644 = vmatprep.subr.bf16.mxu0 0
    %3645 = vmatpush1.bf16.msra.mxu0 0
    %3646 = vmatprep.subr.bf16.mxu0 0
    %3647 = vmatpush1.bf16.msra.mxu0 0
    %3648 = vmatprep.subr.bf16.mxu0 0
    %3649 = vmatpush1.bf16.msra.mxu0 0
    %3650 = vmatprep.subr.bf16.mxu0 0
    %3651 = vmatpush1.bf16.msra.mxu0 0
    %3652 = vmatprep.subr.bf16.mxu0 0
    %3653 = vmatpush1.bf16.msra.mxu0 0
    %3654 = vmatprep.subr.bf16.mxu0 0
    %3655 = vmatpush1.bf16.msra.mxu0 0
    %3656 = vmatprep.subr.bf16.mxu0 0
    %3657 = vmatpush1.bf16.msra.mxu0 0
    %3658 = vmatprep.subr.bf16.mxu0 0
    %3659 = vmatpush1.bf16.msra.mxu0 0
    %3660 = vmatprep.subr.bf16.mxu0 0
    %3661 = vmatpush1.bf16.msra.mxu0 0
    %3662 = vmatprep.subr.bf16.mxu0 0
    %3663 = vmatpush1.bf16.msra.mxu0 0
    %3664 = vmatprep.mubr.bf16.mxu0 0
    %3665 = vmatmul.mubr.bf16.gmra.mrb[0].mxu0 %v3630
    %v3666 = vpop.f32.mrb[0].mxu0
    %v3667 = vadd.f32 0.0, %v3666
    %v3668 = vpop.f32.mrb[0].mxu0
    %v3669 = vpop.f32.mrb[0].mxu0
    %v3670 = vadd.f32 0.0, %v3669
    %v3671 = vpop.f32.mrb[0].mxu0
    %3672 = vdwg.mxu0
    %3675 = vrot.lane.b32.xlu0 %v3667, 16
    %v3676 = vpop.permute.xlu0 %3675
    %3677 = vrot.lane.b32.xlu0 %v3670, 16
    %v3678 = vpop.permute.xlu0 %3677
    %3681 = vst.msk [vmem:[#allocation2] sm:$0xff] %vm833, %v3676
    %3682 = vst.msk [vmem:[#allocation2 + $0x8] sm:$0xff] %vm833, %v3678
    %3683 = vrot.lane.b32.xlu0 %v3422, 96
    %v3684 = vpop.permute.xlu0 %3683
    %3685 = vrot.lane.b32.xlu0 %v3423, 96
    %v3686 = vpop.permute.xlu0 %3685
    %v3688 = vsel %vm576, %v3684, 0
    %v3691 = vsel %vm576, %v3686, 0
    %3693 = vmatprep.subr.bf16.mxu0 0
    %3694 = vmatpush1.bf16.xpose.msra.mxu0 %v3691
    %3695 = vmatprep.subr.bf16.mxu0 0
    %3696 = vmatpush1.bf16.xpose.msra.mxu0 0
    %3697 = vmatprep.subr.bf16.mxu0 0
    %3698 = vmatpush1.bf16.xpose.msra.mxu0 0
    %3699 = vmatprep.subr.bf16.mxu0 0
    %3700 = vmatpush1.bf16.xpose.msra.mxu0 0
    %3701 = vmatprep.subr.bf16.mxu0 0
    %3702 = vmatpush1.bf16.xpose.msra.mxu0 0
    %3703 = vmatprep.subr.bf16.mxu0 0
    %3704 = vmatpush1.bf16.xpose.msra.mxu0 0
    %3705 = vmatprep.subr.bf16.mxu0 0
    %3706 = vmatpush1.bf16.xpose.msra.mxu0 0
    %3707 = vmatprep.subr.bf16.mxu0 0
    %3708 = vmatpush1.bf16.xpose.msra.mxu0 0
    %3709 = vmatprep.subr.bf16.mxu0 0
    %3710 = vmatpush1.bf16.xpose.msra.mxu0 0
    %3711 = vmatprep.subr.bf16.mxu0 0
    %3712 = vmatpush1.bf16.xpose.msra.mxu0 0
    %3713 = vmatprep.subr.bf16.mxu0 0
    %3714 = vmatpush1.bf16.xpose.msra.mxu0 0
    %3715 = vmatprep.subr.bf16.mxu0 0
    %3716 = vmatpush1.bf16.xpose.msra.mxu0 0
    %3717 = vmatprep.subr.bf16.mxu0 0
    %3718 = vmatpush1.bf16.xpose.msra.mxu0 0
    %3719 = vmatprep.subr.bf16.mxu0 0
    %3720 = vmatpush1.bf16.xpose.msra.mxu0 0
    %3721 = vmatprep.subr.bf16.mxu0 0
    %3722 = vmatpush1.bf16.xpose.msra.mxu0 0
    %3723 = vmatprep.subr.bf16.mxu0 0
    %3724 = vmatpush1.bf16.xpose.msra.mxu0 0
    %3725 = vmatprep.mubr.bf16.mxu0 0
    %3726 = vmatmul.mubr.bf16.gmra.mrb[0].mxu0 %v3688
    %v3727 = vpop.f32.mrb[0].mxu0
    %v3728 = vadd.f32 0.0, %v3727
    %v3729 = vpop.f32.mrb[0].mxu0
    %v3730 = vpop.f32.mrb[0].mxu0
    %v3731 = vadd.f32 0.0, %v3730
    %v3732 = vpop.f32.mrb[0].mxu0
    %3733 = vdwg.mxu0
    %v3734 = vmul.f32 %v3728, 0.25
    %v3735 = vmul.f32 %v3731, 0.25
    %v3736 = vadd.f32 %v3734, %v309
    %v3737 = vadd.f32 %v3735, %v310
    %v3738 = vsel %vm576, %v3736, -inf
    %3739 = vmax.xlane.f32.xlu0 %v3738
    %v3740 = vpop.xlane.xlu0 %3739
    %v3741 = vsel %vm576, %v3737, -inf
    %3742 = vmax.xlane.f32.xlu0 %v3741
    %v3743 = vpop.xlane.xlu0 %3742
    %v3744 = vsub.f32 %v3736, %v3740
    %v3745 = vsub.f32 %v3737, %v3743
    %v3746 = vmul.f32 %v3744, 1.442695
    %v3747 = vpow.pop %v3746
    %v3748 = vmul.f32 %v3745, 1.442695
    %v3749 = vpow.pop %v3748
    %v3750 = vsel %vm576, %v3747, 0.0
    %3751 = vadd.xlane.f32.xlu0 %v3750
    %v3752 = vpop.xlane.xlu0 %3751
    %v3753 = vsel %vm576, %v3749, 0.0
    %3754 = vadd.xlane.f32.xlu0 %v3753
    %v3755 = vpop.xlane.xlu0 %3754
    %v3756 = vrcp.pop %v3752
    %v3757 = vrcp.pop %v3755
    %v3758 = vmul.f32 %v3747, %v3756
    %v3759 = vmul.f32 %v3749, %v3757
    %v3760 = vpack.c.bf16 %v3759, %v3758
    %3761 = vrot.lane.b32.xlu0 %v3424, 96
    %v3762 = vpop.permute.xlu0 %3761
    %v3765 = vsel %vm576, %v3760, 0
    %3767 = vmatprep.subr.bf16.mxu0 0
    %3768 = vmatpush1.bf16.msra.mxu0 %v3762
    %3769 = vmatprep.subr.bf16.mxu0 0
    %3770 = vmatpush1.bf16.msra.mxu0 0
    %3771 = vmatprep.subr.bf16.mxu0 0
    %3772 = vmatpush1.bf16.msra.mxu0 0
    %3773 = vmatprep.subr.bf16.mxu0 0
    %3774 = vmatpush1.bf16.msra.mxu0 0
    %3775 = vmatprep.subr.bf16.mxu0 0
    %3776 = vmatpush1.bf16.msra.mxu0 0
    %3777 = vmatprep.subr.bf16.mxu0 0
    %3778 = vmatpush1.bf16.msra.mxu0 0
    %3779 = vmatprep.subr.bf16.mxu0 0
    %3780 = vmatpush1.bf16.msra.mxu0 0
    %3781 = vmatprep.subr.bf16.mxu0 0
    %3782 = vmatpush1.bf16.msra.mxu0 0
    %3783 = vmatprep.subr.bf16.mxu0 0
    %3784 = vmatpush1.bf16.msra.mxu0 0
    %3785 = vmatprep.subr.bf16.mxu0 0
    %3786 = vmatpush1.bf16.msra.mxu0 0
    %3787 = vmatprep.subr.bf16.mxu0 0
    %3788 = vmatpush1.bf16.msra.mxu0 0
    %3789 = vmatprep.subr.bf16.mxu0 0
    %3790 = vmatpush1.bf16.msra.mxu0 0
    %3791 = vmatprep.subr.bf16.mxu0 0
    %3792 = vmatpush1.bf16.msra.mxu0 0
    %3793 = vmatprep.subr.bf16.mxu0 0
    %3794 = vmatpush1.bf16.msra.mxu0 0
    %3795 = vmatprep.subr.bf16.mxu0 0
    %3796 = vmatpush1.bf16.msra.mxu0 0
    %3797 = vmatprep.subr.bf16.mxu0 0
    %3798 = vmatpush1.bf16.msra.mxu0 0
    %3799 = vmatprep.mubr.bf16.mxu0 0
    %3800 = vmatmul.mubr.bf16.gmra.mrb[0].mxu0 %v3765
    %v3801 = vpop.f32.mrb[0].mxu0
    %v3802 = vadd.f32 0.0, %v3801
    %v3803 = vpop.f32.mrb[0].mxu0
    %v3804 = vpop.f32.mrb[0].mxu0
    %v3805 = vadd.f32 0.0, %v3804
    %v3806 = vpop.f32.mrb[0].mxu0
    %3807 = vdwg.mxu0
    %3810 = vrot.lane.b32.xlu0 %v3802, 32
    %v3811 = vpop.permute.xlu0 %3810
    %3812 = vrot.lane.b32.xlu0 %v3805, 32
    %v3813 = vpop.permute.xlu0 %3812
    %3816 = vst.msk [vmem:[#allocation2] sm:$0xff] %vm969, %v3811
    %3817 = vst.msk [vmem:[#allocation2 + $0x8] sm:$0xff] %vm969, %v3813
    %3818 = vrot.lane.b32.xlu0 %v3422, 80
    %v3819 = vpop.permute.xlu0 %3818
    %3820 = vrot.lane.b32.xlu0 %v3423, 80
    %v3821 = vpop.permute.xlu0 %3820
    %v3823 = vsel %vm576, %v3819, 0
    %v3826 = vsel %vm576, %v3821, 0
    %3828 = vmatprep.subr.bf16.mxu0 0
    %3829 = vmatpush1.bf16.xpose.msra.mxu0 %v3826
    %3830 = vmatprep.subr.bf16.mxu0 0
    %3831 = vmatpush1.bf16.xpose.msra.mxu0 0
    %3832 = vmatprep.subr.bf16.mxu0 0
    %3833 = vmatpush1.bf16.xpose.msra.mxu0 0
    %3834 = vmatprep.subr.bf16.mxu0 0
    %3835 = vmatpush1.bf16.xpose.msra.mxu0 0
    %3836 = vmatprep.subr.bf16.mxu0 0
    %3837 = vmatpush1.bf16.xpose.msra.mxu0 0
    %3838 = vmatprep.subr.bf16.mxu0 0
    %3839 = vmatpush1.bf16.xpose.msra.mxu0 0
    %3840 = vmatprep.subr.bf16.mxu0 0
    %3841 = vmatpush1.bf16.xpose.msra.mxu0 0
    %3842 = vmatprep.subr.bf16.mxu0 0
    %3843 = vmatpush1.bf16.xpose.msra.mxu0 0
    %3844 = vmatprep.subr.bf16.mxu0 0
    %3845 = vmatpush1.bf16.xpose.msra.mxu0 0
    %3846 = vmatprep.subr.bf16.mxu0 0
    %3847 = vmatpush1.bf16.xpose.msra.mxu0 0
    %3848 = vmatprep.subr.bf16.mxu0 0
    %3849 = vmatpush1.bf16.xpose.msra.mxu0 0
    %3850 = vmatprep.subr.bf16.mxu0 0
    %3851 = vmatpush1.bf16.xpose.msra.mxu0 0
    %3852 = vmatprep.subr.bf16.mxu0 0
    %3853 = vmatpush1.bf16.xpose.msra.mxu0 0
    %3854 = vmatprep.subr.bf16.mxu0 0
    %3855 = vmatpush1.bf16.xpose.msra.mxu0 0
    %3856 = vmatprep.subr.bf16.mxu0 0
    %3857 = vmatpush1.bf16.xpose.msra.mxu0 0
    %3858 = vmatprep.subr.bf16.mxu0 0
    %3859 = vmatpush1.bf16.xpose.msra.mxu0 0
    %3860 = vmatprep.mubr.bf16.mxu0 0
    %3861 = vmatmul.mubr.bf16.gmra.mrb[0].mxu0 %v3823
    %v3862 = vpop.f32.mrb[0].mxu0
    %v3863 = vadd.f32 0.0, %v3862
    %v3864 = vpop.f32.mrb[0].mxu0
    %v3865 = vpop.f32.mrb[0].mxu0
    %v3866 = vadd.f32 0.0, %v3865
    %v3867 = vpop.f32.mrb[0].mxu0
    %3868 = vdwg.mxu0
    %v3869 = vmul.f32 %v3863, 0.25
    %v3870 = vmul.f32 %v3866, 0.25
    %v3871 = vadd.f32 %v3869, %v309
    %v3872 = vadd.f32 %v3870, %v310
    %v3873 = vsel %vm576, %v3871, -inf
    %3874 = vmax.xlane.f32.xlu0 %v3873
    %v3875 = vpop.xlane.xlu0 %3874
    %v3876 = vsel %vm576, %v3872, -inf
    %3877 = vmax.xlane.f32.xlu0 %v3876
    %v3878 = vpop.xlane.xlu0 %3877
    %v3879 = vsub.f32 %v3871, %v3875
    %v3880 = vsub.f32 %v3872, %v3878
    %v3881 = vmul.f32 %v3879, 1.442695
    %v3882 = vpow.pop %v3881
    %v3883 = vmul.f32 %v3880, 1.442695
    %v3884 = vpow.pop %v3883
    %v3885 = vsel %vm576, %v3882, 0.0
    %3886 = vadd.xlane.f32.xlu0 %v3885
    %v3887 = vpop.xlane.xlu0 %3886
    %v3888 = vsel %vm576, %v3884, 0.0
    %3889 = vadd.xlane.f32.xlu0 %v3888
    %v3890 = vpop.xlane.xlu0 %3889
    %v3891 = vrcp.pop %v3887
    %v3892 = vrcp.pop %v3890
    %v3893 = vmul.f32 %v3882, %v3891
    %v3894 = vmul.f32 %v3884, %v3892
    %v3895 = vpack.c.bf16 %v3894, %v3893
    %3896 = vrot.lane.b32.xlu0 %v3424, 80
    %v3897 = vpop.permute.xlu0 %3896
    %v3900 = vsel %vm576, %v3895, 0
    %3902 = vmatprep.subr.bf16.mxu0 0
    %3903 = vmatpush1.bf16.msra.mxu0 %v3897
    %3904 = vmatprep.subr.bf16.mxu0 0
    %3905 = vmatpush1.bf16.msra.mxu0 0
    %3906 = vmatprep.subr.bf16.mxu0 0
    %3907 = vmatpush1.bf16.msra.mxu0 0
    %3908 = vmatprep.subr.bf16.mxu0 0
    %3909 = vmatpush1.bf16.msra.mxu0 0
    %3910 = vmatprep.subr.bf16.mxu0 0
    %3911 = vmatpush1.bf16.msra.mxu0 0
    %3912 = vmatprep.subr.bf16.mxu0 0
    %3913 = vmatpush1.bf16.msra.mxu0 0
    %3914 = vmatprep.subr.bf16.mxu0 0
    %3915 = vmatpush1.bf16.msra.mxu0 0
    %3916 = vmatprep.subr.bf16.mxu0 0
    %3917 = vmatpush1.bf16.msra.mxu0 0
    %3918 = vmatprep.subr.bf16.mxu0 0
    %3919 = vmatpush1.bf16.msra.mxu0 0
    %3920 = vmatprep.subr.bf16.mxu0 0
    %3921 = vmatpush1.bf16.msra.mxu0 0
    %3922 = vmatprep.subr.bf16.mxu0 0
    %3923 = vmatpush1.bf16.msra.mxu0 0
    %3924 = vmatprep.subr.bf16.mxu0 0
    %3925 = vmatpush1.bf16.msra.mxu0 0
    %3926 = vmatprep.subr.bf16.mxu0 0
    %3927 = vmatpush1.bf16.msra.mxu0 0
    %3928 = vmatprep.subr.bf16.mxu0 0
    %3929 = vmatpush1.bf16.msra.mxu0 0
    %3930 = vmatprep.subr.bf16.mxu0 0
    %3931 = vmatpush1.bf16.msra.mxu0 0
    %3932 = vmatprep.subr.bf16.mxu0 0
    %3933 = vmatpush1.bf16.msra.mxu0 0
    %3934 = vmatprep.mubr.bf16.mxu0 0
    %3935 = vmatmul.mubr.bf16.gmra.mrb[0].mxu0 %v3900
    %v3936 = vpop.f32.mrb[0].mxu0
    %v3937 = vadd.f32 0.0, %v3936
    %v3938 = vpop.f32.mrb[0].mxu0
    %v3939 = vpop.f32.mrb[0].mxu0
    %v3940 = vadd.f32 0.0, %v3939
    %v3941 = vpop.f32.mrb[0].mxu0
    %3942 = vdwg.mxu0
    %3945 = vrot.lane.b32.xlu0 %v3937, 48
    %v3946 = vpop.permute.xlu0 %3945
    %3947 = vrot.lane.b32.xlu0 %v3940, 48
    %v3948 = vpop.permute.xlu0 %3947
    %3951 = vst.msk [vmem:[#allocation2] sm:$0xff] %vm1105, %v3946
    %3952 = vst.msk [vmem:[#allocation2 + $0x8] sm:$0xff] %vm1105, %v3948
    %3953 = vrot.lane.b32.xlu0 %v3422, 64
    %v3954 = vpop.permute.xlu0 %3953
    %3955 = vrot.lane.b32.xlu0 %v3423, 64
    %v3956 = vpop.permute.xlu0 %3955
    %v3958 = vsel %vm576, %v3954, 0
    %v3961 = vsel %vm576, %v3956, 0
    %3963 = vmatprep.subr.bf16.mxu0 0
    %3964 = vmatpush1.bf16.xpose.msra.mxu0 %v3961
    %3965 = vmatprep.subr.bf16.mxu0 0
    %3966 = vmatpush1.bf16.xpose.msra.mxu0 0
    %3967 = vmatprep.subr.bf16.mxu0 0
    %3968 = vmatpush1.bf16.xpose.msra.mxu0 0
    %3969 = vmatprep.subr.bf16.mxu0 0
    %3970 = vmatpush1.bf16.xpose.msra.mxu0 0
    %3971 = vmatprep.subr.bf16.mxu0 0
    %3972 = vmatpush1.bf16.xpose.msra.mxu0 0
    %3973 = vmatprep.subr.bf16.mxu0 0
    %3974 = vmatpush1.bf16.xpose.msra.mxu0 0
    %3975 = vmatprep.subr.bf16.mxu0 0
    %3976 = vmatpush1.bf16.xpose.msra.mxu0 0
    %3977 = vmatprep.subr.bf16.mxu0 0
    %3978 = vmatpush1.bf16.xpose.msra.mxu0 0
    %3979 = vmatprep.subr.bf16.mxu0 0
    %3980 = vmatpush1.bf16.xpose.msra.mxu0 0
    %3981 = vmatprep.subr.bf16.mxu0 0
    %3982 = vmatpush1.bf16.xpose.msra.mxu0 0
    %3983 = vmatprep.subr.bf16.mxu0 0
    %3984 = vmatpush1.bf16.xpose.msra.mxu0 0
    %3985 = vmatprep.subr.bf16.mxu0 0
    %3986 = vmatpush1.bf16.xpose.msra.mxu0 0
    %3987 = vmatprep.subr.bf16.mxu0 0
    %3988 = vmatpush1.bf16.xpose.msra.mxu0 0
    %3989 = vmatprep.subr.bf16.mxu0 0
    %3990 = vmatpush1.bf16.xpose.msra.mxu0 0
    %3991 = vmatprep.subr.bf16.mxu0 0
    %3992 = vmatpush1.bf16.xpose.msra.mxu0 0
    %3993 = vmatprep.subr.bf16.mxu0 0
    %3994 = vmatpush1.bf16.xpose.msra.mxu0 0
    %3995 = vmatprep.mubr.bf16.mxu0 0
    %3996 = vmatmul.mubr.bf16.gmra.mrb[0].mxu0 %v3958
    %v3997 = vpop.f32.mrb[0].mxu0
    %v3998 = vadd.f32 0.0, %v3997
    %v3999 = vpop.f32.mrb[0].mxu0
    %v4000 = vpop.f32.mrb[0].mxu0
    %v4001 = vadd.f32 0.0, %v4000
    %v4002 = vpop.f32.mrb[0].mxu0
    %4003 = vdwg.mxu0
    %v4004 = vmul.f32 %v3998, 0.25
    %v4005 = vmul.f32 %v4001, 0.25
    %v4006 = vadd.f32 %v4004, %v309
    %v4007 = vadd.f32 %v4005, %v310
    %v4008 = vsel %vm576, %v4006, -inf
    %4009 = vmax.xlane.f32.xlu0 %v4008
    %v4010 = vpop.xlane.xlu0 %4009
    %v4011 = vsel %vm576, %v4007, -inf
    %4012 = vmax.xlane.f32.xlu0 %v4011
    %v4013 = vpop.xlane.xlu0 %4012
    %v4014 = vsub.f32 %v4006, %v4010
    %v4015 = vsub.f32 %v4007, %v4013
    %v4016 = vmul.f32 %v4014, 1.442695
    %v4017 = vpow.pop %v4016
    %v4018 = vmul.f32 %v4015, 1.442695
    %v4019 = vpow.pop %v4018
    %v4020 = vsel %vm576, %v4017, 0.0
    %4021 = vadd.xlane.f32.xlu0 %v4020
    %v4022 = vpop.xlane.xlu0 %4021
    %v4023 = vsel %vm576, %v4019, 0.0
    %4024 = vadd.xlane.f32.xlu0 %v4023
    %v4025 = vpop.xlane.xlu0 %4024
    %v4026 = vrcp.pop %v4022
    %v4027 = vrcp.pop %v4025
    %v4028 = vmul.f32 %v4017, %v4026
    %v4029 = vmul.f32 %v4019, %v4027
    %v4030 = vpack.c.bf16 %v4029, %v4028
    %4031 = vrot.lane.b32.xlu0 %v3424, 64
    %v4032 = vpop.permute.xlu0 %4031
    %v4035 = vsel %vm576, %v4030, 0
    %4037 = vmatprep.subr.bf16.mxu0 0
    %4038 = vmatpush1.bf16.msra.mxu0 %v4032
    %4039 = vmatprep.subr.bf16.mxu0 0
    %4040 = vmatpush1.bf16.msra.mxu0 0
    %4041 = vmatprep.subr.bf16.mxu0 0
    %4042 = vmatpush1.bf16.msra.mxu0 0
    %4043 = vmatprep.subr.bf16.mxu0 0
    %4044 = vmatpush1.bf16.msra.mxu0 0
    %4045 = vmatprep.subr.bf16.mxu0 0
    %4046 = vmatpush1.bf16.msra.mxu0 0
    %4047 = vmatprep.subr.bf16.mxu0 0
    %4048 = vmatpush1.bf16.msra.mxu0 0
    %4049 = vmatprep.subr.bf16.mxu0 0
    %4050 = vmatpush1.bf16.msra.mxu0 0
    %4051 = vmatprep.subr.bf16.mxu0 0
    %4052 = vmatpush1.bf16.msra.mxu0 0
    %4053 = vmatprep.subr.bf16.mxu0 0
    %4054 = vmatpush1.bf16.msra.mxu0 0
    %4055 = vmatprep.subr.bf16.mxu0 0
    %4056 = vmatpush1.bf16.msra.mxu0 0
    %4057 = vmatprep.subr.bf16.mxu0 0
    %4058 = vmatpush1.bf16.msra.mxu0 0
    %4059 = vmatprep.subr.bf16.mxu0 0
    %4060 = vmatpush1.bf16.msra.mxu0 0
    %4061 = vmatprep.subr.bf16.mxu0 0
    %4062 = vmatpush1.bf16.msra.mxu0 0
    %4063 = vmatprep.subr.bf16.mxu0 0
    %4064 = vmatpush1.bf16.msra.mxu0 0
    %4065 = vmatprep.subr.bf16.mxu0 0
    %4066 = vmatpush1.bf16.msra.mxu0 0
    %4067 = vmatprep.subr.bf16.mxu0 0
    %4068 = vmatpush1.bf16.msra.mxu0 0
    %4069 = vmatprep.mubr.bf16.mxu0 0
    %4070 = vmatmul.mubr.bf16.gmra.mrb[0].mxu0 %v4035
    %v4071 = vpop.f32.mrb[0].mxu0
    %v4072 = vadd.f32 0.0, %v4071
    %v4073 = vpop.f32.mrb[0].mxu0
    %v4074 = vpop.f32.mrb[0].mxu0
    %v4075 = vadd.f32 0.0, %v4074
    %v4076 = vpop.f32.mrb[0].mxu0
    %4077 = vdwg.mxu0
    %4080 = vrot.lane.b32.xlu0 %v4072, 64
    %v4081 = vpop.permute.xlu0 %4080
    %4082 = vrot.lane.b32.xlu0 %v4075, 64
    %v4083 = vpop.permute.xlu0 %4082
    %4086 = vst.msk [vmem:[#allocation2] sm:$0xff] %vm1241, %v4081
    %4087 = vst.msk [vmem:[#allocation2 + $0x8] sm:$0xff] %vm1241, %v4083
    %4088 = vrot.lane.b32.xlu0 %v3422, 48
    %v4089 = vpop.permute.xlu0 %4088
    %4090 = vrot.lane.b32.xlu0 %v3423, 48
    %v4091 = vpop.permute.xlu0 %4090
    %v4093 = vsel %vm576, %v4089, 0
    %v4096 = vsel %vm576, %v4091, 0
    %4098 = vmatprep.subr.bf16.mxu0 0
    %4099 = vmatpush1.bf16.xpose.msra.mxu0 %v4096
    %4100 = vmatprep.subr.bf16.mxu0 0
    %4101 = vmatpush1.bf16.xpose.msra.mxu0 0
    %4102 = vmatprep.subr.bf16.mxu0 0
    %4103 = vmatpush1.bf16.xpose.msra.mxu0 0
    %4104 = vmatprep.subr.bf16.mxu0 0
    %4105 = vmatpush1.bf16.xpose.msra.mxu0 0
    %4106 = vmatprep.subr.bf16.mxu0 0
    %4107 = vmatpush1.bf16.xpose.msra.mxu0 0
    %4108 = vmatprep.subr.bf16.mxu0 0
    %4109 = vmatpush1.bf16.xpose.msra.mxu0 0
    %4110 = vmatprep.subr.bf16.mxu0 0
    %4111 = vmatpush1.bf16.xpose.msra.mxu0 0
    %4112 = vmatprep.subr.bf16.mxu0 0
    %4113 = vmatpush1.bf16.xpose.msra.mxu0 0
    %4114 = vmatprep.subr.bf16.mxu0 0
    %4115 = vmatpush1.bf16.xpose.msra.mxu0 0
    %4116 = vmatprep.subr.bf16.mxu0 0
    %4117 = vmatpush1.bf16.xpose.msra.mxu0 0
    %4118 = vmatprep.subr.bf16.mxu0 0
    %4119 = vmatpush1.bf16.xpose.msra.mxu0 0
    %4120 = vmatprep.subr.bf16.mxu0 0
    %4121 = vmatpush1.bf16.xpose.msra.mxu0 0
    %4122 = vmatprep.subr.bf16.mxu0 0
    %4123 = vmatpush1.bf16.xpose.msra.mxu0 0
    %4124 = vmatprep.subr.bf16.mxu0 0
    %4125 = vmatpush1.bf16.xpose.msra.mxu0 0
    %4126 = vmatprep.subr.bf16.mxu0 0
    %4127 = vmatpush1.bf16.xpose.msra.mxu0 0
    %4128 = vmatprep.subr.bf16.mxu0 0
    %4129 = vmatpush1.bf16.xpose.msra.mxu0 0
    %4130 = vmatprep.mubr.bf16.mxu0 0
    %4131 = vmatmul.mubr.bf16.gmra.mrb[0].mxu0 %v4093
    %v4132 = vpop.f32.mrb[0].mxu0
    %v4133 = vadd.f32 0.0, %v4132
    %v4134 = vpop.f32.mrb[0].mxu0
    %v4135 = vpop.f32.mrb[0].mxu0
    %v4136 = vadd.f32 0.0, %v4135
    %v4137 = vpop.f32.mrb[0].mxu0
    %4138 = vdwg.mxu0
    %v4139 = vmul.f32 %v4133, 0.25
    %v4140 = vmul.f32 %v4136, 0.25
    %v4141 = vadd.f32 %v4139, %v309
    %v4142 = vadd.f32 %v4140, %v310
    %v4143 = vsel %vm576, %v4141, -inf
    %4144 = vmax.xlane.f32.xlu0 %v4143
    %v4145 = vpop.xlane.xlu0 %4144
    %v4146 = vsel %vm576, %v4142, -inf
    %4147 = vmax.xlane.f32.xlu0 %v4146
    %v4148 = vpop.xlane.xlu0 %4147
    %v4149 = vsub.f32 %v4141, %v4145
    %v4150 = vsub.f32 %v4142, %v4148
    %v4151 = vmul.f32 %v4149, 1.442695
    %v4152 = vpow.pop %v4151
    %v4153 = vmul.f32 %v4150, 1.442695
    %v4154 = vpow.pop %v4153
    %v4155 = vsel %vm576, %v4152, 0.0
    %4156 = vadd.xlane.f32.xlu0 %v4155
    %v4157 = vpop.xlane.xlu0 %4156
    %v4158 = vsel %vm576, %v4154, 0.0
    %4159 = vadd.xlane.f32.xlu0 %v4158
    %v4160 = vpop.xlane.xlu0 %4159
    %v4161 = vrcp.pop %v4157
    %v4162 = vrcp.pop %v4160
    %v4163 = vmul.f32 %v4152, %v4161
    %v4164 = vmul.f32 %v4154, %v4162
    %v4165 = vpack.c.bf16 %v4164, %v4163
    %4166 = vrot.lane.b32.xlu0 %v3424, 48
    %v4167 = vpop.permute.xlu0 %4166
    %v4170 = vsel %vm576, %v4165, 0
    %4172 = vmatprep.subr.bf16.mxu0 0
    %4173 = vmatpush1.bf16.msra.mxu0 %v4167
    %4174 = vmatprep.subr.bf16.mxu0 0
    %4175 = vmatpush1.bf16.msra.mxu0 0
    %4176 = vmatprep.subr.bf16.mxu0 0
    %4177 = vmatpush1.bf16.msra.mxu0 0
    %4178 = vmatprep.subr.bf16.mxu0 0
    %4179 = vmatpush1.bf16.msra.mxu0 0
    %4180 = vmatprep.subr.bf16.mxu0 0
    %4181 = vmatpush1.bf16.msra.mxu0 0
    %4182 = vmatprep.subr.bf16.mxu0 0
    %4183 = vmatpush1.bf16.msra.mxu0 0
    %4184 = vmatprep.subr.bf16.mxu0 0
    %4185 = vmatpush1.bf16.msra.mxu0 0
    %4186 = vmatprep.subr.bf16.mxu0 0
    %4187 = vmatpush1.bf16.msra.mxu0 0
    %4188 = vmatprep.subr.bf16.mxu0 0
    %4189 = vmatpush1.bf16.msra.mxu0 0
    %4190 = vmatprep.subr.bf16.mxu0 0
    %4191 = vmatpush1.bf16.msra.mxu0 0
    %4192 = vmatprep.subr.bf16.mxu0 0
    %4193 = vmatpush1.bf16.msra.mxu0 0
    %4194 = vmatprep.subr.bf16.mxu0 0
    %4195 = vmatpush1.bf16.msra.mxu0 0
    %4196 = vmatprep.subr.bf16.mxu0 0
    %4197 = vmatpush1.bf16.msra.mxu0 0
    %4198 = vmatprep.subr.bf16.mxu0 0
    %4199 = vmatpush1.bf16.msra.mxu0 0
    %4200 = vmatprep.subr.bf16.mxu0 0
    %4201 = vmatpush1.bf16.msra.mxu0 0
    %4202 = vmatprep.subr.bf16.mxu0 0
    %4203 = vmatpush1.bf16.msra.mxu0 0
    %4204 = vmatprep.mubr.bf16.mxu0 0
    %4205 = vmatmul.mubr.bf16.gmra.mrb[0].mxu0 %v4170
    %v4206 = vpop.f32.mrb[0].mxu0
    %v4207 = vadd.f32 0.0, %v4206
    %v4208 = vpop.f32.mrb[0].mxu0
    %v4209 = vpop.f32.mrb[0].mxu0
    %v4210 = vadd.f32 0.0, %v4209
    %v4211 = vpop.f32.mrb[0].mxu0
    %4212 = vdwg.mxu0
    %4215 = vrot.lane.b32.xlu0 %v4207, 80
    %v4216 = vpop.permute.xlu0 %4215
    %4217 = vrot.lane.b32.xlu0 %v4210, 80
    %v4218 = vpop.permute.xlu0 %4217
    %4221 = vst.msk [vmem:[#allocation2] sm:$0xff] %vm1377, %v4216
    %4222 = vst.msk [vmem:[#allocation2 + $0x8] sm:$0xff] %vm1377, %v4218
    %4223 = vrot.lane.b32.xlu0 %v3422, 32
    %v4224 = vpop.permute.xlu0 %4223
    %4225 = vrot.lane.b32.xlu0 %v3423, 32
    %v4226 = vpop.permute.xlu0 %4225
    %v4228 = vsel %vm576, %v4224, 0
    %v4231 = vsel %vm576, %v4226, 0
    %4233 = vmatprep.subr.bf16.mxu0 0
    %4234 = vmatpush1.bf16.xpose.msra.mxu0 %v4231
    %4235 = vmatprep.subr.bf16.mxu0 0
    %4236 = vmatpush1.bf16.xpose.msra.mxu0 0
    %4237 = vmatprep.subr.bf16.mxu0 0
    %4238 = vmatpush1.bf16.xpose.msra.mxu0 0
    %4239 = vmatprep.subr.bf16.mxu0 0
    %4240 = vmatpush1.bf16.xpose.msra.mxu0 0
    %4241 = vmatprep.subr.bf16.mxu0 0
    %4242 = vmatpush1.bf16.xpose.msra.mxu0 0
    %4243 = vmatprep.subr.bf16.mxu0 0
    %4244 = vmatpush1.bf16.xpose.msra.mxu0 0
    %4245 = vmatprep.subr.bf16.mxu0 0
    %4246 = vmatpush1.bf16.xpose.msra.mxu0 0
    %4247 = vmatprep.subr.bf16.mxu0 0
    %4248 = vmatpush1.bf16.xpose.msra.mxu0 0
    %4249 = vmatprep.subr.bf16.mxu0 0
    %4250 = vmatpush1.bf16.xpose.msra.mxu0 0
    %4251 = vmatprep.subr.bf16.mxu0 0
    %4252 = vmatpush1.bf16.xpose.msra.mxu0 0
    %4253 = vmatprep.subr.bf16.mxu0 0
    %4254 = vmatpush1.bf16.xpose.msra.mxu0 0
    %4255 = vmatprep.subr.bf16.mxu0 0
    %4256 = vmatpush1.bf16.xpose.msra.mxu0 0
    %4257 = vmatprep.subr.bf16.mxu0 0
    %4258 = vmatpush1.bf16.xpose.msra.mxu0 0
    %4259 = vmatprep.subr.bf16.mxu0 0
    %4260 = vmatpush1.bf16.xpose.msra.mxu0 0
    %4261 = vmatprep.subr.bf16.mxu0 0
    %4262 = vmatpush1.bf16.xpose.msra.mxu0 0
    %4263 = vmatprep.subr.bf16.mxu0 0
    %4264 = vmatpush1.bf16.xpose.msra.mxu0 0
    %4265 = vmatprep.mubr.bf16.mxu0 0
    %4266 = vmatmul.mubr.bf16.gmra.mrb[0].mxu0 %v4228
    %v4267 = vpop.f32.mrb[0].mxu0
    %v4268 = vadd.f32 0.0, %v4267
    %v4269 = vpop.f32.mrb[0].mxu0
    %v4270 = vpop.f32.mrb[0].mxu0
    %v4271 = vadd.f32 0.0, %v4270
    %v4272 = vpop.f32.mrb[0].mxu0
    %4273 = vdwg.mxu0
    %v4274 = vmul.f32 %v4268, 0.25
    %v4275 = vmul.f32 %v4271, 0.25
    %v4276 = vadd.f32 %v4274, %v309
    %v4277 = vadd.f32 %v4275, %v310
    %v4278 = vsel %vm576, %v4276, -inf
    %4279 = vmax.xlane.f32.xlu0 %v4278
    %v4280 = vpop.xlane.xlu0 %4279
    %v4281 = vsel %vm576, %v4277, -inf
    %4282 = vmax.xlane.f32.xlu0 %v4281
    %v4283 = vpop.xlane.xlu0 %4282
    %v4284 = vsub.f32 %v4276, %v4280
    %v4285 = vsub.f32 %v4277, %v4283
    %v4286 = vmul.f32 %v4284, 1.442695
    %v4287 = vpow.pop %v4286
    %v4288 = vmul.f32 %v4285, 1.442695
    %v4289 = vpow.pop %v4288
    %v4290 = vsel %vm576, %v4287, 0.0
    %4291 = vadd.xlane.f32.xlu0 %v4290
    %v4292 = vpop.xlane.xlu0 %4291
    %v4293 = vsel %vm576, %v4289, 0.0
    %4294 = vadd.xlane.f32.xlu0 %v4293
    %v4295 = vpop.xlane.xlu0 %4294
    %v4296 = vrcp.pop %v4292
    %v4297 = vrcp.pop %v4295
    %v4298 = vmul.f32 %v4287, %v4296
    %v4299 = vmul.f32 %v4289, %v4297
    %v4300 = vpack.c.bf16 %v4299, %v4298
    %4301 = vrot.lane.b32.xlu0 %v3424, 32
    %v4302 = vpop.permute.xlu0 %4301
    %v4305 = vsel %vm576, %v4300, 0
    %4307 = vmatprep.subr.bf16.mxu0 0
    %4308 = vmatpush1.bf16.msra.mxu0 %v4302
    %4309 = vmatprep.subr.bf16.mxu0 0
    %4310 = vmatpush1.bf16.msra.mxu0 0
    %4311 = vmatprep.subr.bf16.mxu0 0
    %4312 = vmatpush1.bf16.msra.mxu0 0
    %4313 = vmatprep.subr.bf16.mxu0 0
    %4314 = vmatpush1.bf16.msra.mxu0 0
    %4315 = vmatprep.subr.bf16.mxu0 0
    %4316 = vmatpush1.bf16.msra.mxu0 0
    %4317 = vmatprep.subr.bf16.mxu0 0
    %4318 = vmatpush1.bf16.msra.mxu0 0
    %4319 = vmatprep.subr.bf16.mxu0 0
    %4320 = vmatpush1.bf16.msra.mxu0 0
    %4321 = vmatprep.subr.bf16.mxu0 0
    %4322 = vmatpush1.bf16.msra.mxu0 0
    %4323 = vmatprep.subr.bf16.mxu0 0
    %4324 = vmatpush1.bf16.msra.mxu0 0
    %4325 = vmatprep.subr.bf16.mxu0 0
    %4326 = vmatpush1.bf16.msra.mxu0 0
    %4327 = vmatprep.subr.bf16.mxu0 0
    %4328 = vmatpush1.bf16.msra.mxu0 0
    %4329 = vmatprep.subr.bf16.mxu0 0
    %4330 = vmatpush1.bf16.msra.mxu0 0
    %4331 = vmatprep.subr.bf16.mxu0 0
    %4332 = vmatpush1.bf16.msra.mxu0 0
    %4333 = vmatprep.subr.bf16.mxu0 0
    %4334 = vmatpush1.bf16.msra.mxu0 0
    %4335 = vmatprep.subr.bf16.mxu0 0
    %4336 = vmatpush1.bf16.msra.mxu0 0
    %4337 = vmatprep.subr.bf16.mxu0 0
    %4338 = vmatpush1.bf16.msra.mxu0 0
    %4339 = vmatprep.mubr.bf16.mxu0 0
    %4340 = vmatmul.mubr.bf16.gmra.mrb[0].mxu0 %v4305
    %v4341 = vpop.f32.mrb[0].mxu0
    %v4342 = vadd.f32 0.0, %v4341
    %v4343 = vpop.f32.mrb[0].mxu0
    %v4344 = vpop.f32.mrb[0].mxu0
    %v4345 = vadd.f32 0.0, %v4344
    %v4346 = vpop.f32.mrb[0].mxu0
    %4347 = vdwg.mxu0
    %4350 = vrot.lane.b32.xlu0 %v4342, 96
    %v4351 = vpop.permute.xlu0 %4350
    %4352 = vrot.lane.b32.xlu0 %v4345, 96
    %v4353 = vpop.permute.xlu0 %4352
    %4356 = vst.msk [vmem:[#allocation2] sm:$0xff] %vm1513, %v4351
    %4357 = vst.msk [vmem:[#allocation2 + $0x8] sm:$0xff] %vm1513, %v4353
    %4358 = vrot.lane.b32.xlu0 %v3422, 16
    %v4359 = vpop.permute.xlu0 %4358
    %4360 = vrot.lane.b32.xlu0 %v3423, 16
    %v4361 = vpop.permute.xlu0 %4360
    %v4363 = vsel %vm576, %v4359, 0
    %v4366 = vsel %vm576, %v4361, 0
    %4368 = vmatprep.subr.bf16.mxu0 0
    %4369 = vmatpush1.bf16.xpose.msra.mxu0 %v4366
    %4370 = vmatprep.subr.bf16.mxu0 0
    %4371 = vmatpush1.bf16.xpose.msra.mxu0 0
    %4372 = vmatprep.subr.bf16.mxu0 0
    %4373 = vmatpush1.bf16.xpose.msra.mxu0 0
    %4374 = vmatprep.subr.bf16.mxu0 0
    %4375 = vmatpush1.bf16.xpose.msra.mxu0 0
    %4376 = vmatprep.subr.bf16.mxu0 0
    %4377 = vmatpush1.bf16.xpose.msra.mxu0 0
    %4378 = vmatprep.subr.bf16.mxu0 0
    %4379 = vmatpush1.bf16.xpose.msra.mxu0 0
    %4380 = vmatprep.subr.bf16.mxu0 0
    %4381 = vmatpush1.bf16.xpose.msra.mxu0 0
    %4382 = vmatprep.subr.bf16.mxu0 0
    %4383 = vmatpush1.bf16.xpose.msra.mxu0 0
    %4384 = vmatprep.subr.bf16.mxu0 0
    %4385 = vmatpush1.bf16.xpose.msra.mxu0 0
    %4386 = vmatprep.subr.bf16.mxu0 0
    %4387 = vmatpush1.bf16.xpose.msra.mxu0 0
    %4388 = vmatprep.subr.bf16.mxu0 0
    %4389 = vmatpush1.bf16.xpose.msra.mxu0 0
    %4390 = vmatprep.subr.bf16.mxu0 0
    %4391 = vmatpush1.bf16.xpose.msra.mxu0 0
    %4392 = vmatprep.subr.bf16.mxu0 0
    %4393 = vmatpush1.bf16.xpose.msra.mxu0 0
    %4394 = vmatprep.subr.bf16.mxu0 0
    %4395 = vmatpush1.bf16.xpose.msra.mxu0 0
    %4396 = vmatprep.subr.bf16.mxu0 0
    %4397 = vmatpush1.bf16.xpose.msra.mxu0 0
    %4398 = vmatprep.subr.bf16.mxu0 0
    %4399 = vmatpush1.bf16.xpose.msra.mxu0 0
    %4400 = vmatprep.mubr.bf16.mxu0 0
    %4401 = vmatmul.mubr.bf16.gmra.mrb[0].mxu0 %v4363
    %v4402 = vpop.f32.mrb[0].mxu0
    %v4403 = vadd.f32 0.0, %v4402
    %v4404 = vpop.f32.mrb[0].mxu0
    %v4405 = vpop.f32.mrb[0].mxu0
    %v4406 = vadd.f32 0.0, %v4405
    %v4407 = vpop.f32.mrb[0].mxu0
    %4408 = vdwg.mxu0
    %v4409 = vmul.f32 %v4403, 0.25
    %v4410 = vmul.f32 %v4406, 0.25
    %v4411 = vadd.f32 %v4409, %v309
    %v4412 = vadd.f32 %v4410, %v310
    %v4413 = vsel %vm576, %v4411, -inf
    %4414 = vmax.xlane.f32.xlu0 %v4413
    %v4415 = vpop.xlane.xlu0 %4414
    %v4416 = vsel %vm576, %v4412, -inf
    %4417 = vmax.xlane.f32.xlu0 %v4416
    %v4418 = vpop.xlane.xlu0 %4417
    %v4419 = vsub.f32 %v4411, %v4415
    %v4420 = vsub.f32 %v4412, %v4418
    %v4421 = vmul.f32 %v4419, 1.442695
    %v4422 = vpow.pop %v4421
    %v4423 = vmul.f32 %v4420, 1.442695
    %v4424 = vpow.pop %v4423
    %v4425 = vsel %vm576, %v4422, 0.0
    %4426 = vadd.xlane.f32.xlu0 %v4425
    %v4427 = vpop.xlane.xlu0 %4426
    %v4428 = vsel %vm576, %v4424, 0.0
    %4429 = vadd.xlane.f32.xlu0 %v4428
    %v4430 = vpop.xlane.xlu0 %4429
    %v4431 = vrcp.pop %v4427
    %v4432 = vrcp.pop %v4430
    %v4433 = vmul.f32 %v4422, %v4431
    %v4434 = vmul.f32 %v4424, %v4432
    %v4435 = vpack.c.bf16 %v4434, %v4433
    %4436 = vrot.lane.b32.xlu0 %v3424, 16
    %v4437 = vpop.permute.xlu0 %4436
    %v4440 = vsel %vm576, %v4435, 0
    %4442 = vmatprep.subr.bf16.mxu0 0
    %4443 = vmatpush1.bf16.msra.mxu0 %v4437
    %4444 = vmatprep.subr.bf16.mxu0 0
    %4445 = vmatpush1.bf16.msra.mxu0 0
    %4446 = vmatprep.subr.bf16.mxu0 0
    %4447 = vmatpush1.bf16.msra.mxu0 0
    %4448 = vmatprep.subr.bf16.mxu0 0
    %4449 = vmatpush1.bf16.msra.mxu0 0
    %4450 = vmatprep.subr.bf16.mxu0 0
    %4451 = vmatpush1.bf16.msra.mxu0 0
    %4452 = vmatprep.subr.bf16.mxu0 0
    %4453 = vmatpush1.bf16.msra.mxu0 0
    %4454 = vmatprep.subr.bf16.mxu0 0
    %4455 = vmatpush1.bf16.msra.mxu0 0
    %4456 = vmatprep.subr.bf16.mxu0 0
    %4457 = vmatpush1.bf16.msra.mxu0 0
    %4458 = vmatprep.subr.bf16.mxu0 0
    %4459 = vmatpush1.bf16.msra.mxu0 0
    %4460 = vmatprep.subr.bf16.mxu0 0
    %4461 = vmatpush1.bf16.msra.mxu0 0
    %4462 = vmatprep.subr.bf16.mxu0 0
    %4463 = vmatpush1.bf16.msra.mxu0 0
    %4464 = vmatprep.subr.bf16.mxu0 0
    %4465 = vmatpush1.bf16.msra.mxu0 0
    %4466 = vmatprep.subr.bf16.mxu0 0
    %4467 = vmatpush1.bf16.msra.mxu0 0
    %4468 = vmatprep.subr.bf16.mxu0 0
    %4469 = vmatpush1.bf16.msra.mxu0 0
    %4470 = vmatprep.subr.bf16.mxu0 0
    %4471 = vmatpush1.bf16.msra.mxu0 0
    %4472 = vmatprep.subr.bf16.mxu0 0
    %4473 = vmatpush1.bf16.msra.mxu0 0
    %4474 = vmatprep.mubr.bf16.mxu0 0
    %4475 = vmatmul.mubr.bf16.gmra.mrb[0].mxu0 %v4440
    %v4476 = vpop.f32.mrb[0].mxu0
    %v4477 = vadd.f32 0.0, %v4476
    %v4478 = vpop.f32.mrb[0].mxu0
    %v4479 = vpop.f32.mrb[0].mxu0
    %v4480 = vadd.f32 0.0, %v4479
    %v4481 = vpop.f32.mrb[0].mxu0
    %4482 = vdwg.mxu0
    %4485 = vrot.lane.b32.xlu0 %v4477, 112
    %v4486 = vpop.permute.xlu0 %4485
    %4487 = vrot.lane.b32.xlu0 %v4480, 112
    %v4488 = vpop.permute.xlu0 %4487
    %4491 = vst.msk [vmem:[#allocation2] sm:$0xff] %vm1649, %v4486
    %4492 = vst.msk [vmem:[#allocation2 + $0x8] sm:$0xff] %vm1649, %v4488
    %v4493 = vld [vmem:[#allocation2] sm:$0xff]
    %v4494 = vld [vmem:[#allocation2 + $0x8] sm:$0xff]
    %v4495 = vpack.c.bf16 %v4494, %v4493
    %s4496 = scalar_lea.vmem %s7, 64
    %v4497 = vld [vmem:[%s4496] sm:$0xf]
    %v4498 = vld [vmem:[%s4496 + $0x4] sm:$0xf]
    %v4499 = vld [vmem:[%s4496 + $0x8] sm:$0xf]
    %v4500 = vld [vmem:[%s4496 + $0xc] sm:$0xf]
    %v4501 = vld [vmem:[%s4496 + $0x10] sm:$0xf]
    %v4502 = vld [vmem:[%s4496 + $0x14] sm:$0xf]
    %v4503 = vld [vmem:[%s4496 + $0x18] sm:$0xf]
    %v4504 = vld [vmem:[%s4496 + $0x1c] sm:$0xf]
    %v4505 = vld [vmem:[%s4496 + $0x20] sm:$0xf]
    %v4506 = vld [vmem:[%s4496 + $0x24] sm:$0xf]
    %v4507 = vld [vmem:[%s4496 + $0x28] sm:$0xf]
    %v4508 = vld [vmem:[%s4496 + $0x2c] sm:$0xf]
    %v4509 = vld [vmem:[%s4496 + $0x30] sm:$0xf]
    %v4510 = vld [vmem:[%s4496 + $0x34] sm:$0xf]
    %v4511 = vld [vmem:[%s4496 + $0x38] sm:$0xf]
    %v4512 = vld [vmem:[%s4496 + $0x3c] sm:$0xf]
    %s4513 = scalar_lea.vmem %s8, 1
    %v4514 = vld [vmem:[%s4513] sm:$0x1]
    %v4516 = vlaneseq
    %v4517 = vshrl.u32 %v4516, 7
    %v4518 = vsub.s32 0, %v4517
    %v4519 = vrot.slane %v4514, %v4518
    %v4537 = vunpack.c.l.b16 %v4497
    %v4538 = vunpack.c.l.b16 %v4498
    %v4539 = vunpack.c.l.b16 %v4499
    %v4540 = vunpack.c.l.b16 %v4500
    %v4541 = vunpack.c.l.b16 %v4501
    %v4542 = vunpack.c.l.b16 %v4502
    %v4543 = vunpack.c.l.b16 %v4503
    %v4544 = vunpack.c.l.b16 %v4504
    %v4545 = vunpack.c.l.b16 %v4505
    %v4546 = vunpack.c.l.b16 %v4506
    %v4547 = vunpack.c.l.b16 %v4507
    %v4548 = vunpack.c.l.b16 %v4508
    %v4549 = vunpack.c.l.b16 %v4509
    %v4550 = vunpack.c.l.b16 %v4510
    %v4551 = vunpack.c.l.b16 %v4511
    %v4552 = vunpack.c.l.b16 %v4512
    %v4553 = vpack.c.b16 %v4538, %v4537
    %v4554 = vpack.c.b16 %v4540, %v4539
    %v4555 = vpack.c.b16 %v4542, %v4541
    %v4556 = vpack.c.b16 %v4544, %v4543
    %v4557 = vpack.c.b16 %v4546, %v4545
    %v4558 = vpack.c.b16 %v4548, %v4547
    %v4559 = vpack.c.b16 %v4550, %v4549
    %v4560 = vpack.c.b16 %v4552, %v4551
    %4569 = vmatprep.subr.bf16.mxu0 0
    %4570 = vmatpush1.bf16.msra.mxu0 %v4553
    %4571 = vmatprep.subr.bf16.mxu0 0
    %4572 = vmatpush1.bf16.msra.mxu0 %v4554
    %4573 = vmatprep.subr.bf16.mxu0 0
    %4574 = vmatpush1.bf16.msra.mxu0 %v4555
    %4575 = vmatprep.subr.bf16.mxu0 0
    %4576 = vmatpush1.bf16.msra.mxu0 %v4556
    %4577 = vmatprep.subr.bf16.mxu0 0
    %4578 = vmatpush1.bf16.msra.mxu0 %v4557
    %4579 = vmatprep.subr.bf16.mxu0 0
    %4580 = vmatpush1.bf16.msra.mxu0 %v4558
    %4581 = vmatprep.subr.bf16.mxu0 0
    %4582 = vmatpush1.bf16.msra.mxu0 %v4559
    %4583 = vmatprep.subr.bf16.mxu0 0
    %4584 = vmatpush1.bf16.msra.mxu0 %v4560
    %4585 = vmatprep.subr.bf16.mxu0 0
    %4586 = vmatpush1.bf16.msra.mxu0 0
    %4587 = vmatprep.subr.bf16.mxu0 0
    %4588 = vmatpush1.bf16.msra.mxu0 0
    %4589 = vmatprep.subr.bf16.mxu0 0
    %4590 = vmatpush1.bf16.msra.mxu0 0
    %4591 = vmatprep.subr.bf16.mxu0 0
    %4592 = vmatpush1.bf16.msra.mxu0 0
    %4593 = vmatprep.subr.bf16.mxu0 0
    %4594 = vmatpush1.bf16.msra.mxu0 0
    %4595 = vmatprep.subr.bf16.mxu0 0
    %4596 = vmatpush1.bf16.msra.mxu0 0
    %4597 = vmatprep.subr.bf16.mxu0 0
    %4598 = vmatpush1.bf16.msra.mxu0 0
    %4599 = vmatprep.subr.bf16.mxu0 0
    %4600 = vmatpush1.bf16.msra.mxu0 0
    %4601 = vmatprep.mubr.bf16.mxu0 0
    %4602 = vmatmul.mubr.bf16.gmra.mrb[0].mxu0 %v4495
    %v4603 = vpop.f32.mrb[0].mxu0
    %v4604 = vadd.f32 %v4519, %v4603
    %v4605 = vpop.f32.mrb[0].mxu0
    %v4606 = vpop.f32.mrb[0].mxu0
    %v4607 = vadd.f32 %v4519, %v4606
    %v4608 = vpop.f32.mrb[0].mxu0
    %4609 = vdwg.mxu0
    %v4610 = vadd.f32 %v3156, %v4604
    %v4611 = vadd.f32 %v3157, %v4607
    %s4612 = scalar_lea.vmem %s9, 1
    %v4613 = vld [vmem:[%s4612] sm:$0x1]
    %s4614 = scalar_lea.vmem %s10, 1
    %v4615 = vld [vmem:[%s4614] sm:$0x1]
    %4616 = vadd.xlane.f32.xlu0 %v4610
    %v4617 = vpop.xlane.xlu0 %4616
    %4618 = vadd.xlane.f32.xlu0 %v4611
    %v4619 = vpop.xlane.xlu0 %4618
    %v4620 = vmul.f32 %v4617, %v1775
    %v4621 = vmul.f32 %v4619, %v1775
    %v4622 = vsub.f32 %v4610, %v4620
    %v4623 = vsub.f32 %v4611, %v4621
    %v4624 = vmul.f32 %v4622, %v4622
    %v4625 = vmul.f32 %v4623, %v4623
    %4626 = vadd.xlane.f32.xlu0 %v4624
    %v4627 = vpop.xlane.xlu0 %4626
    %4628 = vadd.xlane.f32.xlu0 %v4625
    %v4629 = vpop.xlane.xlu0 %4628
    %v4630 = vmul.f32 %v4627, %v1775
    %v4631 = vmul.f32 %v4629, %v1775
    %v4632 = vadd.f32 %v4630, 1e-05
    %v4633 = vadd.f32 %v4631, 1e-05
    %v4634 = vrsqrt.pop %v4632
    %v4635 = vrsqrt.pop %v4633
    %v4636 = vmul.f32 %v4622, %v4634
    %v4637 = vmul.f32 %v4623, %v4635
    %v4639 = vlaneseq
    %v4640 = vshrl.u32 %v4639, 7
    %v4641 = vsub.s32 0, %v4640
    %v4642 = vrot.slane %v4613, %v4641
    %v4644 = vmul.f32 %v4636, %v4642
    %v4645 = vmul.f32 %v4637, %v4642
    %v4647 = vlaneseq
    %v4648 = vshrl.u32 %v4647, 7
    %v4649 = vsub.s32 0, %v4648
    %v4650 = vrot.slane %v4615, %v4649
    %v4652 = vadd.f32 %v4644, %v4650
    %v4653 = vadd.f32 %v4645, %v4650
    %v4654 = vpack.c.bf16 %v4653, %v4652
    %s4655 = scalar_lea.vmem %s11, 512
    %v4656 = vld [vmem:[%s4655] sm:$0xff]
    %v4657 = vld [vmem:[%s4655 + $0x8] sm:$0xff]
    %v4658 = vld [vmem:[%s4655 + $0x10] sm:$0xff]
    %v4659 = vld [vmem:[%s4655 + $0x18] sm:$0xff]
    %v4660 = vld [vmem:[%s4655 + $0x20] sm:$0xff]
    %v4661 = vld [vmem:[%s4655 + $0x28] sm:$0xff]
    %v4662 = vld [vmem:[%s4655 + $0x30] sm:$0xff]
    %v4663 = vld [vmem:[%s4655 + $0x38] sm:$0xff]
    %v4664 = vld [vmem:[%s4655 + $0x40] sm:$0xff]
    %v4665 = vld [vmem:[%s4655 + $0x48] sm:$0xff]
    %v4666 = vld [vmem:[%s4655 + $0x50] sm:$0xff]
    %v4667 = vld [vmem:[%s4655 + $0x58] sm:$0xff]
    %v4668 = vld [vmem:[%s4655 + $0x60] sm:$0xff]
    %v4669 = vld [vmem:[%s4655 + $0x68] sm:$0xff]
    %v4670 = vld [vmem:[%s4655 + $0x70] sm:$0xff]
    %v4671 = vld [vmem:[%s4655 + $0x78] sm:$0xff]
    %v4672 = vld [vmem:[%s4655 + $0x80] sm:$0xff]
    %v4673 = vld [vmem:[%s4655 + $0x88] sm:$0xff]
    %v4674 = vld [vmem:[%s4655 + $0x90] sm:$0xff]
    %v4675 = vld [vmem:[%s4655 + $0x98] sm:$0xff]
    %v4676 = vld [vmem:[%s4655 + $0xa0] sm:$0xff]
    %v4677 = vld [vmem:[%s4655 + $0xa8] sm:$0xff]
    %v4678 = vld [vmem:[%s4655 + $0xb0] sm:$0xff]
    %v4679 = vld [vmem:[%s4655 + $0xb8] sm:$0xff]
    %v4680 = vld [vmem:[%s4655 + $0xc0] sm:$0xff]
    %v4681 = vld [vmem:[%s4655 + $0xc8] sm:$0xff]
    %v4682 = vld [vmem:[%s4655 + $0xd0] sm:$0xff]
    %v4683 = vld [vmem:[%s4655 + $0xd8] sm:$0xff]
    %v4684 = vld [vmem:[%s4655 + $0xe0] sm:$0xff]
    %v4685 = vld [vmem:[%s4655 + $0xe8] sm:$0xff]
    %v4686 = vld [vmem:[%s4655 + $0xf0] sm:$0xff]
    %v4687 = vld [vmem:[%s4655 + $0xf8] sm:$0xff]
    %v4688 = vld [vmem:[%s4655 + $0x100] sm:$0xff]
    %v4689 = vld [vmem:[%s4655 + $0x108] sm:$0xff]
    %v4690 = vld [vmem:[%s4655 + $0x110] sm:$0xff]
    %v4691 = vld [vmem:[%s4655 + $0x118] sm:$0xff]
    %v4692 = vld [vmem:[%s4655 + $0x120] sm:$0xff]
    %v4693 = vld [vmem:[%s4655 + $0x128] sm:$0xff]
    %v4694 = vld [vmem:[%s4655 + $0x130] sm:$0xff]
    %v4695 = vld [vmem:[%s4655 + $0x138] sm:$0xff]
    %v4696 = vld [vmem:[%s4655 + $0x140] sm:$0xff]
    %v4697 = vld [vmem:[%s4655 + $0x148] sm:$0xff]
    %v4698 = vld [vmem:[%s4655 + $0x150] sm:$0xff]
    %v4699 = vld [vmem:[%s4655 + $0x158] sm:$0xff]
    %v4700 = vld [vmem:[%s4655 + $0x160] sm:$0xff]
    %v4701 = vld [vmem:[%s4655 + $0x168] sm:$0xff]
    %v4702 = vld [vmem:[%s4655 + $0x170] sm:$0xff]
    %v4703 = vld [vmem:[%s4655 + $0x178] sm:$0xff]
    %v4704 = vld [vmem:[%s4655 + $0x180] sm:$0xff]
    %v4705 = vld [vmem:[%s4655 + $0x188] sm:$0xff]
    %v4706 = vld [vmem:[%s4655 + $0x190] sm:$0xff]
    %v4707 = vld [vmem:[%s4655 + $0x198] sm:$0xff]
    %v4708 = vld [vmem:[%s4655 + $0x1a0] sm:$0xff]
    %v4709 = vld [vmem:[%s4655 + $0x1a8] sm:$0xff]
    %v4710 = vld [vmem:[%s4655 + $0x1b0] sm:$0xff]
    %v4711 = vld [vmem:[%s4655 + $0x1b8] sm:$0xff]
    %v4712 = vld [vmem:[%s4655 + $0x1c0] sm:$0xff]
    %v4713 = vld [vmem:[%s4655 + $0x1c8] sm:$0xff]
    %v4714 = vld [vmem:[%s4655 + $0x1d0] sm:$0xff]
    %v4715 = vld [vmem:[%s4655 + $0x1d8] sm:$0xff]
    %v4716 = vld [vmem:[%s4655 + $0x1e0] sm:$0xff]
    %v4717 = vld [vmem:[%s4655 + $0x1e8] sm:$0xff]
    %v4718 = vld [vmem:[%s4655 + $0x1f0] sm:$0xff]
    %v4719 = vld [vmem:[%s4655 + $0x1f8] sm:$0xff]
    %s4720 = scalar_lea.vmem %s12, 8
    %v4721 = vld [vmem:[%s4720] sm:$0xff]
    %v4723 = vlaneseq
    %v4724 = vshrl.u32 %v4723, 7
    %v4725 = vsub.s32 0, %v4724
    %v4726 = vrot.slane %v4721, %v4725
    %v4727 = vlaneseq
    %v4728 = vshrl.u32 %v4727, 7
    %v4729 = vsub.s32 1, %v4728
    %v4730 = vrot.slane %v4721, %v4729
    %v4731 = vlaneseq
    %v4732 = vshrl.u32 %v4731, 7
    %v4733 = vsub.s32 2, %v4732
    %v4734 = vrot.slane %v4721, %v4733
    %v4735 = vlaneseq
    %v4736 = vshrl.u32 %v4735, 7
    %v4737 = vsub.s32 3, %v4736
    %v4738 = vrot.slane %v4721, %v4737
    %v4739 = vlaneseq
    %v4740 = vshrl.u32 %v4739, 7
    %v4741 = vsub.s32 4, %v4740
    %v4742 = vrot.slane %v4721, %v4741
    %v4743 = vlaneseq
    %v4744 = vshrl.u32 %v4743, 7
    %v4745 = vsub.s32 5, %v4744
    %v4746 = vrot.slane %v4721, %v4745
    %v4747 = vlaneseq
    %v4748 = vshrl.u32 %v4747, 7
    %v4749 = vsub.s32 6, %v4748
    %v4750 = vrot.slane %v4721, %v4749
    %v4751 = vlaneseq
    %v4752 = vshrl.u32 %v4751, 7
    %v4753 = vsub.s32 7, %v4752
    %v4754 = vrot.slane %v4721, %v4753
    %v4827 = vunpack.c.l.b16 %v4656
    %v4828 = vunpack.c.h.b16 %v4656
    %v4829 = vunpack.c.l.b16 %v4657
    %v4830 = vunpack.c.h.b16 %v4657
    %v4831 = vunpack.c.l.b16 %v4658
    %v4832 = vunpack.c.h.b16 %v4658
    %v4833 = vunpack.c.l.b16 %v4659
    %v4834 = vunpack.c.h.b16 %v4659
    %v4835 = vunpack.c.l.b16 %v4660
    %v4836 = vunpack.c.h.b16 %v4660
    %v4837 = vunpack.c.l.b16 %v4661
    %v4838 = vunpack.c.h.b16 %v4661
    %v4839 = vunpack.c.l.b16 %v4662
    %v4840 = vunpack.c.h.b16 %v4662
    %v4841 = vunpack.c.l.b16 %v4663
    %v4842 = vunpack.c.h.b16 %v4663
    %v4843 = vunpack.c.l.b16 %v4664
    %v4844 = vunpack.c.h.b16 %v4664
    %v4845 = vunpack.c.l.b16 %v4665
    %v4846 = vunpack.c.h.b16 %v4665
    %v4847 = vunpack.c.l.b16 %v4666
    %v4848 = vunpack.c.h.b16 %v4666
    %v4849 = vunpack.c.l.b16 %v4667
    %v4850 = vunpack.c.h.b16 %v4667
    %v4851 = vunpack.c.l.b16 %v4668
    %v4852 = vunpack.c.h.b16 %v4668
    %v4853 = vunpack.c.l.b16 %v4669
    %v4854 = vunpack.c.h.b16 %v4669
    %v4855 = vunpack.c.l.b16 %v4670
    %v4856 = vunpack.c.h.b16 %v4670
    %v4857 = vunpack.c.l.b16 %v4671
    %v4858 = vunpack.c.h.b16 %v4671
    %v4859 = vunpack.c.l.b16 %v4672
    %v4860 = vunpack.c.h.b16 %v4672
    %v4861 = vunpack.c.l.b16 %v4673
    %v4862 = vunpack.c.h.b16 %v4673
    %v4863 = vunpack.c.l.b16 %v4674
    %v4864 = vunpack.c.h.b16 %v4674
    %v4865 = vunpack.c.l.b16 %v4675
    %v4866 = vunpack.c.h.b16 %v4675
    %v4867 = vunpack.c.l.b16 %v4676
    %v4868 = vunpack.c.h.b16 %v4676
    %v4869 = vunpack.c.l.b16 %v4677
    %v4870 = vunpack.c.h.b16 %v4677
    %v4871 = vunpack.c.l.b16 %v4678
    %v4872 = vunpack.c.h.b16 %v4678
    %v4873 = vunpack.c.l.b16 %v4679
    %v4874 = vunpack.c.h.b16 %v4679
    %v4875 = vunpack.c.l.b16 %v4680
    %v4876 = vunpack.c.h.b16 %v4680
    %v4877 = vunpack.c.l.b16 %v4681
    %v4878 = vunpack.c.h.b16 %v4681
    %v4879 = vunpack.c.l.b16 %v4682
    %v4880 = vunpack.c.h.b16 %v4682
    %v4881 = vunpack.c.l.b16 %v4683
    %v4882 = vunpack.c.h.b16 %v4683
    %v4883 = vunpack.c.l.b16 %v4684
    %v4884 = vunpack.c.h.b16 %v4684
    %v4885 = vunpack.c.l.b16 %v4685
    %v4886 = vunpack.c.h.b16 %v4685
    %v4887 = vunpack.c.l.b16 %v4686
    %v4888 = vunpack.c.h.b16 %v4686
    %v4889 = vunpack.c.l.b16 %v4687
    %v4890 = vunpack.c.h.b16 %v4687
    %v4891 = vunpack.c.l.b16 %v4688
    %v4892 = vunpack.c.h.b16 %v4688
    %v4893 = vunpack.c.l.b16 %v4689
    %v4894 = vunpack.c.h.b16 %v4689
    %v4895 = vunpack.c.l.b16 %v4690
    %v4896 = vunpack.c.h.b16 %v4690
    %v4897 = vunpack.c.l.b16 %v4691
    %v4898 = vunpack.c.h.b16 %v4691
    %v4899 = vunpack.c.l.b16 %v4692
    %v4900 = vunpack.c.h.b16 %v4692
    %v4901 = vunpack.c.l.b16 %v4693
    %v4902 = vunpack.c.h.b16 %v4693
    %v4903 = vunpack.c.l.b16 %v4694
    %v4904 = vunpack.c.h.b16 %v4694
    %v4905 = vunpack.c.l.b16 %v4695
    %v4906 = vunpack.c.h.b16 %v4695
    %v4907 = vunpack.c.l.b16 %v4696
    %v4908 = vunpack.c.h.b16 %v4696
    %v4909 = vunpack.c.l.b16 %v4697
    %v4910 = vunpack.c.h.b16 %v4697
    %v4911 = vunpack.c.l.b16 %v4698
    %v4912 = vunpack.c.h.b16 %v4698
    %v4913 = vunpack.c.l.b16 %v4699
    %v4914 = vunpack.c.h.b16 %v4699
    %v4915 = vunpack.c.l.b16 %v4700
    %v4916 = vunpack.c.h.b16 %v4700
    %v4917 = vunpack.c.l.b16 %v4701
    %v4918 = vunpack.c.h.b16 %v4701
    %v4919 = vunpack.c.l.b16 %v4702
    %v4920 = vunpack.c.h.b16 %v4702
    %v4921 = vunpack.c.l.b16 %v4703
    %v4922 = vunpack.c.h.b16 %v4703
    %v4923 = vunpack.c.l.b16 %v4704
    %v4924 = vunpack.c.h.b16 %v4704
    %v4925 = vunpack.c.l.b16 %v4705
    %v4926 = vunpack.c.h.b16 %v4705
    %v4927 = vunpack.c.l.b16 %v4706
    %v4928 = vunpack.c.h.b16 %v4706
    %v4929 = vunpack.c.l.b16 %v4707
    %v4930 = vunpack.c.h.b16 %v4707
    %v4931 = vunpack.c.l.b16 %v4708
    %v4932 = vunpack.c.h.b16 %v4708
    %v4933 = vunpack.c.l.b16 %v4709
    %v4934 = vunpack.c.h.b16 %v4709
    %v4935 = vunpack.c.l.b16 %v4710
    %v4936 = vunpack.c.h.b16 %v4710
    %v4937 = vunpack.c.l.b16 %v4711
    %v4938 = vunpack.c.h.b16 %v4711
    %v4939 = vunpack.c.l.b16 %v4712
    %v4940 = vunpack.c.h.b16 %v4712
    %v4941 = vunpack.c.l.b16 %v4713
    %v4942 = vunpack.c.h.b16 %v4713
    %v4943 = vunpack.c.l.b16 %v4714
    %v4944 = vunpack.c.h.b16 %v4714
    %v4945 = vunpack.c.l.b16 %v4715
    %v4946 = vunpack.c.h.b16 %v4715
    %v4947 = vunpack.c.l.b16 %v4716
    %v4948 = vunpack.c.h.b16 %v4716
    %v4949 = vunpack.c.l.b16 %v4717
    %v4950 = vunpack.c.h.b16 %v4717
    %v4951 = vunpack.c.l.b16 %v4718
    %v4952 = vunpack.c.h.b16 %v4718
    %v4953 = vunpack.c.l.b16 %v4719
    %v4954 = vunpack.c.h.b16 %v4719
    %v4955 = vpack.c.b16 %v4835, %v4827
    %v4956 = vpack.c.b16 %v4836, %v4828
    %v4957 = vpack.c.b16 %v4837, %v4829
    %v4958 = vpack.c.b16 %v4838, %v4830
    %v4959 = vpack.c.b16 %v4839, %v4831
    %v4960 = vpack.c.b16 %v4840, %v4832
    %v4961 = vpack.c.b16 %v4841, %v4833
    %v4962 = vpack.c.b16 %v4842, %v4834
    %v4963 = vpack.c.b16 %v4851, %v4843
    %v4964 = vpack.c.b16 %v4852, %v4844
    %v4965 = vpack.c.b16 %v4853, %v4845
    %v4966 = vpack.c.b16 %v4854, %v4846
    %v4967 = vpack.c.b16 %v4855, %v4847
    %v4968 = vpack.c.b16 %v4856, %v4848
    %v4969 = vpack.c.b16 %v4857, %v4849
    %v4970 = vpack.c.b16 %v4858, %v4850
    %v4971 = vpack.c.b16 %v4867, %v4859
    %v4972 = vpack.c.b16 %v4868, %v4860
    %v4973 = vpack.c.b16 %v4869, %v4861
    %v4974 = vpack.c.b16 %v4870, %v4862
    %v4975 = vpack.c.b16 %v4871, %v4863
    %v4976 = vpack.c.b16 %v4872, %v4864
    %v4977 = vpack.c.b16 %v4873, %v4865
    %v4978 = vpack.c.b16 %v4874, %v4866
    %v4979 = vpack.c.b16 %v4883, %v4875
    %v4980 = vpack.c.b16 %v4884, %v4876
    %v4981 = vpack.c.b16 %v4885, %v4877
    %v4982 = vpack.c.b16 %v4886, %v4878
    %v4983 = vpack.c.b16 %v4887, %v4879
    %v4984 = vpack.c.b16 %v4888, %v4880
    %v4985 = vpack.c.b16 %v4889, %v4881
    %v4986 = vpack.c.b16 %v4890, %v4882
    %v4987 = vpack.c.b16 %v4899, %v4891
    %v4988 = vpack.c.b16 %v4900, %v4892
    %v4989 = vpack.c.b16 %v4901, %v4893
    %v4990 = vpack.c.b16 %v4902, %v4894
    %v4991 = vpack.c.b16 %v4903, %v4895
    %v4992 = vpack.c.b16 %v4904, %v4896
    %v4993 = vpack.c.b16 %v4905, %v4897
    %v4994 = vpack.c.b16 %v4906, %v4898
    %v4995 = vpack.c.b16 %v4915, %v4907
    %v4996 = vpack.c.b16 %v4916, %v4908
    %v4997 = vpack.c.b16 %v4917, %v4909
    %v4998 = vpack.c.b16 %v4918, %v4910
    %v4999 = vpack.c.b16 %v4919, %v4911
    %v5000 = vpack.c.b16 %v4920, %v4912
    %v5001 = vpack.c.b16 %v4921, %v4913
    %v5002 = vpack.c.b16 %v4922, %v4914
    %v5003 = vpack.c.b16 %v4931, %v4923
    %v5004 = vpack.c.b16 %v4932, %v4924
    %v5005 = vpack.c.b16 %v4933, %v4925
    %v5006 = vpack.c.b16 %v4934, %v4926
    %v5007 = vpack.c.b16 %v4935, %v4927
    %v5008 = vpack.c.b16 %v4936, %v4928
    %v5009 = vpack.c.b16 %v4937, %v4929
    %v5010 = vpack.c.b16 %v4938, %v4930
    %v5011 = vpack.c.b16 %v4947, %v4939
    %v5012 = vpack.c.b16 %v4948, %v4940
    %v5013 = vpack.c.b16 %v4949, %v4941
    %v5014 = vpack.c.b16 %v4950, %v4942
    %v5015 = vpack.c.b16 %v4951, %v4943
    %v5016 = vpack.c.b16 %v4952, %v4944
    %v5017 = vpack.c.b16 %v4953, %v4945
    %v5018 = vpack.c.b16 %v4954, %v4946
    %5083 = vmatprep.subr.bf16.mxu0 %v4956
    %5084 = vmatpush1.bf16.msra.mxu0 %v4955
    %5085 = vmatprep.subr.bf16.mxu0 %v4964
    %5086 = vmatpush1.bf16.msra.mxu0 %v4963
    %5087 = vmatprep.subr.bf16.mxu0 %v4972
    %5088 = vmatpush1.bf16.msra.mxu0 %v4971
    %5089 = vmatprep.subr.bf16.mxu0 %v4980
    %5090 = vmatpush1.bf16.msra.mxu0 %v4979
    %5091 = vmatprep.subr.bf16.mxu0 %v4988
    %5092 = vmatpush1.bf16.msra.mxu0 %v4987
    %5093 = vmatprep.subr.bf16.mxu0 %v4996
    %5094 = vmatpush1.bf16.msra.mxu0 %v4995
    %5095 = vmatprep.subr.bf16.mxu0 %v5004
    %5096 = vmatpush1.bf16.msra.mxu0 %v5003
    %5097 = vmatprep.subr.bf16.mxu0 %v5012
    %5098 = vmatpush1.bf16.msra.mxu0 %v5011
    %5099 = vmatprep.subr.bf16.mxu0 0
    %5100 = vmatpush1.bf16.msra.mxu0 0
    %5101 = vmatprep.subr.bf16.mxu0 0
    %5102 = vmatpush1.bf16.msra.mxu0 0
    %5103 = vmatprep.subr.bf16.mxu0 0
    %5104 = vmatpush1.bf16.msra.mxu0 0
    %5105 = vmatprep.subr.bf16.mxu0 0
    %5106 = vmatpush1.bf16.msra.mxu0 0
    %5107 = vmatprep.subr.bf16.mxu0 0
    %5108 = vmatpush1.bf16.msra.mxu0 0
    %5109 = vmatprep.subr.bf16.mxu0 0
    %5110 = vmatpush1.bf16.msra.mxu0 0
    %5111 = vmatprep.subr.bf16.mxu0 0
    %5112 = vmatpush1.bf16.msra.mxu0 0
    %5113 = vmatprep.subr.bf16.mxu0 0
    %5114 = vmatpush1.bf16.msra.mxu0 0
    %5115 = vmatprep.mubr.bf16.mxu0 0
    %5116 = vmatmul.mubr.bf16.gmra.mrb[0].mxu0 %v4654
    %v5117 = vpop.f32.mrb[0].mxu0
    %v5118 = vadd.f32 %v4726, %v5117
    %v5119 = vpop.f32.mrb[0].mxu0
    %v5120 = vadd.f32 %v4730, %v5119
    %v5121 = vpop.f32.mrb[0].mxu0
    %v5122 = vadd.f32 %v4726, %v5121
    %v5123 = vpop.f32.mrb[0].mxu0
    %v5124 = vadd.f32 %v4730, %v5123
    %5125 = vdwg.mxu0
    %5126 = vmatprep.subr.bf16.mxu0 %v4958
    %5127 = vmatpush1.bf16.msra.mxu0 %v4957
    %5128 = vmatprep.subr.bf16.mxu0 %v4966
    %5129 = vmatpush1.bf16.msra.mxu0 %v4965
    %5130 = vmatprep.subr.bf16.mxu0 %v4974
    %5131 = vmatpush1.bf16.msra.mxu0 %v4973
    %5132 = vmatprep.subr.bf16.mxu0 %v4982
    %5133 = vmatpush1.bf16.msra.mxu0 %v4981
    %5134 = vmatprep.subr.bf16.mxu0 %v4990
    %5135 = vmatpush1.bf16.msra.mxu0 %v4989
    %5136 = vmatprep.subr.bf16.mxu0 %v4998
    %5137 = vmatpush1.bf16.msra.mxu0 %v4997
    %5138 = vmatprep.subr.bf16.mxu0 %v5006
    %5139 = vmatpush1.bf16.msra.mxu0 %v5005
    %5140 = vmatprep.subr.bf16.mxu0 %v5014
    %5141 = vmatpush1.bf16.msra.mxu0 %v5013
    %5142 = vmatprep.subr.bf16.mxu0 0
    %5143 = vmatpush1.bf16.msra.mxu0 0
    %5144 = vmatprep.subr.bf16.mxu0 0
    %5145 = vmatpush1.bf16.msra.mxu0 0
    %5146 = vmatprep.subr.bf16.mxu0 0
    %5147 = vmatpush1.bf16.msra.mxu0 0
    %5148 = vmatprep.subr.bf16.mxu0 0
    %5149 = vmatpush1.bf16.msra.mxu0 0
    %5150 = vmatprep.subr.bf16.mxu0 0
    %5151 = vmatpush1.bf16.msra.mxu0 0
    %5152 = vmatprep.subr.bf16.mxu0 0
    %5153 = vmatpush1.bf16.msra.mxu0 0
    %5154 = vmatprep.subr.bf16.mxu0 0
    %5155 = vmatpush1.bf16.msra.mxu0 0
    %5156 = vmatprep.subr.bf16.mxu0 0
    %5157 = vmatpush1.bf16.msra.mxu0 0
    %5158 = vmatprep.mubr.bf16.mxu0 0
    %5159 = vmatmul.mubr.bf16.gmra.mrb[0].mxu0 %v4654
    %v5160 = vpop.f32.mrb[0].mxu0
    %v5161 = vadd.f32 %v4734, %v5160
    %v5162 = vpop.f32.mrb[0].mxu0
    %v5163 = vadd.f32 %v4738, %v5162
    %v5164 = vpop.f32.mrb[0].mxu0
    %v5165 = vadd.f32 %v4734, %v5164
    %v5166 = vpop.f32.mrb[0].mxu0
    %v5167 = vadd.f32 %v4738, %v5166
    %5168 = vdwg.mxu0
    %5169 = vmatprep.subr.bf16.mxu0 %v4960
    %5170 = vmatpush1.bf16.msra.mxu0 %v4959
    %5171 = vmatprep.subr.bf16.mxu0 %v4968
    %5172 = vmatpush1.bf16.msra.mxu0 %v4967
    %5173 = vmatprep.subr.bf16.mxu0 %v4976
    %5174 = vmatpush1.bf16.msra.mxu0 %v4975
    %5175 = vmatprep.subr.bf16.mxu0 %v4984
    %5176 = vmatpush1.bf16.msra.mxu0 %v4983
    %5177 = vmatprep.subr.bf16.mxu0 %v4992
    %5178 = vmatpush1.bf16.msra.mxu0 %v4991
    %5179 = vmatprep.subr.bf16.mxu0 %v5000
    %5180 = vmatpush1.bf16.msra.mxu0 %v4999
    %5181 = vmatprep.subr.bf16.mxu0 %v5008
    %5182 = vmatpush1.bf16.msra.mxu0 %v5007
    %5183 = vmatprep.subr.bf16.mxu0 %v5016
    %5184 = vmatpush1.bf16.msra.mxu0 %v5015
    %5185 = vmatprep.subr.bf16.mxu0 0
    %5186 = vmatpush1.bf16.msra.mxu0 0
    %5187 = vmatprep.subr.bf16.mxu0 0
    %5188 = vmatpush1.bf16.msra.mxu0 0
    %5189 = vmatprep.subr.bf16.mxu0 0
    %5190 = vmatpush1.bf16.msra.mxu0 0
    %5191 = vmatprep.subr.bf16.mxu0 0
    %5192 = vmatpush1.bf16.msra.mxu0 0
    %5193 = vmatprep.subr.bf16.mxu0 0
    %5194 = vmatpush1.bf16.msra.mxu0 0
    %5195 = vmatprep.subr.bf16.mxu0 0
    %5196 = vmatpush1.bf16.msra.mxu0 0
    %5197 = vmatprep.subr.bf16.mxu0 0
    %5198 = vmatpush1.bf16.msra.mxu0 0
    %5199 = vmatprep.subr.bf16.mxu0 0
    %5200 = vmatpush1.bf16.msra.mxu0 0
    %5201 = vmatprep.mubr.bf16.mxu0 0
    %5202 = vmatmul.mubr.bf16.gmra.mrb[0].mxu0 %v4654
    %v5203 = vpop.f32.mrb[0].mxu0
    %v5204 = vadd.f32 %v4742, %v5203
    %v5205 = vpop.f32.mrb[0].mxu0
    %v5206 = vadd.f32 %v4746, %v5205
    %v5207 = vpop.f32.mrb[0].mxu0
    %v5208 = vadd.f32 %v4742, %v5207
    %v5209 = vpop.f32.mrb[0].mxu0
    %v5210 = vadd.f32 %v4746, %v5209
    %5211 = vdwg.mxu0
    %5212 = vmatprep.subr.bf16.mxu0 %v4962
    %5213 = vmatpush1.bf16.msra.mxu0 %v4961
    %5214 = vmatprep.subr.bf16.mxu0 %v4970
    %5215 = vmatpush1.bf16.msra.mxu0 %v4969
    %5216 = vmatprep.subr.bf16.mxu0 %v4978
    %5217 = vmatpush1.bf16.msra.mxu0 %v4977
    %5218 = vmatprep.subr.bf16.mxu0 %v4986
    %5219 = vmatpush1.bf16.msra.mxu0 %v4985
    %5220 = vmatprep.subr.bf16.mxu0 %v4994
    %5221 = vmatpush1.bf16.msra.mxu0 %v4993
    %5222 = vmatprep.subr.bf16.mxu0 %v5002
    %5223 = vmatpush1.bf16.msra.mxu0 %v5001
    %5224 = vmatprep.subr.bf16.mxu0 %v5010
    %5225 = vmatpush1.bf16.msra.mxu0 %v5009
    %5226 = vmatprep.subr.bf16.mxu0 %v5018
    %5227 = vmatpush1.bf16.msra.mxu0 %v5017
    %5228 = vmatprep.subr.bf16.mxu0 0
    %5229 = vmatpush1.bf16.msra.mxu0 0
    %5230 = vmatprep.subr.bf16.mxu0 0
    %5231 = vmatpush1.bf16.msra.mxu0 0
    %5232 = vmatprep.subr.bf16.mxu0 0
    %5233 = vmatpush1.bf16.msra.mxu0 0
    %5234 = vmatprep.subr.bf16.mxu0 0
    %5235 = vmatpush1.bf16.msra.mxu0 0
    %5236 = vmatprep.subr.bf16.mxu0 0
    %5237 = vmatpush1.bf16.msra.mxu0 0
    %5238 = vmatprep.subr.bf16.mxu0 0
    %5239 = vmatpush1.bf16.msra.mxu0 0
    %5240 = vmatprep.subr.bf16.mxu0 0
    %5241 = vmatpush1.bf16.msra.mxu0 0
    %5242 = vmatprep.subr.bf16.mxu0 0
    %5243 = vmatpush1.bf16.msra.mxu0 0
    %5244 = vmatprep.mubr.bf16.mxu0 0
    %5245 = vmatmul.mubr.bf16.gmra.mrb[0].mxu0 %v4654
    %v5246 = vpop.f32.mrb[0].mxu0
    %v5247 = vadd.f32 %v4750, %v5246
    %v5248 = vpop.f32.mrb[0].mxu0
    %v5249 = vadd.f32 %v4754, %v5248
    %v5250 = vpop.f32.mrb[0].mxu0
    %v5251 = vadd.f32 %v4750, %v5250
    %v5252 = vpop.f32.mrb[0].mxu0
    %v5253 = vadd.f32 %v4754, %v5252
    %5254 = vdwg.mxu0
    %v5255 = vmax.f32 %v5118, 0.0
    %v5256 = vmax.f32 %v5120, 0.0
    %v5257 = vmax.f32 %v5161, 0.0
    %v5258 = vmax.f32 %v5163, 0.0
    %v5259 = vmax.f32 %v5204, 0.0
    %v5260 = vmax.f32 %v5206, 0.0
    %v5261 = vmax.f32 %v5247, 0.0
    %v5262 = vmax.f32 %v5249, 0.0
    %v5263 = vmax.f32 %v5122, 0.0
    %v5264 = vmax.f32 %v5124, 0.0
    %v5265 = vmax.f32 %v5165, 0.0
    %v5266 = vmax.f32 %v5167, 0.0
    %v5267 = vmax.f32 %v5208, 0.0
    %v5268 = vmax.f32 %v5210, 0.0
    %v5269 = vmax.f32 %v5251, 0.0
    %v5270 = vmax.f32 %v5253, 0.0
    %v5271 = vpack.c.bf16 %v5263, %v5255
    %v5272 = vpack.c.bf16 %v5264, %v5256
    %v5273 = vpack.c.bf16 %v5265, %v5257
    %v5274 = vpack.c.bf16 %v5266, %v5258
    %v5275 = vpack.c.bf16 %v5267, %v5259
    %v5276 = vpack.c.bf16 %v5268, %v5260
    %v5277 = vpack.c.bf16 %v5269, %v5261
    %v5278 = vpack.c.bf16 %v5270, %v5262
    %s5279 = scalar_lea.vmem %s13, 512
    %v5280 = vld [vmem:[%s5279] sm:$0xf]
    %v5281 = vld [vmem:[%s5279 + $0x4] sm:$0xf]
    %v5282 = vld [vmem:[%s5279 + $0x8] sm:$0xf]
    %v5283 = vld [vmem:[%s5279 + $0xc] sm:$0xf]
    %v5284 = vld [vmem:[%s5279 + $0x10] sm:$0xf]
    %v5285 = vld [vmem:[%s5279 + $0x14] sm:$0xf]
    %v5286 = vld [vmem:[%s5279 + $0x18] sm:$0xf]
    %v5287 = vld [vmem:[%s5279 + $0x1c] sm:$0xf]
    %v5288 = vld [vmem:[%s5279 + $0x20] sm:$0xf]
    %v5289 = vld [vmem:[%s5279 + $0x24] sm:$0xf]
    %v5290 = vld [vmem:[%s5279 + $0x28] sm:$0xf]
    %v5291 = vld [vmem:[%s5279 + $0x2c] sm:$0xf]
    %v5292 = vld [vmem:[%s5279 + $0x30] sm:$0xf]
    %v5293 = vld [vmem:[%s5279 + $0x34] sm:$0xf]
    %v5294 = vld [vmem:[%s5279 + $0x38] sm:$0xf]
    %v5295 = vld [vmem:[%s5279 + $0x3c] sm:$0xf]
    %v5296 = vld [vmem:[%s5279 + $0x40] sm:$0xf]
    %v5297 = vld [vmem:[%s5279 + $0x44] sm:$0xf]
    %v5298 = vld [vmem:[%s5279 + $0x48] sm:$0xf]
    %v5299 = vld [vmem:[%s5279 + $0x4c] sm:$0xf]
    %v5300 = vld [vmem:[%s5279 + $0x50] sm:$0xf]
    %v5301 = vld [vmem:[%s5279 + $0x54] sm:$0xf]
    %v5302 = vld [vmem:[%s5279 + $0x58] sm:$0xf]
    %v5303 = vld [vmem:[%s5279 + $0x5c] sm:$0xf]
    %v5304 = vld [vmem:[%s5279 + $0x60] sm:$0xf]
    %v5305 = vld [vmem:[%s5279 + $0x64] sm:$0xf]
    %v5306 = vld [vmem:[%s5279 + $0x68] sm:$0xf]
    %v5307 = vld [vmem:[%s5279 + $0x6c] sm:$0xf]
    %v5308 = vld [vmem:[%s5279 + $0x70] sm:$0xf]
    %v5309 = vld [vmem:[%s5279 + $0x74] sm:$0xf]
    %v5310 = vld [vmem:[%s5279 + $0x78] sm:$0xf]
    %v5311 = vld [vmem:[%s5279 + $0x7c] sm:$0xf]
    %v5312 = vld [vmem:[%s5279 + $0x80] sm:$0xf]
    %v5313 = vld [vmem:[%s5279 + $0x84] sm:$0xf]
    %v5314 = vld [vmem:[%s5279 + $0x88] sm:$0xf]
    %v5315 = vld [vmem:[%s5279 + $0x8c] sm:$0xf]
    %v5316 = vld [vmem:[%s5279 + $0x90] sm:$0xf]
    %v5317 = vld [vmem:[%s5279 + $0x94] sm:$0xf]
    %v5318 = vld [vmem:[%s5279 + $0x98] sm:$0xf]
    %v5319 = vld [vmem:[%s5279 + $0x9c] sm:$0xf]
    %v5320 = vld [vmem:[%s5279 + $0xa0] sm:$0xf]
    %v5321 = vld [vmem:[%s5279 + $0xa4] sm:$0xf]
    %v5322 = vld [vmem:[%s5279 + $0xa8] sm:$0xf]
    %v5323 = vld [vmem:[%s5279 + $0xac] sm:$0xf]
    %v5324 = vld [vmem:[%s5279 + $0xb0] sm:$0xf]
    %v5325 = vld [vmem:[%s5279 + $0xb4] sm:$0xf]
    %v5326 = vld [vmem:[%s5279 + $0xb8] sm:$0xf]
    %v5327 = vld [vmem:[%s5279 + $0xbc] sm:$0xf]
    %v5328 = vld [vmem:[%s5279 + $0xc0] sm:$0xf]
    %v5329 = vld [vmem:[%s5279 + $0xc4] sm:$0xf]
    %v5330 = vld [vmem:[%s5279 + $0xc8] sm:$0xf]
    %v5331 = vld [vmem:[%s5279 + $0xcc] sm:$0xf]
    %v5332 = vld [vmem:[%s5279 + $0xd0] sm:$0xf]
    %v5333 = vld [vmem:[%s5279 + $0xd4] sm:$0xf]
    %v5334 = vld [vmem:[%s5279 + $0xd8] sm:$0xf]
    %v5335 = vld [vmem:[%s5279 + $0xdc] sm:$0xf]
    %v5336 = vld [vmem:[%s5279 + $0xe0] sm:$0xf]
    %v5337 = vld [vmem:[%s5279 + $0xe4] sm:$0xf]
    %v5338 = vld [vmem:[%s5279 + $0xe8] sm:$0xf]
    %v5339 = vld [vmem:[%s5279 + $0xec] sm:$0xf]
    %v5340 = vld [vmem:[%s5279 + $0xf0] sm:$0xf]
    %v5341 = vld [vmem:[%s5279 + $0xf4] sm:$0xf]
    %v5342 = vld [vmem:[%s5279 + $0xf8] sm:$0xf]
    %v5343 = vld [vmem:[%s5279 + $0xfc] sm:$0xf]
    %v5344 = vld [vmem:[%s5279 + $0x100] sm:$0xf]
    %v5345 = vld [vmem:[%s5279 + $0x104] sm:$0xf]
    %v5346 = vld [vmem:[%s5279 + $0x108] sm:$0xf]
    %v5347 = vld [vmem:[%s5279 + $0x10c] sm:$0xf]
    %v5348 = vld [vmem:[%s5279 + $0x110] sm:$0xf]
    %v5349 = vld [vmem:[%s5279 + $0x114] sm:$0xf]
    %v5350 = vld [vmem:[%s5279 + $0x118] sm:$0xf]
    %v5351 = vld [vmem:[%s5279 + $0x11c] sm:$0xf]
    %v5352 = vld [vmem:[%s5279 + $0x120] sm:$0xf]
    %v5353 = vld [vmem:[%s5279 + $0x124] sm:$0xf]
    %v5354 = vld [vmem:[%s5279 + $0x128] sm:$0xf]
    %v5355 = vld [vmem:[%s5279 + $0x12c] sm:$0xf]
    %v5356 = vld [vmem:[%s5279 + $0x130] sm:$0xf]
    %v5357 = vld [vmem:[%s5279 + $0x134] sm:$0xf]
    %v5358 = vld [vmem:[%s5279 + $0x138] sm:$0xf]
    %v5359 = vld [vmem:[%s5279 + $0x13c] sm:$0xf]
    %v5360 = vld [vmem:[%s5279 + $0x140] sm:$0xf]
    %v5361 = vld [vmem:[%s5279 + $0x144] sm:$0xf]
    %v5362 = vld [vmem:[%s5279 + $0x148] sm:$0xf]
    %v5363 = vld [vmem:[%s5279 + $0x14c] sm:$0xf]
    %v5364 = vld [vmem:[%s5279 + $0x150] sm:$0xf]
    %v5365 = vld [vmem:[%s5279 + $0x154] sm:$0xf]
    %v5366 = vld [vmem:[%s5279 + $0x158] sm:$0xf]
    %v5367 = vld [vmem:[%s5279 + $0x15c] sm:$0xf]
    %v5368 = vld [vmem:[%s5279 + $0x160] sm:$0xf]
    %v5369 = vld [vmem:[%s5279 + $0x164] sm:$0xf]
    %v5370 = vld [vmem:[%s5279 + $0x168] sm:$0xf]
    %v5371 = vld [vmem:[%s5279 + $0x16c] sm:$0xf]
    %v5372 = vld [vmem:[%s5279 + $0x170] sm:$0xf]
    %v5373 = vld [vmem:[%s5279 + $0x174] sm:$0xf]
    %v5374 = vld [vmem:[%s5279 + $0x178] sm:$0xf]
    %v5375 = vld [vmem:[%s5279 + $0x17c] sm:$0xf]
    %v5376 = vld [vmem:[%s5279 + $0x180] sm:$0xf]
    %v5377 = vld [vmem:[%s5279 + $0x184] sm:$0xf]
    %v5378 = vld [vmem:[%s5279 + $0x188] sm:$0xf]
    %v5379 = vld [vmem:[%s5279 + $0x18c] sm:$0xf]
    %v5380 = vld [vmem:[%s5279 + $0x190] sm:$0xf]
    %v5381 = vld [vmem:[%s5279 + $0x194] sm:$0xf]
    %v5382 = vld [vmem:[%s5279 + $0x198] sm:$0xf]
    %v5383 = vld [vmem:[%s5279 + $0x19c] sm:$0xf]
    %v5384 = vld [vmem:[%s5279 + $0x1a0] sm:$0xf]
    %v5385 = vld [vmem:[%s5279 + $0x1a4] sm:$0xf]
    %v5386 = vld [vmem:[%s5279 + $0x1a8] sm:$0xf]
    %v5387 = vld [vmem:[%s5279 + $0x1ac] sm:$0xf]
    %v5388 = vld [vmem:[%s5279 + $0x1b0] sm:$0xf]
    %v5389 = vld [vmem:[%s5279 + $0x1b4] sm:$0xf]
    %v5390 = vld [vmem:[%s5279 + $0x1b8] sm:$0xf]
    %v5391 = vld [vmem:[%s5279 + $0x1bc] sm:$0xf]
    %v5392 = vld [vmem:[%s5279 + $0x1c0] sm:$0xf]
    %v5393 = vld [vmem:[%s5279 + $0x1c4] sm:$0xf]
    %v5394 = vld [vmem:[%s5279 + $0x1c8] sm:$0xf]
    %v5395 = vld [vmem:[%s5279 + $0x1cc] sm:$0xf]
    %v5396 = vld [vmem:[%s5279 + $0x1d0] sm:$0xf]
    %v5397 = vld [vmem:[%s5279 + $0x1d4] sm:$0xf]
    %v5398 = vld [vmem:[%s5279 + $0x1d8] sm:$0xf]
    %v5399 = vld [vmem:[%s5279 + $0x1dc] sm:$0xf]
    %v5400 = vld [vmem:[%s5279 + $0x1e0] sm:$0xf]
    %v5401 = vld [vmem:[%s5279 + $0x1e4] sm:$0xf]
    %v5402 = vld [vmem:[%s5279 + $0x1e8] sm:$0xf]
    %v5403 = vld [vmem:[%s5279 + $0x1ec] sm:$0xf]
    %v5404 = vld [vmem:[%s5279 + $0x1f0] sm:$0xf]
    %v5405 = vld [vmem:[%s5279 + $0x1f4] sm:$0xf]
    %v5406 = vld [vmem:[%s5279 + $0x1f8] sm:$0xf]
    %v5407 = vld [vmem:[%s5279 + $0x1fc] sm:$0xf]
    %s5408 = scalar_lea.vmem %s14, 1
    %v5409 = vld [vmem:[%s5408] sm:$0x1]
    %v5411 = vlaneseq
    %v5412 = vshrl.u32 %v5411, 7
    %v5413 = vsub.s32 0, %v5412
    %v5414 = vrot.slane %v5409, %v5413
    %v5544 = vunpack.c.l.b16 %v5280
    %v5545 = vunpack.c.l.b16 %v5281
    %v5546 = vunpack.c.l.b16 %v5282
    %v5547 = vunpack.c.l.b16 %v5283
    %v5548 = vunpack.c.l.b16 %v5284
    %v5549 = vunpack.c.l.b16 %v5285
    %v5550 = vunpack.c.l.b16 %v5286
    %v5551 = vunpack.c.l.b16 %v5287
    %v5552 = vunpack.c.l.b16 %v5288
    %v5553 = vunpack.c.l.b16 %v5289
    %v5554 = vunpack.c.l.b16 %v5290
    %v5555 = vunpack.c.l.b16 %v5291
    %v5556 = vunpack.c.l.b16 %v5292
    %v5557 = vunpack.c.l.b16 %v5293
    %v5558 = vunpack.c.l.b16 %v5294
    %v5559 = vunpack.c.l.b16 %v5295
    %v5560 = vunpack.c.l.b16 %v5296
    %v5561 = vunpack.c.l.b16 %v5297
    %v5562 = vunpack.c.l.b16 %v5298
    %v5563 = vunpack.c.l.b16 %v5299
    %v5564 = vunpack.c.l.b16 %v5300
    %v5565 = vunpack.c.l.b16 %v5301
    %v5566 = vunpack.c.l.b16 %v5302
    %v5567 = vunpack.c.l.b16 %v5303
    %v5568 = vunpack.c.l.b16 %v5304
    %v5569 = vunpack.c.l.b16 %v5305
    %v5570 = vunpack.c.l.b16 %v5306
    %v5571 = vunpack.c.l.b16 %v5307
    %v5572 = vunpack.c.l.b16 %v5308
    %v5573 = vunpack.c.l.b16 %v5309
    %v5574 = vunpack.c.l.b16 %v5310
    %v5575 = vunpack.c.l.b16 %v5311
    %v5576 = vunpack.c.l.b16 %v5312
    %v5577 = vunpack.c.l.b16 %v5313
    %v5578 = vunpack.c.l.b16 %v5314
    %v5579 = vunpack.c.l.b16 %v5315
    %v5580 = vunpack.c.l.b16 %v5316
    %v5581 = vunpack.c.l.b16 %v5317
    %v5582 = vunpack.c.l.b16 %v5318
    %v5583 = vunpack.c.l.b16 %v5319
    %v5584 = vunpack.c.l.b16 %v5320
    %v5585 = vunpack.c.l.b16 %v5321
    %v5586 = vunpack.c.l.b16 %v5322
    %v5587 = vunpack.c.l.b16 %v5323
    %v5588 = vunpack.c.l.b16 %v5324
    %v5589 = vunpack.c.l.b16 %v5325
    %v5590 = vunpack.c.l.b16 %v5326
    %v5591 = vunpack.c.l.b16 %v5327
    %v5592 = vunpack.c.l.b16 %v5328
    %v5593 = vunpack.c.l.b16 %v5329
    %v5594 = vunpack.c.l.b16 %v5330
    %v5595 = vunpack.c.l.b16 %v5331
    %v5596 = vunpack.c.l.b16 %v5332
    %v5597 = vunpack.c.l.b16 %v5333
    %v5598 = vunpack.c.l.b16 %v5334
    %v5599 = vunpack.c.l.b16 %v5335
    %v5600 = vunpack.c.l.b16 %v5336
    %v5601 = vunpack.c.l.b16 %v5337
    %v5602 = vunpack.c.l.b16 %v5338
    %v5603 = vunpack.c.l.b16 %v5339
    %v5604 = vunpack.c.l.b16 %v5340
    %v5605 = vunpack.c.l.b16 %v5341
    %v5606 = vunpack.c.l.b16 %v5342
    %v5607 = vunpack.c.l.b16 %v5343
    %v5608 = vunpack.c.l.b16 %v5344
    %v5609 = vunpack.c.l.b16 %v5345
    %v5610 = vunpack.c.l.b16 %v5346
    %v5611 = vunpack.c.l.b16 %v5347
    %v5612 = vunpack.c.l.b16 %v5348
    %v5613 = vunpack.c.l.b16 %v5349
    %v5614 = vunpack.c.l.b16 %v5350
    %v5615 = vunpack.c.l.b16 %v5351
    %v5616 = vunpack.c.l.b16 %v5352
    %v5617 = vunpack.c.l.b16 %v5353
    %v5618 = vunpack.c.l.b16 %v5354
    %v5619 = vunpack.c.l.b16 %v5355
    %v5620 = vunpack.c.l.b16 %v5356
    %v5621 = vunpack.c.l.b16 %v5357
    %v5622 = vunpack.c.l.b16 %v5358
    %v5623 = vunpack.c.l.b16 %v5359
    %v5624 = vunpack.c.l.b16 %v5360
    %v5625 = vunpack.c.l.b16 %v5361
    %v5626 = vunpack.c.l.b16 %v5362
    %v5627 = vunpack.c.l.b16 %v5363
    %v5628 = vunpack.c.l.b16 %v5364
    %v5629 = vunpack.c.l.b16 %v5365
    %v5630 = vunpack.c.l.b16 %v5366
    %v5631 = vunpack.c.l.b16 %v5367
    %v5632 = vunpack.c.l.b16 %v5368
    %v5633 = vunpack.c.l.b16 %v5369
    %v5634 = vunpack.c.l.b16 %v5370
    %v5635 = vunpack.c.l.b16 %v5371
    %v5636 = vunpack.c.l.b16 %v5372
    %v5637 = vunpack.c.l.b16 %v5373
    %v5638 = vunpack.c.l.b16 %v5374
    %v5639 = vunpack.c.l.b16 %v5375
    %v5640 = vunpack.c.l.b16 %v5376
    %v5641 = vunpack.c.l.b16 %v5377
    %v5642 = vunpack.c.l.b16 %v5378
    %v5643 = vunpack.c.l.b16 %v5379
    %v5644 = vunpack.c.l.b16 %v5380
    %v5645 = vunpack.c.l.b16 %v5381
    %v5646 = vunpack.c.l.b16 %v5382
    %v5647 = vunpack.c.l.b16 %v5383
    %v5648 = vunpack.c.l.b16 %v5384
    %v5649 = vunpack.c.l.b16 %v5385
    %v5650 = vunpack.c.l.b16 %v5386
    %v5651 = vunpack.c.l.b16 %v5387
    %v5652 = vunpack.c.l.b16 %v5388
    %v5653 = vunpack.c.l.b16 %v5389
    %v5654 = vunpack.c.l.b16 %v5390
    %v5655 = vunpack.c.l.b16 %v5391
    %v5656 = vunpack.c.l.b16 %v5392
    %v5657 = vunpack.c.l.b16 %v5393
    %v5658 = vunpack.c.l.b16 %v5394
    %v5659 = vunpack.c.l.b16 %v5395
    %v5660 = vunpack.c.l.b16 %v5396
    %v5661 = vunpack.c.l.b16 %v5397
    %v5662 = vunpack.c.l.b16 %v5398
    %v5663 = vunpack.c.l.b16 %v5399
    %v5664 = vunpack.c.l.b16 %v5400
    %v5665 = vunpack.c.l.b16 %v5401
    %v5666 = vunpack.c.l.b16 %v5402
    %v5667 = vunpack.c.l.b16 %v5403
    %v5668 = vunpack.c.l.b16 %v5404
    %v5669 = vunpack.c.l.b16 %v5405
    %v5670 = vunpack.c.l.b16 %v5406
    %v5671 = vunpack.c.l.b16 %v5407
    %v5672 = vpack.c.b16 %v5545, %v5544
    %v5673 = vpack.c.b16 %v5547, %v5546
    %v5674 = vpack.c.b16 %v5549, %v5548
    %v5675 = vpack.c.b16 %v5551, %v5550
    %v5676 = vpack.c.b16 %v5553, %v5552
    %v5677 = vpack.c.b16 %v5555, %v5554
    %v5678 = vpack.c.b16 %v5557, %v5556
    %v5679 = vpack.c.b16 %v5559, %v5558
    %v5680 = vpack.c.b16 %v5561, %v5560
    %v5681 = vpack.c.b16 %v5563, %v5562
    %v5682 = vpack.c.b16 %v5565, %v5564
    %v5683 = vpack.c.b16 %v5567, %v5566
    %v5684 = vpack.c.b16 %v5569, %v5568
    %v5685 = vpack.c.b16 %v5571, %v5570
    %v5686 = vpack.c.b16 %v5573, %v5572
    %v5687 = vpack.c.b16 %v5575, %v5574
    %v5688 = vpack.c.b16 %v5577, %v5576
    %v5689 = vpack.c.b16 %v5579, %v5578
    %v5690 = vpack.c.b16 %v5581, %v5580
    %v5691 = vpack.c.b16 %v5583, %v5582
    %v5692 = vpack.c.b16 %v5585, %v5584
    %v5693 = vpack.c.b16 %v5587, %v5586
    %v5694 = vpack.c.b16 %v5589, %v5588
    %v5695 = vpack.c.b16 %v5591, %v5590
    %v5696 = vpack.c.b16 %v5593, %v5592
    %v5697 = vpack.c.b16 %v5595, %v5594
    %v5698 = vpack.c.b16 %v5597, %v5596
    %v5699 = vpack.c.b16 %v5599, %v5598
    %v5700 = vpack.c.b16 %v5601, %v5600
    %v5701 = vpack.c.b16 %v5603, %v5602
    %v5702 = vpack.c.b16 %v5605, %v5604
    %v5703 = vpack.c.b16 %v5607, %v5606
    %v5704 = vpack.c.b16 %v5609, %v5608
    %v5705 = vpack.c.b16 %v5611, %v5610
    %v5706 = vpack.c.b16 %v5613, %v5612
    %v5707 = vpack.c.b16 %v5615, %v5614
    %v5708 = vpack.c.b16 %v5617, %v5616
    %v5709 = vpack.c.b16 %v5619, %v5618
    %v5710 = vpack.c.b16 %v5621, %v5620
    %v5711 = vpack.c.b16 %v5623, %v5622
    %v5712 = vpack.c.b16 %v5625, %v5624
    %v5713 = vpack.c.b16 %v5627, %v5626
    %v5714 = vpack.c.b16 %v5629, %v5628
    %v5715 = vpack.c.b16 %v5631, %v5630
    %v5716 = vpack.c.b16 %v5633, %v5632
    %v5717 = vpack.c.b16 %v5635, %v5634
    %v5718 = vpack.c.b16 %v5637, %v5636
    %v5719 = vpack.c.b16 %v5639, %v5638
    %v5720 = vpack.c.b16 %v5641, %v5640
    %v5721 = vpack.c.b16 %v5643, %v5642
    %v5722 = vpack.c.b16 %v5645, %v5644
    %v5723 = vpack.c.b16 %v5647, %v5646
    %v5724 = vpack.c.b16 %v5649, %v5648
    %v5725 = vpack.c.b16 %v5651, %v5650
    %v5726 = vpack.c.b16 %v5653, %v5652
    %v5727 = vpack.c.b16 %v5655, %v5654
    %v5728 = vpack.c.b16 %v5657, %v5656
    %v5729 = vpack.c.b16 %v5659, %v5658
    %v5730 = vpack.c.b16 %v5661, %v5660
    %v5731 = vpack.c.b16 %v5663, %v5662
    %v5732 = vpack.c.b16 %v5665, %v5664
    %v5733 = vpack.c.b16 %v5667, %v5666
    %v5734 = vpack.c.b16 %v5669, %v5668
    %v5735 = vpack.c.b16 %v5671, %v5670
    %5800 = vmatprep.subr.bf16.mxu0 0
    %5801 = vmatpush1.bf16.msra.mxu0 %v5672
    %5802 = vmatprep.subr.bf16.mxu0 0
    %5803 = vmatpush1.bf16.msra.mxu0 %v5673
    %5804 = vmatprep.subr.bf16.mxu0 0
    %5805 = vmatpush1.bf16.msra.mxu0 %v5674
    %5806 = vmatprep.subr.bf16.mxu0 0
    %5807 = vmatpush1.bf16.msra.mxu0 %v5675
    %5808 = vmatprep.subr.bf16.mxu0 0
    %5809 = vmatpush1.bf16.msra.mxu0 %v5676
    %5810 = vmatprep.subr.bf16.mxu0 0
    %5811 = vmatpush1.bf16.msra.mxu0 %v5677
    %5812 = vmatprep.subr.bf16.mxu0 0
    %5813 = vmatpush1.bf16.msra.mxu0 %v5678
    %5814 = vmatprep.subr.bf16.mxu0 0
    %5815 = vmatpush1.bf16.msra.mxu0 %v5679
    %5816 = vmatprep.subr.bf16.mxu0 0
    %5817 = vmatpush1.bf16.msra.mxu0 %v5680
    %5818 = vmatprep.subr.bf16.mxu0 0
    %5819 = vmatpush1.bf16.msra.mxu0 %v5681
    %5820 = vmatprep.subr.bf16.mxu0 0
    %5821 = vmatpush1.bf16.msra.mxu0 %v5682
    %5822 = vmatprep.subr.bf16.mxu0 0
    %5823 = vmatpush1.bf16.msra.mxu0 %v5683
    %5824 = vmatprep.subr.bf16.mxu0 0
    %5825 = vmatpush1.bf16.msra.mxu0 %v5684
    %5826 = vmatprep.subr.bf16.mxu0 0
    %5827 = vmatpush1.bf16.msra.mxu0 %v5685
    %5828 = vmatprep.subr.bf16.mxu0 0
    %5829 = vmatpush1.bf16.msra.mxu0 %v5686
    %5830 = vmatprep.subr.bf16.mxu0 0
    %5831 = vmatpush1.bf16.msra.mxu0 %v5687
    %5832 = vmatprep.mubr.bf16.mxu0 %v5272
    %5833 = vmatmul.mubr.bf16.gmra.mrb[0].mxu0 %v5271
    %v5834 = vpop.f32.mrb[0].mxu0
    %v5835 = vadd.f32 %v5414, %v5834
    %v5836 = vpop.f32.mrb[0].mxu0
    %v5837 = vpop.f32.mrb[0].mxu0
    %v5838 = vadd.f32 %v5414, %v5837
    %v5839 = vpop.f32.mrb[0].mxu0
    %5840 = vdwg.mxu0
    %5841 = vmatprep.subr.bf16.mxu0 0
    %5842 = vmatpush1.bf16.msra.mxu0 %v5688
    %5843 = vmatprep.subr.bf16.mxu0 0
    %5844 = vmatpush1.bf16.msra.mxu0 %v5689
    %5845 = vmatprep.subr.bf16.mxu0 0
    %5846 = vmatpush1.bf16.msra.mxu0 %v5690
    %5847 = vmatprep.subr.bf16.mxu0 0
    %5848 = vmatpush1.bf16.msra.mxu0 %v5691
    %5849 = vmatprep.subr.bf16.mxu0 0
    %5850 = vmatpush1.bf16.msra.mxu0 %v5692
    %5851 = vmatprep.subr.bf16.mxu0 0
    %5852 = vmatpush1.bf16.msra.mxu0 %v5693
    %5853 = vmatprep.subr.bf16.mxu0 0
    %5854 = vmatpush1.bf16.msra.mxu0 %v5694
    %5855 = vmatprep.subr.bf16.mxu0 0
    %5856 = vmatpush1.bf16.msra.mxu0 %v5695
    %5857 = vmatprep.subr.bf16.mxu0 0
    %5858 = vmatpush1.bf16.msra.mxu0 %v5696
    %5859 = vmatprep.subr.bf16.mxu0 0
    %5860 = vmatpush1.bf16.msra.mxu0 %v5697
    %5861 = vmatprep.subr.bf16.mxu0 0
    %5862 = vmatpush1.bf16.msra.mxu0 %v5698
    %5863 = vmatprep.subr.bf16.mxu0 0
    %5864 = vmatpush1.bf16.msra.mxu0 %v5699
    %5865 = vmatprep.subr.bf16.mxu0 0
    %5866 = vmatpush1.bf16.msra.mxu0 %v5700
    %5867 = vmatprep.subr.bf16.mxu0 0
    %5868 = vmatpush1.bf16.msra.mxu0 %v5701
    %5869 = vmatprep.subr.bf16.mxu0 0
    %5870 = vmatpush1.bf16.msra.mxu0 %v5702
    %5871 = vmatprep.subr.bf16.mxu0 0
    %5872 = vmatpush1.bf16.msra.mxu0 %v5703
    %5873 = vmatprep.mubr.bf16.mxu0 %v5274
    %5874 = vmatmul.mubr.bf16.gmra.mrb[0].mxu0 %v5273
    %v5875 = vpop.f32.mrb[0].mxu0
    %v5876 = vadd.f32 %v5835, %v5875
    %v5877 = vpop.f32.mrb[0].mxu0
    %v5878 = vpop.f32.mrb[0].mxu0
    %v5879 = vadd.f32 %v5838, %v5878
    %v5880 = vpop.f32.mrb[0].mxu0
    %5881 = vdwg.mxu0
    %5882 = vmatprep.subr.bf16.mxu0 0
    %5883 = vmatpush1.bf16.msra.mxu0 %v5704
    %5884 = vmatprep.subr.bf16.mxu0 0
    %5885 = vmatpush1.bf16.msra.mxu0 %v5705
    %5886 = vmatprep.subr.bf16.mxu0 0
    %5887 = vmatpush1.bf16.msra.mxu0 %v5706
    %5888 = vmatprep.subr.bf16.mxu0 0
    %5889 = vmatpush1.bf16.msra.mxu0 %v5707
    %5890 = vmatprep.subr.bf16.mxu0 0
    %5891 = vmatpush1.bf16.msra.mxu0 %v5708
    %5892 = vmatprep.subr.bf16.mxu0 0
    %5893 = vmatpush1.bf16.msra.mxu0 %v5709
    %5894 = vmatprep.subr.bf16.mxu0 0
    %5895 = vmatpush1.bf16.msra.mxu0 %v5710
    %5896 = vmatprep.subr.bf16.mxu0 0
    %5897 = vmatpush1.bf16.msra.mxu0 %v5711
    %5898 = vmatprep.subr.bf16.mxu0 0
    %5899 = vmatpush1.bf16.msra.mxu0 %v5712
    %5900 = vmatprep.subr.bf16.mxu0 0
    %5901 = vmatpush1.bf16.msra.mxu0 %v5713
    %5902 = vmatprep.subr.bf16.mxu0 0
    %5903 = vmatpush1.bf16.msra.mxu0 %v5714
    %5904 = vmatprep.subr.bf16.mxu0 0
    %5905 = vmatpush1.bf16.msra.mxu0 %v5715
    %5906 = vmatprep.subr.bf16.mxu0 0
    %5907 = vmatpush1.bf16.msra.mxu0 %v5716
    %5908 = vmatprep.subr.bf16.mxu0 0
    %5909 = vmatpush1.bf16.msra.mxu0 %v5717
    %5910 = vmatprep.subr.bf16.mxu0 0
    %5911 = vmatpush1.bf16.msra.mxu0 %v5718
    %5912 = vmatprep.subr.bf16.mxu0 0
    %5913 = vmatpush1.bf16.msra.mxu0 %v5719
    %5914 = vmatprep.mubr.bf16.mxu0 %v5276
    %5915 = vmatmul.mubr.bf16.gmra.mrb[0].mxu0 %v5275
    %v5916 = vpop.f32.mrb[0].mxu0
    %v5917 = vadd.f32 %v5876, %v5916
    %v5918 = vpop.f32.mrb[0].mxu0
    %v5919 = vpop.f32.mrb[0].mxu0
    %v5920 = vadd.f32 %v5879, %v5919
    %v5921 = vpop.f32.mrb[0].mxu0
    %5922 = vdwg.mxu0
    %5923 = vmatprep.subr.bf16.mxu0 0
    %5924 = vmatpush1.bf16.msra.mxu0 %v5720
    %5925 = vmatprep.subr.bf16.mxu0 0
    %5926 = vmatpush1.bf16.msra.mxu0 %v5721
    %5927 = vmatprep.subr.bf16.mxu0 0
    %5928 = vmatpush1.bf16.msra.mxu0 %v5722
    %5929 = vmatprep.subr.bf16.mxu0 0
    %5930 = vmatpush1.bf16.msra.mxu0 %v5723
    %5931 = vmatprep.subr.bf16.mxu0 0
    %5932 = vmatpush1.bf16.msra.mxu0 %v5724
    %5933 = vmatprep.subr.bf16.mxu0 0
    %5934 = vmatpush1.bf16.msra.mxu0 %v5725
    %5935 = vmatprep.subr.bf16.mxu0 0
    %5936 = vmatpush1.bf16.msra.mxu0 %v5726
    %5937 = vmatprep.subr.bf16.mxu0 0
    %5938 = vmatpush1.bf16.msra.mxu0 %v5727
    %5939 = vmatprep.subr.bf16.mxu0 0
    %5940 = vmatpush1.bf16.msra.mxu0 %v5728
    %5941 = vmatprep.subr.bf16.mxu0 0
    %5942 = vmatpush1.bf16.msra.mxu0 %v5729
    %5943 = vmatprep.subr.bf16.mxu0 0
    %5944 = vmatpush1.bf16.msra.mxu0 %v5730
    %5945 = vmatprep.subr.bf16.mxu0 0
    %5946 = vmatpush1.bf16.msra.mxu0 %v5731
    %5947 = vmatprep.subr.bf16.mxu0 0
    %5948 = vmatpush1.bf16.msra.mxu0 %v5732
    %5949 = vmatprep.subr.bf16.mxu0 0
    %5950 = vmatpush1.bf16.msra.mxu0 %v5733
    %5951 = vmatprep.subr.bf16.mxu0 0
    %5952 = vmatpush1.bf16.msra.mxu0 %v5734
    %5953 = vmatprep.subr.bf16.mxu0 0
    %5954 = vmatpush1.bf16.msra.mxu0 %v5735
    %5955 = vmatprep.mubr.bf16.mxu0 %v5278
    %5956 = vmatmul.mubr.bf16.gmra.mrb[0].mxu0 %v5277
    %v5957 = vpop.f32.mrb[0].mxu0
    %v5958 = vadd.f32 %v5917, %v5957
    %v5959 = vpop.f32.mrb[0].mxu0
    %v5960 = vpop.f32.mrb[0].mxu0
    %v5961 = vadd.f32 %v5920, %v5960
    %v5962 = vpop.f32.mrb[0].mxu0
    %5963 = vdwg.mxu0
    %v5964 = vadd.f32 %v4652, %v5958
    %v5965 = vadd.f32 %v4653, %v5961
    %s5966 = scalar_lea.vmem %s15, 1
    %v5967 = vld [vmem:[%s5966] sm:$0x1]
    %s5968 = scalar_lea.vmem %s16, 1
    %v5969 = vld [vmem:[%s5968] sm:$0x1]
    %5970 = vadd.xlane.f32.xlu0 %v5964
    %v5971 = vpop.xlane.xlu0 %5970
    %5972 = vadd.xlane.f32.xlu0 %v5965
    %v5973 = vpop.xlane.xlu0 %5972
    %v5974 = vmul.f32 %v5971, %v1775
    %v5975 = vmul.f32 %v5973, %v1775
    %v5976 = vsub.f32 %v5964, %v5974
    %v5977 = vsub.f32 %v5965, %v5975
    %v5978 = vmul.f32 %v5976, %v5976
    %v5979 = vmul.f32 %v5977, %v5977
    %5980 = vadd.xlane.f32.xlu0 %v5978
    %v5981 = vpop.xlane.xlu0 %5980
    %5982 = vadd.xlane.f32.xlu0 %v5979
    %v5983 = vpop.xlane.xlu0 %5982
    %v5984 = vmul.f32 %v5981, %v1775
    %v5985 = vmul.f32 %v5983, %v1775
    %v5986 = vadd.f32 %v5984, 1e-05
    %v5987 = vadd.f32 %v5985, 1e-05
    %v5988 = vrsqrt.pop %v5986
    %v5989 = vrsqrt.pop %v5987
    %v5990 = vmul.f32 %v5976, %v5988
    %v5991 = vmul.f32 %v5977, %v5989
    %v5993 = vlaneseq
    %v5994 = vshrl.u32 %v5993, 7
    %v5995 = vsub.s32 0, %v5994
    %v5996 = vrot.slane %v5967, %v5995
    %v5998 = vmul.f32 %v5990, %v5996
    %v5999 = vmul.f32 %v5991, %v5996
    %v6001 = vlaneseq
    %v6002 = vshrl.u32 %v6001, 7
    %v6003 = vsub.s32 0, %v6002
    %v6004 = vrot.slane %v5969, %v6003
    %v6006 = vadd.f32 %v5998, %v6004
    %v6007 = vadd.f32 %v5999, %v6004
    %v6008 = vpack.c.bf16 %v6007, %v6006
    %v6009 = vld [vmem:[%s17] sm:$0xf]
    %v6010 = vld [vmem:[%s17 + $0x4] sm:$0xf]
    %v6011 = vld [vmem:[%s17 + $0x8] sm:$0xf]
    %v6012 = vld [vmem:[%s17 + $0xc] sm:$0xf]
    %v6013 = vld [vmem:[%s17 + $0x10] sm:$0xf]
    %v6014 = vld [vmem:[%s17 + $0x14] sm:$0xf]
    %v6015 = vld [vmem:[%s17 + $0x18] sm:$0xf]
    %v6016 = vld [vmem:[%s17 + $0x1c] sm:$0xf]
    %v6017 = vld [vmem:[%s17 + $0x20] sm:$0xf]
    %v6018 = vld [vmem:[%s17 + $0x24] sm:$0xf]
    %v6019 = vld [vmem:[%s17 + $0x28] sm:$0xf]
    %v6020 = vld [vmem:[%s17 + $0x2c] sm:$0xf]
    %v6021 = vld [vmem:[%s17 + $0x30] sm:$0xf]
    %v6022 = vld [vmem:[%s17 + $0x34] sm:$0xf]
    %v6023 = vld [vmem:[%s17 + $0x38] sm:$0xf]
    %v6024 = vld [vmem:[%s17 + $0x3c] sm:$0xf]
    %v6025 = vld [vmem:[%s18] sm:$0x1]
    %v6027 = vlaneseq
    %v6028 = vshrl.u32 %v6027, 7
    %v6029 = vsub.s32 0, %v6028
    %v6030 = vrot.slane %v6025, %v6029
    %v6048 = vunpack.c.l.b16 %v6009
    %v6049 = vunpack.c.l.b16 %v6010
    %v6050 = vunpack.c.l.b16 %v6011
    %v6051 = vunpack.c.l.b16 %v6012
    %v6052 = vunpack.c.l.b16 %v6013
    %v6053 = vunpack.c.l.b16 %v6014
    %v6054 = vunpack.c.l.b16 %v6015
    %v6055 = vunpack.c.l.b16 %v6016
    %v6056 = vunpack.c.l.b16 %v6017
    %v6057 = vunpack.c.l.b16 %v6018
    %v6058 = vunpack.c.l.b16 %v6019
    %v6059 = vunpack.c.l.b16 %v6020
    %v6060 = vunpack.c.l.b16 %v6021
    %v6061 = vunpack.c.l.b16 %v6022
    %v6062 = vunpack.c.l.b16 %v6023
    %v6063 = vunpack.c.l.b16 %v6024
    %v6064 = vpack.c.b16 %v6049, %v6048
    %v6065 = vpack.c.b16 %v6051, %v6050
    %v6066 = vpack.c.b16 %v6053, %v6052
    %v6067 = vpack.c.b16 %v6055, %v6054
    %v6068 = vpack.c.b16 %v6057, %v6056
    %v6069 = vpack.c.b16 %v6059, %v6058
    %v6070 = vpack.c.b16 %v6061, %v6060
    %v6071 = vpack.c.b16 %v6063, %v6062
    %6080 = vmatprep.subr.bf16.mxu0 0
    %6081 = vmatpush1.bf16.msra.mxu0 %v6064
    %6082 = vmatprep.subr.bf16.mxu0 0
    %6083 = vmatpush1.bf16.msra.mxu0 %v6065
    %6084 = vmatprep.subr.bf16.mxu0 0
    %6085 = vmatpush1.bf16.msra.mxu0 %v6066
    %6086 = vmatprep.subr.bf16.mxu0 0
    %6087 = vmatpush1.bf16.msra.mxu0 %v6067
    %6088 = vmatprep.subr.bf16.mxu0 0
    %6089 = vmatpush1.bf16.msra.mxu0 %v6068
    %6090 = vmatprep.subr.bf16.mxu0 0
    %6091 = vmatpush1.bf16.msra.mxu0 %v6069
    %6092 = vmatprep.subr.bf16.mxu0 0
    %6093 = vmatpush1.bf16.msra.mxu0 %v6070
    %6094 = vmatprep.subr.bf16.mxu0 0
    %6095 = vmatpush1.bf16.msra.mxu0 %v6071
    %6096 = vmatprep.subr.bf16.mxu0 0
    %6097 = vmatpush1.bf16.msra.mxu0 0
    %6098 = vmatprep.subr.bf16.mxu0 0
    %6099 = vmatpush1.bf16.msra.mxu0 0
    %6100 = vmatprep.subr.bf16.mxu0 0
    %6101 = vmatpush1.bf16.msra.mxu0 0
    %6102 = vmatprep.subr.bf16.mxu0 0
    %6103 = vmatpush1.bf16.msra.mxu0 0
    %6104 = vmatprep.subr.bf16.mxu0 0
    %6105 = vmatpush1.bf16.msra.mxu0 0
    %6106 = vmatprep.subr.bf16.mxu0 0
    %6107 = vmatpush1.bf16.msra.mxu0 0
    %6108 = vmatprep.subr.bf16.mxu0 0
    %6109 = vmatpush1.bf16.msra.mxu0 0
    %6110 = vmatprep.subr.bf16.mxu0 0
    %6111 = vmatpush1.bf16.msra.mxu0 0
    %6112 = vmatprep.mubr.bf16.mxu0 0
    %6113 = vmatmul.mubr.bf16.gmra.mrb[0].mxu0 %v6008
    %v6114 = vpop.f32.mrb[0].mxu0
    %v6115 = vadd.f32 %v6030, %v6114
    %v6116 = vpop.f32.mrb[0].mxu0
    %v6117 = vpop.f32.mrb[0].mxu0
    %v6118 = vadd.f32 %v6030, %v6117
    %v6119 = vpop.f32.mrb[0].mxu0
    %6120 = vdwg.mxu0
    %6121 = vst [vmem:[%s19] sm:$0xff] %v6115
    %6122 = vst [vmem:[%s19 + $0x8] sm:$0xff] %v6118
    // Predicated region
    $region82: #{downstream_forward.1} parent=1 // pred_check
      _
    $region83: #{downstream_forward.1} parent=1 // pred_check_branch
      %6124 = sbr.rel (0) target = $region85
    $region84: #{downstream_forward.1} parent=1 // pred_region
      _
    $region85: #{downstream_forward.1} parent=1 // pred_fallthru
      _
    // Predicated region
    $region86: #{downstream_forward.1} parent=1 // pred_check
      _
    $region87: #{downstream_forward.1} parent=1 // pred_check_branch
      %6126 = sbr.rel (0) target = $region89
    $region88: #{downstream_forward.1} parent=1 // pred_region
      _
    $region89: #{downstream_forward.1} parent=1 // pred_fallthru
      _
    %6127 = vsyncpa [#allocation4], 1

</llo_original>
